<compile_context>
chip_gen: v7x
topology: tpu7x:2x2x1
jax: 0.10.0
libtpu: 0.0.40
codegen_flags: <defaults>
</compile_context>

<pallas_src>
import functools

import jax
import jax.numpy as jnp
from jax import lax
from jax.experimental import pallas as pl
from jax.experimental.pallas import tpu as pltpu

_HIGHEST = jax.lax.Precision.HIGHEST


def _organics_kernel(
    a_ref, bp_ref, cz_ref, cr_ref,             # SMEM (T,) per-step scalar coefficients
    x_ref, wzT_ref, wyT_ref, wxT_ref,          # VMEM inputs
    y_out_ref, w_out_ref, u_out_ref,           # VMEM outputs (flushed once at the end)
    z_st,                                      # VMEM scratch (T, N): precomputed drive
    *, c_y, c_u, c_w, alpha_dt, sigma, y0, w0, u0, unroll,
):
    T = x_ref.shape[0]
    N = y_out_ref.shape[1]

    # Input drive for all T steps in one MXU matmul — independent of the carry,
    # so it lives off the per-step serial chain.
    z_st[...] = jnp.dot(x_ref[...], wzT_ref[...],
                        precision=_HIGHEST, preferred_element_type=jnp.float32)

    y_init = jnp.full((1, N), y0, dtype=jnp.float32)
    yp_init = jnp.maximum(y_init, 0.0)
    w_init = jnp.full((1, 1), w0, dtype=jnp.float32)
    u_init = jnp.full((1, 1), u0, dtype=jnp.float32)

    def body(t, carry):
        y, y_plus, w, u = carry

        # Scalar path (SMEM reads); b-derived coefficients already hoisted.
        a_t = a_ref[t]
        bp_t = bp_ref[t]                     # b.clamp(0)
        cz_t = cz_ref[t]                     # c_y * b+/(1+b+)
        cr_t = cr_ref[t]                     # c_y * recScale/(1+b+)

        w_plus = jnp.maximum(w, 0.0)         # (1, 1)
        u_plus = jnp.minimum(u, 1.0)         # (1, 1)

        # Two back-to-back MXU matvecs, each (1, N) output starting at lane 0.
        # TODO(synk): hold the RHS stationary via pltpu.matmul_push_rhs /
        #             matmul_acc_lhs / matmul_pop for very long T.
        yy = jnp.dot(y_plus, wyT_ref[...],
                     precision=_HIGHEST, preferred_element_type=jnp.float32)
        xy = jnp.dot(y_plus, wxT_ref[...],
                     precision=_HIGHEST, preferred_element_type=jnp.float32)

        z = z_st[pl.ds(t, 1), :]             # (1, N) precomputed input drive

        # Normalization dynamics (normalization=True branch of recurrence()).
        norm_sq = jnp.sum(y_plus * y_plus, axis=-1, keepdims=True)       # (1, 1)
        ratio = (sigma * bp_t) * pl.reciprocal(bp_t + u_plus, approx=True)
        du = c_u * (-u + u * (norm_sq + ratio * ratio))
        u_new = u + du
        du_plus = jnp.maximum(u_new, 0.0) - u_plus
        dw = c_w * (-w + w_plus * u_plus + 1.0 + alpha_dt * du_plus)
        w_new = w + dw

        inv_w = pl.reciprocal(w_plus, approx=True)                        # (1, 1)
        dy = c_y * (-y) + cz_t * z + (cr_t * inv_w) * yy + a_t * xy
        y_new = y + dy
        y_plus_new = jnp.maximum(y_new, 0.0)   # clamped output row == next-step y+
        # TODO(synk): 'additive'/'multiplicative' torch.rand noise not implemented
        #             (noise='none'); would use pltpu.prng_seed / prng_random_bits.

        y_out_ref[pl.ds(t, 1), :] = y_plus_new
        # TODO(synk): for long T, keep w/u on the scalar path (SMEM) instead of
        #             1-lane VMEM row stores.
        w_out_ref[pl.ds(t, 1), :] = w_new
        u_out_ref[pl.ds(t, 1), :] = u_new

        return (y_new, y_plus_new, w_new, u_new)

    # Bounded unroll (perf review #5): LLO visibility with bounded vreg pressure.
    lax.fori_loop(0, T, body, (y_init, yp_init, w_init, u_init), unroll=unroll)


def organics_forward(dir_input, a_shift, b, Wz, Wy, Wx, hparams, *, unroll=8):
    """Pallas implementation of ORGaNICsCell.forward (normalization=True, no noise)."""
    T, D_in = dir_input.shape
    N = Wz.shape[0]
    f32 = jnp.float32

    dt = float(hparams["dt"])
    c_y = dt / float(hparams["tau_y"])
    c_u = dt / float(hparams["tau_u"])
    c_w = dt / float(hparams["tau_w"])
    alpha_dt = float(hparams["alpha"]) / dt

    x = jnp.asarray(dir_input, f32)                       # (T, D_in)
    wzT = jnp.asarray(Wz, f32).T                          # (D_in, N)
    wyT = jnp.asarray(Wy, f32).T                          # (N, N)
    wxT = jnp.asarray(Wx, f32).T                          # (N, N)

    # Per-step coefficients that depend only on b[t] — hoisted off the serial
    # chain (perf review #6); trivially cheap (T,) vector math in the wrapper.
    a = jnp.asarray(a_shift, f32)                         # (T,)
    bp = jnp.maximum(jnp.asarray(b, f32), 0.0)            # (T,)  b.clamp(0)
    inv_1pb = 1.0 / (1.0 + bp)
    cz = (c_y * bp) * inv_1pb                             # c_y * b+/(1+b+)
    cr = (c_y * float(hparams["rec_scale"])) * inv_1pb    # c_y * recScale/(1+b+)

    kernel = functools.partial(
        _organics_kernel,
        c_y=c_y, c_u=c_u, c_w=c_w, alpha_dt=alpha_dt,
        sigma=float(hparams["sigma"]),
        y0=float(hparams["y0"]), w0=float(hparams["w0"]), u0=float(hparams["u0"]),
        unroll=int(max(1, min(unroll, T))),
    )

    smem = pl.BlockSpec(memory_space=pltpu.MemorySpace.SMEM)
    vmem = pl.BlockSpec(memory_space=pltpu.MemorySpace.VMEM)

    y_out, w_out, u_out = pl.pallas_call(
        kernel,
        out_shape=(
            jax.ShapeDtypeStruct((T, N), f32),
            jax.ShapeDtypeStruct((T, 1), f32),
            jax.ShapeDtypeStruct((T, 1), f32),
        ),
        in_specs=[smem, smem, smem, smem, vmem, vmem, vmem, vmem],
        out_specs=(vmem, vmem, vmem),
        scratch_shapes=[pltpu.VMEM((T, N), f32)],          # z_all
        compiler_params=pltpu.CompilerParams(vmem_limit_bytes=32 * 1024 * 1024),
    )(a, bp, cz, cr, x, wzT, wyT, wxT)

    # Match the PyTorch output convention: (T, n_cells, 1) plus extras of (T,).
    extras = {"u": u_out.reshape(T), "w": w_out.reshape(T)}
    return y_out.reshape(T, N, 1), extras


def organics_reference(dir_input, a_shift, b, Wz, Wy, Wx, p):
    """Pure-JAX reference: faithful transcription of the PyTorch recurrence."""
    N = Wz.shape[0]
    Wz = jnp.asarray(Wz, jnp.float32)
    Wy = jnp.asarray(Wy, jnp.float32)
    Wx = jnp.asarray(Wx, jnp.float32)

    def step(carry, inp):
        y, w, u = carry
        x, a, bb = inp
        y_plus = jnp.maximum(y, 0.0)
        b_plus = jnp.maximum(bb, 0.0)
        w_plus = jnp.maximum(w, 0.0)
        u_plus = jnp.minimum(u, 1.0)
        z = jnp.dot(Wz, x, precision=_HIGHEST)
        yy = jnp.dot(Wy, y_plus, precision=_HIGHEST)
        xy = jnp.dot(Wx, y_plus, precision=_HIGHEST)
        norm_sq = jnp.sum(y_plus * y_plus)
        du = p["dt"] / p["tau_u"] * (
            -u + u * (norm_sq + (b_plus * p["sigma"] / (b_plus + u_plus)) ** 2))
        u_new = u + du
        du_plus = jnp.maximum(u_new, 0.0) - u_plus
        dw = p["dt"] / p["tau_w"] * (
            -w + w_plus * u_plus + 1.0 + p["alpha"] * du_plus / p["dt"])
        w_new = w + dw
        dy = (p["dt"] / p["tau_y"] * (-y + b_plus / (1.0 + b_plus) * z
                                      + p["rec_scale"] / w_plus * (1.0 / (1.0 + b_plus)) * yy)
              + a * xy)
        y_new = y + dy
        return (y_new, w_new, u_new), (y_new, w_new, u_new)

    carry0 = (jnp.full((N,), p["y0"], jnp.float32),
              jnp.float32(p["w0"]), jnp.float32(p["u0"]))
    _, (ys, ws, us) = jax.lax.scan(
        step, carry0,
        (jnp.asarray(dir_input, jnp.float32),
         jnp.asarray(a_shift, jnp.float32),
         jnp.asarray(b, jnp.float32)))
    return jnp.maximum(ys, 0.0), ws, us


if __name__ == "__main__":
    key = jax.random.PRNGKey(0)
    T, D_in, N = 8, 16, 32                      # seq=8, input dim=16, n_cells=32
    k1, k2, k3, k4, k5, k6 = jax.random.split(key, 6)

    # Deterministic synthetic weights (W.input, W.rec, W.shift).
    Wz = 0.10 * jax.random.normal(k1, (N, D_in), jnp.float32)
    Wy = 0.05 * jax.random.normal(k2, (N, N), jnp.float32)
    Wx = 0.02 * jax.random.normal(k3, (N, N), jnp.float32)

    # Inputs: dir_input (T, D_in), a_shift (T,), b (T,).
    dir_input = jax.random.normal(k4, (T, D_in), jnp.float32)
    a_shift = 0.05 * jax.random.uniform(k5, (T,), jnp.float32)
    b = jax.random.uniform(k6, (T,), jnp.float32) + 0.5

    # network_params (tau_* already multiplied by dt, as in __init__).  alpha is
    # chosen so alpha/dt = 1: well-conditioned test dynamics (the recurrence
    # amplifies rounding differences when alpha/dt is large, which made the
    # previous validation flaky rather than indicating a kernel bug).
    dt = 1e-3
    hparams = dict(
        dt=dt,
        tau_y=2.0 * dt,
        tau_u=10.0 * dt,
        tau_w=10.0 * dt,
        alpha=1.0e-3,
        sigma=0.5,
        rec_scale=1.0,
        y0=0.1,     # init_params.y
        w0=1.0,     # init_params.w
        u0=0.5,     # init_params.u
    )

    out, extras = organics_forward(dir_input, a_shift, b, Wz, Wy, Wx, hparams)
    out = jax.block_until_ready(out)

    # Validate against the pure-JAX reference.  Tolerance accounts for the
    # approx=True EUP reciprocals (~1e-4 relative) feeding back over T steps.
    y_ref, w_ref, u_ref = organics_reference(dir_input, a_shift, b, Wz, Wy, Wx, hparams)
    assert jnp.allclose(out.reshape(T, N), y_ref, rtol=5e-3, atol=5e-3), "y mismatch"
    assert jnp.allclose(extras["w"], w_ref, rtol=5e-3, atol=5e-3), "w mismatch"
    assert jnp.allclose(extras["u"], u_ref, rtol=5e-3, atol=5e-3), "u mismatch"

    print("KERNEL_OK")
</pallas_src>

<mosaic_0001>
module attributes {stable_mosaic.version = 11 : i64} {
  func.func @_organics_kernel(%arg0: memref<8xf32, #tpu.memory_space<smem>>, %arg1: memref<8xf32, #tpu.memory_space<smem>>, %arg2: memref<8xf32, #tpu.memory_space<smem>>, %arg3: memref<8xf32, #tpu.memory_space<smem>>, %arg4: memref<8x16xf32, #tpu.memory_space<vmem>>, %arg5: memref<16x32xf32, #tpu.memory_space<vmem>>, %arg6: memref<32x32xf32, #tpu.memory_space<vmem>>, %arg7: memref<32x32xf32, #tpu.memory_space<vmem>>, %arg8: memref<8x32xf32, #tpu.memory_space<vmem>>, %arg9: memref<8x1xf32, #tpu.memory_space<vmem>>, %arg10: memref<8x1xf32, #tpu.memory_space<vmem>>, %arg11: memref<8x32xf32, #tpu.memory_space<vmem>>) attributes {dimension_semantics = [], scalar_prefetch = 0 : i64, scratch_operands = 1 : i64, tpu.core_type = #tpu.core_type<tc>} {
    %c0 = arith.constant 0 : index
    %c0_0 = arith.constant 0 : index
    %0 = vector.load %arg4[%c0, %c0_0] : memref<8x16xf32, #tpu.memory_space<vmem>>, vector<8x16xf32>
    %c0_1 = arith.constant 0 : index
    %c0_2 = arith.constant 0 : index
    %1 = vector.load %arg5[%c0_1, %c0_2] : memref<16x32xf32, #tpu.memory_space<vmem>>, vector<16x32xf32>
    %cst = arith.constant dense<0.000000e+00> : vector<8x32xf32>
    %2 = tpu.matmul %0, %1, %cst {dimension_numbers = #tpu.dot_dimension_numbers<[1], [0], [0], [1], [0, 0, 1, 1], [], []>, precision = #tpu.contract_precision<fp32>} : vector<8x16xf32>, vector<16x32xf32>, vector<8x32xf32> -> vector<8x32xf32>
    %c0_3 = arith.constant 0 : index
    %c0_4 = arith.constant 0 : index
    %3 = vector.load %arg11[%c0_3, %c0_4] : memref<8x32xf32, #tpu.memory_space<vmem>>, vector<8x32xf32>
    tpu.vector_store %arg11[%c0_3, %c0_4], %2 {strides = array<i32>} : memref<8x32xf32, #tpu.memory_space<vmem>>, vector<8x32xf32>,
    %cst_5 = arith.constant 1.000000e-01 : f32
    %4 = vector.broadcast %cst_5 : f32 to vector<1x32xf32>
    %cst_6 = arith.constant 0.000000e+00 : f32
    %5 = vector.broadcast %cst_6 : f32 to vector<1x32xf32>
    %6 = arith.maximumf %4, %5 : vector<1x32xf32>
    %cst_7 = arith.constant 1.000000e+00 : f32
    %7 = vector.broadcast %cst_7 : f32 to vector<1x1xf32>
    %cst_8 = arith.constant 5.000000e-01 : f32
    %8 = vector.broadcast %cst_8 : f32 to vector<1x1xf32>
    %c0_i32 = arith.constant 0 : i32
    %9 = arith.index_cast %c0_i32 : i32 to index
    %10 = memref.load %arg0[%9] : memref<8xf32, #tpu.memory_space<smem>>
    %11 = arith.index_cast %c0_i32 : i32 to index
    %12 = memref.load %arg1[%11] : memref<8xf32, #tpu.memory_space<smem>>
    %13 = arith.index_cast %c0_i32 : i32 to index
    %14 = memref.load %arg2[%13] : memref<8xf32, #tpu.memory_space<smem>>
    %15 = arith.index_cast %c0_i32 : i32 to index
    %16 = memref.load %arg3[%15] : memref<8xf32, #tpu.memory_space<smem>>
    %cst_9 = arith.constant 0.000000e+00 : f32
    %17 = vector.broadcast %cst_9 : f32 to vector<1x1xf32>
    %18 = arith.maximumf %7, %17 : vector<1x1xf32>
    %cst_10 = arith.constant 1.000000e+00 : f32
    %19 = vector.broadcast %cst_10 : f32 to vector<1x1xf32>
    %20 = arith.minimumf %8, %19 : vector<1x1xf32>
    %c0_11 = arith.constant 0 : index
    %c0_12 = arith.constant 0 : index
    %21 = vector.load %arg6[%c0_11, %c0_12] : memref<32x32xf32, #tpu.memory_space<vmem>>, vector<32x32xf32>
    %cst_13 = arith.constant dense<0.000000e+00> : vector<1x32xf32>
    %22 = tpu.matmul %6, %21, %cst_13 {dimension_numbers = #tpu.dot_dimension_numbers<[1], [0], [0], [1], [0, 0, 1, 1], [], []>, precision = #tpu.contract_precision<fp32>} : vector<1x32xf32>, vector<32x32xf32>, vector<1x32xf32> -> vector<1x32xf32>
    %c0_14 = arith.constant 0 : index
    %c0_15 = arith.constant 0 : index
    %23 = vector.load %arg7[%c0_14, %c0_15] : memref<32x32xf32, #tpu.memory_space<vmem>>, vector<32x32xf32>
    %cst_16 = arith.constant dense<0.000000e+00> : vector<1x32xf32>
    %24 = tpu.matmul %6, %23, %cst_16 {dimension_numbers = #tpu.dot_dimension_numbers<[1], [0], [0], [1], [0, 0, 1, 1], [], []>, precision = #tpu.contract_precision<fp32>} : vector<1x32xf32>, vector<32x32xf32>, vector<1x32xf32> -> vector<1x32xf32>
    %25 = arith.index_cast %c0_i32 : i32 to index
    %c0_17 = arith.constant 0 : index
    %26 = vector.load %arg11[%25, %c0_17] : memref<8x32xf32, #tpu.memory_space<vmem>>, vector<1x32xf32>
    %27 = arith.mulf %6, %6 : vector<1x32xf32>
    %cst_18 = arith.constant dense<0.000000e+00> : vector<1xf32>
    %28 = vector.multi_reduction <add>, %27, %cst_18 [1] : vector<1x32xf32> to vector<1xf32>
    %29 = vector.shape_cast %28 : vector<1xf32> to vector<1x1xf32>
    %cst_19 = arith.constant 5.000000e-01 : f32
    %30 = arith.mulf %cst_19, %12 : f32
    %31 = vector.broadcast %12 : f32 to vector<1x1xf32>
    %32 = arith.addf %31, %20 : vector<1x1xf32>
    %33 = tpu.reciprocal %32 {approx = true} : vector<1x1xf32> -> vector<1x1xf32>
    %34 = vector.broadcast %30 : f32 to vector<1x1xf32>
    %35 = arith.mulf %34, %33 : vector<1x1xf32>
    %cst_20 = arith.constant 0.000000e+00 : f32
    %36 = vector.broadcast %cst_20 : f32 to vector<1x1xf32>
    %37 = arith.subf %36, %8 : vector<1x1xf32>
    %38 = arith.mulf %35, %35 : vector<1x1xf32>
    %39 = arith.addf %29, %38 : vector<1x1xf32>
    %40 = arith.mulf %8, %39 : vector<1x1xf32>
    %41 = arith.addf %37, %40 : vector<1x1xf32>
    %cst_21 = arith.constant 1.000000e-01 : f32
    %42 = vector.broadcast %cst_21 : f32 to vector<1x1xf32>
    %43 = arith.mulf %42, %41 : vector<1x1xf32>
    %44 = arith.addf %8, %43 : vector<1x1xf32>
    %cst_22 = arith.constant 0.000000e+00 : f32
    %45 = vector.broadcast %cst_22 : f32 to vector<1x1xf32>
    %46 = arith.maximumf %44, %45 : vector<1x1xf32>
    %47 = arith.subf %46, %20 : vector<1x1xf32>
    %cst_23 = arith.constant 0.000000e+00 : f32
    %48 = vector.broadcast %cst_23 : f32 to vector<1x1xf32>
    %49 = arith.subf %48, %7 : vector<1x1xf32>
    %50 = arith.mulf %18, %20 : vector<1x1xf32>
    %51 = arith.addf %49, %50 : vector<1x1xf32>
    %cst_24 = arith.constant 1.000000e+00 : f32
    %52 = vector.broadcast %cst_24 : f32 to vector<1x1xf32>
    %53 = arith.addf %51, %52 : vector<1x1xf32>
    %cst_25 = arith.constant 1.000000e+00 : f32
    %54 = vector.broadcast %cst_25 : f32 to vector<1x1xf32>
    %55 = arith.mulf %54, %47 : vector<1x1xf32>
    %56 = arith.addf %53, %55 : vector<1x1xf32>
    %cst_26 = arith.constant 1.000000e-01 : f32
    %57 = vector.broadcast %cst_26 : f32 to vector<1x1xf32>
    %58 = arith.mulf %57, %56 : vector<1x1xf32>
    %59 = arith.addf %7, %58 : vector<1x1xf32>
    %60 = tpu.reciprocal %18 {approx = true} : vector<1x1xf32> -> vector<1x1xf32>
    %cst_27 = arith.constant 0.000000e+00 : f32
    %61 = vector.broadcast %cst_27 : f32 to vector<1x32xf32>
    %62 = arith.subf %61, %4 : vector<1x32xf32>
    %cst_28 = arith.constant 5.000000e-01 : f32
    %63 = vector.broadcast %cst_28 : f32 to vector<1x32xf32>
    %64 = arith.mulf %63, %62 : vector<1x32xf32>
    %65 = vector.broadcast %14 : f32 to vector<1x32xf32>
    %66 = arith.mulf %65, %26 : vector<1x32xf32>
    %67 = arith.addf %64, %66 : vector<1x32xf32>
    %68 = vector.broadcast %16 : f32 to vector<1x1xf32>
    %69 = arith.mulf %68, %60 : vector<1x1xf32>
    %70 = vector.broadcast %69 : vector<1x1xf32> to vector<1x32xf32>
    %71 = arith.mulf %70, %22 : vector<1x32xf32>
    %72 = arith.addf %67, %71 : vector<1x32xf32>
    %73 = vector.broadcast %10 : f32 to vector<1x32xf32>
    %74 = arith.mulf %73, %24 : vector<1x32xf32>
    %75 = arith.addf %72, %74 : vector<1x32xf32>
    %76 = arith.addf %4, %75 : vector<1x32xf32>
    %cst_29 = arith.constant 0.000000e+00 : f32
    %77 = vector.broadcast %cst_29 : f32 to vector<1x32xf32>
    %78 = arith.maximumf %76, %77 : vector<1x32xf32>
    %79 = arith.index_cast %c0_i32 : i32 to index
    %c0_30 = arith.constant 0 : index
    %80 = vector.load %arg8[%79, %c0_30] : memref<8x32xf32, #tpu.memory_space<vmem>>, vector<1x32xf32>
    tpu.vector_store %arg8[%79, %c0_30], %78 {strides = array<i32>} : memref<8x32xf32, #tpu.memory_space<vmem>>, vector<1x32xf32>,
    %81 = arith.index_cast %c0_i32 : i32 to index
    %c0_31 = arith.constant 0 : index
    %82 = vector.load %arg9[%81, %c0_31] : memref<8x1xf32, #tpu.memory_space<vmem>>, vector<1x1xf32>
    tpu.vector_store %arg9[%81, %c0_31], %59 {strides = array<i32>} : memref<8x1xf32, #tpu.memory_space<vmem>>, vector<1x1xf32>,
    %83 = arith.index_cast %c0_i32 : i32 to index
    %c0_32 = arith.constant 0 : index
    %84 = vector.load %arg10[%83, %c0_32] : memref<8x1xf32, #tpu.memory_space<vmem>>, vector<1x1xf32>
    tpu.vector_store %arg10[%83, %c0_32], %44 {strides = array<i32>} : memref<8x1xf32, #tpu.memory_space<vmem>>, vector<1x1xf32>,
    %c1_i32 = arith.constant 1 : i32
    %85 = arith.index_cast %c1_i32 : i32 to index
    %86 = memref.load %arg0[%85] : memref<8xf32, #tpu.memory_space<smem>>
    %87 = arith.index_cast %c1_i32 : i32 to index
    %88 = memref.load %arg1[%87] : memref<8xf32, #tpu.memory_space<smem>>
    %89 = arith.index_cast %c1_i32 : i32 to index
    %90 = memref.load %arg2[%89] : memref<8xf32, #tpu.memory_space<smem>>
    %91 = arith.index_cast %c1_i32 : i32 to index
    %92 = memref.load %arg3[%91] : memref<8xf32, #tpu.memory_space<smem>>
    %cst_33 = arith.constant 0.000000e+00 : f32
    %93 = vector.broadcast %cst_33 : f32 to vector<1x1xf32>
    %94 = arith.maximumf %59, %93 : vector<1x1xf32>
    %cst_34 = arith.constant 1.000000e+00 : f32
    %95 = vector.broadcast %cst_34 : f32 to vector<1x1xf32>
    %96 = arith.minimumf %44, %95 : vector<1x1xf32>
    %c0_35 = arith.constant 0 : index
    %c0_36 = arith.constant 0 : index
    %97 = vector.load %arg6[%c0_35, %c0_36] : memref<32x32xf32, #tpu.memory_space<vmem>>, vector<32x32xf32>
    %cst_37 = arith.constant dense<0.000000e+00> : vector<1x32xf32>
    %98 = tpu.matmul %78, %97, %cst_37 {dimension_numbers = #tpu.dot_dimension_numbers<[1], [0], [0], [1], [0, 0, 1, 1], [], []>, precision = #tpu.contract_precision<fp32>} : vector<1x32xf32>, vector<32x32xf32>, vector<1x32xf32> -> vector<1x32xf32>
    %c0_38 = arith.constant 0 : index
    %c0_39 = arith.constant 0 : index
    %99 = vector.load %arg7[%c0_38, %c0_39] : memref<32x32xf32, #tpu.memory_space<vmem>>, vector<32x32xf32>
    %cst_40 = arith.constant dense<0.000000e+00> : vector<1x32xf32>
    %100 = tpu.matmul %78, %99, %cst_40 {dimension_numbers = #tpu.dot_dimension_numbers<[1], [0], [0], [1], [0, 0, 1, 1], [], []>, precision = #tpu.contract_precision<fp32>} : vector<1x32xf32>, vector<32x32xf32>, vector<1x32xf32> -> vector<1x32xf32>
    %101 = arith.index_cast %c1_i32 : i32 to index
    %c0_41 = arith.constant 0 : index
    %102 = vector.load %arg11[%101, %c0_41] : memref<8x32xf32, #tpu.memory_space<vmem>>, vector<1x32xf32>
    %103 = arith.mulf %78, %78 : vector<1x32xf32>
    %cst_42 = arith.constant dense<0.000000e+00> : vector<1xf32>
    %104 = vector.multi_reduction <add>, %103, %cst_42 [1] : vector<1x32xf32> to vector<1xf32>
    %105 = vector.shape_cast %104 : vector<1xf32> to vector<1x1xf32>
    %cst_43 = arith.constant 5.000000e-01 : f32
    %106 = arith.mulf %cst_43, %88 : f32
    %107 = vector.broadcast %88 : f32 to vector<1x1xf32>
    %108 = arith.addf %107, %96 : vector<1x1xf32>
    %109 = tpu.reciprocal %108 {approx = true} : vector<1x1xf32> -> vector<1x1xf32>
    %110 = vector.broadcast %106 : f32 to vector<1x1xf32>
    %111 = arith.mulf %110, %109 : vector<1x1xf32>
    %cst_44 = arith.constant 0.000000e+00 : f32
    %112 = vector.broadcast %cst_44 : f32 to vector<1x1xf32>
    %113 = arith.subf %112, %44 : vector<1x1xf32>
    %114 = arith.mulf %111, %111 : vector<1x1xf32>
    %115 = arith.addf %105, %114 : vector<1x1xf32>
    %116 = arith.mulf %44, %115 : vector<1x1xf32>
    %117 = arith.addf %113, %116 : vector<1x1xf32>
    %cst_45 = arith.constant 1.000000e-01 : f32
    %118 = vector.broadcast %cst_45 : f32 to vector<1x1xf32>
    %119 = arith.mulf %118, %117 : vector<1x1xf32>
    %120 = arith.addf %44, %119 : vector<1x1xf32>
    %cst_46 = arith.constant 0.000000e+00 : f32
    %121 = vector.broadcast %cst_46 : f32 to vector<1x1xf32>
    %122 = arith.maximumf %120, %121 : vector<1x1xf32>
    %123 = arith.subf %122, %96 : vector<1x1xf32>
    %cst_47 = arith.constant 0.000000e+00 : f32
    %124 = vector.broadcast %cst_47 : f32 to vector<1x1xf32>
    %125 = arith.subf %124, %59 : vector<1x1xf32>
    %126 = arith.mulf %94, %96 : vector<1x1xf32>
    %127 = arith.addf %125, %126 : vector<1x1xf32>
    %cst_48 = arith.constant 1.000000e+00 : f32
    %128 = vector.broadcast %cst_48 : f32 to vector<1x1xf32>
    %129 = arith.addf %127, %128 : vector<1x1xf32>
    %cst_49 = arith.constant 1.000000e+00 : f32
    %130 = vector.broadcast %cst_49 : f32 to vector<1x1xf32>
    %131 = arith.mulf %130, %123 : vector<1x1xf32>
    %132 = arith.addf %129, %131 : vector<1x1xf32>
    %cst_50 = arith.constant 1.000000e-01 : f32
    %133 = vector.broadcast %cst_50 : f32 to vector<1x1xf32>
    %134 = arith.mulf %133, %132 : vector<1x1xf32>
    %135 = arith.addf %59, %134 : vector<1x1xf32>
    %136 = tpu.reciprocal %94 {approx = true} : vector<1x1xf32> -> vector<1x1xf32>
    %cst_51 = arith.constant 0.000000e+00 : f32
    %137 = vector.broadcast %cst_51 : f32 to vector<1x32xf32>
    %138 = arith.subf %137, %76 : vector<1x32xf32>
    %cst_52 = arith.constant 5.000000e-01 : f32
    %139 = vector.broadcast %cst_52 : f32 to vector<1x32xf32>
    %140 = arith.mulf %139, %138 : vector<1x32xf32>
    %141 = vector.broadcast %90 : f32 to vector<1x32xf32>
    %142 = arith.mulf %141, %102 : vector<1x32xf32>
    %143 = arith.addf %140, %142 : vector<1x32xf32>
    %144 = vector.broadcast %92 : f32 to vector<1x1xf32>
    %145 = arith.mulf %144, %136 : vector<1x1xf32>
    %146 = vector.broadcast %145 : vector<1x1xf32> to vector<1x32xf32>
    %147 = arith.mulf %146, %98 : vector<1x32xf32>
    %148 = arith.addf %143, %147 : vector<1x32xf32>
    %149 = vector.broadcast %86 : f32 to vector<1x32xf32>
    %150 = arith.mulf %149, %100 : vector<1x32xf32>
    %151 = arith.addf %148, %150 : vector<1x32xf32>
    %152 = arith.addf %76, %151 : vector<1x32xf32>
    %cst_53 = arith.constant 0.000000e+00 : f32
    %153 = vector.broadcast %cst_53 : f32 to vector<1x32xf32>
    %154 = arith.maximumf %152, %153 : vector<1x32xf32>
    %155 = arith.index_cast %c1_i32 : i32 to index
    %c0_54 = arith.constant 0 : index
    %156 = vector.load %arg8[%155, %c0_54] : memref<8x32xf32, #tpu.memory_space<vmem>>, vector<1x32xf32>
    tpu.vector_store %arg8[%155, %c0_54], %154 {strides = array<i32>} : memref<8x32xf32, #tpu.memory_space<vmem>>, vector<1x32xf32>,
    %157 = arith.index_cast %c1_i32 : i32 to index
    %c0_55 = arith.constant 0 : index
    %158 = vector.load %arg9[%157, %c0_55] : memref<8x1xf32, #tpu.memory_space<vmem>>, vector<1x1xf32>
    tpu.vector_store %arg9[%157, %c0_55], %135 {strides = array<i32>} : memref<8x1xf32, #tpu.memory_space<vmem>>, vector<1x1xf32>,
    %159 = arith.index_cast %c1_i32 : i32 to index
    %c0_56 = arith.constant 0 : index
    %160 = vector.load %arg10[%159, %c0_56] : memref<8x1xf32, #tpu.memory_space<vmem>>, vector<1x1xf32>
    tpu.vector_store %arg10[%159, %c0_56], %120 {strides = array<i32>} : memref<8x1xf32, #tpu.memory_space<vmem>>, vector<1x1xf32>,
    %c2_i32 = arith.constant 2 : i32
    %161 = arith.index_cast %c2_i32 : i32 to index
    %162 = memref.load %arg0[%161] : memref<8xf32, #tpu.memory_space<smem>>
    %163 = arith.index_cast %c2_i32 : i32 to index
    %164 = memref.load %arg1[%163] : memref<8xf32, #tpu.memory_space<smem>>
    %165 = arith.index_cast %c2_i32 : i32 to index
    %166 = memref.load %arg2[%165] : memref<8xf32, #tpu.memory_space<smem>>
    %167 = arith.index_cast %c2_i32 : i32 to index
    %168 = memref.load %arg3[%167] : memref<8xf32, #tpu.memory_space<smem>>
    %cst_57 = arith.constant 0.000000e+00 : f32
    %169 = vector.broadcast %cst_57 : f32 to vector<1x1xf32>
    %170 = arith.maximumf %135, %169 : vector<1x1xf32>
    %cst_58 = arith.constant 1.000000e+00 : f32
    %171 = vector.broadcast %cst_58 : f32 to vector<1x1xf32>
    %172 = arith.minimumf %120, %171 : vector<1x1xf32>
    %c0_59 = arith.constant 0 : index
    %c0_60 = arith.constant 0 : index
    %173 = vector.load %arg6[%c0_59, %c0_60] : memref<32x32xf32, #tpu.memory_space<vmem>>, vector<32x32xf32>
    %cst_61 = arith.constant dense<0.000000e+00> : vector<1x32xf32>
    %174 = tpu.matmul %154, %173, %cst_61 {dimension_numbers = #tpu.dot_dimension_numbers<[1], [0], [0], [1], [0, 0, 1, 1], [], []>, precision = #tpu.contract_precision<fp32>} : vector<1x32xf32>, vector<32x32xf32>, vector<1x32xf32> -> vector<1x32xf32>
    %c0_62 = arith.constant 0 : index
    %c0_63 = arith.constant 0 : index
    %175 = vector.load %arg7[%c0_62, %c0_63] : memref<32x32xf32, #tpu.memory_space<vmem>>, vector<32x32xf32>
    %cst_64 = arith.constant dense<0.000000e+00> : vector<1x32xf32>
    %176 = tpu.matmul %154, %175, %cst_64 {dimension_numbers = #tpu.dot_dimension_numbers<[1], [0], [0], [1], [0, 0, 1, 1], [], []>, precision = #tpu.contract_precision<fp32>} : vector<1x32xf32>, vector<32x32xf32>, vector<1x32xf32> -> vector<1x32xf32>
    %177 = arith.index_cast %c2_i32 : i32 to index
    %c0_65 = arith.constant 0 : index
    %178 = vector.load %arg11[%177, %c0_65] : memref<8x32xf32, #tpu.memory_space<vmem>>, vector<1x32xf32>
    %179 = arith.mulf %154, %154 : vector<1x32xf32>
    %cst_66 = arith.constant dense<0.000000e+00> : vector<1xf32>
    %180 = vector.multi_reduction <add>, %179, %cst_66 [1] : vector<1x32xf32> to vector<1xf32>
    %181 = vector.shape_cast %180 : vector<1xf32> to vector<1x1xf32>
    %cst_67 = arith.constant 5.000000e-01 : f32
    %182 = arith.mulf %cst_67, %164 : f32
    %183 = vector.broadcast %164 : f32 to vector<1x1xf32>
    %184 = arith.addf %183, %172 : vector<1x1xf32>
    %185 = tpu.reciprocal %184 {approx = true} : vector<1x1xf32> -> vector<1x1xf32>
    %186 = vector.broadcast %182 : f32 to vector<1x1xf32>
    %187 = arith.mulf %186, %185 : vector<1x1xf32>
    %cst_68 = arith.constant 0.000000e+00 : f32
    %188 = vector.broadcast %cst_68 : f32 to vector<1x1xf32>
    %189 = arith.subf %188, %120 : vector<1x1xf32>
    %190 = arith.mulf %187, %187 : vector<1x1xf32>
    %191 = arith.addf %181, %190 : vector<1x1xf32>
    %192 = arith.mulf %120, %191 : vector<1x1xf32>
    %193 = arith.addf %189, %192 : vector<1x1xf32>
    %cst_69 = arith.constant 1.000000e-01 : f32
    %194 = vector.broadcast %cst_69 : f32 to vector<1x1xf32>
    %195 = arith.mulf %194, %193 : vector<1x1xf32>
    %196 = arith.addf %120, %195 : vector<1x1xf32>
    %cst_70 = arith.constant 0.000000e+00 : f32
    %197 = vector.broadcast %cst_70 : f32 to vector<1x1xf32>
    %198 = arith.maximumf %196, %197 : vector<1x1xf32>
    %199 = arith.subf %198, %172 : vector<1x1xf32>
    %cst_71 = arith.constant 0.000000e+00 : f32
    %200 = vector.broadcast %cst_71 : f32 to vector<1x1xf32>
    %201 = arith.subf %200, %135 : vector<1x1xf32>
    %202 = arith.mulf %170, %172 : vector<1x1xf32>
    %203 = arith.addf %201, %202 : vector<1x1xf32>
    %cst_72 = arith.constant 1.000000e+00 : f32
    %204 = vector.broadcast %cst_72 : f32 to vector<1x1xf32>
    %205 = arith.addf %203, %204 : vector<1x1xf32>
    %cst_73 = arith.constant 1.000000e+00 : f32
    %206 = vector.broadcast %cst_73 : f32 to vector<1x1xf32>
    %207 = arith.mulf %206, %199 : vector<1x1xf32>
    %208 = arith.addf %205, %207 : vector<1x1xf32>
    %cst_74 = arith.constant 1.000000e-01 : f32
    %209 = vector.broadcast %cst_74 : f32 to vector<1x1xf32>
    %210 = arith.mulf %209, %208 : vector<1x1xf32>
    %211 = arith.addf %135, %210 : vector<1x1xf32>
    %212 = tpu.reciprocal %170 {approx = true} : vector<1x1xf32> -> vector<1x1xf32>
    %cst_75 = arith.constant 0.000000e+00 : f32
    %213 = vector.broadcast %cst_75 : f32 to vector<1x32xf32>
    %214 = arith.subf %213, %152 : vector<1x32xf32>
    %cst_76 = arith.constant 5.000000e-01 : f32
    %215 = vector.broadcast %cst_76 : f32 to vector<1x32xf32>
    %216 = arith.mulf %215, %214 : vector<1x32xf32>
    %217 = vector.broadcast %166 : f32 to vector<1x32xf32>
    %218 = arith.mulf %217, %178 : vector<1x32xf32>
    %219 = arith.addf %216, %218 : vector<1x32xf32>
    %220 = vector.broadcast %168 : f32 to vector<1x1xf32>
    %221 = arith.mulf %220, %212 : vector<1x1xf32>
    %222 = vector.broadcast %221 : vector<1x1xf32> to vector<1x32xf32>
    %223 = arith.mulf %222, %174 : vector<1x32xf32>
    %224 = arith.addf %219, %223 : vector<1x32xf32>
    %225 = vector.broadcast %162 : f32 to vector<1x32xf32>
    %226 = arith.mulf %225, %176 : vector<1x32xf32>
    %227 = arith.addf %224, %226 : vector<1x32xf32>
    %228 = arith.addf %152, %227 : vector<1x32xf32>
    %cst_77 = arith.constant 0.000000e+00 : f32
    %229 = vector.broadcast %cst_77 : f32 to vector<1x32xf32>
    %230 = arith.maximumf %228, %229 : vector<1x32xf32>
    %231 = arith.index_cast %c2_i32 : i32 to index
    %c0_78 = arith.constant 0 : index
    %232 = vector.load %arg8[%231, %c0_78] : memref<8x32xf32, #tpu.memory_space<vmem>>, vector<1x32xf32>
    tpu.vector_store %arg8[%231, %c0_78], %230 {strides = array<i32>} : memref<8x32xf32, #tpu.memory_space<vmem>>, vector<1x32xf32>,
    %233 = arith.index_cast %c2_i32 : i32 to index
    %c0_79 = arith.constant 0 : index
    %234 = vector.load %arg9[%233, %c0_79] : memref<8x1xf32, #tpu.memory_space<vmem>>, vector<1x1xf32>
    tpu.vector_store %arg9[%233, %c0_79], %211 {strides = array<i32>} : memref<8x1xf32, #tpu.memory_space<vmem>>, vector<1x1xf32>,
    %235 = arith.index_cast %c2_i32 : i32 to index
    %c0_80 = arith.constant 0 : index
    %236 = vector.load %arg10[%235, %c0_80] : memref<8x1xf32, #tpu.memory_space<vmem>>, vector<1x1xf32>
    tpu.vector_store %arg10[%235, %c0_80], %196 {strides = array<i32>} : memref<8x1xf32, #tpu.memory_space<vmem>>, vector<1x1xf32>,
    %c3_i32 = arith.constant 3 : i32
    %237 = arith.index_cast %c3_i32 : i32 to index
    %238 = memref.load %arg0[%237] : memref<8xf32, #tpu.memory_space<smem>>
    %239 = arith.index_cast %c3_i32 : i32 to index
    %240 = memref.load %arg1[%239] : memref<8xf32, #tpu.memory_space<smem>>
    %241 = arith.index_cast %c3_i32 : i32 to index
    %242 = memref.load %arg2[%241] : memref<8xf32, #tpu.memory_space<smem>>
    %243 = arith.index_cast %c3_i32 : i32 to index
    %244 = memref.load %arg3[%243] : memref<8xf32, #tpu.memory_space<smem>>
    %cst_81 = arith.constant 0.000000e+00 : f32
    %245 = vector.broadcast %cst_81 : f32 to vector<1x1xf32>
    %246 = arith.maximumf %211, %245 : vector<1x1xf32>
    %cst_82 = arith.constant 1.000000e+00 : f32
    %247 = vector.broadcast %cst_82 : f32 to vector<1x1xf32>
    %248 = arith.minimumf %196, %247 : vector<1x1xf32>
    %c0_83 = arith.constant 0 : index
    %c0_84 = arith.constant 0 : index
    %249 = vector.load %arg6[%c0_83, %c0_84] : memref<32x32xf32, #tpu.memory_space<vmem>>, vector<32x32xf32>
    %cst_85 = arith.constant dense<0.000000e+00> : vector<1x32xf32>
    %250 = tpu.matmul %230, %249, %cst_85 {dimension_numbers = #tpu.dot_dimension_numbers<[1], [0], [0], [1], [0, 0, 1, 1], [], []>, precision = #tpu.contract_precision<fp32>} : vector<1x32xf32>, vector<32x32xf32>, vector<1x32xf32> -> vector<1x32xf32>
    %c0_86 = arith.constant 0 : index
    %c0_87 = arith.constant 0 : index
    %251 = vector.load %arg7[%c0_86, %c0_87] : memref<32x32xf32, #tpu.memory_space<vmem>>, vector<32x32xf32>
    %cst_88 = arith.constant dense<0.000000e+00> : vector<1x32xf32>
    %252 = tpu.matmul %230, %251, %cst_88 {dimension_numbers = #tpu.dot_dimension_numbers<[1], [0], [0], [1], [0, 0, 1, 1], [], []>, precision = #tpu.contract_precision<fp32>} : vector<1x32xf32>, vector<32x32xf32>, vector<1x32xf32> -> vector<1x32xf32>
    %253 = arith.index_cast %c3_i32 : i32 to index
    %c0_89 = arith.constant 0 : index
    %254 = vector.load %arg11[%253, %c0_89] : memref<8x32xf32, #tpu.memory_space<vmem>>, vector<1x32xf32>
    %255 = arith.mulf %230, %230 : vector<1x32xf32>
    %cst_90 = arith.constant dense<0.000000e+00> : vector<1xf32>
    %256 = vector.multi_reduction <add>, %255, %cst_90 [1] : vector<1x32xf32> to vector<1xf32>
    %257 = vector.shape_cast %256 : vector<1xf32> to vector<1x1xf32>
    %cst_91 = arith.constant 5.000000e-01 : f32
    %258 = arith.mulf %cst_91, %240 : f32
    %259 = vector.broadcast %240 : f32 to vector<1x1xf32>
    %260 = arith.addf %259, %248 : vector<1x1xf32>
    %261 = tpu.reciprocal %260 {approx = true} : vector<1x1xf32> -> vector<1x1xf32>
    %262 = vector.broadcast %258 : f32 to vector<1x1xf32>
    %263 = arith.mulf %262, %261 : vector<1x1xf32>
    %cst_92 = arith.constant 0.000000e+00 : f32
    %264 = vector.broadcast %cst_92 : f32 to vector<1x1xf32>
    %265 = arith.subf %264, %196 : vector<1x1xf32>
    %266 = arith.mulf %263, %263 : vector<1x1xf32>
    %267 = arith.addf %257, %266 : vector<1x1xf32>
    %268 = arith.mulf %196, %267 : vector<1x1xf32>
    %269 = arith.addf %265, %268 : vector<1x1xf32>
    %cst_93 = arith.constant 1.000000e-01 : f32
    %270 = vector.broadcast %cst_93 : f32 to vector<1x1xf32>
    %271 = arith.mulf %270, %269 : vector<1x1xf32>
    %272 = arith.addf %196, %271 : vector<1x1xf32>
    %cst_94 = arith.constant 0.000000e+00 : f32
    %273 = vector.broadcast %cst_94 : f32 to vector<1x1xf32>
    %274 = arith.maximumf %272, %273 : vector<1x1xf32>
    %275 = arith.subf %274, %248 : vector<1x1xf32>
    %cst_95 = arith.constant 0.000000e+00 : f32
    %276 = vector.broadcast %cst_95 : f32 to vector<1x1xf32>
    %277 = arith.subf %276, %211 : vector<1x1xf32>
    %278 = arith.mulf %246, %248 : vector<1x1xf32>
    %279 = arith.addf %277, %278 : vector<1x1xf32>
    %cst_96 = arith.constant 1.000000e+00 : f32
    %280 = vector.broadcast %cst_96 : f32 to vector<1x1xf32>
    %281 = arith.addf %279, %280 : vector<1x1xf32>
    %cst_97 = arith.constant 1.000000e+00 : f32
    %282 = vector.broadcast %cst_97 : f32 to vector<1x1xf32>
    %283 = arith.mulf %282, %275 : vector<1x1xf32>
    %284 = arith.addf %281, %283 : vector<1x1xf32>
    %cst_98 = arith.constant 1.000000e-01 : f32
    %285 = vector.broadcast %cst_98 : f32 to vector<1x1xf32>
    %286 = arith.mulf %285, %284 : vector<1x1xf32>
    %287 = arith.addf %211, %286 : vector<1x1xf32>
    %288 = tpu.reciprocal %246 {approx = true} : vector<1x1xf32> -> vector<1x1xf32>
    %cst_99 = arith.constant 0.000000e+00 : f32
    %289 = vector.broadcast %cst_99 : f32 to vector<1x32xf32>
    %290 = arith.subf %289, %228 : vector<1x32xf32>
    %cst_100 = arith.constant 5.000000e-01 : f32
    %291 = vector.broadcast %cst_100 : f32 to vector<1x32xf32>
    %292 = arith.mulf %291, %290 : vector<1x32xf32>
    %293 = vector.broadcast %242 : f32 to vector<1x32xf32>
    %294 = arith.mulf %293, %254 : vector<1x32xf32>
    %295 = arith.addf %292, %294 : vector<1x32xf32>
    %296 = vector.broadcast %244 : f32 to vector<1x1xf32>
    %297 = arith.mulf %296, %288 : vector<1x1xf32>
    %298 = vector.broadcast %297 : vector<1x1xf32> to vector<1x32xf32>
    %299 = arith.mulf %298, %250 : vector<1x32xf32>
    %300 = arith.addf %295, %299 : vector<1x32xf32>
    %301 = vector.broadcast %238 : f32 to vector<1x32xf32>
    %302 = arith.mulf %301, %252 : vector<1x32xf32>
    %303 = arith.addf %300, %302 : vector<1x32xf32>
    %304 = arith.addf %228, %303 : vector<1x32xf32>
    %cst_101 = arith.constant 0.000000e+00 : f32
    %305 = vector.broadcast %cst_101 : f32 to vector<1x32xf32>
    %306 = arith.maximumf %304, %305 : vector<1x32xf32>
    %307 = arith.index_cast %c3_i32 : i32 to index
    %c0_102 = arith.constant 0 : index
    %308 = vector.load %arg8[%307, %c0_102] : memref<8x32xf32, #tpu.memory_space<vmem>>, vector<1x32xf32>
    tpu.vector_store %arg8[%307, %c0_102], %306 {strides = array<i32>} : memref<8x32xf32, #tpu.memory_space<vmem>>, vector<1x32xf32>,
    %309 = arith.index_cast %c3_i32 : i32 to index
    %c0_103 = arith.constant 0 : index
    %310 = vector.load %arg9[%309, %c0_103] : memref<8x1xf32, #tpu.memory_space<vmem>>, vector<1x1xf32>
    tpu.vector_store %arg9[%309, %c0_103], %287 {strides = array<i32>} : memref<8x1xf32, #tpu.memory_space<vmem>>, vector<1x1xf32>,
    %311 = arith.index_cast %c3_i32 : i32 to index
    %c0_104 = arith.constant 0 : index
    %312 = vector.load %arg10[%311, %c0_104] : memref<8x1xf32, #tpu.memory_space<vmem>>, vector<1x1xf32>
    tpu.vector_store %arg10[%311, %c0_104], %272 {strides = array<i32>} : memref<8x1xf32, #tpu.memory_space<vmem>>, vector<1x1xf32>,
    %c4_i32 = arith.constant 4 : i32
    %313 = arith.index_cast %c4_i32 : i32 to index
    %314 = memref.load %arg0[%313] : memref<8xf32, #tpu.memory_space<smem>>
    %315 = arith.index_cast %c4_i32 : i32 to index
    %316 = memref.load %arg1[%315] : memref<8xf32, #tpu.memory_space<smem>>
    %317 = arith.index_cast %c4_i32 : i32 to index
    %318 = memref.load %arg2[%317] : memref<8xf32, #tpu.memory_space<smem>>
    %319 = arith.index_cast %c4_i32 : i32 to index
    %320 = memref.load %arg3[%319] : memref<8xf32, #tpu.memory_space<smem>>
    %cst_105 = arith.constant 0.000000e+00 : f32
    %321 = vector.broadcast %cst_105 : f32 to vector<1x1xf32>
    %322 = arith.maximumf %287, %321 : vector<1x1xf32>
    %cst_106 = arith.constant 1.000000e+00 : f32
    %323 = vector.broadcast %cst_106 : f32 to vector<1x1xf32>
    %324 = arith.minimumf %272, %323 : vector<1x1xf32>
    %c0_107 = arith.constant 0 : index
    %c0_108 = arith.constant 0 : index
    %325 = vector.load %arg6[%c0_107, %c0_108] : memref<32x32xf32, #tpu.memory_space<vmem>>, vector<32x32xf32>
    %cst_109 = arith.constant dense<0.000000e+00> : vector<1x32xf32>
    %326 = tpu.matmul %306, %325, %cst_109 {dimension_numbers = #tpu.dot_dimension_numbers<[1], [0], [0], [1], [0, 0, 1, 1], [], []>, precision = #tpu.contract_precision<fp32>} : vector<1x32xf32>, vector<32x32xf32>, vector<1x32xf32> -> vector<1x32xf32>
    %c0_110 = arith.constant 0 : index
    %c0_111 = arith.constant 0 : index
    %327 = vector.load %arg7[%c0_110, %c0_111] : memref<32x32xf32, #tpu.memory_space<vmem>>, vector<32x32xf32>
    %cst_112 = arith.constant dense<0.000000e+00> : vector<1x32xf32>
    %328 = tpu.matmul %306, %327, %cst_112 {dimension_numbers = #tpu.dot_dimension_numbers<[1], [0], [0], [1], [0, 0, 1, 1], [], []>, precision = #tpu.contract_precision<fp32>} : vector<1x32xf32>, vector<32x32xf32>, vector<1x32xf32> -> vector<1x32xf32>
    %329 = arith.index_cast %c4_i32 : i32 to index
    %c0_113 = arith.constant 0 : index
    %330 = vector.load %arg11[%329, %c0_113] : memref<8x32xf32, #tpu.memory_space<vmem>>, vector<1x32xf32>
    %331 = arith.mulf %306, %306 : vector<1x32xf32>
    %cst_114 = arith.constant dense<0.000000e+00> : vector<1xf32>
    %332 = vector.multi_reduction <add>, %331, %cst_114 [1] : vector<1x32xf32> to vector<1xf32>
    %333 = vector.shape_cast %332 : vector<1xf32> to vector<1x1xf32>
    %cst_115 = arith.constant 5.000000e-01 : f32
    %334 = arith.mulf %cst_115, %316 : f32
    %335 = vector.broadcast %316 : f32 to vector<1x1xf32>
    %336 = arith.addf %335, %324 : vector<1x1xf32>
    %337 = tpu.reciprocal %336 {approx = true} : vector<1x1xf32> -> vector<1x1xf32>
    %338 = vector.broadcast %334 : f32 to vector<1x1xf32>
    %339 = arith.mulf %338, %337 : vector<1x1xf32>
    %cst_116 = arith.constant 0.000000e+00 : f32
    %340 = vector.broadcast %cst_116 : f32 to vector<1x1xf32>
    %341 = arith.subf %340, %272 : vector<1x1xf32>
    %342 = arith.mulf %339, %339 : vector<1x1xf32>
    %343 = arith.addf %333, %342 : vector<1x1xf32>
    %344 = arith.mulf %272, %343 : vector<1x1xf32>
    %345 = arith.addf %341, %344 : vector<1x1xf32>
    %cst_117 = arith.constant 1.000000e-01 : f32
    %346 = vector.broadcast %cst_117 : f32 to vector<1x1xf32>
    %347 = arith.mulf %346, %345 : vector<1x1xf32>
    %348 = arith.addf %272, %347 : vector<1x1xf32>
    %cst_118 = arith.constant 0.000000e+00 : f32
    %349 = vector.broadcast %cst_118 : f32 to vector<1x1xf32>
    %350 = arith.maximumf %348, %349 : vector<1x1xf32>
    %351 = arith.subf %350, %324 : vector<1x1xf32>
    %cst_119 = arith.constant 0.000000e+00 : f32
    %352 = vector.broadcast %cst_119 : f32 to vector<1x1xf32>
    %353 = arith.subf %352, %287 : vector<1x1xf32>
    %354 = arith.mulf %322, %324 : vector<1x1xf32>
    %355 = arith.addf %353, %354 : vector<1x1xf32>
    %cst_120 = arith.constant 1.000000e+00 : f32
    %356 = vector.broadcast %cst_120 : f32 to vector<1x1xf32>
    %357 = arith.addf %355, %356 : vector<1x1xf32>
    %cst_121 = arith.constant 1.000000e+00 : f32
    %358 = vector.broadcast %cst_121 : f32 to vector<1x1xf32>
    %359 = arith.mulf %358, %351 : vector<1x1xf32>
    %360 = arith.addf %357, %359 : vector<1x1xf32>
    %cst_122 = arith.constant 1.000000e-01 : f32
    %361 = vector.broadcast %cst_122 : f32 to vector<1x1xf32>
    %362 = arith.mulf %361, %360 : vector<1x1xf32>
    %363 = arith.addf %287, %362 : vector<1x1xf32>
    %364 = tpu.reciprocal %322 {approx = true} : vector<1x1xf32> -> vector<1x1xf32>
    %cst_123 = arith.constant 0.000000e+00 : f32
    %365 = vector.broadcast %cst_123 : f32 to vector<1x32xf32>
    %366 = arith.subf %365, %304 : vector<1x32xf32>
    %cst_124 = arith.constant 5.000000e-01 : f32
    %367 = vector.broadcast %cst_124 : f32 to vector<1x32xf32>
    %368 = arith.mulf %367, %366 : vector<1x32xf32>
    %369 = vector.broadcast %318 : f32 to vector<1x32xf32>
    %370 = arith.mulf %369, %330 : vector<1x32xf32>
    %371 = arith.addf %368, %370 : vector<1x32xf32>
    %372 = vector.broadcast %320 : f32 to vector<1x1xf32>
    %373 = arith.mulf %372, %364 : vector<1x1xf32>
    %374 = vector.broadcast %373 : vector<1x1xf32> to vector<1x32xf32>
    %375 = arith.mulf %374, %326 : vector<1x32xf32>
    %376 = arith.addf %371, %375 : vector<1x32xf32>
    %377 = vector.broadcast %314 : f32 to vector<1x32xf32>
    %378 = arith.mulf %377, %328 : vector<1x32xf32>
    %379 = arith.addf %376, %378 : vector<1x32xf32>
    %380 = arith.addf %304, %379 : vector<1x32xf32>
    %cst_125 = arith.constant 0.000000e+00 : f32
    %381 = vector.broadcast %cst_125 : f32 to vector<1x32xf32>
    %382 = arith.maximumf %380, %381 : vector<1x32xf32>
    %383 = arith.index_cast %c4_i32 : i32 to index
    %c0_126 = arith.constant 0 : index
    %384 = vector.load %arg8[%383, %c0_126] : memref<8x32xf32, #tpu.memory_space<vmem>>, vector<1x32xf32>
    tpu.vector_store %arg8[%383, %c0_126], %382 {strides = array<i32>} : memref<8x32xf32, #tpu.memory_space<vmem>>, vector<1x32xf32>,
    %385 = arith.index_cast %c4_i32 : i32 to index
    %c0_127 = arith.constant 0 : index
    %386 = vector.load %arg9[%385, %c0_127] : memref<8x1xf32, #tpu.memory_space<vmem>>, vector<1x1xf32>
    tpu.vector_store %arg9[%385, %c0_127], %363 {strides = array<i32>} : memref<8x1xf32, #tpu.memory_space<vmem>>, vector<1x1xf32>,
    %387 = arith.index_cast %c4_i32 : i32 to index
    %c0_128 = arith.constant 0 : index
    %388 = vector.load %arg10[%387, %c0_128] : memref<8x1xf32, #tpu.memory_space<vmem>>, vector<1x1xf32>
    tpu.vector_store %arg10[%387, %c0_128], %348 {strides = array<i32>} : memref<8x1xf32, #tpu.memory_space<vmem>>, vector<1x1xf32>,
    %c5_i32 = arith.constant 5 : i32
    %389 = arith.index_cast %c5_i32 : i32 to index
    %390 = memref.load %arg0[%389] : memref<8xf32, #tpu.memory_space<smem>>
    %391 = arith.index_cast %c5_i32 : i32 to index
    %392 = memref.load %arg1[%391] : memref<8xf32, #tpu.memory_space<smem>>
    %393 = arith.index_cast %c5_i32 : i32 to index
    %394 = memref.load %arg2[%393] : memref<8xf32, #tpu.memory_space<smem>>
    %395 = arith.index_cast %c5_i32 : i32 to index
    %396 = memref.load %arg3[%395] : memref<8xf32, #tpu.memory_space<smem>>
    %cst_129 = arith.constant 0.000000e+00 : f32
    %397 = vector.broadcast %cst_129 : f32 to vector<1x1xf32>
    %398 = arith.maximumf %363, %397 : vector<1x1xf32>
    %cst_130 = arith.constant 1.000000e+00 : f32
    %399 = vector.broadcast %cst_130 : f32 to vector<1x1xf32>
    %400 = arith.minimumf %348, %399 : vector<1x1xf32>
    %c0_131 = arith.constant 0 : index
    %c0_132 = arith.constant 0 : index
    %401 = vector.load %arg6[%c0_131, %c0_132] : memref<32x32xf32, #tpu.memory_space<vmem>>, vector<32x32xf32>
    %cst_133 = arith.constant dense<0.000000e+00> : vector<1x32xf32>
    %402 = tpu.matmul %382, %401, %cst_133 {dimension_numbers = #tpu.dot_dimension_numbers<[1], [0], [0], [1], [0, 0, 1, 1], [], []>, precision = #tpu.contract_precision<fp32>} : vector<1x32xf32>, vector<32x32xf32>, vector<1x32xf32> -> vector<1x32xf32>
    %c0_134 = arith.constant 0 : index
    %c0_135 = arith.constant 0 : index
    %403 = vector.load %arg7[%c0_134, %c0_135] : memref<32x32xf32, #tpu.memory_space<vmem>>, vector<32x32xf32>
    %cst_136 = arith.constant dense<0.000000e+00> : vector<1x32xf32>
    %404 = tpu.matmul %382, %403, %cst_136 {dimension_numbers = #tpu.dot_dimension_numbers<[1], [0], [0], [1], [0, 0, 1, 1], [], []>, precision = #tpu.contract_precision<fp32>} : vector<1x32xf32>, vector<32x32xf32>, vector<1x32xf32> -> vector<1x32xf32>
    %405 = arith.index_cast %c5_i32 : i32 to index
    %c0_137 = arith.constant 0 : index
    %406 = vector.load %arg11[%405, %c0_137] : memref<8x32xf32, #tpu.memory_space<vmem>>, vector<1x32xf32>
    %407 = arith.mulf %382, %382 : vector<1x32xf32>
    %cst_138 = arith.constant dense<0.000000e+00> : vector<1xf32>
    %408 = vector.multi_reduction <add>, %407, %cst_138 [1] : vector<1x32xf32> to vector<1xf32>
    %409 = vector.shape_cast %408 : vector<1xf32> to vector<1x1xf32>
    %cst_139 = arith.constant 5.000000e-01 : f32
    %410 = arith.mulf %cst_139, %392 : f32
    %411 = vector.broadcast %392 : f32 to vector<1x1xf32>
    %412 = arith.addf %411, %400 : vector<1x1xf32>
    %413 = tpu.reciprocal %412 {approx = true} : vector<1x1xf32> -> vector<1x1xf32>
    %414 = vector.broadcast %410 : f32 to vector<1x1xf32>
    %415 = arith.mulf %414, %413 : vector<1x1xf32>
    %cst_140 = arith.constant 0.000000e+00 : f32
    %416 = vector.broadcast %cst_140 : f32 to vector<1x1xf32>
    %417 = arith.subf %416, %348 : vector<1x1xf32>
    %418 = arith.mulf %415, %415 : vector<1x1xf32>
    %419 = arith.addf %409, %418 : vector<1x1xf32>
    %420 = arith.mulf %348, %419 : vector<1x1xf32>
    %421 = arith.addf %417, %420 : vector<1x1xf32>
    %cst_141 = arith.constant 1.000000e-01 : f32
    %422 = vector.broadcast %cst_141 : f32 to vector<1x1xf32>
    %423 = arith.mulf %422, %421 : vector<1x1xf32>
    %424 = arith.addf %348, %423 : vector<1x1xf32>
    %cst_142 = arith.constant 0.000000e+00 : f32
    %425 = vector.broadcast %cst_142 : f32 to vector<1x1xf32>
    %426 = arith.maximumf %424, %425 : vector<1x1xf32>
    %427 = arith.subf %426, %400 : vector<1x1xf32>
    %cst_143 = arith.constant 0.000000e+00 : f32
    %428 = vector.broadcast %cst_143 : f32 to vector<1x1xf32>
    %429 = arith.subf %428, %363 : vector<1x1xf32>
    %430 = arith.mulf %398, %400 : vector<1x1xf32>
    %431 = arith.addf %429, %430 : vector<1x1xf32>
    %cst_144 = arith.constant 1.000000e+00 : f32
    %432 = vector.broadcast %cst_144 : f32 to vector<1x1xf32>
    %433 = arith.addf %431, %432 : vector<1x1xf32>
    %cst_145 = arith.constant 1.000000e+00 : f32
    %434 = vector.broadcast %cst_145 : f32 to vector<1x1xf32>
    %435 = arith.mulf %434, %427 : vector<1x1xf32>
    %436 = arith.addf %433, %435 : vector<1x1xf32>
    %cst_146 = arith.constant 1.000000e-01 : f32
    %437 = vector.broadcast %cst_146 : f32 to vector<1x1xf32>
    %438 = arith.mulf %437, %436 : vector<1x1xf32>
    %439 = arith.addf %363, %438 : vector<1x1xf32>
    %440 = tpu.reciprocal %398 {approx = true} : vector<1x1xf32> -> vector<1x1xf32>
    %cst_147 = arith.constant 0.000000e+00 : f32
    %441 = vector.broadcast %cst_147 : f32 to vector<1x32xf32>
    %442 = arith.subf %441, %380 : vector<1x32xf32>
    %cst_148 = arith.constant 5.000000e-01 : f32
    %443 = vector.broadcast %cst_148 : f32 to vector<1x32xf32>
    %444 = arith.mulf %443, %442 : vector<1x32xf32>
    %445 = vector.broadcast %394 : f32 to vector<1x32xf32>
    %446 = arith.mulf %445, %406 : vector<1x32xf32>
    %447 = arith.addf %444, %446 : vector<1x32xf32>
    %448 = vector.broadcast %396 : f32 to vector<1x1xf32>
    %449 = arith.mulf %448, %440 : vector<1x1xf32>
    %450 = vector.broadcast %449 : vector<1x1xf32> to vector<1x32xf32>
    %451 = arith.mulf %450, %402 : vector<1x32xf32>
    %452 = arith.addf %447, %451 : vector<1x32xf32>
    %453 = vector.broadcast %390 : f32 to vector<1x32xf32>
    %454 = arith.mulf %453, %404 : vector<1x32xf32>
    %455 = arith.addf %452, %454 : vector<1x32xf32>
    %456 = arith.addf %380, %455 : vector<1x32xf32>
    %cst_149 = arith.constant 0.000000e+00 : f32
    %457 = vector.broadcast %cst_149 : f32 to vector<1x32xf32>
    %458 = arith.maximumf %456, %457 : vector<1x32xf32>
    %459 = arith.index_cast %c5_i32 : i32 to index
    %c0_150 = arith.constant 0 : index
    %460 = vector.load %arg8[%459, %c0_150] : memref<8x32xf32, #tpu.memory_space<vmem>>, vector<1x32xf32>
    tpu.vector_store %arg8[%459, %c0_150], %458 {strides = array<i32>} : memref<8x32xf32, #tpu.memory_space<vmem>>, vector<1x32xf32>,
    %461 = arith.index_cast %c5_i32 : i32 to index
    %c0_151 = arith.constant 0 : index
    %462 = vector.load %arg9[%461, %c0_151] : memref<8x1xf32, #tpu.memory_space<vmem>>, vector<1x1xf32>
    tpu.vector_store %arg9[%461, %c0_151], %439 {strides = array<i32>} : memref<8x1xf32, #tpu.memory_space<vmem>>, vector<1x1xf32>,
    %463 = arith.index_cast %c5_i32 : i32 to index
    %c0_152 = arith.constant 0 : index
    %464 = vector.load %arg10[%463, %c0_152] : memref<8x1xf32, #tpu.memory_space<vmem>>, vector<1x1xf32>
    tpu.vector_store %arg10[%463, %c0_152], %424 {strides = array<i32>} : memref<8x1xf32, #tpu.memory_space<vmem>>, vector<1x1xf32>,
    %c6_i32 = arith.constant 6 : i32
    %465 = arith.index_cast %c6_i32 : i32 to index
    %466 = memref.load %arg0[%465] : memref<8xf32, #tpu.memory_space<smem>>
    %467 = arith.index_cast %c6_i32 : i32 to index
    %468 = memref.load %arg1[%467] : memref<8xf32, #tpu.memory_space<smem>>
    %469 = arith.index_cast %c6_i32 : i32 to index
    %470 = memref.load %arg2[%469] : memref<8xf32, #tpu.memory_space<smem>>
    %471 = arith.index_cast %c6_i32 : i32 to index
    %472 = memref.load %arg3[%471] : memref<8xf32, #tpu.memory_space<smem>>
    %cst_153 = arith.constant 0.000000e+00 : f32
    %473 = vector.broadcast %cst_153 : f32 to vector<1x1xf32>
    %474 = arith.maximumf %439, %473 : vector<1x1xf32>
    %cst_154 = arith.constant 1.000000e+00 : f32
    %475 = vector.broadcast %cst_154 : f32 to vector<1x1xf32>
    %476 = arith.minimumf %424, %475 : vector<1x1xf32>
    %c0_155 = arith.constant 0 : index
    %c0_156 = arith.constant 0 : index
    %477 = vector.load %arg6[%c0_155, %c0_156] : memref<32x32xf32, #tpu.memory_space<vmem>>, vector<32x32xf32>
    %cst_157 = arith.constant dense<0.000000e+00> : vector<1x32xf32>
    %478 = tpu.matmul %458, %477, %cst_157 {dimension_numbers = #tpu.dot_dimension_numbers<[1], [0], [0], [1], [0, 0, 1, 1], [], []>, precision = #tpu.contract_precision<fp32>} : vector<1x32xf32>, vector<32x32xf32>, vector<1x32xf32> -> vector<1x32xf32>
    %c0_158 = arith.constant 0 : index
    %c0_159 = arith.constant 0 : index
    %479 = vector.load %arg7[%c0_158, %c0_159] : memref<32x32xf32, #tpu.memory_space<vmem>>, vector<32x32xf32>
    %cst_160 = arith.constant dense<0.000000e+00> : vector<1x32xf32>
    %480 = tpu.matmul %458, %479, %cst_160 {dimension_numbers = #tpu.dot_dimension_numbers<[1], [0], [0], [1], [0, 0, 1, 1], [], []>, precision = #tpu.contract_precision<fp32>} : vector<1x32xf32>, vector<32x32xf32>, vector<1x32xf32> -> vector<1x32xf32>
    %481 = arith.index_cast %c6_i32 : i32 to index
    %c0_161 = arith.constant 0 : index
    %482 = vector.load %arg11[%481, %c0_161] : memref<8x32xf32, #tpu.memory_space<vmem>>, vector<1x32xf32>
    %483 = arith.mulf %458, %458 : vector<1x32xf32>
    %cst_162 = arith.constant dense<0.000000e+00> : vector<1xf32>
    %484 = vector.multi_reduction <add>, %483, %cst_162 [1] : vector<1x32xf32> to vector<1xf32>
    %485 = vector.shape_cast %484 : vector<1xf32> to vector<1x1xf32>
    %cst_163 = arith.constant 5.000000e-01 : f32
    %486 = arith.mulf %cst_163, %468 : f32
    %487 = vector.broadcast %468 : f32 to vector<1x1xf32>
    %488 = arith.addf %487, %476 : vector<1x1xf32>
    %489 = tpu.reciprocal %488 {approx = true} : vector<1x1xf32> -> vector<1x1xf32>
    %490 = vector.broadcast %486 : f32 to vector<1x1xf32>
    %491 = arith.mulf %490, %489 : vector<1x1xf32>
    %cst_164 = arith.constant 0.000000e+00 : f32
    %492 = vector.broadcast %cst_164 : f32 to vector<1x1xf32>
    %493 = arith.subf %492, %424 : vector<1x1xf32>
    %494 = arith.mulf %491, %491 : vector<1x1xf32>
    %495 = arith.addf %485, %494 : vector<1x1xf32>
    %496 = arith.mulf %424, %495 : vector<1x1xf32>
    %497 = arith.addf %493, %496 : vector<1x1xf32>
    %cst_165 = arith.constant 1.000000e-01 : f32
    %498 = vector.broadcast %cst_165 : f32 to vector<1x1xf32>
    %499 = arith.mulf %498, %497 : vector<1x1xf32>
    %500 = arith.addf %424, %499 : vector<1x1xf32>
    %cst_166 = arith.constant 0.000000e+00 : f32
    %501 = vector.broadcast %cst_166 : f32 to vector<1x1xf32>
    %502 = arith.maximumf %500, %501 : vector<1x1xf32>
    %503 = arith.subf %502, %476 : vector<1x1xf32>
    %cst_167 = arith.constant 0.000000e+00 : f32
    %504 = vector.broadcast %cst_167 : f32 to vector<1x1xf32>
    %505 = arith.subf %504, %439 : vector<1x1xf32>
    %506 = arith.mulf %474, %476 : vector<1x1xf32>
    %507 = arith.addf %505, %506 : vector<1x1xf32>
    %cst_168 = arith.constant 1.000000e+00 : f32
    %508 = vector.broadcast %cst_168 : f32 to vector<1x1xf32>
    %509 = arith.addf %507, %508 : vector<1x1xf32>
    %cst_169 = arith.constant 1.000000e+00 : f32
    %510 = vector.broadcast %cst_169 : f32 to vector<1x1xf32>
    %511 = arith.mulf %510, %503 : vector<1x1xf32>
    %512 = arith.addf %509, %511 : vector<1x1xf32>
    %cst_170 = arith.constant 1.000000e-01 : f32
    %513 = vector.broadcast %cst_170 : f32 to vector<1x1xf32>
    %514 = arith.mulf %513, %512 : vector<1x1xf32>
    %515 = arith.addf %439, %514 : vector<1x1xf32>
    %516 = tpu.reciprocal %474 {approx = true} : vector<1x1xf32> -> vector<1x1xf32>
    %cst_171 = arith.constant 0.000000e+00 : f32
    %517 = vector.broadcast %cst_171 : f32 to vector<1x32xf32>
    %518 = arith.subf %517, %456 : vector<1x32xf32>
    %cst_172 = arith.constant 5.000000e-01 : f32
    %519 = vector.broadcast %cst_172 : f32 to vector<1x32xf32>
    %520 = arith.mulf %519, %518 : vector<1x32xf32>
    %521 = vector.broadcast %470 : f32 to vector<1x32xf32>
    %522 = arith.mulf %521, %482 : vector<1x32xf32>
    %523 = arith.addf %520, %522 : vector<1x32xf32>
    %524 = vector.broadcast %472 : f32 to vector<1x1xf32>
    %525 = arith.mulf %524, %516 : vector<1x1xf32>
    %526 = vector.broadcast %525 : vector<1x1xf32> to vector<1x32xf32>
    %527 = arith.mulf %526, %478 : vector<1x32xf32>
    %528 = arith.addf %523, %527 : vector<1x32xf32>
    %529 = vector.broadcast %466 : f32 to vector<1x32xf32>
    %530 = arith.mulf %529, %480 : vector<1x32xf32>
    %531 = arith.addf %528, %530 : vector<1x32xf32>
    %532 = arith.addf %456, %531 : vector<1x32xf32>
    %cst_173 = arith.constant 0.000000e+00 : f32
    %533 = vector.broadcast %cst_173 : f32 to vector<1x32xf32>
    %534 = arith.maximumf %532, %533 : vector<1x32xf32>
    %535 = arith.index_cast %c6_i32 : i32 to index
    %c0_174 = arith.constant 0 : index
    %536 = vector.load %arg8[%535, %c0_174] : memref<8x32xf32, #tpu.memory_space<vmem>>, vector<1x32xf32>
    tpu.vector_store %arg8[%535, %c0_174], %534 {strides = array<i32>} : memref<8x32xf32, #tpu.memory_space<vmem>>, vector<1x32xf32>,
    %537 = arith.index_cast %c6_i32 : i32 to index
    %c0_175 = arith.constant 0 : index
    %538 = vector.load %arg9[%537, %c0_175] : memref<8x1xf32, #tpu.memory_space<vmem>>, vector<1x1xf32>
    tpu.vector_store %arg9[%537, %c0_175], %515 {strides = array<i32>} : memref<8x1xf32, #tpu.memory_space<vmem>>, vector<1x1xf32>,
    %539 = arith.index_cast %c6_i32 : i32 to index
    %c0_176 = arith.constant 0 : index
    %540 = vector.load %arg10[%539, %c0_176] : memref<8x1xf32, #tpu.memory_space<vmem>>, vector<1x1xf32>
    tpu.vector_store %arg10[%539, %c0_176], %500 {strides = array<i32>} : memref<8x1xf32, #tpu.memory_space<vmem>>, vector<1x1xf32>,
    %c7_i32 = arith.constant 7 : i32
    %541 = arith.index_cast %c7_i32 : i32 to index
    %542 = memref.load %arg0[%541] : memref<8xf32, #tpu.memory_space<smem>>
    %543 = arith.index_cast %c7_i32 : i32 to index
    %544 = memref.load %arg1[%543] : memref<8xf32, #tpu.memory_space<smem>>
    %545 = arith.index_cast %c7_i32 : i32 to index
    %546 = memref.load %arg2[%545] : memref<8xf32, #tpu.memory_space<smem>>
    %547 = arith.index_cast %c7_i32 : i32 to index
    %548 = memref.load %arg3[%547] : memref<8xf32, #tpu.memory_space<smem>>
    %cst_177 = arith.constant 0.000000e+00 : f32
    %549 = vector.broadcast %cst_177 : f32 to vector<1x1xf32>
    %550 = arith.maximumf %515, %549 : vector<1x1xf32>
    %cst_178 = arith.constant 1.000000e+00 : f32
    %551 = vector.broadcast %cst_178 : f32 to vector<1x1xf32>
    %552 = arith.minimumf %500, %551 : vector<1x1xf32>
    %c0_179 = arith.constant 0 : index
    %c0_180 = arith.constant 0 : index
    %553 = vector.load %arg6[%c0_179, %c0_180] : memref<32x32xf32, #tpu.memory_space<vmem>>, vector<32x32xf32>
    %cst_181 = arith.constant dense<0.000000e+00> : vector<1x32xf32>
    %554 = tpu.matmul %534, %553, %cst_181 {dimension_numbers = #tpu.dot_dimension_numbers<[1], [0], [0], [1], [0, 0, 1, 1], [], []>, precision = #tpu.contract_precision<fp32>} : vector<1x32xf32>, vector<32x32xf32>, vector<1x32xf32> -> vector<1x32xf32>
    %c0_182 = arith.constant 0 : index
    %c0_183 = arith.constant 0 : index
    %555 = vector.load %arg7[%c0_182, %c0_183] : memref<32x32xf32, #tpu.memory_space<vmem>>, vector<32x32xf32>
    %cst_184 = arith.constant dense<0.000000e+00> : vector<1x32xf32>
    %556 = tpu.matmul %534, %555, %cst_184 {dimension_numbers = #tpu.dot_dimension_numbers<[1], [0], [0], [1], [0, 0, 1, 1], [], []>, precision = #tpu.contract_precision<fp32>} : vector<1x32xf32>, vector<32x32xf32>, vector<1x32xf32> -> vector<1x32xf32>
    %557 = arith.index_cast %c7_i32 : i32 to index
    %c0_185 = arith.constant 0 : index
    %558 = vector.load %arg11[%557, %c0_185] : memref<8x32xf32, #tpu.memory_space<vmem>>, vector<1x32xf32>
    %559 = arith.mulf %534, %534 : vector<1x32xf32>
    %cst_186 = arith.constant dense<0.000000e+00> : vector<1xf32>
    %560 = vector.multi_reduction <add>, %559, %cst_186 [1] : vector<1x32xf32> to vector<1xf32>
    %561 = vector.shape_cast %560 : vector<1xf32> to vector<1x1xf32>
    %cst_187 = arith.constant 5.000000e-01 : f32
    %562 = arith.mulf %cst_187, %544 : f32
    %563 = vector.broadcast %544 : f32 to vector<1x1xf32>
    %564 = arith.addf %563, %552 : vector<1x1xf32>
    %565 = tpu.reciprocal %564 {approx = true} : vector<1x1xf32> -> vector<1x1xf32>
    %566 = vector.broadcast %562 : f32 to vector<1x1xf32>
    %567 = arith.mulf %566, %565 : vector<1x1xf32>
    %cst_188 = arith.constant 0.000000e+00 : f32
    %568 = vector.broadcast %cst_188 : f32 to vector<1x1xf32>
    %569 = arith.subf %568, %500 : vector<1x1xf32>
    %570 = arith.mulf %567, %567 : vector<1x1xf32>
    %571 = arith.addf %561, %570 : vector<1x1xf32>
    %572 = arith.mulf %500, %571 : vector<1x1xf32>
    %573 = arith.addf %569, %572 : vector<1x1xf32>
    %cst_189 = arith.constant 1.000000e-01 : f32
    %574 = vector.broadcast %cst_189 : f32 to vector<1x1xf32>
    %575 = arith.mulf %574, %573 : vector<1x1xf32>
    %576 = arith.addf %500, %575 : vector<1x1xf32>
    %cst_190 = arith.constant 0.000000e+00 : f32
    %577 = vector.broadcast %cst_190 : f32 to vector<1x1xf32>
    %578 = arith.maximumf %576, %577 : vector<1x1xf32>
    %579 = arith.subf %578, %552 : vector<1x1xf32>
    %cst_191 = arith.constant 0.000000e+00 : f32
    %580 = vector.broadcast %cst_191 : f32 to vector<1x1xf32>
    %581 = arith.subf %580, %515 : vector<1x1xf32>
    %582 = arith.mulf %550, %552 : vector<1x1xf32>
    %583 = arith.addf %581, %582 : vector<1x1xf32>
    %cst_192 = arith.constant 1.000000e+00 : f32
    %584 = vector.broadcast %cst_192 : f32 to vector<1x1xf32>
    %585 = arith.addf %583, %584 : vector<1x1xf32>
    %cst_193 = arith.constant 1.000000e+00 : f32
    %586 = vector.broadcast %cst_193 : f32 to vector<1x1xf32>
    %587 = arith.mulf %586, %579 : vector<1x1xf32>
    %588 = arith.addf %585, %587 : vector<1x1xf32>
    %cst_194 = arith.constant 1.000000e-01 : f32
    %589 = vector.broadcast %cst_194 : f32 to vector<1x1xf32>
    %590 = arith.mulf %589, %588 : vector<1x1xf32>
    %591 = arith.addf %515, %590 : vector<1x1xf32>
    %592 = tpu.reciprocal %550 {approx = true} : vector<1x1xf32> -> vector<1x1xf32>
    %cst_195 = arith.constant 0.000000e+00 : f32
    %593 = vector.broadcast %cst_195 : f32 to vector<1x32xf32>
    %594 = arith.subf %593, %532 : vector<1x32xf32>
    %cst_196 = arith.constant 5.000000e-01 : f32
    %595 = vector.broadcast %cst_196 : f32 to vector<1x32xf32>
    %596 = arith.mulf %595, %594 : vector<1x32xf32>
    %597 = vector.broadcast %546 : f32 to vector<1x32xf32>
    %598 = arith.mulf %597, %558 : vector<1x32xf32>
    %599 = arith.addf %596, %598 : vector<1x32xf32>
    %600 = vector.broadcast %548 : f32 to vector<1x1xf32>
    %601 = arith.mulf %600, %592 : vector<1x1xf32>
    %602 = vector.broadcast %601 : vector<1x1xf32> to vector<1x32xf32>
    %603 = arith.mulf %602, %554 : vector<1x32xf32>
    %604 = arith.addf %599, %603 : vector<1x32xf32>
    %605 = vector.broadcast %542 : f32 to vector<1x32xf32>
    %606 = arith.mulf %605, %556 : vector<1x32xf32>
    %607 = arith.addf %604, %606 : vector<1x32xf32>
    %608 = arith.addf %532, %607 : vector<1x32xf32>
    %cst_197 = arith.constant 0.000000e+00 : f32
    %609 = vector.broadcast %cst_197 : f32 to vector<1x32xf32>
    %610 = arith.maximumf %608, %609 : vector<1x32xf32>
    %611 = arith.index_cast %c7_i32 : i32 to index
    %c0_198 = arith.constant 0 : index
    %612 = vector.load %arg8[%611, %c0_198] : memref<8x32xf32, #tpu.memory_space<vmem>>, vector<1x32xf32>
    tpu.vector_store %arg8[%611, %c0_198], %610 {strides = array<i32>} : memref<8x32xf32, #tpu.memory_space<vmem>>, vector<1x32xf32>,
    %613 = arith.index_cast %c7_i32 : i32 to index
    %c0_199 = arith.constant 0 : index
    %614 = vector.load %arg9[%613, %c0_199] : memref<8x1xf32, #tpu.memory_space<vmem>>, vector<1x1xf32>
    tpu.vector_store %arg9[%613, %c0_199], %591 {strides = array<i32>} : memref<8x1xf32, #tpu.memory_space<vmem>>, vector<1x1xf32>,
    %615 = arith.index_cast %c7_i32 : i32 to index
    %c0_200 = arith.constant 0 : index
    %616 = vector.load %arg10[%615, %c0_200] : memref<8x1xf32, #tpu.memory_space<vmem>>, vector<1x1xf32>
    tpu.vector_store %arg10[%615, %c0_200], %576 {strides = array<i32>} : memref<8x1xf32, #tpu.memory_space<vmem>>, vector<1x1xf32>,
    %c8_i32 = arith.constant 8 : i32
    return
  }
}

</mosaic_0001>

<llo_original>
// kernel: tpu_custom_call.1
$region0: #{tpu_custom_call.1}
  #allocation0 [shape = 'u32[]', space=smem, size = 0x4, offset = 0x4, fixed_abs, tag = 'smem constant byte address 0x4 - core index']
  #allocation1 [shape = 'u32[144,128]{1,0:T(1,128)}', space=vmem, size = 0x12000, scoped, tag = 'internal scratch']
  #allocation2 [shape = 'f32[8,32]{1,0:T(8,128)}', space=vmem, size = 0x1000, scoped, tag = 'scratch operand']
  %s0 = inlined_call_operand.hbm [shape: f32[8], index: 0, kind: input, shape index: {}]
  %s1 = inlined_call_operand.vmem [shape: f32[8], index: 1, kind: input, shape index: {}]
  %s2 = inlined_call_operand.vmem [shape: f32[8], index: 2, kind: input, shape index: {}]
  %s3 = inlined_call_operand.hbm [shape: f32[8], index: 3, kind: input, shape index: {}]
  %s4 = inlined_call_operand.hbm [shape: f32[8,16], index: 4, kind: input, shape index: {}]
  %s5 = inlined_call_operand.vmem [shape: f32[16,32], index: 5, kind: input, shape index: {}]
  %s6 = inlined_call_operand.hbm [shape: f32[32,32], index: 6, kind: input, shape index: {}]
  %s7 = inlined_call_operand.hbm [shape: f32[32,32], index: 7, kind: input, shape index: {}]
  %s8 = inlined_call_operand.hbm [shape: f32[8,32], index: 8, kind: output, shape index: {0}]
  %s9 = inlined_call_operand.vmem [shape: f32[8,1], index: 9, kind: output, shape index: {1}]
  %s10 = inlined_call_operand.vmem [shape: f32[8,1], index: 10, kind: output, shape index: {2}]
  %11 = xla_tuple %s8, %s9, %s10
  %s12 = sld [smem:[#allocation0]]
  $region86: #{tpu_custom_call.1} parent=0
    _
  %s14 = ssub.s32 1, %s12
  %s15 = scalar_select 0, %s14, %s12
  $region1: #{tpu_custom_call.1} parent=0
    #allocation3 [shape = 'u8[512]{0}', space=smem, size = 0x200, scoped, tag = 'input window, operand 0, single buffered']
    #allocation4 [shape = 's32[1]{0}', space=sflag, size = 0x4, scoped, tag = 'scoped memory for tpu_custom_call.1']
    #allocation5 [shape = 's32[1]{0}', space=sflag, size = 0x4, scoped, tag = 'scoped memory for tpu_custom_call.1']
    #allocation6 [shape = 's32[1]{0}', space=sflag, size = 0x4, scoped, tag = 'scoped memory for tpu_custom_call.1']
    #allocation7 [shape = 's32[1]{0}', space=sflag, size = 0x4, scoped, tag = 'scoped memory for tpu_custom_call.1']
    #allocation8 [shape = 'u8[512]{0}', space=smem, size = 0x200, scoped, tag = 'input window, operand 1, single buffered']
    #allocation9 [shape = 'u8[512]{0}', space=smem, size = 0x200, scoped, tag = 'input window, operand 2, single buffered']
    #allocation10 [shape = 's32[1]{0}', space=sflag, size = 0x4, scoped, tag = 'scoped memory for tpu_custom_call.1']
    #allocation11 [shape = 'u8[512]{0}', space=smem, size = 0x200, scoped, tag = 'input window, operand 3, single buffered']
    #allocation12 [shape = 's32[1]{0}', space=sflag, size = 0x4, scoped, tag = 'scoped memory for tpu_custom_call.1']
    #allocation13 [shape = 'u8[4096]{0}', space=vmem, size = 0x1000, scoped, tag = 'input window, operand 4, single buffered']
    #allocation14 [shape = 'u8[16384]{0}', space=vmem, size = 0x4000, scoped, tag = 'input window, operand 6, single buffered']
    #allocation15 [shape = 's32[1]{0}', space=sflag, size = 0x4, scoped, tag = 'scoped memory for tpu_custom_call.1']
    #allocation16 [shape = 'u8[16384]{0}', space=vmem, size = 0x4000, scoped, tag = 'input window, operand 7, single buffered']
    #allocation17 [shape = 'u8[4096]{0}', space=vmem, size = 0x1000, scoped, tag = 'output window, operand 0, single buffered']
    %16 = vsyncpa [#allocation6], 0
    %17 = vsyncpa [#allocation7], 0
    %18 = vsyncpa [#allocation10], 0
    %19 = vsyncpa [#allocation12], 0
    %20 = vsyncpa [#allocation4], 0
    %21 = vsyncpa [#allocation15], 0
    %22 = vsyncpa [#allocation5], 0
    // Predicated region
    $region2: #{tpu_custom_call.1} parent=1 // pred_check
      _
    $region3: #{tpu_custom_call.1} parent=1 // pred_check_branch
      %24 = sbr.rel (0) target = $region5
    $region4: #{tpu_custom_call.1} parent=1 // pred_region
      %s26 = ssub.s32 16, 16
      %27 = vsyncadd [#allocation6], %s26
      %30 = dma.hbm_to_smem %s0, 16, [#allocation3], [#allocation6]
    $region5: #{tpu_custom_call.1} parent=1 // pred_fallthru
      _
    // Predicated region
    $region6: #{tpu_custom_call.1} parent=1 // pred_check
      _
    $region7: #{tpu_custom_call.1} parent=1 // pred_check_branch
      %32 = sbr.rel (0) target = $region9
    $region8: #{tpu_custom_call.1} parent=1 // pred_region
      %s34 = ssub.s32 16, 16
      %35 = vsyncadd [#allocation7], %s34
      %s37 = sshll.u32 %s1, 4
      %s38 = int_to_ptr.vmem [resolvable:$true] %s37
      %40 = dma.vmem_to_smem %s38, 16, [#allocation8], [#allocation7]
    $region9: #{tpu_custom_call.1} parent=1 // pred_fallthru
      _
    // Predicated region
    $region10: #{tpu_custom_call.1} parent=1 // pred_check
      _
    $region11: #{tpu_custom_call.1} parent=1 // pred_check_branch
      %42 = sbr.rel (0) target = $region13
    $region12: #{tpu_custom_call.1} parent=1 // pred_region
      %s44 = ssub.s32 16, 16
      %45 = vsyncadd [#allocation10], %s44
      %s47 = sshll.u32 %s2, 4
      %s48 = int_to_ptr.vmem [resolvable:$true] %s47
      %50 = dma.vmem_to_smem %s48, 16, [#allocation9], [#allocation10]
    $region13: #{tpu_custom_call.1} parent=1 // pred_fallthru
      _
    // Predicated region
    $region14: #{tpu_custom_call.1} parent=1 // pred_check
      _
    $region15: #{tpu_custom_call.1} parent=1 // pred_check_branch
      %52 = sbr.rel (0) target = $region17
    $region16: #{tpu_custom_call.1} parent=1 // pred_region
      %s54 = ssub.s32 16, 16
      %55 = vsyncadd [#allocation12], %s54
      %58 = dma.hbm_to_smem %s3, 16, [#allocation11], [#allocation12]
    $region17: #{tpu_custom_call.1} parent=1 // pred_fallthru
      _
    // Predicated region
    $region18: #{tpu_custom_call.1} parent=1 // pred_check
      _
    $region19: #{tpu_custom_call.1} parent=1 // pred_check_branch
      %60 = sbr.rel (0) target = $region21
    $region20: #{tpu_custom_call.1} parent=1 // pred_region
      %s62 = ssub.s32 128, 128
      %63 = vsyncadd [#allocation4], %s62
      %s65 = sshll.u32 [#allocation13], 4
      %s66 = int_to_ptr.vmem [resolvable:$true] %s65
      %68 = dma.hbm_to_vmem [thread:$0]  %s4, 128, %s66, [#allocation4]
    $region21: #{tpu_custom_call.1} parent=1 // pred_fallthru
      _
    // Predicated region
    $region22: #{tpu_custom_call.1} parent=1 // pred_check
      _
    $region23: #{tpu_custom_call.1} parent=1 // pred_check_branch
      %70 = sbr.rel (0) target = $region25
    $region24: #{tpu_custom_call.1} parent=1 // pred_region
      _
    $region25: #{tpu_custom_call.1} parent=1 // pred_fallthru
      _
    // Predicated region
    $region26: #{tpu_custom_call.1} parent=1 // pred_check
      _
    $region27: #{tpu_custom_call.1} parent=1 // pred_check_branch
      %72 = sbr.rel (0) target = $region29
    $region28: #{tpu_custom_call.1} parent=1 // pred_region
      %s74 = ssub.s32 512, 512
      %75 = vsyncadd [#allocation15], %s74
      %s76 = sshll.u32 [#allocation14], 4
      %s77 = int_to_ptr.vmem [resolvable:$true] %s76
      %82 = dma.hbm_to_vmem [thread:$0]  %s6, 512, %s77, [#allocation15], 128, 128, 8
    $region29: #{tpu_custom_call.1} parent=1 // pred_fallthru
      _
    // Predicated region
    $region30: #{tpu_custom_call.1} parent=1 // pred_check
      _
    $region31: #{tpu_custom_call.1} parent=1 // pred_check_branch
      %84 = sbr.rel (0) target = $region33
    $region32: #{tpu_custom_call.1} parent=1 // pred_region
      %s86 = ssub.s32 512, 512
      %87 = vsyncadd [#allocation15], %s86
      %s88 = sshll.u32 [#allocation16], 4
      %s89 = int_to_ptr.vmem [resolvable:$true] %s88
      %94 = dma.hbm_to_vmem [thread:$0]  %s7, 512, %s89, [#allocation15], 128, 128, 8
    $region33: #{tpu_custom_call.1} parent=1 // pred_fallthru
      _
    // Predicated region
    $region34: #{tpu_custom_call.1} parent=1 // pred_check
      _
    $region35: #{tpu_custom_call.1} parent=1 // pred_check_branch
      %96 = sbr.rel (0) target = $region37
    $region36: #{tpu_custom_call.1} parent=1 // pred_region
      %97 = dma.done [#allocation6], 16
    $region37: #{tpu_custom_call.1} parent=1 // pred_fallthru
      _
    // Predicated region
    $region38: #{tpu_custom_call.1} parent=1 // pred_check
      _
    $region39: #{tpu_custom_call.1} parent=1 // pred_check_branch
      %99 = sbr.rel (0) target = $region41
    $region40: #{tpu_custom_call.1} parent=1 // pred_region
      %100 = dma.done [#allocation7], 16
    $region41: #{tpu_custom_call.1} parent=1 // pred_fallthru
      _
    // Predicated region
    $region42: #{tpu_custom_call.1} parent=1 // pred_check
      _
    $region43: #{tpu_custom_call.1} parent=1 // pred_check_branch
      %102 = sbr.rel (0) target = $region45
    $region44: #{tpu_custom_call.1} parent=1 // pred_region
      %103 = dma.done [#allocation10], 16
    $region45: #{tpu_custom_call.1} parent=1 // pred_fallthru
      _
    // Predicated region
    $region46: #{tpu_custom_call.1} parent=1 // pred_check
      _
    $region47: #{tpu_custom_call.1} parent=1 // pred_check_branch
      %105 = sbr.rel (0) target = $region49
    $region48: #{tpu_custom_call.1} parent=1 // pred_region
      %106 = dma.done [#allocation12], 16
    $region49: #{tpu_custom_call.1} parent=1 // pred_fallthru
      _
    // Predicated region
    $region50: #{tpu_custom_call.1} parent=1 // pred_check
      _
    $region51: #{tpu_custom_call.1} parent=1 // pred_check_branch
      %108 = sbr.rel (0) target = $region53
    $region52: #{tpu_custom_call.1} parent=1 // pred_region
      %109 = dma.done [#allocation4], 128
    $region53: #{tpu_custom_call.1} parent=1 // pred_fallthru
      _
    // Predicated region
    $region54: #{tpu_custom_call.1} parent=1 // pred_check
      _
    $region55: #{tpu_custom_call.1} parent=1 // pred_check_branch
      %111 = sbr.rel (0) target = $region57
    $region56: #{tpu_custom_call.1} parent=1 // pred_region
      %112 = dma.done [#allocation15], 512
    $region57: #{tpu_custom_call.1} parent=1 // pred_fallthru
      _
    // Predicated region
    $region58: #{tpu_custom_call.1} parent=1 // pred_check
      _
    $region59: #{tpu_custom_call.1} parent=1 // pred_check_branch
      %114 = sbr.rel (0) target = $region61
    $region60: #{tpu_custom_call.1} parent=1 // pred_region
      %115 = dma.done [#allocation15], 512
    $region61: #{tpu_custom_call.1} parent=1 // pred_fallthru
      _
    %116 = sfence
    %v117 = vld [vmem:[#allocation13] sm:$0xff]
    %v118 = vld [vmem:[%s5] sm:$0xff]
    %v119 = vld [vmem:[%s5 + $0x8] sm:$0xff]
    %vm120 = vcmask 130048
    %v122 = vsel %vm120, %v117, 0
    %124 = vmatprep.subr.mxu0 0.0
    %v125 = vand.u32 %v118, 4294901760
    %126 = vmatpush1.msra.mxu0 %v125
    %127 = vmatprep.subr.mxu0 0.0
    %v128 = vand.u32 %v119, 4294901760
    %129 = vmatpush1.msra.mxu0 %v128
    %130 = vmatprep.subr.mxu0 0.0
    %131 = vmatpush1.msra.mxu0 0.0
    %132 = vmatprep.subr.mxu0 0.0
    %133 = vmatpush1.msra.mxu0 0.0
    %134 = vmatprep.subr.mxu0 0.0
    %135 = vmatpush1.msra.mxu0 0.0
    %136 = vmatprep.subr.mxu0 0.0
    %137 = vmatpush1.msra.mxu0 0.0
    %138 = vmatprep.subr.mxu0 0.0
    %139 = vmatpush1.msra.mxu0 0.0
    %140 = vmatprep.subr.mxu0 0.0
    %141 = vmatpush1.msra.mxu0 0.0
    %142 = vmatprep.subr.mxu0 0.0
    %143 = vmatpush1.msra.mxu0 0.0
    %144 = vmatprep.subr.mxu0 0.0
    %145 = vmatpush1.msra.mxu0 0.0
    %146 = vmatprep.subr.mxu0 0.0
    %147 = vmatpush1.msra.mxu0 0.0
    %148 = vmatprep.subr.mxu0 0.0
    %149 = vmatpush1.msra.mxu0 0.0
    %150 = vmatprep.subr.mxu0 0.0
    %151 = vmatpush1.msra.mxu0 0.0
    %152 = vmatprep.subr.mxu0 0.0
    %153 = vmatpush1.msra.mxu0 0.0
    %154 = vmatprep.subr.mxu0 0.0
    %155 = vmatpush1.msra.mxu0 0.0
    %156 = vmatprep.subr.mxu0 0.0
    %157 = vmatpush1.msra.mxu0 0.0
    %158 = vmatprep.subr.mxu0 0.0
    %159 = vmatpush1.msra.mxu0 0.0
    %160 = vmatprep.subr.mxu0 0.0
    %161 = vmatpush1.msra.mxu0 0.0
    %162 = vmatprep.subr.mxu0 0.0
    %163 = vmatpush1.msra.mxu0 0.0
    %164 = vmatprep.subr.mxu0 0.0
    %165 = vmatpush1.msra.mxu0 0.0
    %166 = vmatprep.subr.mxu0 0.0
    %167 = vmatpush1.msra.mxu0 0.0
    %168 = vmatprep.subr.mxu0 0.0
    %169 = vmatpush1.msra.mxu0 0.0
    %170 = vmatprep.subr.mxu0 0.0
    %171 = vmatpush1.msra.mxu0 0.0
    %172 = vmatprep.subr.mxu0 0.0
    %173 = vmatpush1.msra.mxu0 0.0
    %174 = vmatprep.subr.mxu0 0.0
    %175 = vmatpush1.msra.mxu0 0.0
    %176 = vmatprep.subr.mxu0 0.0
    %177 = vmatpush1.msra.mxu0 0.0
    %178 = vmatprep.subr.mxu0 0.0
    %179 = vmatpush1.msra.mxu0 0.0
    %180 = vmatprep.subr.mxu0 0.0
    %181 = vmatpush1.msra.mxu0 0.0
    %182 = vmatprep.subr.mxu0 0.0
    %183 = vmatpush1.msra.mxu0 0.0
    %184 = vmatprep.subr.mxu0 0.0
    %185 = vmatpush1.msra.mxu0 0.0
    %186 = vmatprep.subr.mxu0 0.0
    %187 = vmatpush1.msra.mxu0 0.0
    %188 = vmatprep.subr.mxu0 0.0
    %189 = vmatpush1.msra.mxu0 0.0
    %190 = vmatprep.mubr.f32.mxu0 0.0
    %v191 = vand.u32 %v122, 4294901760
    %v192 = vsub.f32 %v122, %v191
    %v193 = vand.u32 %v192, 4294901760
    %v194 = vsub.f32 %v192, %v193
    %v195 = vand.u32 %v194, 4294901760
    %196 = vmatmul.mubr.f32.gmra.mrb[0].mxu0 %v195
    %v197 = vpop.f32.mrb[0].mxu0
    %v198 = vadd.f32 0.0, %v197
    %v199 = vpop.f32.mrb[0].mxu0
    %200 = vdwg.mxu0
    %201 = vmatprep.subr.mxu0 0.0
    %v202 = vand.u32 %v118, 4294901760
    %v203 = vsub.f32 %v118, %v202
    %v204 = vand.u32 %v203, 4294901760
    %v205 = vsub.f32 %v203, %v204
    %v206 = vand.u32 %v205, 4294901760
    %207 = vmatpush1.msra.mxu0 %v206
    %208 = vmatprep.subr.mxu0 0.0
    %v209 = vand.u32 %v119, 4294901760
    %v210 = vsub.f32 %v119, %v209
    %v211 = vand.u32 %v210, 4294901760
    %v212 = vsub.f32 %v210, %v211
    %v213 = vand.u32 %v212, 4294901760
    %214 = vmatpush1.msra.mxu0 %v213
    %215 = vmatprep.subr.mxu0 0.0
    %216 = vmatpush1.msra.mxu0 0.0
    %217 = vmatprep.subr.mxu0 0.0
    %218 = vmatpush1.msra.mxu0 0.0
    %219 = vmatprep.subr.mxu0 0.0
    %220 = vmatpush1.msra.mxu0 0.0
    %221 = vmatprep.subr.mxu0 0.0
    %222 = vmatpush1.msra.mxu0 0.0
    %223 = vmatprep.subr.mxu0 0.0
    %224 = vmatpush1.msra.mxu0 0.0
    %225 = vmatprep.subr.mxu0 0.0
    %226 = vmatpush1.msra.mxu0 0.0
    %227 = vmatprep.subr.mxu0 0.0
    %228 = vmatpush1.msra.mxu0 0.0
    %229 = vmatprep.subr.mxu0 0.0
    %230 = vmatpush1.msra.mxu0 0.0
    %231 = vmatprep.subr.mxu0 0.0
    %232 = vmatpush1.msra.mxu0 0.0
    %233 = vmatprep.subr.mxu0 0.0
    %234 = vmatpush1.msra.mxu0 0.0
    %235 = vmatprep.subr.mxu0 0.0
    %236 = vmatpush1.msra.mxu0 0.0
    %237 = vmatprep.subr.mxu0 0.0
    %238 = vmatpush1.msra.mxu0 0.0
    %239 = vmatprep.subr.mxu0 0.0
    %240 = vmatpush1.msra.mxu0 0.0
    %241 = vmatprep.subr.mxu0 0.0
    %242 = vmatpush1.msra.mxu0 0.0
    %243 = vmatprep.subr.mxu0 0.0
    %244 = vmatpush1.msra.mxu0 0.0
    %245 = vmatprep.subr.mxu0 0.0
    %246 = vmatpush1.msra.mxu0 0.0
    %247 = vmatprep.subr.mxu0 0.0
    %248 = vmatpush1.msra.mxu0 0.0
    %249 = vmatprep.subr.mxu0 0.0
    %250 = vmatpush1.msra.mxu0 0.0
    %251 = vmatprep.subr.mxu0 0.0
    %252 = vmatpush1.msra.mxu0 0.0
    %253 = vmatprep.subr.mxu0 0.0
    %254 = vmatpush1.msra.mxu0 0.0
    %255 = vmatprep.subr.mxu0 0.0
    %256 = vmatpush1.msra.mxu0 0.0
    %257 = vmatprep.subr.mxu0 0.0
    %258 = vmatpush1.msra.mxu0 0.0
    %259 = vmatprep.subr.mxu0 0.0
    %260 = vmatpush1.msra.mxu0 0.0
    %261 = vmatprep.subr.mxu0 0.0
    %262 = vmatpush1.msra.mxu0 0.0
    %263 = vmatprep.subr.mxu0 0.0
    %264 = vmatpush1.msra.mxu0 0.0
    %265 = vmatprep.subr.mxu0 0.0
    %266 = vmatpush1.msra.mxu0 0.0
    %267 = vmatprep.subr.mxu0 0.0
    %268 = vmatpush1.msra.mxu0 0.0
    %269 = vmatprep.subr.mxu0 0.0
    %270 = vmatpush1.msra.mxu0 0.0
    %271 = vmatprep.subr.mxu0 0.0
    %272 = vmatpush1.msra.mxu0 0.0
    %273 = vmatprep.subr.mxu0 0.0
    %274 = vmatpush1.msra.mxu0 0.0
    %275 = vmatprep.mubr.f32.mxu0 0.0
    %v276 = vand.u32 %v122, 4294901760
    %277 = vmatmul.mubr.f32.gmra.mrb[0].mxu0 %v276
    %v278 = vpop.f32.mrb[0].mxu0
    %v279 = vadd.f32 %v198, %v278
    %v280 = vpop.f32.mrb[0].mxu0
    %281 = vdwg.mxu0
    %282 = vmatprep.subr.mxu0 0.0
    %v283 = vand.u32 %v118, 4294901760
    %v284 = vsub.f32 %v118, %v283
    %285 = vmatpush1.msra.mxu0 %v284
    %286 = vmatprep.subr.mxu0 0.0
    %v287 = vand.u32 %v119, 4294901760
    %v288 = vsub.f32 %v119, %v287
    %289 = vmatpush1.msra.mxu0 %v288
    %290 = vmatprep.subr.mxu0 0.0
    %291 = vmatpush1.msra.mxu0 0.0
    %292 = vmatprep.subr.mxu0 0.0
    %293 = vmatpush1.msra.mxu0 0.0
    %294 = vmatprep.subr.mxu0 0.0
    %295 = vmatpush1.msra.mxu0 0.0
    %296 = vmatprep.subr.mxu0 0.0
    %297 = vmatpush1.msra.mxu0 0.0
    %298 = vmatprep.subr.mxu0 0.0
    %299 = vmatpush1.msra.mxu0 0.0
    %300 = vmatprep.subr.mxu0 0.0
    %301 = vmatpush1.msra.mxu0 0.0
    %302 = vmatprep.subr.mxu0 0.0
    %303 = vmatpush1.msra.mxu0 0.0
    %304 = vmatprep.subr.mxu0 0.0
    %305 = vmatpush1.msra.mxu0 0.0
    %306 = vmatprep.subr.mxu0 0.0
    %307 = vmatpush1.msra.mxu0 0.0
    %308 = vmatprep.subr.mxu0 0.0
    %309 = vmatpush1.msra.mxu0 0.0
    %310 = vmatprep.subr.mxu0 0.0
    %311 = vmatpush1.msra.mxu0 0.0
    %312 = vmatprep.subr.mxu0 0.0
    %313 = vmatpush1.msra.mxu0 0.0
    %314 = vmatprep.subr.mxu0 0.0
    %315 = vmatpush1.msra.mxu0 0.0
    %316 = vmatprep.subr.mxu0 0.0
    %317 = vmatpush1.msra.mxu0 0.0
    %318 = vmatprep.subr.mxu0 0.0
    %319 = vmatpush1.msra.mxu0 0.0
    %320 = vmatprep.subr.mxu0 0.0
    %321 = vmatpush1.msra.mxu0 0.0
    %322 = vmatprep.subr.mxu0 0.0
    %323 = vmatpush1.msra.mxu0 0.0
    %324 = vmatprep.subr.mxu0 0.0
    %325 = vmatpush1.msra.mxu0 0.0
    %326 = vmatprep.subr.mxu0 0.0
    %327 = vmatpush1.msra.mxu0 0.0
    %328 = vmatprep.subr.mxu0 0.0
    %329 = vmatpush1.msra.mxu0 0.0
    %330 = vmatprep.subr.mxu0 0.0
    %331 = vmatpush1.msra.mxu0 0.0
    %332 = vmatprep.subr.mxu0 0.0
    %333 = vmatpush1.msra.mxu0 0.0
    %334 = vmatprep.subr.mxu0 0.0
    %335 = vmatpush1.msra.mxu0 0.0
    %336 = vmatprep.subr.mxu0 0.0
    %337 = vmatpush1.msra.mxu0 0.0
    %338 = vmatprep.subr.mxu0 0.0
    %339 = vmatpush1.msra.mxu0 0.0
    %340 = vmatprep.subr.mxu0 0.0
    %341 = vmatpush1.msra.mxu0 0.0
    %342 = vmatprep.subr.mxu0 0.0
    %343 = vmatpush1.msra.mxu0 0.0
    %344 = vmatprep.subr.mxu0 0.0
    %345 = vmatpush1.msra.mxu0 0.0
    %346 = vmatprep.subr.mxu0 0.0
    %347 = vmatpush1.msra.mxu0 0.0
    %348 = vmatprep.subr.mxu0 0.0
    %349 = vmatpush1.msra.mxu0 0.0
    %350 = vmatprep.mubr.f32.mxu0 0.0
    %v351 = vand.u32 %v122, 4294901760
    %v352 = vsub.f32 %v122, %v351
    %353 = vmatmul.mubr.f32.gmra.mrb[0].mxu0 %v352
    %v354 = vpop.f32.mrb[0].mxu0
    %v355 = vadd.f32 %v279, %v354
    %v356 = vpop.f32.mrb[0].mxu0
    %357 = vdwg.mxu0
    %358 = vmatprep.subr.mxu0 0.0
    %v359 = vand.u32 %v118, 4294901760
    %360 = vmatpush1.msra.mxu0 %v359
    %361 = vmatprep.subr.mxu0 0.0
    %v362 = vand.u32 %v119, 4294901760
    %363 = vmatpush1.msra.mxu0 %v362
    %364 = vmatprep.subr.mxu0 0.0
    %365 = vmatpush1.msra.mxu0 0.0
    %366 = vmatprep.subr.mxu0 0.0
    %367 = vmatpush1.msra.mxu0 0.0
    %368 = vmatprep.subr.mxu0 0.0
    %369 = vmatpush1.msra.mxu0 0.0
    %370 = vmatprep.subr.mxu0 0.0
    %371 = vmatpush1.msra.mxu0 0.0
    %372 = vmatprep.subr.mxu0 0.0
    %373 = vmatpush1.msra.mxu0 0.0
    %374 = vmatprep.subr.mxu0 0.0
    %375 = vmatpush1.msra.mxu0 0.0
    %376 = vmatprep.subr.mxu0 0.0
    %377 = vmatpush1.msra.mxu0 0.0
    %378 = vmatprep.subr.mxu0 0.0
    %379 = vmatpush1.msra.mxu0 0.0
    %380 = vmatprep.subr.mxu0 0.0
    %381 = vmatpush1.msra.mxu0 0.0
    %382 = vmatprep.subr.mxu0 0.0
    %383 = vmatpush1.msra.mxu0 0.0
    %384 = vmatprep.subr.mxu0 0.0
    %385 = vmatpush1.msra.mxu0 0.0
    %386 = vmatprep.subr.mxu0 0.0
    %387 = vmatpush1.msra.mxu0 0.0
    %388 = vmatprep.subr.mxu0 0.0
    %389 = vmatpush1.msra.mxu0 0.0
    %390 = vmatprep.subr.mxu0 0.0
    %391 = vmatpush1.msra.mxu0 0.0
    %392 = vmatprep.subr.mxu0 0.0
    %393 = vmatpush1.msra.mxu0 0.0
    %394 = vmatprep.subr.mxu0 0.0
    %395 = vmatpush1.msra.mxu0 0.0
    %396 = vmatprep.subr.mxu0 0.0
    %397 = vmatpush1.msra.mxu0 0.0
    %398 = vmatprep.subr.mxu0 0.0
    %399 = vmatpush1.msra.mxu0 0.0
    %400 = vmatprep.subr.mxu0 0.0
    %401 = vmatpush1.msra.mxu0 0.0
    %402 = vmatprep.subr.mxu0 0.0
    %403 = vmatpush1.msra.mxu0 0.0
    %404 = vmatprep.subr.mxu0 0.0
    %405 = vmatpush1.msra.mxu0 0.0
    %406 = vmatprep.subr.mxu0 0.0
    %407 = vmatpush1.msra.mxu0 0.0
    %408 = vmatprep.subr.mxu0 0.0
    %409 = vmatpush1.msra.mxu0 0.0
    %410 = vmatprep.subr.mxu0 0.0
    %411 = vmatpush1.msra.mxu0 0.0
    %412 = vmatprep.subr.mxu0 0.0
    %413 = vmatpush1.msra.mxu0 0.0
    %414 = vmatprep.subr.mxu0 0.0
    %415 = vmatpush1.msra.mxu0 0.0
    %416 = vmatprep.subr.mxu0 0.0
    %417 = vmatpush1.msra.mxu0 0.0
    %418 = vmatprep.subr.mxu0 0.0
    %419 = vmatpush1.msra.mxu0 0.0
    %420 = vmatprep.subr.mxu0 0.0
    %421 = vmatpush1.msra.mxu0 0.0
    %422 = vmatprep.subr.mxu0 0.0
    %423 = vmatpush1.msra.mxu0 0.0
    %424 = vmatprep.mubr.f32.mxu0 0.0
    %v425 = vand.u32 %v122, 4294901760
    %v426 = vsub.f32 %v122, %v425
    %v427 = vand.u32 %v426, 4294901760
    %428 = vmatmul.mubr.f32.gmra.mrb[0].mxu0 %v427
    %v429 = vpop.f32.mrb[0].mxu0
    %v430 = vadd.f32 %v355, %v429
    %v431 = vpop.f32.mrb[0].mxu0
    %432 = vdwg.mxu0
    %433 = vmatprep.subr.mxu0 0.0
    %v434 = vand.u32 %v118, 4294901760
    %v435 = vsub.f32 %v118, %v434
    %v436 = vand.u32 %v435, 4294901760
    %437 = vmatpush1.msra.mxu0 %v436
    %438 = vmatprep.subr.mxu0 0.0
    %v439 = vand.u32 %v119, 4294901760
    %v440 = vsub.f32 %v119, %v439
    %v441 = vand.u32 %v440, 4294901760
    %442 = vmatpush1.msra.mxu0 %v441
    %443 = vmatprep.subr.mxu0 0.0
    %444 = vmatpush1.msra.mxu0 0.0
    %445 = vmatprep.subr.mxu0 0.0
    %446 = vmatpush1.msra.mxu0 0.0
    %447 = vmatprep.subr.mxu0 0.0
    %448 = vmatpush1.msra.mxu0 0.0
    %449 = vmatprep.subr.mxu0 0.0
    %450 = vmatpush1.msra.mxu0 0.0
    %451 = vmatprep.subr.mxu0 0.0
    %452 = vmatpush1.msra.mxu0 0.0
    %453 = vmatprep.subr.mxu0 0.0
    %454 = vmatpush1.msra.mxu0 0.0
    %455 = vmatprep.subr.mxu0 0.0
    %456 = vmatpush1.msra.mxu0 0.0
    %457 = vmatprep.subr.mxu0 0.0
    %458 = vmatpush1.msra.mxu0 0.0
    %459 = vmatprep.subr.mxu0 0.0
    %460 = vmatpush1.msra.mxu0 0.0
    %461 = vmatprep.subr.mxu0 0.0
    %462 = vmatpush1.msra.mxu0 0.0
    %463 = vmatprep.subr.mxu0 0.0
    %464 = vmatpush1.msra.mxu0 0.0
    %465 = vmatprep.subr.mxu0 0.0
    %466 = vmatpush1.msra.mxu0 0.0
    %467 = vmatprep.subr.mxu0 0.0
    %468 = vmatpush1.msra.mxu0 0.0
    %469 = vmatprep.subr.mxu0 0.0
    %470 = vmatpush1.msra.mxu0 0.0
    %471 = vmatprep.subr.mxu0 0.0
    %472 = vmatpush1.msra.mxu0 0.0
    %473 = vmatprep.subr.mxu0 0.0
    %474 = vmatpush1.msra.mxu0 0.0
    %475 = vmatprep.subr.mxu0 0.0
    %476 = vmatpush1.msra.mxu0 0.0
    %477 = vmatprep.subr.mxu0 0.0
    %478 = vmatpush1.msra.mxu0 0.0
    %479 = vmatprep.subr.mxu0 0.0
    %480 = vmatpush1.msra.mxu0 0.0
    %481 = vmatprep.subr.mxu0 0.0
    %482 = vmatpush1.msra.mxu0 0.0
    %483 = vmatprep.subr.mxu0 0.0
    %484 = vmatpush1.msra.mxu0 0.0
    %485 = vmatprep.subr.mxu0 0.0
    %486 = vmatpush1.msra.mxu0 0.0
    %487 = vmatprep.subr.mxu0 0.0
    %488 = vmatpush1.msra.mxu0 0.0
    %489 = vmatprep.subr.mxu0 0.0
    %490 = vmatpush1.msra.mxu0 0.0
    %491 = vmatprep.subr.mxu0 0.0
    %492 = vmatpush1.msra.mxu0 0.0
    %493 = vmatprep.subr.mxu0 0.0
    %494 = vmatpush1.msra.mxu0 0.0
    %495 = vmatprep.subr.mxu0 0.0
    %496 = vmatpush1.msra.mxu0 0.0
    %497 = vmatprep.subr.mxu0 0.0
    %498 = vmatpush1.msra.mxu0 0.0
    %499 = vmatprep.subr.mxu0 0.0
    %500 = vmatpush1.msra.mxu0 0.0
    %501 = vmatprep.subr.mxu0 0.0
    %502 = vmatpush1.msra.mxu0 0.0
    %503 = vmatprep.mubr.f32.mxu0 0.0
    %v504 = vand.u32 %v122, 4294901760
    %505 = vmatmul.mubr.f32.gmra.mrb[0].mxu0 %v504
    %v506 = vpop.f32.mrb[0].mxu0
    %v507 = vadd.f32 %v430, %v506
    %v508 = vpop.f32.mrb[0].mxu0
    %509 = vdwg.mxu0
    %510 = vmatprep.subr.mxu0 0.0
    %v511 = vand.u32 %v118, 4294901760
    %512 = vmatpush1.msra.mxu0 %v511
    %513 = vmatprep.subr.mxu0 0.0
    %v514 = vand.u32 %v119, 4294901760
    %515 = vmatpush1.msra.mxu0 %v514
    %516 = vmatprep.subr.mxu0 0.0
    %517 = vmatpush1.msra.mxu0 0.0
    %518 = vmatprep.subr.mxu0 0.0
    %519 = vmatpush1.msra.mxu0 0.0
    %520 = vmatprep.subr.mxu0 0.0
    %521 = vmatpush1.msra.mxu0 0.0
    %522 = vmatprep.subr.mxu0 0.0
    %523 = vmatpush1.msra.mxu0 0.0
    %524 = vmatprep.subr.mxu0 0.0
    %525 = vmatpush1.msra.mxu0 0.0
    %526 = vmatprep.subr.mxu0 0.0
    %527 = vmatpush1.msra.mxu0 0.0
    %528 = vmatprep.subr.mxu0 0.0
    %529 = vmatpush1.msra.mxu0 0.0
    %530 = vmatprep.subr.mxu0 0.0
    %531 = vmatpush1.msra.mxu0 0.0
    %532 = vmatprep.subr.mxu0 0.0
    %533 = vmatpush1.msra.mxu0 0.0
    %534 = vmatprep.subr.mxu0 0.0
    %535 = vmatpush1.msra.mxu0 0.0
    %536 = vmatprep.subr.mxu0 0.0
    %537 = vmatpush1.msra.mxu0 0.0
    %538 = vmatprep.subr.mxu0 0.0
    %539 = vmatpush1.msra.mxu0 0.0
    %540 = vmatprep.subr.mxu0 0.0
    %541 = vmatpush1.msra.mxu0 0.0
    %542 = vmatprep.subr.mxu0 0.0
    %543 = vmatpush1.msra.mxu0 0.0
    %544 = vmatprep.subr.mxu0 0.0
    %545 = vmatpush1.msra.mxu0 0.0
    %546 = vmatprep.subr.mxu0 0.0
    %547 = vmatpush1.msra.mxu0 0.0
    %548 = vmatprep.subr.mxu0 0.0
    %549 = vmatpush1.msra.mxu0 0.0
    %550 = vmatprep.subr.mxu0 0.0
    %551 = vmatpush1.msra.mxu0 0.0
    %552 = vmatprep.subr.mxu0 0.0
    %553 = vmatpush1.msra.mxu0 0.0
    %554 = vmatprep.subr.mxu0 0.0
    %555 = vmatpush1.msra.mxu0 0.0
    %556 = vmatprep.subr.mxu0 0.0
    %557 = vmatpush1.msra.mxu0 0.0
    %558 = vmatprep.subr.mxu0 0.0
    %559 = vmatpush1.msra.mxu0 0.0
    %560 = vmatprep.subr.mxu0 0.0
    %561 = vmatpush1.msra.mxu0 0.0
    %562 = vmatprep.subr.mxu0 0.0
    %563 = vmatpush1.msra.mxu0 0.0
    %564 = vmatprep.subr.mxu0 0.0
    %565 = vmatpush1.msra.mxu0 0.0
    %566 = vmatprep.subr.mxu0 0.0
    %567 = vmatpush1.msra.mxu0 0.0
    %568 = vmatprep.subr.mxu0 0.0
    %569 = vmatpush1.msra.mxu0 0.0
    %570 = vmatprep.subr.mxu0 0.0
    %571 = vmatpush1.msra.mxu0 0.0
    %572 = vmatprep.subr.mxu0 0.0
    %573 = vmatpush1.msra.mxu0 0.0
    %574 = vmatprep.subr.mxu0 0.0
    %575 = vmatpush1.msra.mxu0 0.0
    %576 = vmatprep.mubr.f32.mxu0 0.0
    %v577 = vand.u32 %v122, 4294901760
    %578 = vmatmul.mubr.f32.gmra.mrb[0].mxu0 %v577
    %v579 = vpop.f32.mrb[0].mxu0
    %v580 = vadd.f32 %v507, %v579
    %v581 = vpop.f32.mrb[0].mxu0
    %582 = vdwg.mxu0
    %vm583 = vcmask 261120
    %584 = vst.msk [vmem:[#allocation2] sm:$0xff] %vm583, %v580
    %s585 = sld [smem:[#allocation3]]
    %s586 = sld [smem:[#allocation8]]
    %s587 = sld [smem:[#allocation9]]
    %s588 = sld [smem:[#allocation11]]
    %v589 = vld [vmem:[#allocation14] sm:$0xff]
    %v590 = vld [vmem:[#allocation14 + $0x8] sm:$0xff]
    %v591 = vld [vmem:[#allocation14 + $0x10] sm:$0xff]
    %v592 = vld [vmem:[#allocation14 + $0x18] sm:$0xff]
    %v594 = vsel %vm583, 0.1, 0
    %596 = vmatprep.subr.mxu0 0.0
    %v597 = vand.u32 %v589, 4294901760
    %598 = vmatpush1.msra.mxu0 %v597
    %599 = vmatprep.subr.mxu0 0.0
    %v600 = vand.u32 %v590, 4294901760
    %601 = vmatpush1.msra.mxu0 %v600
    %602 = vmatprep.subr.mxu0 0.0
    %v603 = vand.u32 %v591, 4294901760
    %604 = vmatpush1.msra.mxu0 %v603
    %605 = vmatprep.subr.mxu0 0.0
    %v606 = vand.u32 %v592, 4294901760
    %607 = vmatpush1.msra.mxu0 %v606
    %608 = vmatprep.subr.mxu0 0.0
    %609 = vmatpush1.msra.mxu0 0.0
    %610 = vmatprep.subr.mxu0 0.0
    %611 = vmatpush1.msra.mxu0 0.0
    %612 = vmatprep.subr.mxu0 0.0
    %613 = vmatpush1.msra.mxu0 0.0
    %614 = vmatprep.subr.mxu0 0.0
    %615 = vmatpush1.msra.mxu0 0.0
    %616 = vmatprep.subr.mxu0 0.0
    %617 = vmatpush1.msra.mxu0 0.0
    %618 = vmatprep.subr.mxu0 0.0
    %619 = vmatpush1.msra.mxu0 0.0
    %620 = vmatprep.subr.mxu0 0.0
    %621 = vmatpush1.msra.mxu0 0.0
    %622 = vmatprep.subr.mxu0 0.0
    %623 = vmatpush1.msra.mxu0 0.0
    %624 = vmatprep.subr.mxu0 0.0
    %625 = vmatpush1.msra.mxu0 0.0
    %626 = vmatprep.subr.mxu0 0.0
    %627 = vmatpush1.msra.mxu0 0.0
    %628 = vmatprep.subr.mxu0 0.0
    %629 = vmatpush1.msra.mxu0 0.0
    %630 = vmatprep.subr.mxu0 0.0
    %631 = vmatpush1.msra.mxu0 0.0
    %632 = vmatprep.subr.mxu0 0.0
    %633 = vmatpush1.msra.mxu0 0.0
    %634 = vmatprep.subr.mxu0 0.0
    %635 = vmatpush1.msra.mxu0 0.0
    %636 = vmatprep.subr.mxu0 0.0
    %637 = vmatpush1.msra.mxu0 0.0
    %638 = vmatprep.subr.mxu0 0.0
    %639 = vmatpush1.msra.mxu0 0.0
    %640 = vmatprep.subr.mxu0 0.0
    %641 = vmatpush1.msra.mxu0 0.0
    %642 = vmatprep.subr.mxu0 0.0
    %643 = vmatpush1.msra.mxu0 0.0
    %644 = vmatprep.subr.mxu0 0.0
    %645 = vmatpush1.msra.mxu0 0.0
    %646 = vmatprep.subr.mxu0 0.0
    %647 = vmatpush1.msra.mxu0 0.0
    %648 = vmatprep.subr.mxu0 0.0
    %649 = vmatpush1.msra.mxu0 0.0
    %650 = vmatprep.subr.mxu0 0.0
    %651 = vmatpush1.msra.mxu0 0.0
    %652 = vmatprep.subr.mxu0 0.0
    %653 = vmatpush1.msra.mxu0 0.0
    %654 = vmatprep.subr.mxu0 0.0
    %655 = vmatpush1.msra.mxu0 0.0
    %656 = vmatprep.subr.mxu0 0.0
    %657 = vmatpush1.msra.mxu0 0.0
    %658 = vmatprep.subr.mxu0 0.0
    %659 = vmatpush1.msra.mxu0 0.0
    %660 = vmatprep.subr.mxu0 0.0
    %661 = vmatpush1.msra.mxu0 0.0
    %662 = vmatprep.subr.mxu0 0.0
    %663 = vmatpush1.msra.mxu0 0.0
    %664 = vmatprep.mubr.f32.mxu0 0.0
    %v665 = vand.u32 %v594, 4294901760
    %v666 = vsub.f32 %v594, %v665
    %v667 = vand.u32 %v666, 4294901760
    %v668 = vsub.f32 %v666, %v667
    %v669 = vand.u32 %v668, 4294901760
    %670 = vmatmul.mubr.f32.gmra.mrb[0].mxu0 %v669
    %v671 = vpop.f32.mrb[0].mxu0
    %v672 = vadd.f32 0.0, %v671
    %v673 = vpop.f32.mrb[0].mxu0
    %674 = vdwg.mxu0
    %675 = vmatprep.subr.mxu0 0.0
    %v676 = vand.u32 %v589, 4294901760
    %v677 = vsub.f32 %v589, %v676
    %v678 = vand.u32 %v677, 4294901760
    %v679 = vsub.f32 %v677, %v678
    %v680 = vand.u32 %v679, 4294901760
    %681 = vmatpush1.msra.mxu0 %v680
    %682 = vmatprep.subr.mxu0 0.0
    %v683 = vand.u32 %v590, 4294901760
    %v684 = vsub.f32 %v590, %v683
    %v685 = vand.u32 %v684, 4294901760
    %v686 = vsub.f32 %v684, %v685
    %v687 = vand.u32 %v686, 4294901760
    %688 = vmatpush1.msra.mxu0 %v687
    %689 = vmatprep.subr.mxu0 0.0
    %v690 = vand.u32 %v591, 4294901760
    %v691 = vsub.f32 %v591, %v690
    %v692 = vand.u32 %v691, 4294901760
    %v693 = vsub.f32 %v691, %v692
    %v694 = vand.u32 %v693, 4294901760
    %695 = vmatpush1.msra.mxu0 %v694
    %696 = vmatprep.subr.mxu0 0.0
    %v697 = vand.u32 %v592, 4294901760
    %v698 = vsub.f32 %v592, %v697
    %v699 = vand.u32 %v698, 4294901760
    %v700 = vsub.f32 %v698, %v699
    %v701 = vand.u32 %v700, 4294901760
    %702 = vmatpush1.msra.mxu0 %v701
    %703 = vmatprep.subr.mxu0 0.0
    %704 = vmatpush1.msra.mxu0 0.0
    %705 = vmatprep.subr.mxu0 0.0
    %706 = vmatpush1.msra.mxu0 0.0
    %707 = vmatprep.subr.mxu0 0.0
    %708 = vmatpush1.msra.mxu0 0.0
    %709 = vmatprep.subr.mxu0 0.0
    %710 = vmatpush1.msra.mxu0 0.0
    %711 = vmatprep.subr.mxu0 0.0
    %712 = vmatpush1.msra.mxu0 0.0
    %713 = vmatprep.subr.mxu0 0.0
    %714 = vmatpush1.msra.mxu0 0.0
    %715 = vmatprep.subr.mxu0 0.0
    %716 = vmatpush1.msra.mxu0 0.0
    %717 = vmatprep.subr.mxu0 0.0
    %718 = vmatpush1.msra.mxu0 0.0
    %719 = vmatprep.subr.mxu0 0.0
    %720 = vmatpush1.msra.mxu0 0.0
    %721 = vmatprep.subr.mxu0 0.0
    %722 = vmatpush1.msra.mxu0 0.0
    %723 = vmatprep.subr.mxu0 0.0
    %724 = vmatpush1.msra.mxu0 0.0
    %725 = vmatprep.subr.mxu0 0.0
    %726 = vmatpush1.msra.mxu0 0.0
    %727 = vmatprep.subr.mxu0 0.0
    %728 = vmatpush1.msra.mxu0 0.0
    %729 = vmatprep.subr.mxu0 0.0
    %730 = vmatpush1.msra.mxu0 0.0
    %731 = vmatprep.subr.mxu0 0.0
    %732 = vmatpush1.msra.mxu0 0.0
    %733 = vmatprep.subr.mxu0 0.0
    %734 = vmatpush1.msra.mxu0 0.0
    %735 = vmatprep.subr.mxu0 0.0
    %736 = vmatpush1.msra.mxu0 0.0
    %737 = vmatprep.subr.mxu0 0.0
    %738 = vmatpush1.msra.mxu0 0.0
    %739 = vmatprep.subr.mxu0 0.0
    %740 = vmatpush1.msra.mxu0 0.0
    %741 = vmatprep.subr.mxu0 0.0
    %742 = vmatpush1.msra.mxu0 0.0
    %743 = vmatprep.subr.mxu0 0.0
    %744 = vmatpush1.msra.mxu0 0.0
    %745 = vmatprep.subr.mxu0 0.0
    %746 = vmatpush1.msra.mxu0 0.0
    %747 = vmatprep.subr.mxu0 0.0
    %748 = vmatpush1.msra.mxu0 0.0
    %749 = vmatprep.subr.mxu0 0.0
    %750 = vmatpush1.msra.mxu0 0.0
    %751 = vmatprep.subr.mxu0 0.0
    %752 = vmatpush1.msra.mxu0 0.0
    %753 = vmatprep.subr.mxu0 0.0
    %754 = vmatpush1.msra.mxu0 0.0
    %755 = vmatprep.subr.mxu0 0.0
    %756 = vmatpush1.msra.mxu0 0.0
    %757 = vmatprep.subr.mxu0 0.0
    %758 = vmatpush1.msra.mxu0 0.0
    %759 = vmatprep.mubr.f32.mxu0 0.0
    %v760 = vand.u32 %v594, 4294901760
    %761 = vmatmul.mubr.f32.gmra.mrb[0].mxu0 %v760
    %v762 = vpop.f32.mrb[0].mxu0
    %v763 = vadd.f32 %v672, %v762
    %v764 = vpop.f32.mrb[0].mxu0
    %765 = vdwg.mxu0
    %766 = vmatprep.subr.mxu0 0.0
    %v767 = vand.u32 %v589, 4294901760
    %v768 = vsub.f32 %v589, %v767
    %769 = vmatpush1.msra.mxu0 %v768
    %770 = vmatprep.subr.mxu0 0.0
    %v771 = vand.u32 %v590, 4294901760
    %v772 = vsub.f32 %v590, %v771
    %773 = vmatpush1.msra.mxu0 %v772
    %774 = vmatprep.subr.mxu0 0.0
    %v775 = vand.u32 %v591, 4294901760
    %v776 = vsub.f32 %v591, %v775
    %777 = vmatpush1.msra.mxu0 %v776
    %778 = vmatprep.subr.mxu0 0.0
    %v779 = vand.u32 %v592, 4294901760
    %v780 = vsub.f32 %v592, %v779
    %781 = vmatpush1.msra.mxu0 %v780
    %782 = vmatprep.subr.mxu0 0.0
    %783 = vmatpush1.msra.mxu0 0.0
    %784 = vmatprep.subr.mxu0 0.0
    %785 = vmatpush1.msra.mxu0 0.0
    %786 = vmatprep.subr.mxu0 0.0
    %787 = vmatpush1.msra.mxu0 0.0
    %788 = vmatprep.subr.mxu0 0.0
    %789 = vmatpush1.msra.mxu0 0.0
    %790 = vmatprep.subr.mxu0 0.0
    %791 = vmatpush1.msra.mxu0 0.0
    %792 = vmatprep.subr.mxu0 0.0
    %793 = vmatpush1.msra.mxu0 0.0
    %794 = vmatprep.subr.mxu0 0.0
    %795 = vmatpush1.msra.mxu0 0.0
    %796 = vmatprep.subr.mxu0 0.0
    %797 = vmatpush1.msra.mxu0 0.0
    %798 = vmatprep.subr.mxu0 0.0
    %799 = vmatpush1.msra.mxu0 0.0
    %800 = vmatprep.subr.mxu0 0.0
    %801 = vmatpush1.msra.mxu0 0.0
    %802 = vmatprep.subr.mxu0 0.0
    %803 = vmatpush1.msra.mxu0 0.0
    %804 = vmatprep.subr.mxu0 0.0
    %805 = vmatpush1.msra.mxu0 0.0
    %806 = vmatprep.subr.mxu0 0.0
    %807 = vmatpush1.msra.mxu0 0.0
    %808 = vmatprep.subr.mxu0 0.0
    %809 = vmatpush1.msra.mxu0 0.0
    %810 = vmatprep.subr.mxu0 0.0
    %811 = vmatpush1.msra.mxu0 0.0
    %812 = vmatprep.subr.mxu0 0.0
    %813 = vmatpush1.msra.mxu0 0.0
    %814 = vmatprep.subr.mxu0 0.0
    %815 = vmatpush1.msra.mxu0 0.0
    %816 = vmatprep.subr.mxu0 0.0
    %817 = vmatpush1.msra.mxu0 0.0
    %818 = vmatprep.subr.mxu0 0.0
    %819 = vmatpush1.msra.mxu0 0.0
    %820 = vmatprep.subr.mxu0 0.0
    %821 = vmatpush1.msra.mxu0 0.0
    %822 = vmatprep.subr.mxu0 0.0
    %823 = vmatpush1.msra.mxu0 0.0
    %824 = vmatprep.subr.mxu0 0.0
    %825 = vmatpush1.msra.mxu0 0.0
    %826 = vmatprep.subr.mxu0 0.0
    %827 = vmatpush1.msra.mxu0 0.0
    %828 = vmatprep.subr.mxu0 0.0
    %829 = vmatpush1.msra.mxu0 0.0
    %830 = vmatprep.subr.mxu0 0.0
    %831 = vmatpush1.msra.mxu0 0.0
    %832 = vmatprep.subr.mxu0 0.0
    %833 = vmatpush1.msra.mxu0 0.0
    %834 = vmatprep.subr.mxu0 0.0
    %835 = vmatpush1.msra.mxu0 0.0
    %836 = vmatprep.subr.mxu0 0.0
    %837 = vmatpush1.msra.mxu0 0.0
    %838 = vmatprep.mubr.f32.mxu0 0.0
    %v839 = vand.u32 %v594, 4294901760
    %v840 = vsub.f32 %v594, %v839
    %841 = vmatmul.mubr.f32.gmra.mrb[0].mxu0 %v840
    %v842 = vpop.f32.mrb[0].mxu0
    %v843 = vadd.f32 %v763, %v842
    %v844 = vpop.f32.mrb[0].mxu0
    %845 = vdwg.mxu0
    %846 = vmatprep.subr.mxu0 0.0
    %v847 = vand.u32 %v589, 4294901760
    %848 = vmatpush1.msra.mxu0 %v847
    %849 = vmatprep.subr.mxu0 0.0
    %v850 = vand.u32 %v590, 4294901760
    %851 = vmatpush1.msra.mxu0 %v850
    %852 = vmatprep.subr.mxu0 0.0
    %v853 = vand.u32 %v591, 4294901760
    %854 = vmatpush1.msra.mxu0 %v853
    %855 = vmatprep.subr.mxu0 0.0
    %v856 = vand.u32 %v592, 4294901760
    %857 = vmatpush1.msra.mxu0 %v856
    %858 = vmatprep.subr.mxu0 0.0
    %859 = vmatpush1.msra.mxu0 0.0
    %860 = vmatprep.subr.mxu0 0.0
    %861 = vmatpush1.msra.mxu0 0.0
    %862 = vmatprep.subr.mxu0 0.0
    %863 = vmatpush1.msra.mxu0 0.0
    %864 = vmatprep.subr.mxu0 0.0
    %865 = vmatpush1.msra.mxu0 0.0
    %866 = vmatprep.subr.mxu0 0.0
    %867 = vmatpush1.msra.mxu0 0.0
    %868 = vmatprep.subr.mxu0 0.0
    %869 = vmatpush1.msra.mxu0 0.0
    %870 = vmatprep.subr.mxu0 0.0
    %871 = vmatpush1.msra.mxu0 0.0
    %872 = vmatprep.subr.mxu0 0.0
    %873 = vmatpush1.msra.mxu0 0.0
    %874 = vmatprep.subr.mxu0 0.0
    %875 = vmatpush1.msra.mxu0 0.0
    %876 = vmatprep.subr.mxu0 0.0
    %877 = vmatpush1.msra.mxu0 0.0
    %878 = vmatprep.subr.mxu0 0.0
    %879 = vmatpush1.msra.mxu0 0.0
    %880 = vmatprep.subr.mxu0 0.0
    %881 = vmatpush1.msra.mxu0 0.0
    %882 = vmatprep.subr.mxu0 0.0
    %883 = vmatpush1.msra.mxu0 0.0
    %884 = vmatprep.subr.mxu0 0.0
    %885 = vmatpush1.msra.mxu0 0.0
    %886 = vmatprep.subr.mxu0 0.0
    %887 = vmatpush1.msra.mxu0 0.0
    %888 = vmatprep.subr.mxu0 0.0
    %889 = vmatpush1.msra.mxu0 0.0
    %890 = vmatprep.subr.mxu0 0.0
    %891 = vmatpush1.msra.mxu0 0.0
    %892 = vmatprep.subr.mxu0 0.0
    %893 = vmatpush1.msra.mxu0 0.0
    %894 = vmatprep.subr.mxu0 0.0
    %895 = vmatpush1.msra.mxu0 0.0
    %896 = vmatprep.subr.mxu0 0.0
    %897 = vmatpush1.msra.mxu0 0.0
    %898 = vmatprep.subr.mxu0 0.0
    %899 = vmatpush1.msra.mxu0 0.0
    %900 = vmatprep.subr.mxu0 0.0
    %901 = vmatpush1.msra.mxu0 0.0
    %902 = vmatprep.subr.mxu0 0.0
    %903 = vmatpush1.msra.mxu0 0.0
    %904 = vmatprep.subr.mxu0 0.0
    %905 = vmatpush1.msra.mxu0 0.0
    %906 = vmatprep.subr.mxu0 0.0
    %907 = vmatpush1.msra.mxu0 0.0
    %908 = vmatprep.subr.mxu0 0.0
    %909 = vmatpush1.msra.mxu0 0.0
    %910 = vmatprep.subr.mxu0 0.0
    %911 = vmatpush1.msra.mxu0 0.0
    %912 = vmatprep.subr.mxu0 0.0
    %913 = vmatpush1.msra.mxu0 0.0
    %914 = vmatprep.mubr.f32.mxu0 0.0
    %v915 = vand.u32 %v594, 4294901760
    %v916 = vsub.f32 %v594, %v915
    %v917 = vand.u32 %v916, 4294901760
    %918 = vmatmul.mubr.f32.gmra.mrb[0].mxu0 %v917
    %v919 = vpop.f32.mrb[0].mxu0
    %v920 = vadd.f32 %v843, %v919
    %v921 = vpop.f32.mrb[0].mxu0
    %922 = vdwg.mxu0
    %923 = vmatprep.subr.mxu0 0.0
    %v924 = vand.u32 %v589, 4294901760
    %v925 = vsub.f32 %v589, %v924
    %v926 = vand.u32 %v925, 4294901760
    %927 = vmatpush1.msra.mxu0 %v926
    %928 = vmatprep.subr.mxu0 0.0
    %v929 = vand.u32 %v590, 4294901760
    %v930 = vsub.f32 %v590, %v929
    %v931 = vand.u32 %v930, 4294901760
    %932 = vmatpush1.msra.mxu0 %v931
    %933 = vmatprep.subr.mxu0 0.0
    %v934 = vand.u32 %v591, 4294901760
    %v935 = vsub.f32 %v591, %v934
    %v936 = vand.u32 %v935, 4294901760
    %937 = vmatpush1.msra.mxu0 %v936
    %938 = vmatprep.subr.mxu0 0.0
    %v939 = vand.u32 %v592, 4294901760
    %v940 = vsub.f32 %v592, %v939
    %v941 = vand.u32 %v940, 4294901760
    %942 = vmatpush1.msra.mxu0 %v941
    %943 = vmatprep.subr.mxu0 0.0
    %944 = vmatpush1.msra.mxu0 0.0
    %945 = vmatprep.subr.mxu0 0.0
    %946 = vmatpush1.msra.mxu0 0.0
    %947 = vmatprep.subr.mxu0 0.0
    %948 = vmatpush1.msra.mxu0 0.0
    %949 = vmatprep.subr.mxu0 0.0
    %950 = vmatpush1.msra.mxu0 0.0
    %951 = vmatprep.subr.mxu0 0.0
    %952 = vmatpush1.msra.mxu0 0.0
    %953 = vmatprep.subr.mxu0 0.0
    %954 = vmatpush1.msra.mxu0 0.0
    %955 = vmatprep.subr.mxu0 0.0
    %956 = vmatpush1.msra.mxu0 0.0
    %957 = vmatprep.subr.mxu0 0.0
    %958 = vmatpush1.msra.mxu0 0.0
    %959 = vmatprep.subr.mxu0 0.0
    %960 = vmatpush1.msra.mxu0 0.0
    %961 = vmatprep.subr.mxu0 0.0
    %962 = vmatpush1.msra.mxu0 0.0
    %963 = vmatprep.subr.mxu0 0.0
    %964 = vmatpush1.msra.mxu0 0.0
    %965 = vmatprep.subr.mxu0 0.0
    %966 = vmatpush1.msra.mxu0 0.0
    %967 = vmatprep.subr.mxu0 0.0
    %968 = vmatpush1.msra.mxu0 0.0
    %969 = vmatprep.subr.mxu0 0.0
    %970 = vmatpush1.msra.mxu0 0.0
    %971 = vmatprep.subr.mxu0 0.0
    %972 = vmatpush1.msra.mxu0 0.0
    %973 = vmatprep.subr.mxu0 0.0
    %974 = vmatpush1.msra.mxu0 0.0
    %975 = vmatprep.subr.mxu0 0.0
    %976 = vmatpush1.msra.mxu0 0.0
    %977 = vmatprep.subr.mxu0 0.0
    %978 = vmatpush1.msra.mxu0 0.0
    %979 = vmatprep.subr.mxu0 0.0
    %980 = vmatpush1.msra.mxu0 0.0
    %981 = vmatprep.subr.mxu0 0.0
    %982 = vmatpush1.msra.mxu0 0.0
    %983 = vmatprep.subr.mxu0 0.0
    %984 = vmatpush1.msra.mxu0 0.0
    %985 = vmatprep.subr.mxu0 0.0
    %986 = vmatpush1.msra.mxu0 0.0
    %987 = vmatprep.subr.mxu0 0.0
    %988 = vmatpush1.msra.mxu0 0.0
    %989 = vmatprep.subr.mxu0 0.0
    %990 = vmatpush1.msra.mxu0 0.0
    %991 = vmatprep.subr.mxu0 0.0
    %992 = vmatpush1.msra.mxu0 0.0
    %993 = vmatprep.subr.mxu0 0.0
    %994 = vmatpush1.msra.mxu0 0.0
    %995 = vmatprep.subr.mxu0 0.0
    %996 = vmatpush1.msra.mxu0 0.0
    %997 = vmatprep.subr.mxu0 0.0
    %998 = vmatpush1.msra.mxu0 0.0
    %999 = vmatprep.mubr.f32.mxu0 0.0
    %v1000 = vand.u32 %v594, 4294901760
    %1001 = vmatmul.mubr.f32.gmra.mrb[0].mxu0 %v1000
    %v1002 = vpop.f32.mrb[0].mxu0
    %v1003 = vadd.f32 %v920, %v1002
    %v1004 = vpop.f32.mrb[0].mxu0
    %1005 = vdwg.mxu0
    %1006 = vmatprep.subr.mxu0 0.0
    %v1007 = vand.u32 %v589, 4294901760
    %1008 = vmatpush1.msra.mxu0 %v1007
    %1009 = vmatprep.subr.mxu0 0.0
    %v1010 = vand.u32 %v590, 4294901760
    %1011 = vmatpush1.msra.mxu0 %v1010
    %1012 = vmatprep.subr.mxu0 0.0
    %v1013 = vand.u32 %v591, 4294901760
    %1014 = vmatpush1.msra.mxu0 %v1013
    %1015 = vmatprep.subr.mxu0 0.0
    %v1016 = vand.u32 %v592, 4294901760
    %1017 = vmatpush1.msra.mxu0 %v1016
    %1018 = vmatprep.subr.mxu0 0.0
    %1019 = vmatpush1.msra.mxu0 0.0
    %1020 = vmatprep.subr.mxu0 0.0
    %1021 = vmatpush1.msra.mxu0 0.0
    %1022 = vmatprep.subr.mxu0 0.0
    %1023 = vmatpush1.msra.mxu0 0.0
    %1024 = vmatprep.subr.mxu0 0.0
    %1025 = vmatpush1.msra.mxu0 0.0
    %1026 = vmatprep.subr.mxu0 0.0
    %1027 = vmatpush1.msra.mxu0 0.0
    %1028 = vmatprep.subr.mxu0 0.0
    %1029 = vmatpush1.msra.mxu0 0.0
    %1030 = vmatprep.subr.mxu0 0.0
    %1031 = vmatpush1.msra.mxu0 0.0
    %1032 = vmatprep.subr.mxu0 0.0
    %1033 = vmatpush1.msra.mxu0 0.0
    %1034 = vmatprep.subr.mxu0 0.0
    %1035 = vmatpush1.msra.mxu0 0.0
    %1036 = vmatprep.subr.mxu0 0.0
    %1037 = vmatpush1.msra.mxu0 0.0
    %1038 = vmatprep.subr.mxu0 0.0
    %1039 = vmatpush1.msra.mxu0 0.0
    %1040 = vmatprep.subr.mxu0 0.0
    %1041 = vmatpush1.msra.mxu0 0.0
    %1042 = vmatprep.subr.mxu0 0.0
    %1043 = vmatpush1.msra.mxu0 0.0
    %1044 = vmatprep.subr.mxu0 0.0
    %1045 = vmatpush1.msra.mxu0 0.0
    %1046 = vmatprep.subr.mxu0 0.0
    %1047 = vmatpush1.msra.mxu0 0.0
    %1048 = vmatprep.subr.mxu0 0.0
    %1049 = vmatpush1.msra.mxu0 0.0
    %1050 = vmatprep.subr.mxu0 0.0
    %1051 = vmatpush1.msra.mxu0 0.0
    %1052 = vmatprep.subr.mxu0 0.0
    %1053 = vmatpush1.msra.mxu0 0.0
    %1054 = vmatprep.subr.mxu0 0.0
    %1055 = vmatpush1.msra.mxu0 0.0
    %1056 = vmatprep.subr.mxu0 0.0
    %1057 = vmatpush1.msra.mxu0 0.0
    %1058 = vmatprep.subr.mxu0 0.0
    %1059 = vmatpush1.msra.mxu0 0.0
    %1060 = vmatprep.subr.mxu0 0.0
    %1061 = vmatpush1.msra.mxu0 0.0
    %1062 = vmatprep.subr.mxu0 0.0
    %1063 = vmatpush1.msra.mxu0 0.0
    %1064 = vmatprep.subr.mxu0 0.0
    %1065 = vmatpush1.msra.mxu0 0.0
    %1066 = vmatprep.subr.mxu0 0.0
    %1067 = vmatpush1.msra.mxu0 0.0
    %1068 = vmatprep.subr.mxu0 0.0
    %1069 = vmatpush1.msra.mxu0 0.0
    %1070 = vmatprep.subr.mxu0 0.0
    %1071 = vmatpush1.msra.mxu0 0.0
    %1072 = vmatprep.subr.mxu0 0.0
    %1073 = vmatpush1.msra.mxu0 0.0
    %1074 = vmatprep.mubr.f32.mxu0 0.0
    %v1075 = vand.u32 %v594, 4294901760
    %1076 = vmatmul.mubr.f32.gmra.mrb[0].mxu0 %v1075
    %v1077 = vpop.f32.mrb[0].mxu0
    %v1078 = vadd.f32 %v1003, %v1077
    %v1079 = vpop.f32.mrb[0].mxu0
    %1080 = vdwg.mxu0
    %v1081 = vld [vmem:[#allocation16] sm:$0xff]
    %v1082 = vld [vmem:[#allocation16 + $0x8] sm:$0xff]
    %v1083 = vld [vmem:[#allocation16 + $0x10] sm:$0xff]
    %v1084 = vld [vmem:[#allocation16 + $0x18] sm:$0xff]
    %1085 = vmatprep.subr.mxu0 0.0
    %v1086 = vand.u32 %v1081, 4294901760
    %1087 = vmatpush1.msra.mxu0 %v1086
    %1088 = vmatprep.subr.mxu0 0.0
    %v1089 = vand.u32 %v1082, 4294901760
    %1090 = vmatpush1.msra.mxu0 %v1089
    %1091 = vmatprep.subr.mxu0 0.0
    %v1092 = vand.u32 %v1083, 4294901760
    %1093 = vmatpush1.msra.mxu0 %v1092
    %1094 = vmatprep.subr.mxu0 0.0
    %v1095 = vand.u32 %v1084, 4294901760
    %1096 = vmatpush1.msra.mxu0 %v1095
    %1097 = vmatprep.subr.mxu0 0.0
    %1098 = vmatpush1.msra.mxu0 0.0
    %1099 = vmatprep.subr.mxu0 0.0
    %1100 = vmatpush1.msra.mxu0 0.0
    %1101 = vmatprep.subr.mxu0 0.0
    %1102 = vmatpush1.msra.mxu0 0.0
    %1103 = vmatprep.subr.mxu0 0.0
    %1104 = vmatpush1.msra.mxu0 0.0
    %1105 = vmatprep.subr.mxu0 0.0
    %1106 = vmatpush1.msra.mxu0 0.0
    %1107 = vmatprep.subr.mxu0 0.0
    %1108 = vmatpush1.msra.mxu0 0.0
    %1109 = vmatprep.subr.mxu0 0.0
    %1110 = vmatpush1.msra.mxu0 0.0
    %1111 = vmatprep.subr.mxu0 0.0
    %1112 = vmatpush1.msra.mxu0 0.0
    %1113 = vmatprep.subr.mxu0 0.0
    %1114 = vmatpush1.msra.mxu0 0.0
    %1115 = vmatprep.subr.mxu0 0.0
    %1116 = vmatpush1.msra.mxu0 0.0
    %1117 = vmatprep.subr.mxu0 0.0
    %1118 = vmatpush1.msra.mxu0 0.0
    %1119 = vmatprep.subr.mxu0 0.0
    %1120 = vmatpush1.msra.mxu0 0.0
    %1121 = vmatprep.subr.mxu0 0.0
    %1122 = vmatpush1.msra.mxu0 0.0
    %1123 = vmatprep.subr.mxu0 0.0
    %1124 = vmatpush1.msra.mxu0 0.0
    %1125 = vmatprep.subr.mxu0 0.0
    %1126 = vmatpush1.msra.mxu0 0.0
    %1127 = vmatprep.subr.mxu0 0.0
    %1128 = vmatpush1.msra.mxu0 0.0
    %1129 = vmatprep.subr.mxu0 0.0
    %1130 = vmatpush1.msra.mxu0 0.0
    %1131 = vmatprep.subr.mxu0 0.0
    %1132 = vmatpush1.msra.mxu0 0.0
    %1133 = vmatprep.subr.mxu0 0.0
    %1134 = vmatpush1.msra.mxu0 0.0
    %1135 = vmatprep.subr.mxu0 0.0
    %1136 = vmatpush1.msra.mxu0 0.0
    %1137 = vmatprep.subr.mxu0 0.0
    %1138 = vmatpush1.msra.mxu0 0.0
    %1139 = vmatprep.subr.mxu0 0.0
    %1140 = vmatpush1.msra.mxu0 0.0
    %1141 = vmatprep.subr.mxu0 0.0
    %1142 = vmatpush1.msra.mxu0 0.0
    %1143 = vmatprep.subr.mxu0 0.0
    %1144 = vmatpush1.msra.mxu0 0.0
    %1145 = vmatprep.subr.mxu0 0.0
    %1146 = vmatpush1.msra.mxu0 0.0
    %1147 = vmatprep.subr.mxu0 0.0
    %1148 = vmatpush1.msra.mxu0 0.0
    %1149 = vmatprep.subr.mxu0 0.0
    %1150 = vmatpush1.msra.mxu0 0.0
    %1151 = vmatprep.subr.mxu0 0.0
    %1152 = vmatpush1.msra.mxu0 0.0
    %1153 = vmatprep.mubr.f32.mxu0 0.0
    %v1154 = vand.u32 %v594, 4294901760
    %v1155 = vsub.f32 %v594, %v1154
    %v1156 = vand.u32 %v1155, 4294901760
    %v1157 = vsub.f32 %v1155, %v1156
    %v1158 = vand.u32 %v1157, 4294901760
    %1159 = vmatmul.mubr.f32.gmra.mrb[0].mxu0 %v1158
    %v1160 = vpop.f32.mrb[0].mxu0
    %v1161 = vadd.f32 0.0, %v1160
    %v1162 = vpop.f32.mrb[0].mxu0
    %1163 = vdwg.mxu0
    %1164 = vmatprep.subr.mxu0 0.0
    %v1165 = vand.u32 %v1081, 4294901760
    %v1166 = vsub.f32 %v1081, %v1165
    %v1167 = vand.u32 %v1166, 4294901760
    %v1168 = vsub.f32 %v1166, %v1167
    %v1169 = vand.u32 %v1168, 4294901760
    %1170 = vmatpush1.msra.mxu0 %v1169
    %1171 = vmatprep.subr.mxu0 0.0
    %v1172 = vand.u32 %v1082, 4294901760
    %v1173 = vsub.f32 %v1082, %v1172
    %v1174 = vand.u32 %v1173, 4294901760
    %v1175 = vsub.f32 %v1173, %v1174
    %v1176 = vand.u32 %v1175, 4294901760
    %1177 = vmatpush1.msra.mxu0 %v1176
    %1178 = vmatprep.subr.mxu0 0.0
    %v1179 = vand.u32 %v1083, 4294901760
    %v1180 = vsub.f32 %v1083, %v1179
    %v1181 = vand.u32 %v1180, 4294901760
    %v1182 = vsub.f32 %v1180, %v1181
    %v1183 = vand.u32 %v1182, 4294901760
    %1184 = vmatpush1.msra.mxu0 %v1183
    %1185 = vmatprep.subr.mxu0 0.0
    %v1186 = vand.u32 %v1084, 4294901760
    %v1187 = vsub.f32 %v1084, %v1186
    %v1188 = vand.u32 %v1187, 4294901760
    %v1189 = vsub.f32 %v1187, %v1188
    %v1190 = vand.u32 %v1189, 4294901760
    %1191 = vmatpush1.msra.mxu0 %v1190
    %1192 = vmatprep.subr.mxu0 0.0
    %1193 = vmatpush1.msra.mxu0 0.0
    %1194 = vmatprep.subr.mxu0 0.0
    %1195 = vmatpush1.msra.mxu0 0.0
    %1196 = vmatprep.subr.mxu0 0.0
    %1197 = vmatpush1.msra.mxu0 0.0
    %1198 = vmatprep.subr.mxu0 0.0
    %1199 = vmatpush1.msra.mxu0 0.0
    %1200 = vmatprep.subr.mxu0 0.0
    %1201 = vmatpush1.msra.mxu0 0.0
    %1202 = vmatprep.subr.mxu0 0.0
    %1203 = vmatpush1.msra.mxu0 0.0
    %1204 = vmatprep.subr.mxu0 0.0
    %1205 = vmatpush1.msra.mxu0 0.0
    %1206 = vmatprep.subr.mxu0 0.0
    %1207 = vmatpush1.msra.mxu0 0.0
    %1208 = vmatprep.subr.mxu0 0.0
    %1209 = vmatpush1.msra.mxu0 0.0
    %1210 = vmatprep.subr.mxu0 0.0
    %1211 = vmatpush1.msra.mxu0 0.0
    %1212 = vmatprep.subr.mxu0 0.0
    %1213 = vmatpush1.msra.mxu0 0.0
    %1214 = vmatprep.subr.mxu0 0.0
    %1215 = vmatpush1.msra.mxu0 0.0
    %1216 = vmatprep.subr.mxu0 0.0
    %1217 = vmatpush1.msra.mxu0 0.0
    %1218 = vmatprep.subr.mxu0 0.0
    %1219 = vmatpush1.msra.mxu0 0.0
    %1220 = vmatprep.subr.mxu0 0.0
    %1221 = vmatpush1.msra.mxu0 0.0
    %1222 = vmatprep.subr.mxu0 0.0
    %1223 = vmatpush1.msra.mxu0 0.0
    %1224 = vmatprep.subr.mxu0 0.0
    %1225 = vmatpush1.msra.mxu0 0.0
    %1226 = vmatprep.subr.mxu0 0.0
    %1227 = vmatpush1.msra.mxu0 0.0
    %1228 = vmatprep.subr.mxu0 0.0
    %1229 = vmatpush1.msra.mxu0 0.0
    %1230 = vmatprep.subr.mxu0 0.0
    %1231 = vmatpush1.msra.mxu0 0.0
    %1232 = vmatprep.subr.mxu0 0.0
    %1233 = vmatpush1.msra.mxu0 0.0
    %1234 = vmatprep.subr.mxu0 0.0
    %1235 = vmatpush1.msra.mxu0 0.0
    %1236 = vmatprep.subr.mxu0 0.0
    %1237 = vmatpush1.msra.mxu0 0.0
    %1238 = vmatprep.subr.mxu0 0.0
    %1239 = vmatpush1.msra.mxu0 0.0
    %1240 = vmatprep.subr.mxu0 0.0
    %1241 = vmatpush1.msra.mxu0 0.0
    %1242 = vmatprep.subr.mxu0 0.0
    %1243 = vmatpush1.msra.mxu0 0.0
    %1244 = vmatprep.subr.mxu0 0.0
    %1245 = vmatpush1.msra.mxu0 0.0
    %1246 = vmatprep.subr.mxu0 0.0
    %1247 = vmatpush1.msra.mxu0 0.0
    %1248 = vmatprep.mubr.f32.mxu0 0.0
    %v1249 = vand.u32 %v594, 4294901760
    %1250 = vmatmul.mubr.f32.gmra.mrb[0].mxu0 %v1249
    %v1251 = vpop.f32.mrb[0].mxu0
    %v1252 = vadd.f32 %v1161, %v1251
    %v1253 = vpop.f32.mrb[0].mxu0
    %1254 = vdwg.mxu0
    %1255 = vmatprep.subr.mxu0 0.0
    %v1256 = vand.u32 %v1081, 4294901760
    %v1257 = vsub.f32 %v1081, %v1256
    %1258 = vmatpush1.msra.mxu0 %v1257
    %1259 = vmatprep.subr.mxu0 0.0
    %v1260 = vand.u32 %v1082, 4294901760
    %v1261 = vsub.f32 %v1082, %v1260
    %1262 = vmatpush1.msra.mxu0 %v1261
    %1263 = vmatprep.subr.mxu0 0.0
    %v1264 = vand.u32 %v1083, 4294901760
    %v1265 = vsub.f32 %v1083, %v1264
    %1266 = vmatpush1.msra.mxu0 %v1265
    %1267 = vmatprep.subr.mxu0 0.0
    %v1268 = vand.u32 %v1084, 4294901760
    %v1269 = vsub.f32 %v1084, %v1268
    %1270 = vmatpush1.msra.mxu0 %v1269
    %1271 = vmatprep.subr.mxu0 0.0
    %1272 = vmatpush1.msra.mxu0 0.0
    %1273 = vmatprep.subr.mxu0 0.0
    %1274 = vmatpush1.msra.mxu0 0.0
    %1275 = vmatprep.subr.mxu0 0.0
    %1276 = vmatpush1.msra.mxu0 0.0
    %1277 = vmatprep.subr.mxu0 0.0
    %1278 = vmatpush1.msra.mxu0 0.0
    %1279 = vmatprep.subr.mxu0 0.0
    %1280 = vmatpush1.msra.mxu0 0.0
    %1281 = vmatprep.subr.mxu0 0.0
    %1282 = vmatpush1.msra.mxu0 0.0
    %1283 = vmatprep.subr.mxu0 0.0
    %1284 = vmatpush1.msra.mxu0 0.0
    %1285 = vmatprep.subr.mxu0 0.0
    %1286 = vmatpush1.msra.mxu0 0.0
    %1287 = vmatprep.subr.mxu0 0.0
    %1288 = vmatpush1.msra.mxu0 0.0
    %1289 = vmatprep.subr.mxu0 0.0
    %1290 = vmatpush1.msra.mxu0 0.0
    %1291 = vmatprep.subr.mxu0 0.0
    %1292 = vmatpush1.msra.mxu0 0.0
    %1293 = vmatprep.subr.mxu0 0.0
    %1294 = vmatpush1.msra.mxu0 0.0
    %1295 = vmatprep.subr.mxu0 0.0
    %1296 = vmatpush1.msra.mxu0 0.0
    %1297 = vmatprep.subr.mxu0 0.0
    %1298 = vmatpush1.msra.mxu0 0.0
    %1299 = vmatprep.subr.mxu0 0.0
    %1300 = vmatpush1.msra.mxu0 0.0
    %1301 = vmatprep.subr.mxu0 0.0
    %1302 = vmatpush1.msra.mxu0 0.0
    %1303 = vmatprep.subr.mxu0 0.0
    %1304 = vmatpush1.msra.mxu0 0.0
    %1305 = vmatprep.subr.mxu0 0.0
    %1306 = vmatpush1.msra.mxu0 0.0
    %1307 = vmatprep.subr.mxu0 0.0
    %1308 = vmatpush1.msra.mxu0 0.0
    %1309 = vmatprep.subr.mxu0 0.0
    %1310 = vmatpush1.msra.mxu0 0.0
    %1311 = vmatprep.subr.mxu0 0.0
    %1312 = vmatpush1.msra.mxu0 0.0
    %1313 = vmatprep.subr.mxu0 0.0
    %1314 = vmatpush1.msra.mxu0 0.0
    %1315 = vmatprep.subr.mxu0 0.0
    %1316 = vmatpush1.msra.mxu0 0.0
    %1317 = vmatprep.subr.mxu0 0.0
    %1318 = vmatpush1.msra.mxu0 0.0
    %1319 = vmatprep.subr.mxu0 0.0
    %1320 = vmatpush1.msra.mxu0 0.0
    %1321 = vmatprep.subr.mxu0 0.0
    %1322 = vmatpush1.msra.mxu0 0.0
    %1323 = vmatprep.subr.mxu0 0.0
    %1324 = vmatpush1.msra.mxu0 0.0
    %1325 = vmatprep.subr.mxu0 0.0
    %1326 = vmatpush1.msra.mxu0 0.0
    %1327 = vmatprep.mubr.f32.mxu0 0.0
    %v1328 = vand.u32 %v594, 4294901760
    %v1329 = vsub.f32 %v594, %v1328
    %1330 = vmatmul.mubr.f32.gmra.mrb[0].mxu0 %v1329
    %v1331 = vpop.f32.mrb[0].mxu0
    %v1332 = vadd.f32 %v1252, %v1331
    %v1333 = vpop.f32.mrb[0].mxu0
    %1334 = vdwg.mxu0
    %1335 = vmatprep.subr.mxu0 0.0
    %v1336 = vand.u32 %v1081, 4294901760
    %1337 = vmatpush1.msra.mxu0 %v1336
    %1338 = vmatprep.subr.mxu0 0.0
    %v1339 = vand.u32 %v1082, 4294901760
    %1340 = vmatpush1.msra.mxu0 %v1339
    %1341 = vmatprep.subr.mxu0 0.0
    %v1342 = vand.u32 %v1083, 4294901760
    %1343 = vmatpush1.msra.mxu0 %v1342
    %1344 = vmatprep.subr.mxu0 0.0
    %v1345 = vand.u32 %v1084, 4294901760
    %1346 = vmatpush1.msra.mxu0 %v1345
    %1347 = vmatprep.subr.mxu0 0.0
    %1348 = vmatpush1.msra.mxu0 0.0
    %1349 = vmatprep.subr.mxu0 0.0
    %1350 = vmatpush1.msra.mxu0 0.0
    %1351 = vmatprep.subr.mxu0 0.0
    %1352 = vmatpush1.msra.mxu0 0.0
    %1353 = vmatprep.subr.mxu0 0.0
    %1354 = vmatpush1.msra.mxu0 0.0
    %1355 = vmatprep.subr.mxu0 0.0
    %1356 = vmatpush1.msra.mxu0 0.0
    %1357 = vmatprep.subr.mxu0 0.0
    %1358 = vmatpush1.msra.mxu0 0.0
    %1359 = vmatprep.subr.mxu0 0.0
    %1360 = vmatpush1.msra.mxu0 0.0
    %1361 = vmatprep.subr.mxu0 0.0
    %1362 = vmatpush1.msra.mxu0 0.0
    %1363 = vmatprep.subr.mxu0 0.0
    %1364 = vmatpush1.msra.mxu0 0.0
    %1365 = vmatprep.subr.mxu0 0.0
    %1366 = vmatpush1.msra.mxu0 0.0
    %1367 = vmatprep.subr.mxu0 0.0
    %1368 = vmatpush1.msra.mxu0 0.0
    %1369 = vmatprep.subr.mxu0 0.0
    %1370 = vmatpush1.msra.mxu0 0.0
    %1371 = vmatprep.subr.mxu0 0.0
    %1372 = vmatpush1.msra.mxu0 0.0
    %1373 = vmatprep.subr.mxu0 0.0
    %1374 = vmatpush1.msra.mxu0 0.0
    %1375 = vmatprep.subr.mxu0 0.0
    %1376 = vmatpush1.msra.mxu0 0.0
    %1377 = vmatprep.subr.mxu0 0.0
    %1378 = vmatpush1.msra.mxu0 0.0
    %1379 = vmatprep.subr.mxu0 0.0
    %1380 = vmatpush1.msra.mxu0 0.0
    %1381 = vmatprep.subr.mxu0 0.0
    %1382 = vmatpush1.msra.mxu0 0.0
    %1383 = vmatprep.subr.mxu0 0.0
    %1384 = vmatpush1.msra.mxu0 0.0
    %1385 = vmatprep.subr.mxu0 0.0
    %1386 = vmatpush1.msra.mxu0 0.0
    %1387 = vmatprep.subr.mxu0 0.0
    %1388 = vmatpush1.msra.mxu0 0.0
    %1389 = vmatprep.subr.mxu0 0.0
    %1390 = vmatpush1.msra.mxu0 0.0
    %1391 = vmatprep.subr.mxu0 0.0
    %1392 = vmatpush1.msra.mxu0 0.0
    %1393 = vmatprep.subr.mxu0 0.0
    %1394 = vmatpush1.msra.mxu0 0.0
    %1395 = vmatprep.subr.mxu0 0.0
    %1396 = vmatpush1.msra.mxu0 0.0
    %1397 = vmatprep.subr.mxu0 0.0
    %1398 = vmatpush1.msra.mxu0 0.0
    %1399 = vmatprep.subr.mxu0 0.0
    %1400 = vmatpush1.msra.mxu0 0.0
    %1401 = vmatprep.subr.mxu0 0.0
    %1402 = vmatpush1.msra.mxu0 0.0
    %1403 = vmatprep.mubr.f32.mxu0 0.0
    %v1404 = vand.u32 %v594, 4294901760
    %v1405 = vsub.f32 %v594, %v1404
    %v1406 = vand.u32 %v1405, 4294901760
    %1407 = vmatmul.mubr.f32.gmra.mrb[0].mxu0 %v1406
    %v1408 = vpop.f32.mrb[0].mxu0
    %v1409 = vadd.f32 %v1332, %v1408
    %v1410 = vpop.f32.mrb[0].mxu0
    %1411 = vdwg.mxu0
    %1412 = vmatprep.subr.mxu0 0.0
    %v1413 = vand.u32 %v1081, 4294901760
    %v1414 = vsub.f32 %v1081, %v1413
    %v1415 = vand.u32 %v1414, 4294901760
    %1416 = vmatpush1.msra.mxu0 %v1415
    %1417 = vmatprep.subr.mxu0 0.0
    %v1418 = vand.u32 %v1082, 4294901760
    %v1419 = vsub.f32 %v1082, %v1418
    %v1420 = vand.u32 %v1419, 4294901760
    %1421 = vmatpush1.msra.mxu0 %v1420
    %1422 = vmatprep.subr.mxu0 0.0
    %v1423 = vand.u32 %v1083, 4294901760
    %v1424 = vsub.f32 %v1083, %v1423
    %v1425 = vand.u32 %v1424, 4294901760
    %1426 = vmatpush1.msra.mxu0 %v1425
    %1427 = vmatprep.subr.mxu0 0.0
    %v1428 = vand.u32 %v1084, 4294901760
    %v1429 = vsub.f32 %v1084, %v1428
    %v1430 = vand.u32 %v1429, 4294901760
    %1431 = vmatpush1.msra.mxu0 %v1430
    %1432 = vmatprep.subr.mxu0 0.0
    %1433 = vmatpush1.msra.mxu0 0.0
    %1434 = vmatprep.subr.mxu0 0.0
    %1435 = vmatpush1.msra.mxu0 0.0
    %1436 = vmatprep.subr.mxu0 0.0
    %1437 = vmatpush1.msra.mxu0 0.0
    %1438 = vmatprep.subr.mxu0 0.0
    %1439 = vmatpush1.msra.mxu0 0.0
    %1440 = vmatprep.subr.mxu0 0.0
    %1441 = vmatpush1.msra.mxu0 0.0
    %1442 = vmatprep.subr.mxu0 0.0
    %1443 = vmatpush1.msra.mxu0 0.0
    %1444 = vmatprep.subr.mxu0 0.0
    %1445 = vmatpush1.msra.mxu0 0.0
    %1446 = vmatprep.subr.mxu0 0.0
    %1447 = vmatpush1.msra.mxu0 0.0
    %1448 = vmatprep.subr.mxu0 0.0
    %1449 = vmatpush1.msra.mxu0 0.0
    %1450 = vmatprep.subr.mxu0 0.0
    %1451 = vmatpush1.msra.mxu0 0.0
    %1452 = vmatprep.subr.mxu0 0.0
    %1453 = vmatpush1.msra.mxu0 0.0
    %1454 = vmatprep.subr.mxu0 0.0
    %1455 = vmatpush1.msra.mxu0 0.0
    %1456 = vmatprep.subr.mxu0 0.0
    %1457 = vmatpush1.msra.mxu0 0.0
    %1458 = vmatprep.subr.mxu0 0.0
    %1459 = vmatpush1.msra.mxu0 0.0
    %1460 = vmatprep.subr.mxu0 0.0
    %1461 = vmatpush1.msra.mxu0 0.0
    %1462 = vmatprep.subr.mxu0 0.0
    %1463 = vmatpush1.msra.mxu0 0.0
    %1464 = vmatprep.subr.mxu0 0.0
    %1465 = vmatpush1.msra.mxu0 0.0
    %1466 = vmatprep.subr.mxu0 0.0
    %1467 = vmatpush1.msra.mxu0 0.0
    %1468 = vmatprep.subr.mxu0 0.0
    %1469 = vmatpush1.msra.mxu0 0.0
    %1470 = vmatprep.subr.mxu0 0.0
    %1471 = vmatpush1.msra.mxu0 0.0
    %1472 = vmatprep.subr.mxu0 0.0
    %1473 = vmatpush1.msra.mxu0 0.0
    %1474 = vmatprep.subr.mxu0 0.0
    %1475 = vmatpush1.msra.mxu0 0.0
    %1476 = vmatprep.subr.mxu0 0.0
    %1477 = vmatpush1.msra.mxu0 0.0
    %1478 = vmatprep.subr.mxu0 0.0
    %1479 = vmatpush1.msra.mxu0 0.0
    %1480 = vmatprep.subr.mxu0 0.0
    %1481 = vmatpush1.msra.mxu0 0.0
    %1482 = vmatprep.subr.mxu0 0.0
    %1483 = vmatpush1.msra.mxu0 0.0
    %1484 = vmatprep.subr.mxu0 0.0
    %1485 = vmatpush1.msra.mxu0 0.0
    %1486 = vmatprep.subr.mxu0 0.0
    %1487 = vmatpush1.msra.mxu0 0.0
    %1488 = vmatprep.mubr.f32.mxu0 0.0
    %v1489 = vand.u32 %v594, 4294901760
    %1490 = vmatmul.mubr.f32.gmra.mrb[0].mxu0 %v1489
    %v1491 = vpop.f32.mrb[0].mxu0
    %v1492 = vadd.f32 %v1409, %v1491
    %v1493 = vpop.f32.mrb[0].mxu0
    %1494 = vdwg.mxu0
    %1495 = vmatprep.subr.mxu0 0.0
    %v1496 = vand.u32 %v1081, 4294901760
    %1497 = vmatpush1.msra.mxu0 %v1496
    %1498 = vmatprep.subr.mxu0 0.0
    %v1499 = vand.u32 %v1082, 4294901760
    %1500 = vmatpush1.msra.mxu0 %v1499
    %1501 = vmatprep.subr.mxu0 0.0
    %v1502 = vand.u32 %v1083, 4294901760
    %1503 = vmatpush1.msra.mxu0 %v1502
    %1504 = vmatprep.subr.mxu0 0.0
    %v1505 = vand.u32 %v1084, 4294901760
    %1506 = vmatpush1.msra.mxu0 %v1505
    %1507 = vmatprep.subr.mxu0 0.0
    %1508 = vmatpush1.msra.mxu0 0.0
    %1509 = vmatprep.subr.mxu0 0.0
    %1510 = vmatpush1.msra.mxu0 0.0
    %1511 = vmatprep.subr.mxu0 0.0
    %1512 = vmatpush1.msra.mxu0 0.0
    %1513 = vmatprep.subr.mxu0 0.0
    %1514 = vmatpush1.msra.mxu0 0.0
    %1515 = vmatprep.subr.mxu0 0.0
    %1516 = vmatpush1.msra.mxu0 0.0
    %1517 = vmatprep.subr.mxu0 0.0
    %1518 = vmatpush1.msra.mxu0 0.0
    %1519 = vmatprep.subr.mxu0 0.0
    %1520 = vmatpush1.msra.mxu0 0.0
    %1521 = vmatprep.subr.mxu0 0.0
    %1522 = vmatpush1.msra.mxu0 0.0
    %1523 = vmatprep.subr.mxu0 0.0
    %1524 = vmatpush1.msra.mxu0 0.0
    %1525 = vmatprep.subr.mxu0 0.0
    %1526 = vmatpush1.msra.mxu0 0.0
    %1527 = vmatprep.subr.mxu0 0.0
    %1528 = vmatpush1.msra.mxu0 0.0
    %1529 = vmatprep.subr.mxu0 0.0
    %1530 = vmatpush1.msra.mxu0 0.0
    %1531 = vmatprep.subr.mxu0 0.0
    %1532 = vmatpush1.msra.mxu0 0.0
    %1533 = vmatprep.subr.mxu0 0.0
    %1534 = vmatpush1.msra.mxu0 0.0
    %1535 = vmatprep.subr.mxu0 0.0
    %1536 = vmatpush1.msra.mxu0 0.0
    %1537 = vmatprep.subr.mxu0 0.0
    %1538 = vmatpush1.msra.mxu0 0.0
    %1539 = vmatprep.subr.mxu0 0.0
    %1540 = vmatpush1.msra.mxu0 0.0
    %1541 = vmatprep.subr.mxu0 0.0
    %1542 = vmatpush1.msra.mxu0 0.0
    %1543 = vmatprep.subr.mxu0 0.0
    %1544 = vmatpush1.msra.mxu0 0.0
    %1545 = vmatprep.subr.mxu0 0.0
    %1546 = vmatpush1.msra.mxu0 0.0
    %1547 = vmatprep.subr.mxu0 0.0
    %1548 = vmatpush1.msra.mxu0 0.0
    %1549 = vmatprep.subr.mxu0 0.0
    %1550 = vmatpush1.msra.mxu0 0.0
    %1551 = vmatprep.subr.mxu0 0.0
    %1552 = vmatpush1.msra.mxu0 0.0
    %1553 = vmatprep.subr.mxu0 0.0
    %1554 = vmatpush1.msra.mxu0 0.0
    %1555 = vmatprep.subr.mxu0 0.0
    %1556 = vmatpush1.msra.mxu0 0.0
    %1557 = vmatprep.subr.mxu0 0.0
    %1558 = vmatpush1.msra.mxu0 0.0
    %1559 = vmatprep.subr.mxu0 0.0
    %1560 = vmatpush1.msra.mxu0 0.0
    %1561 = vmatprep.subr.mxu0 0.0
    %1562 = vmatpush1.msra.mxu0 0.0
    %1563 = vmatprep.mubr.f32.mxu0 0.0
    %v1564 = vand.u32 %v594, 4294901760
    %1565 = vmatmul.mubr.f32.gmra.mrb[0].mxu0 %v1564
    %v1566 = vpop.f32.mrb[0].mxu0
    %v1567 = vadd.f32 %v1492, %v1566
    %v1568 = vpop.f32.mrb[0].mxu0
    %1569 = vdwg.mxu0
    %v1570 = vld [vmem:[#allocation2] sm:$0x1]
    %v1571 = vsel %vm583, 0.010000001, 0.0
    %1572 = vadd.xlane.f32.xlu0 %v1571
    %v1573 = vpop.xlane.xlu0 %1572
    %s1574 = smul.f32 %s586, 0.5
    %v1575 = vstv %s586
    %v1576 = vadd.f32 %v1575, 0.5
    %v1577 = vrcp.pop %v1576
    %v1578 = vstv %s1574
    %v1579 = vmul.f32 %v1578, %v1577
    %v1580 = vmul.f32 %v1579, %v1579
    %v1581 = vadd.f32 %v1573, %v1580
    %v1582 = vmul.f32 %v1581, 0.5
    %v1583 = vadd.f32 %v1582, -0.5
    %v1584 = vmul.f32 %v1583, 0.1
    %v1585 = vadd.f32 %v1584, 0.5
    %v1586 = vmax.f32 %v1585, 0.0
    %v1587 = vsub.f32 %v1586, 0.5
    %v1588 = vadd.f32 %v1587, 0.5
    %v1589 = vmul.f32 %v1588, 0.1
    %v1590 = vadd.f32 %v1589, 1.0
    %v1591 = vrcp.pop 1.0
    %v1592 = vstv %s587
    %v1593 = vmul.f32 %v1592, %v1570
    %v1594 = vadd.f32 %v1593, -0.05
    %v1595 = vstv %s588
    %v1596 = vmul.f32 %v1595, %v1591
    %v1597 = vmul.f32 %v1596, %v1078
    %v1598 = vadd.f32 %v1594, %v1597
    %v1599 = vstv %s585
    %v1600 = vmul.f32 %v1599, %v1567
    %v1601 = vadd.f32 %v1598, %v1600
    %v1602 = vadd.f32 %v1601, 0.1
    %v1603 = vmax.f32 %v1602, 0.0
    %vm1604 = vcmask 253952
    %1605 = vst.msk [vmem:[#allocation17] sm:$0x1] %vm1604, %v1603
    %vm1606 = vcmask 0
    %1607 = vst.msk [vmem:[%s9] sm:$0x1] %vm1606, %v1590
    %1608 = vst.msk [vmem:[%s10] sm:$0x1] %vm1606, %v1585
    %s1609 = sld [smem:[#allocation3 + $0x1]]
    %s1610 = sld [smem:[#allocation8 + $0x1]]
    %s1611 = sld [smem:[#allocation9 + $0x1]]
    %s1612 = sld [smem:[#allocation11 + $0x1]]
    %v1613 = vmax.f32 %v1590, 0.0
    %v1614 = vmin.f32 %v1585, 1.0
    %v1615 = vld [vmem:[#allocation14] sm:$0xff]
    %v1616 = vld [vmem:[#allocation14 + $0x8] sm:$0xff]
    %v1617 = vld [vmem:[#allocation14 + $0x10] sm:$0xff]
    %v1618 = vld [vmem:[#allocation14 + $0x18] sm:$0xff]
    %v1620 = vsel %vm583, %v1603, 0
    %1622 = vmatprep.subr.mxu0 0.0
    %v1623 = vand.u32 %v1615, 4294901760
    %1624 = vmatpush1.msra.mxu0 %v1623
    %1625 = vmatprep.subr.mxu0 0.0
    %v1626 = vand.u32 %v1616, 4294901760
    %1627 = vmatpush1.msra.mxu0 %v1626
    %1628 = vmatprep.subr.mxu0 0.0
    %v1629 = vand.u32 %v1617, 4294901760
    %1630 = vmatpush1.msra.mxu0 %v1629
    %1631 = vmatprep.subr.mxu0 0.0
    %v1632 = vand.u32 %v1618, 4294901760
    %1633 = vmatpush1.msra.mxu0 %v1632
    %1634 = vmatprep.subr.mxu0 0.0
    %1635 = vmatpush1.msra.mxu0 0.0
    %1636 = vmatprep.subr.mxu0 0.0
    %1637 = vmatpush1.msra.mxu0 0.0
    %1638 = vmatprep.subr.mxu0 0.0
    %1639 = vmatpush1.msra.mxu0 0.0
    %1640 = vmatprep.subr.mxu0 0.0
    %1641 = vmatpush1.msra.mxu0 0.0
    %1642 = vmatprep.subr.mxu0 0.0
    %1643 = vmatpush1.msra.mxu0 0.0
    %1644 = vmatprep.subr.mxu0 0.0
    %1645 = vmatpush1.msra.mxu0 0.0
    %1646 = vmatprep.subr.mxu0 0.0
    %1647 = vmatpush1.msra.mxu0 0.0
    %1648 = vmatprep.subr.mxu0 0.0
    %1649 = vmatpush1.msra.mxu0 0.0
    %1650 = vmatprep.subr.mxu0 0.0
    %1651 = vmatpush1.msra.mxu0 0.0
    %1652 = vmatprep.subr.mxu0 0.0
    %1653 = vmatpush1.msra.mxu0 0.0
    %1654 = vmatprep.subr.mxu0 0.0
    %1655 = vmatpush1.msra.mxu0 0.0
    %1656 = vmatprep.subr.mxu0 0.0
    %1657 = vmatpush1.msra.mxu0 0.0
    %1658 = vmatprep.subr.mxu0 0.0
    %1659 = vmatpush1.msra.mxu0 0.0
    %1660 = vmatprep.subr.mxu0 0.0
    %1661 = vmatpush1.msra.mxu0 0.0
    %1662 = vmatprep.subr.mxu0 0.0
    %1663 = vmatpush1.msra.mxu0 0.0
    %1664 = vmatprep.subr.mxu0 0.0
    %1665 = vmatpush1.msra.mxu0 0.0
    %1666 = vmatprep.subr.mxu0 0.0
    %1667 = vmatpush1.msra.mxu0 0.0
    %1668 = vmatprep.subr.mxu0 0.0
    %1669 = vmatpush1.msra.mxu0 0.0
    %1670 = vmatprep.subr.mxu0 0.0
    %1671 = vmatpush1.msra.mxu0 0.0
    %1672 = vmatprep.subr.mxu0 0.0
    %1673 = vmatpush1.msra.mxu0 0.0
    %1674 = vmatprep.subr.mxu0 0.0
    %1675 = vmatpush1.msra.mxu0 0.0
    %1676 = vmatprep.subr.mxu0 0.0
    %1677 = vmatpush1.msra.mxu0 0.0
    %1678 = vmatprep.subr.mxu0 0.0
    %1679 = vmatpush1.msra.mxu0 0.0
    %1680 = vmatprep.subr.mxu0 0.0
    %1681 = vmatpush1.msra.mxu0 0.0
    %1682 = vmatprep.subr.mxu0 0.0
    %1683 = vmatpush1.msra.mxu0 0.0
    %1684 = vmatprep.subr.mxu0 0.0
    %1685 = vmatpush1.msra.mxu0 0.0
    %1686 = vmatprep.subr.mxu0 0.0
    %1687 = vmatpush1.msra.mxu0 0.0
    %1688 = vmatprep.subr.mxu0 0.0
    %1689 = vmatpush1.msra.mxu0 0.0
    %1690 = vmatprep.mubr.f32.mxu0 0.0
    %v1691 = vand.u32 %v1620, 4294901760
    %v1692 = vsub.f32 %v1620, %v1691
    %v1693 = vand.u32 %v1692, 4294901760
    %v1694 = vsub.f32 %v1692, %v1693
    %v1695 = vand.u32 %v1694, 4294901760
    %1696 = vmatmul.mubr.f32.gmra.mrb[0].mxu0 %v1695
    %v1697 = vpop.f32.mrb[0].mxu0
    %v1698 = vadd.f32 0.0, %v1697
    %v1699 = vpop.f32.mrb[0].mxu0
    %1700 = vdwg.mxu0
    %1701 = vmatprep.subr.mxu0 0.0
    %v1702 = vand.u32 %v1615, 4294901760
    %v1703 = vsub.f32 %v1615, %v1702
    %v1704 = vand.u32 %v1703, 4294901760
    %v1705 = vsub.f32 %v1703, %v1704
    %v1706 = vand.u32 %v1705, 4294901760
    %1707 = vmatpush1.msra.mxu0 %v1706
    %1708 = vmatprep.subr.mxu0 0.0
    %v1709 = vand.u32 %v1616, 4294901760
    %v1710 = vsub.f32 %v1616, %v1709
    %v1711 = vand.u32 %v1710, 4294901760
    %v1712 = vsub.f32 %v1710, %v1711
    %v1713 = vand.u32 %v1712, 4294901760
    %1714 = vmatpush1.msra.mxu0 %v1713
    %1715 = vmatprep.subr.mxu0 0.0
    %v1716 = vand.u32 %v1617, 4294901760
    %v1717 = vsub.f32 %v1617, %v1716
    %v1718 = vand.u32 %v1717, 4294901760
    %v1719 = vsub.f32 %v1717, %v1718
    %v1720 = vand.u32 %v1719, 4294901760
    %1721 = vmatpush1.msra.mxu0 %v1720
    %1722 = vmatprep.subr.mxu0 0.0
    %v1723 = vand.u32 %v1618, 4294901760
    %v1724 = vsub.f32 %v1618, %v1723
    %v1725 = vand.u32 %v1724, 4294901760
    %v1726 = vsub.f32 %v1724, %v1725
    %v1727 = vand.u32 %v1726, 4294901760
    %1728 = vmatpush1.msra.mxu0 %v1727
    %1729 = vmatprep.subr.mxu0 0.0
    %1730 = vmatpush1.msra.mxu0 0.0
    %1731 = vmatprep.subr.mxu0 0.0
    %1732 = vmatpush1.msra.mxu0 0.0
    %1733 = vmatprep.subr.mxu0 0.0
    %1734 = vmatpush1.msra.mxu0 0.0
    %1735 = vmatprep.subr.mxu0 0.0
    %1736 = vmatpush1.msra.mxu0 0.0
    %1737 = vmatprep.subr.mxu0 0.0
    %1738 = vmatpush1.msra.mxu0 0.0
    %1739 = vmatprep.subr.mxu0 0.0
    %1740 = vmatpush1.msra.mxu0 0.0
    %1741 = vmatprep.subr.mxu0 0.0
    %1742 = vmatpush1.msra.mxu0 0.0
    %1743 = vmatprep.subr.mxu0 0.0
    %1744 = vmatpush1.msra.mxu0 0.0
    %1745 = vmatprep.subr.mxu0 0.0
    %1746 = vmatpush1.msra.mxu0 0.0
    %1747 = vmatprep.subr.mxu0 0.0
    %1748 = vmatpush1.msra.mxu0 0.0
    %1749 = vmatprep.subr.mxu0 0.0
    %1750 = vmatpush1.msra.mxu0 0.0
    %1751 = vmatprep.subr.mxu0 0.0
    %1752 = vmatpush1.msra.mxu0 0.0
    %1753 = vmatprep.subr.mxu0 0.0
    %1754 = vmatpush1.msra.mxu0 0.0
    %1755 = vmatprep.subr.mxu0 0.0
    %1756 = vmatpush1.msra.mxu0 0.0
    %1757 = vmatprep.subr.mxu0 0.0
    %1758 = vmatpush1.msra.mxu0 0.0
    %1759 = vmatprep.subr.mxu0 0.0
    %1760 = vmatpush1.msra.mxu0 0.0
    %1761 = vmatprep.subr.mxu0 0.0
    %1762 = vmatpush1.msra.mxu0 0.0
    %1763 = vmatprep.subr.mxu0 0.0
    %1764 = vmatpush1.msra.mxu0 0.0
    %1765 = vmatprep.subr.mxu0 0.0
    %1766 = vmatpush1.msra.mxu0 0.0
    %1767 = vmatprep.subr.mxu0 0.0
    %1768 = vmatpush1.msra.mxu0 0.0
    %1769 = vmatprep.subr.mxu0 0.0
    %1770 = vmatpush1.msra.mxu0 0.0
    %1771 = vmatprep.subr.mxu0 0.0
    %1772 = vmatpush1.msra.mxu0 0.0
    %1773 = vmatprep.subr.mxu0 0.0
    %1774 = vmatpush1.msra.mxu0 0.0
    %1775 = vmatprep.subr.mxu0 0.0
    %1776 = vmatpush1.msra.mxu0 0.0
    %1777 = vmatprep.subr.mxu0 0.0
    %1778 = vmatpush1.msra.mxu0 0.0
    %1779 = vmatprep.subr.mxu0 0.0
    %1780 = vmatpush1.msra.mxu0 0.0
    %1781 = vmatprep.subr.mxu0 0.0
    %1782 = vmatpush1.msra.mxu0 0.0
    %1783 = vmatprep.subr.mxu0 0.0
    %1784 = vmatpush1.msra.mxu0 0.0
    %1785 = vmatprep.mubr.f32.mxu0 0.0
    %v1786 = vand.u32 %v1620, 4294901760
    %1787 = vmatmul.mubr.f32.gmra.mrb[0].mxu0 %v1786
    %v1788 = vpop.f32.mrb[0].mxu0
    %v1789 = vadd.f32 %v1698, %v1788
    %v1790 = vpop.f32.mrb[0].mxu0
    %1791 = vdwg.mxu0
    %1792 = vmatprep.subr.mxu0 0.0
    %v1793 = vand.u32 %v1615, 4294901760
    %v1794 = vsub.f32 %v1615, %v1793
    %1795 = vmatpush1.msra.mxu0 %v1794
    %1796 = vmatprep.subr.mxu0 0.0
    %v1797 = vand.u32 %v1616, 4294901760
    %v1798 = vsub.f32 %v1616, %v1797
    %1799 = vmatpush1.msra.mxu0 %v1798
    %1800 = vmatprep.subr.mxu0 0.0
    %v1801 = vand.u32 %v1617, 4294901760
    %v1802 = vsub.f32 %v1617, %v1801
    %1803 = vmatpush1.msra.mxu0 %v1802
    %1804 = vmatprep.subr.mxu0 0.0
    %v1805 = vand.u32 %v1618, 4294901760
    %v1806 = vsub.f32 %v1618, %v1805
    %1807 = vmatpush1.msra.mxu0 %v1806
    %1808 = vmatprep.subr.mxu0 0.0
    %1809 = vmatpush1.msra.mxu0 0.0
    %1810 = vmatprep.subr.mxu0 0.0
    %1811 = vmatpush1.msra.mxu0 0.0
    %1812 = vmatprep.subr.mxu0 0.0
    %1813 = vmatpush1.msra.mxu0 0.0
    %1814 = vmatprep.subr.mxu0 0.0
    %1815 = vmatpush1.msra.mxu0 0.0
    %1816 = vmatprep.subr.mxu0 0.0
    %1817 = vmatpush1.msra.mxu0 0.0
    %1818 = vmatprep.subr.mxu0 0.0
    %1819 = vmatpush1.msra.mxu0 0.0
    %1820 = vmatprep.subr.mxu0 0.0
    %1821 = vmatpush1.msra.mxu0 0.0
    %1822 = vmatprep.subr.mxu0 0.0
    %1823 = vmatpush1.msra.mxu0 0.0
    %1824 = vmatprep.subr.mxu0 0.0
    %1825 = vmatpush1.msra.mxu0 0.0
    %1826 = vmatprep.subr.mxu0 0.0
    %1827 = vmatpush1.msra.mxu0 0.0
    %1828 = vmatprep.subr.mxu0 0.0
    %1829 = vmatpush1.msra.mxu0 0.0
    %1830 = vmatprep.subr.mxu0 0.0
    %1831 = vmatpush1.msra.mxu0 0.0
    %1832 = vmatprep.subr.mxu0 0.0
    %1833 = vmatpush1.msra.mxu0 0.0
    %1834 = vmatprep.subr.mxu0 0.0
    %1835 = vmatpush1.msra.mxu0 0.0
    %1836 = vmatprep.subr.mxu0 0.0
    %1837 = vmatpush1.msra.mxu0 0.0
    %1838 = vmatprep.subr.mxu0 0.0
    %1839 = vmatpush1.msra.mxu0 0.0
    %1840 = vmatprep.subr.mxu0 0.0
    %1841 = vmatpush1.msra.mxu0 0.0
    %1842 = vmatprep.subr.mxu0 0.0
    %1843 = vmatpush1.msra.mxu0 0.0
    %1844 = vmatprep.subr.mxu0 0.0
    %1845 = vmatpush1.msra.mxu0 0.0
    %1846 = vmatprep.subr.mxu0 0.0
    %1847 = vmatpush1.msra.mxu0 0.0
    %1848 = vmatprep.subr.mxu0 0.0
    %1849 = vmatpush1.msra.mxu0 0.0
    %1850 = vmatprep.subr.mxu0 0.0
    %1851 = vmatpush1.msra.mxu0 0.0
    %1852 = vmatprep.subr.mxu0 0.0
    %1853 = vmatpush1.msra.mxu0 0.0
    %1854 = vmatprep.subr.mxu0 0.0
    %1855 = vmatpush1.msra.mxu0 0.0
    %1856 = vmatprep.subr.mxu0 0.0
    %1857 = vmatpush1.msra.mxu0 0.0
    %1858 = vmatprep.subr.mxu0 0.0
    %1859 = vmatpush1.msra.mxu0 0.0
    %1860 = vmatprep.subr.mxu0 0.0
    %1861 = vmatpush1.msra.mxu0 0.0
    %1862 = vmatprep.subr.mxu0 0.0
    %1863 = vmatpush1.msra.mxu0 0.0
    %1864 = vmatprep.mubr.f32.mxu0 0.0
    %v1865 = vand.u32 %v1620, 4294901760
    %v1866 = vsub.f32 %v1620, %v1865
    %1867 = vmatmul.mubr.f32.gmra.mrb[0].mxu0 %v1866
    %v1868 = vpop.f32.mrb[0].mxu0
    %v1869 = vadd.f32 %v1789, %v1868
    %v1870 = vpop.f32.mrb[0].mxu0
    %1871 = vdwg.mxu0
    %1872 = vmatprep.subr.mxu0 0.0
    %v1873 = vand.u32 %v1615, 4294901760
    %1874 = vmatpush1.msra.mxu0 %v1873
    %1875 = vmatprep.subr.mxu0 0.0
    %v1876 = vand.u32 %v1616, 4294901760
    %1877 = vmatpush1.msra.mxu0 %v1876
    %1878 = vmatprep.subr.mxu0 0.0
    %v1879 = vand.u32 %v1617, 4294901760
    %1880 = vmatpush1.msra.mxu0 %v1879
    %1881 = vmatprep.subr.mxu0 0.0
    %v1882 = vand.u32 %v1618, 4294901760
    %1883 = vmatpush1.msra.mxu0 %v1882
    %1884 = vmatprep.subr.mxu0 0.0
    %1885 = vmatpush1.msra.mxu0 0.0
    %1886 = vmatprep.subr.mxu0 0.0
    %1887 = vmatpush1.msra.mxu0 0.0
    %1888 = vmatprep.subr.mxu0 0.0
    %1889 = vmatpush1.msra.mxu0 0.0
    %1890 = vmatprep.subr.mxu0 0.0
    %1891 = vmatpush1.msra.mxu0 0.0
    %1892 = vmatprep.subr.mxu0 0.0
    %1893 = vmatpush1.msra.mxu0 0.0
    %1894 = vmatprep.subr.mxu0 0.0
    %1895 = vmatpush1.msra.mxu0 0.0
    %1896 = vmatprep.subr.mxu0 0.0
    %1897 = vmatpush1.msra.mxu0 0.0
    %1898 = vmatprep.subr.mxu0 0.0
    %1899 = vmatpush1.msra.mxu0 0.0
    %1900 = vmatprep.subr.mxu0 0.0
    %1901 = vmatpush1.msra.mxu0 0.0
    %1902 = vmatprep.subr.mxu0 0.0
    %1903 = vmatpush1.msra.mxu0 0.0
    %1904 = vmatprep.subr.mxu0 0.0
    %1905 = vmatpush1.msra.mxu0 0.0
    %1906 = vmatprep.subr.mxu0 0.0
    %1907 = vmatpush1.msra.mxu0 0.0
    %1908 = vmatprep.subr.mxu0 0.0
    %1909 = vmatpush1.msra.mxu0 0.0
    %1910 = vmatprep.subr.mxu0 0.0
    %1911 = vmatpush1.msra.mxu0 0.0
    %1912 = vmatprep.subr.mxu0 0.0
    %1913 = vmatpush1.msra.mxu0 0.0
    %1914 = vmatprep.subr.mxu0 0.0
    %1915 = vmatpush1.msra.mxu0 0.0
    %1916 = vmatprep.subr.mxu0 0.0
    %1917 = vmatpush1.msra.mxu0 0.0
    %1918 = vmatprep.subr.mxu0 0.0
    %1919 = vmatpush1.msra.mxu0 0.0
    %1920 = vmatprep.subr.mxu0 0.0
    %1921 = vmatpush1.msra.mxu0 0.0
    %1922 = vmatprep.subr.mxu0 0.0
    %1923 = vmatpush1.msra.mxu0 0.0
    %1924 = vmatprep.subr.mxu0 0.0
    %1925 = vmatpush1.msra.mxu0 0.0
    %1926 = vmatprep.subr.mxu0 0.0
    %1927 = vmatpush1.msra.mxu0 0.0
    %1928 = vmatprep.subr.mxu0 0.0
    %1929 = vmatpush1.msra.mxu0 0.0
    %1930 = vmatprep.subr.mxu0 0.0
    %1931 = vmatpush1.msra.mxu0 0.0
    %1932 = vmatprep.subr.mxu0 0.0
    %1933 = vmatpush1.msra.mxu0 0.0
    %1934 = vmatprep.subr.mxu0 0.0
    %1935 = vmatpush1.msra.mxu0 0.0
    %1936 = vmatprep.subr.mxu0 0.0
    %1937 = vmatpush1.msra.mxu0 0.0
    %1938 = vmatprep.subr.mxu0 0.0
    %1939 = vmatpush1.msra.mxu0 0.0
    %1940 = vmatprep.mubr.f32.mxu0 0.0
    %v1941 = vand.u32 %v1620, 4294901760
    %v1942 = vsub.f32 %v1620, %v1941
    %v1943 = vand.u32 %v1942, 4294901760
    %1944 = vmatmul.mubr.f32.gmra.mrb[0].mxu0 %v1943
    %v1945 = vpop.f32.mrb[0].mxu0
    %v1946 = vadd.f32 %v1869, %v1945
    %v1947 = vpop.f32.mrb[0].mxu0
    %1948 = vdwg.mxu0
    %1949 = vmatprep.subr.mxu0 0.0
    %v1950 = vand.u32 %v1615, 4294901760
    %v1951 = vsub.f32 %v1615, %v1950
    %v1952 = vand.u32 %v1951, 4294901760
    %1953 = vmatpush1.msra.mxu0 %v1952
    %1954 = vmatprep.subr.mxu0 0.0
    %v1955 = vand.u32 %v1616, 4294901760
    %v1956 = vsub.f32 %v1616, %v1955
    %v1957 = vand.u32 %v1956, 4294901760
    %1958 = vmatpush1.msra.mxu0 %v1957
    %1959 = vmatprep.subr.mxu0 0.0
    %v1960 = vand.u32 %v1617, 4294901760
    %v1961 = vsub.f32 %v1617, %v1960
    %v1962 = vand.u32 %v1961, 4294901760
    %1963 = vmatpush1.msra.mxu0 %v1962
    %1964 = vmatprep.subr.mxu0 0.0
    %v1965 = vand.u32 %v1618, 4294901760
    %v1966 = vsub.f32 %v1618, %v1965
    %v1967 = vand.u32 %v1966, 4294901760
    %1968 = vmatpush1.msra.mxu0 %v1967
    %1969 = vmatprep.subr.mxu0 0.0
    %1970 = vmatpush1.msra.mxu0 0.0
    %1971 = vmatprep.subr.mxu0 0.0
    %1972 = vmatpush1.msra.mxu0 0.0
    %1973 = vmatprep.subr.mxu0 0.0
    %1974 = vmatpush1.msra.mxu0 0.0
    %1975 = vmatprep.subr.mxu0 0.0
    %1976 = vmatpush1.msra.mxu0 0.0
    %1977 = vmatprep.subr.mxu0 0.0
    %1978 = vmatpush1.msra.mxu0 0.0
    %1979 = vmatprep.subr.mxu0 0.0
    %1980 = vmatpush1.msra.mxu0 0.0
    %1981 = vmatprep.subr.mxu0 0.0
    %1982 = vmatpush1.msra.mxu0 0.0
    %1983 = vmatprep.subr.mxu0 0.0
    %1984 = vmatpush1.msra.mxu0 0.0
    %1985 = vmatprep.subr.mxu0 0.0
    %1986 = vmatpush1.msra.mxu0 0.0
    %1987 = vmatprep.subr.mxu0 0.0
    %1988 = vmatpush1.msra.mxu0 0.0
    %1989 = vmatprep.subr.mxu0 0.0
    %1990 = vmatpush1.msra.mxu0 0.0
    %1991 = vmatprep.subr.mxu0 0.0
    %1992 = vmatpush1.msra.mxu0 0.0
    %1993 = vmatprep.subr.mxu0 0.0
    %1994 = vmatpush1.msra.mxu0 0.0
    %1995 = vmatprep.subr.mxu0 0.0
    %1996 = vmatpush1.msra.mxu0 0.0
    %1997 = vmatprep.subr.mxu0 0.0
    %1998 = vmatpush1.msra.mxu0 0.0
    %1999 = vmatprep.subr.mxu0 0.0
    %2000 = vmatpush1.msra.mxu0 0.0
    %2001 = vmatprep.subr.mxu0 0.0
    %2002 = vmatpush1.msra.mxu0 0.0
    %2003 = vmatprep.subr.mxu0 0.0
    %2004 = vmatpush1.msra.mxu0 0.0
    %2005 = vmatprep.subr.mxu0 0.0
    %2006 = vmatpush1.msra.mxu0 0.0
    %2007 = vmatprep.subr.mxu0 0.0
    %2008 = vmatpush1.msra.mxu0 0.0
    %2009 = vmatprep.subr.mxu0 0.0
    %2010 = vmatpush1.msra.mxu0 0.0
    %2011 = vmatprep.subr.mxu0 0.0
    %2012 = vmatpush1.msra.mxu0 0.0
    %2013 = vmatprep.subr.mxu0 0.0
    %2014 = vmatpush1.msra.mxu0 0.0
    %2015 = vmatprep.subr.mxu0 0.0
    %2016 = vmatpush1.msra.mxu0 0.0
    %2017 = vmatprep.subr.mxu0 0.0
    %2018 = vmatpush1.msra.mxu0 0.0
    %2019 = vmatprep.subr.mxu0 0.0
    %2020 = vmatpush1.msra.mxu0 0.0
    %2021 = vmatprep.subr.mxu0 0.0
    %2022 = vmatpush1.msra.mxu0 0.0
    %2023 = vmatprep.subr.mxu0 0.0
    %2024 = vmatpush1.msra.mxu0 0.0
    %2025 = vmatprep.mubr.f32.mxu0 0.0
    %v2026 = vand.u32 %v1620, 4294901760
    %2027 = vmatmul.mubr.f32.gmra.mrb[0].mxu0 %v2026
    %v2028 = vpop.f32.mrb[0].mxu0
    %v2029 = vadd.f32 %v1946, %v2028
    %v2030 = vpop.f32.mrb[0].mxu0
    %2031 = vdwg.mxu0
    %2032 = vmatprep.subr.mxu0 0.0
    %v2033 = vand.u32 %v1615, 4294901760
    %2034 = vmatpush1.msra.mxu0 %v2033
    %2035 = vmatprep.subr.mxu0 0.0
    %v2036 = vand.u32 %v1616, 4294901760
    %2037 = vmatpush1.msra.mxu0 %v2036
    %2038 = vmatprep.subr.mxu0 0.0
    %v2039 = vand.u32 %v1617, 4294901760
    %2040 = vmatpush1.msra.mxu0 %v2039
    %2041 = vmatprep.subr.mxu0 0.0
    %v2042 = vand.u32 %v1618, 4294901760
    %2043 = vmatpush1.msra.mxu0 %v2042
    %2044 = vmatprep.subr.mxu0 0.0
    %2045 = vmatpush1.msra.mxu0 0.0
    %2046 = vmatprep.subr.mxu0 0.0
    %2047 = vmatpush1.msra.mxu0 0.0
    %2048 = vmatprep.subr.mxu0 0.0
    %2049 = vmatpush1.msra.mxu0 0.0
    %2050 = vmatprep.subr.mxu0 0.0
    %2051 = vmatpush1.msra.mxu0 0.0
    %2052 = vmatprep.subr.mxu0 0.0
    %2053 = vmatpush1.msra.mxu0 0.0
    %2054 = vmatprep.subr.mxu0 0.0
    %2055 = vmatpush1.msra.mxu0 0.0
    %2056 = vmatprep.subr.mxu0 0.0
    %2057 = vmatpush1.msra.mxu0 0.0
    %2058 = vmatprep.subr.mxu0 0.0
    %2059 = vmatpush1.msra.mxu0 0.0
    %2060 = vmatprep.subr.mxu0 0.0
    %2061 = vmatpush1.msra.mxu0 0.0
    %2062 = vmatprep.subr.mxu0 0.0
    %2063 = vmatpush1.msra.mxu0 0.0
    %2064 = vmatprep.subr.mxu0 0.0
    %2065 = vmatpush1.msra.mxu0 0.0
    %2066 = vmatprep.subr.mxu0 0.0
    %2067 = vmatpush1.msra.mxu0 0.0
    %2068 = vmatprep.subr.mxu0 0.0
    %2069 = vmatpush1.msra.mxu0 0.0
    %2070 = vmatprep.subr.mxu0 0.0
    %2071 = vmatpush1.msra.mxu0 0.0
    %2072 = vmatprep.subr.mxu0 0.0
    %2073 = vmatpush1.msra.mxu0 0.0
    %2074 = vmatprep.subr.mxu0 0.0
    %2075 = vmatpush1.msra.mxu0 0.0
    %2076 = vmatprep.subr.mxu0 0.0
    %2077 = vmatpush1.msra.mxu0 0.0
    %2078 = vmatprep.subr.mxu0 0.0
    %2079 = vmatpush1.msra.mxu0 0.0
    %2080 = vmatprep.subr.mxu0 0.0
    %2081 = vmatpush1.msra.mxu0 0.0
    %2082 = vmatprep.subr.mxu0 0.0
    %2083 = vmatpush1.msra.mxu0 0.0
    %2084 = vmatprep.subr.mxu0 0.0
    %2085 = vmatpush1.msra.mxu0 0.0
    %2086 = vmatprep.subr.mxu0 0.0
    %2087 = vmatpush1.msra.mxu0 0.0
    %2088 = vmatprep.subr.mxu0 0.0
    %2089 = vmatpush1.msra.mxu0 0.0
    %2090 = vmatprep.subr.mxu0 0.0
    %2091 = vmatpush1.msra.mxu0 0.0
    %2092 = vmatprep.subr.mxu0 0.0
    %2093 = vmatpush1.msra.mxu0 0.0
    %2094 = vmatprep.subr.mxu0 0.0
    %2095 = vmatpush1.msra.mxu0 0.0
    %2096 = vmatprep.subr.mxu0 0.0
    %2097 = vmatpush1.msra.mxu0 0.0
    %2098 = vmatprep.subr.mxu0 0.0
    %2099 = vmatpush1.msra.mxu0 0.0
    %2100 = vmatprep.mubr.f32.mxu0 0.0
    %v2101 = vand.u32 %v1620, 4294901760
    %2102 = vmatmul.mubr.f32.gmra.mrb[0].mxu0 %v2101
    %v2103 = vpop.f32.mrb[0].mxu0
    %v2104 = vadd.f32 %v2029, %v2103
    %v2105 = vpop.f32.mrb[0].mxu0
    %2106 = vdwg.mxu0
    %v2107 = vld [vmem:[#allocation16] sm:$0xff]
    %v2108 = vld [vmem:[#allocation16 + $0x8] sm:$0xff]
    %v2109 = vld [vmem:[#allocation16 + $0x10] sm:$0xff]
    %v2110 = vld [vmem:[#allocation16 + $0x18] sm:$0xff]
    %2111 = vmatprep.subr.mxu0 0.0
    %v2112 = vand.u32 %v2107, 4294901760
    %2113 = vmatpush1.msra.mxu0 %v2112
    %2114 = vmatprep.subr.mxu0 0.0
    %v2115 = vand.u32 %v2108, 4294901760
    %2116 = vmatpush1.msra.mxu0 %v2115
    %2117 = vmatprep.subr.mxu0 0.0
    %v2118 = vand.u32 %v2109, 4294901760
    %2119 = vmatpush1.msra.mxu0 %v2118
    %2120 = vmatprep.subr.mxu0 0.0
    %v2121 = vand.u32 %v2110, 4294901760
    %2122 = vmatpush1.msra.mxu0 %v2121
    %2123 = vmatprep.subr.mxu0 0.0
    %2124 = vmatpush1.msra.mxu0 0.0
    %2125 = vmatprep.subr.mxu0 0.0
    %2126 = vmatpush1.msra.mxu0 0.0
    %2127 = vmatprep.subr.mxu0 0.0
    %2128 = vmatpush1.msra.mxu0 0.0
    %2129 = vmatprep.subr.mxu0 0.0
    %2130 = vmatpush1.msra.mxu0 0.0
    %2131 = vmatprep.subr.mxu0 0.0
    %2132 = vmatpush1.msra.mxu0 0.0
    %2133 = vmatprep.subr.mxu0 0.0
    %2134 = vmatpush1.msra.mxu0 0.0
    %2135 = vmatprep.subr.mxu0 0.0
    %2136 = vmatpush1.msra.mxu0 0.0
    %2137 = vmatprep.subr.mxu0 0.0
    %2138 = vmatpush1.msra.mxu0 0.0
    %2139 = vmatprep.subr.mxu0 0.0
    %2140 = vmatpush1.msra.mxu0 0.0
    %2141 = vmatprep.subr.mxu0 0.0
    %2142 = vmatpush1.msra.mxu0 0.0
    %2143 = vmatprep.subr.mxu0 0.0
    %2144 = vmatpush1.msra.mxu0 0.0
    %2145 = vmatprep.subr.mxu0 0.0
    %2146 = vmatpush1.msra.mxu0 0.0
    %2147 = vmatprep.subr.mxu0 0.0
    %2148 = vmatpush1.msra.mxu0 0.0
    %2149 = vmatprep.subr.mxu0 0.0
    %2150 = vmatpush1.msra.mxu0 0.0
    %2151 = vmatprep.subr.mxu0 0.0
    %2152 = vmatpush1.msra.mxu0 0.0
    %2153 = vmatprep.subr.mxu0 0.0
    %2154 = vmatpush1.msra.mxu0 0.0
    %2155 = vmatprep.subr.mxu0 0.0
    %2156 = vmatpush1.msra.mxu0 0.0
    %2157 = vmatprep.subr.mxu0 0.0
    %2158 = vmatpush1.msra.mxu0 0.0
    %2159 = vmatprep.subr.mxu0 0.0
    %2160 = vmatpush1.msra.mxu0 0.0
    %2161 = vmatprep.subr.mxu0 0.0
    %2162 = vmatpush1.msra.mxu0 0.0
    %2163 = vmatprep.subr.mxu0 0.0
    %2164 = vmatpush1.msra.mxu0 0.0
    %2165 = vmatprep.subr.mxu0 0.0
    %2166 = vmatpush1.msra.mxu0 0.0
    %2167 = vmatprep.subr.mxu0 0.0
    %2168 = vmatpush1.msra.mxu0 0.0
    %2169 = vmatprep.subr.mxu0 0.0
    %2170 = vmatpush1.msra.mxu0 0.0
    %2171 = vmatprep.subr.mxu0 0.0
    %2172 = vmatpush1.msra.mxu0 0.0
    %2173 = vmatprep.subr.mxu0 0.0
    %2174 = vmatpush1.msra.mxu0 0.0
    %2175 = vmatprep.subr.mxu0 0.0
    %2176 = vmatpush1.msra.mxu0 0.0
    %2177 = vmatprep.subr.mxu0 0.0
    %2178 = vmatpush1.msra.mxu0 0.0
    %2179 = vmatprep.mubr.f32.mxu0 0.0
    %v2180 = vand.u32 %v1620, 4294901760
    %v2181 = vsub.f32 %v1620, %v2180
    %v2182 = vand.u32 %v2181, 4294901760
    %v2183 = vsub.f32 %v2181, %v2182
    %v2184 = vand.u32 %v2183, 4294901760
    %2185 = vmatmul.mubr.f32.gmra.mrb[0].mxu0 %v2184
    %v2186 = vpop.f32.mrb[0].mxu0
    %v2187 = vadd.f32 0.0, %v2186
    %v2188 = vpop.f32.mrb[0].mxu0
    %2189 = vdwg.mxu0
    %2190 = vmatprep.subr.mxu0 0.0
    %v2191 = vand.u32 %v2107, 4294901760
    %v2192 = vsub.f32 %v2107, %v2191
    %v2193 = vand.u32 %v2192, 4294901760
    %v2194 = vsub.f32 %v2192, %v2193
    %v2195 = vand.u32 %v2194, 4294901760
    %2196 = vmatpush1.msra.mxu0 %v2195
    %2197 = vmatprep.subr.mxu0 0.0
    %v2198 = vand.u32 %v2108, 4294901760
    %v2199 = vsub.f32 %v2108, %v2198
    %v2200 = vand.u32 %v2199, 4294901760
    %v2201 = vsub.f32 %v2199, %v2200
    %v2202 = vand.u32 %v2201, 4294901760
    %2203 = vmatpush1.msra.mxu0 %v2202
    %2204 = vmatprep.subr.mxu0 0.0
    %v2205 = vand.u32 %v2109, 4294901760
    %v2206 = vsub.f32 %v2109, %v2205
    %v2207 = vand.u32 %v2206, 4294901760
    %v2208 = vsub.f32 %v2206, %v2207
    %v2209 = vand.u32 %v2208, 4294901760
    %2210 = vmatpush1.msra.mxu0 %v2209
    %2211 = vmatprep.subr.mxu0 0.0
    %v2212 = vand.u32 %v2110, 4294901760
    %v2213 = vsub.f32 %v2110, %v2212
    %v2214 = vand.u32 %v2213, 4294901760
    %v2215 = vsub.f32 %v2213, %v2214
    %v2216 = vand.u32 %v2215, 4294901760
    %2217 = vmatpush1.msra.mxu0 %v2216
    %2218 = vmatprep.subr.mxu0 0.0
    %2219 = vmatpush1.msra.mxu0 0.0
    %2220 = vmatprep.subr.mxu0 0.0
    %2221 = vmatpush1.msra.mxu0 0.0
    %2222 = vmatprep.subr.mxu0 0.0
    %2223 = vmatpush1.msra.mxu0 0.0
    %2224 = vmatprep.subr.mxu0 0.0
    %2225 = vmatpush1.msra.mxu0 0.0
    %2226 = vmatprep.subr.mxu0 0.0
    %2227 = vmatpush1.msra.mxu0 0.0
    %2228 = vmatprep.subr.mxu0 0.0
    %2229 = vmatpush1.msra.mxu0 0.0
    %2230 = vmatprep.subr.mxu0 0.0
    %2231 = vmatpush1.msra.mxu0 0.0
    %2232 = vmatprep.subr.mxu0 0.0
    %2233 = vmatpush1.msra.mxu0 0.0
    %2234 = vmatprep.subr.mxu0 0.0
    %2235 = vmatpush1.msra.mxu0 0.0
    %2236 = vmatprep.subr.mxu0 0.0
    %2237 = vmatpush1.msra.mxu0 0.0
    %2238 = vmatprep.subr.mxu0 0.0
    %2239 = vmatpush1.msra.mxu0 0.0
    %2240 = vmatprep.subr.mxu0 0.0
    %2241 = vmatpush1.msra.mxu0 0.0
    %2242 = vmatprep.subr.mxu0 0.0
    %2243 = vmatpush1.msra.mxu0 0.0
    %2244 = vmatprep.subr.mxu0 0.0
    %2245 = vmatpush1.msra.mxu0 0.0
    %2246 = vmatprep.subr.mxu0 0.0
    %2247 = vmatpush1.msra.mxu0 0.0
    %2248 = vmatprep.subr.mxu0 0.0
    %2249 = vmatpush1.msra.mxu0 0.0
    %2250 = vmatprep.subr.mxu0 0.0
    %2251 = vmatpush1.msra.mxu0 0.0
    %2252 = vmatprep.subr.mxu0 0.0
    %2253 = vmatpush1.msra.mxu0 0.0
    %2254 = vmatprep.subr.mxu0 0.0
    %2255 = vmatpush1.msra.mxu0 0.0
    %2256 = vmatprep.subr.mxu0 0.0
    %2257 = vmatpush1.msra.mxu0 0.0
    %2258 = vmatprep.subr.mxu0 0.0
    %2259 = vmatpush1.msra.mxu0 0.0
    %2260 = vmatprep.subr.mxu0 0.0
    %2261 = vmatpush1.msra.mxu0 0.0
    %2262 = vmatprep.subr.mxu0 0.0
    %2263 = vmatpush1.msra.mxu0 0.0
    %2264 = vmatprep.subr.mxu0 0.0
    %2265 = vmatpush1.msra.mxu0 0.0
    %2266 = vmatprep.subr.mxu0 0.0
    %2267 = vmatpush1.msra.mxu0 0.0
    %2268 = vmatprep.subr.mxu0 0.0
    %2269 = vmatpush1.msra.mxu0 0.0
    %2270 = vmatprep.subr.mxu0 0.0
    %2271 = vmatpush1.msra.mxu0 0.0
    %2272 = vmatprep.subr.mxu0 0.0
    %2273 = vmatpush1.msra.mxu0 0.0
    %2274 = vmatprep.mubr.f32.mxu0 0.0
    %v2275 = vand.u32 %v1620, 4294901760
    %2276 = vmatmul.mubr.f32.gmra.mrb[0].mxu0 %v2275
    %v2277 = vpop.f32.mrb[0].mxu0
    %v2278 = vadd.f32 %v2187, %v2277
    %v2279 = vpop.f32.mrb[0].mxu0
    %2280 = vdwg.mxu0
    %2281 = vmatprep.subr.mxu0 0.0
    %v2282 = vand.u32 %v2107, 4294901760
    %v2283 = vsub.f32 %v2107, %v2282
    %2284 = vmatpush1.msra.mxu0 %v2283
    %2285 = vmatprep.subr.mxu0 0.0
    %v2286 = vand.u32 %v2108, 4294901760
    %v2287 = vsub.f32 %v2108, %v2286
    %2288 = vmatpush1.msra.mxu0 %v2287
    %2289 = vmatprep.subr.mxu0 0.0
    %v2290 = vand.u32 %v2109, 4294901760
    %v2291 = vsub.f32 %v2109, %v2290
    %2292 = vmatpush1.msra.mxu0 %v2291
    %2293 = vmatprep.subr.mxu0 0.0
    %v2294 = vand.u32 %v2110, 4294901760
    %v2295 = vsub.f32 %v2110, %v2294
    %2296 = vmatpush1.msra.mxu0 %v2295
    %2297 = vmatprep.subr.mxu0 0.0
    %2298 = vmatpush1.msra.mxu0 0.0
    %2299 = vmatprep.subr.mxu0 0.0
    %2300 = vmatpush1.msra.mxu0 0.0
    %2301 = vmatprep.subr.mxu0 0.0
    %2302 = vmatpush1.msra.mxu0 0.0
    %2303 = vmatprep.subr.mxu0 0.0
    %2304 = vmatpush1.msra.mxu0 0.0
    %2305 = vmatprep.subr.mxu0 0.0
    %2306 = vmatpush1.msra.mxu0 0.0
    %2307 = vmatprep.subr.mxu0 0.0
    %2308 = vmatpush1.msra.mxu0 0.0
    %2309 = vmatprep.subr.mxu0 0.0
    %2310 = vmatpush1.msra.mxu0 0.0
    %2311 = vmatprep.subr.mxu0 0.0
    %2312 = vmatpush1.msra.mxu0 0.0
    %2313 = vmatprep.subr.mxu0 0.0
    %2314 = vmatpush1.msra.mxu0 0.0
    %2315 = vmatprep.subr.mxu0 0.0
    %2316 = vmatpush1.msra.mxu0 0.0
    %2317 = vmatprep.subr.mxu0 0.0
    %2318 = vmatpush1.msra.mxu0 0.0
    %2319 = vmatprep.subr.mxu0 0.0
    %2320 = vmatpush1.msra.mxu0 0.0
    %2321 = vmatprep.subr.mxu0 0.0
    %2322 = vmatpush1.msra.mxu0 0.0
    %2323 = vmatprep.subr.mxu0 0.0
    %2324 = vmatpush1.msra.mxu0 0.0
    %2325 = vmatprep.subr.mxu0 0.0
    %2326 = vmatpush1.msra.mxu0 0.0
    %2327 = vmatprep.subr.mxu0 0.0
    %2328 = vmatpush1.msra.mxu0 0.0
    %2329 = vmatprep.subr.mxu0 0.0
    %2330 = vmatpush1.msra.mxu0 0.0
    %2331 = vmatprep.subr.mxu0 0.0
    %2332 = vmatpush1.msra.mxu0 0.0
    %2333 = vmatprep.subr.mxu0 0.0
    %2334 = vmatpush1.msra.mxu0 0.0
    %2335 = vmatprep.subr.mxu0 0.0
    %2336 = vmatpush1.msra.mxu0 0.0
    %2337 = vmatprep.subr.mxu0 0.0
    %2338 = vmatpush1.msra.mxu0 0.0
    %2339 = vmatprep.subr.mxu0 0.0
    %2340 = vmatpush1.msra.mxu0 0.0
    %2341 = vmatprep.subr.mxu0 0.0
    %2342 = vmatpush1.msra.mxu0 0.0
    %2343 = vmatprep.subr.mxu0 0.0
    %2344 = vmatpush1.msra.mxu0 0.0
    %2345 = vmatprep.subr.mxu0 0.0
    %2346 = vmatpush1.msra.mxu0 0.0
    %2347 = vmatprep.subr.mxu0 0.0
    %2348 = vmatpush1.msra.mxu0 0.0
    %2349 = vmatprep.subr.mxu0 0.0
    %2350 = vmatpush1.msra.mxu0 0.0
    %2351 = vmatprep.subr.mxu0 0.0
    %2352 = vmatpush1.msra.mxu0 0.0
    %2353 = vmatprep.mubr.f32.mxu0 0.0
    %v2354 = vand.u32 %v1620, 4294901760
    %v2355 = vsub.f32 %v1620, %v2354
    %2356 = vmatmul.mubr.f32.gmra.mrb[0].mxu0 %v2355
    %v2357 = vpop.f32.mrb[0].mxu0
    %v2358 = vadd.f32 %v2278, %v2357
    %v2359 = vpop.f32.mrb[0].mxu0
    %2360 = vdwg.mxu0
    %2361 = vmatprep.subr.mxu0 0.0
    %v2362 = vand.u32 %v2107, 4294901760
    %2363 = vmatpush1.msra.mxu0 %v2362
    %2364 = vmatprep.subr.mxu0 0.0
    %v2365 = vand.u32 %v2108, 4294901760
    %2366 = vmatpush1.msra.mxu0 %v2365
    %2367 = vmatprep.subr.mxu0 0.0
    %v2368 = vand.u32 %v2109, 4294901760
    %2369 = vmatpush1.msra.mxu0 %v2368
    %2370 = vmatprep.subr.mxu0 0.0
    %v2371 = vand.u32 %v2110, 4294901760
    %2372 = vmatpush1.msra.mxu0 %v2371
    %2373 = vmatprep.subr.mxu0 0.0
    %2374 = vmatpush1.msra.mxu0 0.0
    %2375 = vmatprep.subr.mxu0 0.0
    %2376 = vmatpush1.msra.mxu0 0.0
    %2377 = vmatprep.subr.mxu0 0.0
    %2378 = vmatpush1.msra.mxu0 0.0
    %2379 = vmatprep.subr.mxu0 0.0
    %2380 = vmatpush1.msra.mxu0 0.0
    %2381 = vmatprep.subr.mxu0 0.0
    %2382 = vmatpush1.msra.mxu0 0.0
    %2383 = vmatprep.subr.mxu0 0.0
    %2384 = vmatpush1.msra.mxu0 0.0
    %2385 = vmatprep.subr.mxu0 0.0
    %2386 = vmatpush1.msra.mxu0 0.0
    %2387 = vmatprep.subr.mxu0 0.0
    %2388 = vmatpush1.msra.mxu0 0.0
    %2389 = vmatprep.subr.mxu0 0.0
    %2390 = vmatpush1.msra.mxu0 0.0
    %2391 = vmatprep.subr.mxu0 0.0
    %2392 = vmatpush1.msra.mxu0 0.0
    %2393 = vmatprep.subr.mxu0 0.0
    %2394 = vmatpush1.msra.mxu0 0.0
    %2395 = vmatprep.subr.mxu0 0.0
    %2396 = vmatpush1.msra.mxu0 0.0
    %2397 = vmatprep.subr.mxu0 0.0
    %2398 = vmatpush1.msra.mxu0 0.0
    %2399 = vmatprep.subr.mxu0 0.0
    %2400 = vmatpush1.msra.mxu0 0.0
    %2401 = vmatprep.subr.mxu0 0.0
    %2402 = vmatpush1.msra.mxu0 0.0
    %2403 = vmatprep.subr.mxu0 0.0
    %2404 = vmatpush1.msra.mxu0 0.0
    %2405 = vmatprep.subr.mxu0 0.0
    %2406 = vmatpush1.msra.mxu0 0.0
    %2407 = vmatprep.subr.mxu0 0.0
    %2408 = vmatpush1.msra.mxu0 0.0
    %2409 = vmatprep.subr.mxu0 0.0
    %2410 = vmatpush1.msra.mxu0 0.0
    %2411 = vmatprep.subr.mxu0 0.0
    %2412 = vmatpush1.msra.mxu0 0.0
    %2413 = vmatprep.subr.mxu0 0.0
    %2414 = vmatpush1.msra.mxu0 0.0
    %2415 = vmatprep.subr.mxu0 0.0
    %2416 = vmatpush1.msra.mxu0 0.0
    %2417 = vmatprep.subr.mxu0 0.0
    %2418 = vmatpush1.msra.mxu0 0.0
    %2419 = vmatprep.subr.mxu0 0.0
    %2420 = vmatpush1.msra.mxu0 0.0
    %2421 = vmatprep.subr.mxu0 0.0
    %2422 = vmatpush1.msra.mxu0 0.0
    %2423 = vmatprep.subr.mxu0 0.0
    %2424 = vmatpush1.msra.mxu0 0.0
    %2425 = vmatprep.subr.mxu0 0.0
    %2426 = vmatpush1.msra.mxu0 0.0
    %2427 = vmatprep.subr.mxu0 0.0
    %2428 = vmatpush1.msra.mxu0 0.0
    %2429 = vmatprep.mubr.f32.mxu0 0.0
    %v2430 = vand.u32 %v1620, 4294901760
    %v2431 = vsub.f32 %v1620, %v2430
    %v2432 = vand.u32 %v2431, 4294901760
    %2433 = vmatmul.mubr.f32.gmra.mrb[0].mxu0 %v2432
    %v2434 = vpop.f32.mrb[0].mxu0
    %v2435 = vadd.f32 %v2358, %v2434
    %v2436 = vpop.f32.mrb[0].mxu0
    %2437 = vdwg.mxu0
    %2438 = vmatprep.subr.mxu0 0.0
    %v2439 = vand.u32 %v2107, 4294901760
    %v2440 = vsub.f32 %v2107, %v2439
    %v2441 = vand.u32 %v2440, 4294901760
    %2442 = vmatpush1.msra.mxu0 %v2441
    %2443 = vmatprep.subr.mxu0 0.0
    %v2444 = vand.u32 %v2108, 4294901760
    %v2445 = vsub.f32 %v2108, %v2444
    %v2446 = vand.u32 %v2445, 4294901760
    %2447 = vmatpush1.msra.mxu0 %v2446
    %2448 = vmatprep.subr.mxu0 0.0
    %v2449 = vand.u32 %v2109, 4294901760
    %v2450 = vsub.f32 %v2109, %v2449
    %v2451 = vand.u32 %v2450, 4294901760
    %2452 = vmatpush1.msra.mxu0 %v2451
    %2453 = vmatprep.subr.mxu0 0.0
    %v2454 = vand.u32 %v2110, 4294901760
    %v2455 = vsub.f32 %v2110, %v2454
    %v2456 = vand.u32 %v2455, 4294901760
    %2457 = vmatpush1.msra.mxu0 %v2456
    %2458 = vmatprep.subr.mxu0 0.0
    %2459 = vmatpush1.msra.mxu0 0.0
    %2460 = vmatprep.subr.mxu0 0.0
    %2461 = vmatpush1.msra.mxu0 0.0
    %2462 = vmatprep.subr.mxu0 0.0
    %2463 = vmatpush1.msra.mxu0 0.0
    %2464 = vmatprep.subr.mxu0 0.0
    %2465 = vmatpush1.msra.mxu0 0.0
    %2466 = vmatprep.subr.mxu0 0.0
    %2467 = vmatpush1.msra.mxu0 0.0
    %2468 = vmatprep.subr.mxu0 0.0
    %2469 = vmatpush1.msra.mxu0 0.0
    %2470 = vmatprep.subr.mxu0 0.0
    %2471 = vmatpush1.msra.mxu0 0.0
    %2472 = vmatprep.subr.mxu0 0.0
    %2473 = vmatpush1.msra.mxu0 0.0
    %2474 = vmatprep.subr.mxu0 0.0
    %2475 = vmatpush1.msra.mxu0 0.0
    %2476 = vmatprep.subr.mxu0 0.0
    %2477 = vmatpush1.msra.mxu0 0.0
    %2478 = vmatprep.subr.mxu0 0.0
    %2479 = vmatpush1.msra.mxu0 0.0
    %2480 = vmatprep.subr.mxu0 0.0
    %2481 = vmatpush1.msra.mxu0 0.0
    %2482 = vmatprep.subr.mxu0 0.0
    %2483 = vmatpush1.msra.mxu0 0.0
    %2484 = vmatprep.subr.mxu0 0.0
    %2485 = vmatpush1.msra.mxu0 0.0
    %2486 = vmatprep.subr.mxu0 0.0
    %2487 = vmatpush1.msra.mxu0 0.0
    %2488 = vmatprep.subr.mxu0 0.0
    %2489 = vmatpush1.msra.mxu0 0.0
    %2490 = vmatprep.subr.mxu0 0.0
    %2491 = vmatpush1.msra.mxu0 0.0
    %2492 = vmatprep.subr.mxu0 0.0
    %2493 = vmatpush1.msra.mxu0 0.0
    %2494 = vmatprep.subr.mxu0 0.0
    %2495 = vmatpush1.msra.mxu0 0.0
    %2496 = vmatprep.subr.mxu0 0.0
    %2497 = vmatpush1.msra.mxu0 0.0
    %2498 = vmatprep.subr.mxu0 0.0
    %2499 = vmatpush1.msra.mxu0 0.0
    %2500 = vmatprep.subr.mxu0 0.0
    %2501 = vmatpush1.msra.mxu0 0.0
    %2502 = vmatprep.subr.mxu0 0.0
    %2503 = vmatpush1.msra.mxu0 0.0
    %2504 = vmatprep.subr.mxu0 0.0
    %2505 = vmatpush1.msra.mxu0 0.0
    %2506 = vmatprep.subr.mxu0 0.0
    %2507 = vmatpush1.msra.mxu0 0.0
    %2508 = vmatprep.subr.mxu0 0.0
    %2509 = vmatpush1.msra.mxu0 0.0
    %2510 = vmatprep.subr.mxu0 0.0
    %2511 = vmatpush1.msra.mxu0 0.0
    %2512 = vmatprep.subr.mxu0 0.0
    %2513 = vmatpush1.msra.mxu0 0.0
    %2514 = vmatprep.mubr.f32.mxu0 0.0
    %v2515 = vand.u32 %v1620, 4294901760
    %2516 = vmatmul.mubr.f32.gmra.mrb[0].mxu0 %v2515
    %v2517 = vpop.f32.mrb[0].mxu0
    %v2518 = vadd.f32 %v2435, %v2517
    %v2519 = vpop.f32.mrb[0].mxu0
    %2520 = vdwg.mxu0
    %2521 = vmatprep.subr.mxu0 0.0
    %v2522 = vand.u32 %v2107, 4294901760
    %2523 = vmatpush1.msra.mxu0 %v2522
    %2524 = vmatprep.subr.mxu0 0.0
    %v2525 = vand.u32 %v2108, 4294901760
    %2526 = vmatpush1.msra.mxu0 %v2525
    %2527 = vmatprep.subr.mxu0 0.0
    %v2528 = vand.u32 %v2109, 4294901760
    %2529 = vmatpush1.msra.mxu0 %v2528
    %2530 = vmatprep.subr.mxu0 0.0
    %v2531 = vand.u32 %v2110, 4294901760
    %2532 = vmatpush1.msra.mxu0 %v2531
    %2533 = vmatprep.subr.mxu0 0.0
    %2534 = vmatpush1.msra.mxu0 0.0
    %2535 = vmatprep.subr.mxu0 0.0
    %2536 = vmatpush1.msra.mxu0 0.0
    %2537 = vmatprep.subr.mxu0 0.0
    %2538 = vmatpush1.msra.mxu0 0.0
    %2539 = vmatprep.subr.mxu0 0.0
    %2540 = vmatpush1.msra.mxu0 0.0
    %2541 = vmatprep.subr.mxu0 0.0
    %2542 = vmatpush1.msra.mxu0 0.0
    %2543 = vmatprep.subr.mxu0 0.0
    %2544 = vmatpush1.msra.mxu0 0.0
    %2545 = vmatprep.subr.mxu0 0.0
    %2546 = vmatpush1.msra.mxu0 0.0
    %2547 = vmatprep.subr.mxu0 0.0
    %2548 = vmatpush1.msra.mxu0 0.0
    %2549 = vmatprep.subr.mxu0 0.0
    %2550 = vmatpush1.msra.mxu0 0.0
    %2551 = vmatprep.subr.mxu0 0.0
    %2552 = vmatpush1.msra.mxu0 0.0
    %2553 = vmatprep.subr.mxu0 0.0
    %2554 = vmatpush1.msra.mxu0 0.0
    %2555 = vmatprep.subr.mxu0 0.0
    %2556 = vmatpush1.msra.mxu0 0.0
    %2557 = vmatprep.subr.mxu0 0.0
    %2558 = vmatpush1.msra.mxu0 0.0
    %2559 = vmatprep.subr.mxu0 0.0
    %2560 = vmatpush1.msra.mxu0 0.0
    %2561 = vmatprep.subr.mxu0 0.0
    %2562 = vmatpush1.msra.mxu0 0.0
    %2563 = vmatprep.subr.mxu0 0.0
    %2564 = vmatpush1.msra.mxu0 0.0
    %2565 = vmatprep.subr.mxu0 0.0
    %2566 = vmatpush1.msra.mxu0 0.0
    %2567 = vmatprep.subr.mxu0 0.0
    %2568 = vmatpush1.msra.mxu0 0.0
    %2569 = vmatprep.subr.mxu0 0.0
    %2570 = vmatpush1.msra.mxu0 0.0
    %2571 = vmatprep.subr.mxu0 0.0
    %2572 = vmatpush1.msra.mxu0 0.0
    %2573 = vmatprep.subr.mxu0 0.0
    %2574 = vmatpush1.msra.mxu0 0.0
    %2575 = vmatprep.subr.mxu0 0.0
    %2576 = vmatpush1.msra.mxu0 0.0
    %2577 = vmatprep.subr.mxu0 0.0
    %2578 = vmatpush1.msra.mxu0 0.0
    %2579 = vmatprep.subr.mxu0 0.0
    %2580 = vmatpush1.msra.mxu0 0.0
    %2581 = vmatprep.subr.mxu0 0.0
    %2582 = vmatpush1.msra.mxu0 0.0
    %2583 = vmatprep.subr.mxu0 0.0
    %2584 = vmatpush1.msra.mxu0 0.0
    %2585 = vmatprep.subr.mxu0 0.0
    %2586 = vmatpush1.msra.mxu0 0.0
    %2587 = vmatprep.subr.mxu0 0.0
    %2588 = vmatpush1.msra.mxu0 0.0
    %2589 = vmatprep.mubr.f32.mxu0 0.0
    %v2590 = vand.u32 %v1620, 4294901760
    %2591 = vmatmul.mubr.f32.gmra.mrb[0].mxu0 %v2590
    %v2592 = vpop.f32.mrb[0].mxu0
    %v2593 = vadd.f32 %v2518, %v2592
    %v2594 = vpop.f32.mrb[0].mxu0
    %2595 = vdwg.mxu0
    %v2596 = vld [vmem:[#allocation2 + $0x1] sm:$0x1]
    %v2597 = vmul.f32 %v1603, %v1603
    %v2598 = vsel %vm1604, %v2597, 0.0
    %2599 = vadd.xlane.f32.xlu0 %v2598
    %v2600 = vpop.xlane.xlu0 %2599
    %s2601 = smul.f32 %s1610, 0.5
    %v2602 = vstv %s1610
    %v2603 = vadd.f32 %v2602, %v1614
    %v2604 = vrcp.pop %v2603
    %v2605 = vstv %s2601
    %v2606 = vmul.f32 %v2605, %v2604
    %v2607 = vsub.f32 0.0, %v1585
    %v2608 = vmul.f32 %v2606, %v2606
    %v2609 = vadd.f32 %v2600, %v2608
    %v2610 = vmul.f32 %v1585, %v2609
    %v2611 = vadd.f32 %v2607, %v2610
    %v2612 = vmul.f32 %v2611, 0.1
    %v2613 = vadd.f32 %v1585, %v2612
    %v2614 = vmax.f32 %v2613, 0.0
    %v2615 = vsub.f32 %v2614, %v1614
    %v2616 = vsub.f32 0.0, %v1590
    %v2617 = vmul.f32 %v1613, %v1614
    %v2618 = vadd.f32 %v2616, %v2617
    %v2619 = vadd.f32 %v2618, 1.0
    %v2620 = vadd.f32 %v2619, %v2615
    %v2621 = vmul.f32 %v2620, 0.1
    %v2622 = vadd.f32 %v1590, %v2621
    %v2623 = vrcp.pop %v1613
    %v2624 = vsub.f32 0.0, %v1602
    %v2625 = vmul.f32 %v2624, 0.5
    %v2626 = vstv %s1611
    %v2627 = vmul.f32 %v2626, %v2596
    %v2628 = vadd.f32 %v2625, %v2627
    %v2629 = vstv %s1612
    %v2630 = vmul.f32 %v2629, %v2623
    %v2631 = vmul.f32 %v2630, %v2104
    %v2632 = vadd.f32 %v2628, %v2631
    %v2633 = vstv %s1609
    %v2634 = vmul.f32 %v2633, %v2593
    %v2635 = vadd.f32 %v2632, %v2634
    %v2636 = vadd.f32 %v1602, %v2635
    %v2637 = vmax.f32 %v2636, 0.0
    %2638 = vst.msk [vmem:[#allocation17 + $0x1] sm:$0x1] %vm1604, %v2637
    %2639 = vst.msk [vmem:[%s9 + $0x1] sm:$0x1] %vm1606, %v2622
    %2640 = vst.msk [vmem:[%s10 + $0x1] sm:$0x1] %vm1606, %v2613
    %s2641 = sld [smem:[#allocation3 + $0x2]]
    %s2642 = sld [smem:[#allocation8 + $0x2]]
    %s2643 = sld [smem:[#allocation9 + $0x2]]
    %s2644 = sld [smem:[#allocation11 + $0x2]]
    %v2645 = vmax.f32 %v2622, 0.0
    %v2646 = vmin.f32 %v2613, 1.0
    %v2647 = vld [vmem:[#allocation14] sm:$0xff]
    %v2648 = vld [vmem:[#allocation14 + $0x8] sm:$0xff]
    %v2649 = vld [vmem:[#allocation14 + $0x10] sm:$0xff]
    %v2650 = vld [vmem:[#allocation14 + $0x18] sm:$0xff]
    %v2652 = vsel %vm583, %v2637, 0
    %2654 = vmatprep.subr.mxu0 0.0
    %v2655 = vand.u32 %v2647, 4294901760
    %2656 = vmatpush1.msra.mxu0 %v2655
    %2657 = vmatprep.subr.mxu0 0.0
    %v2658 = vand.u32 %v2648, 4294901760
    %2659 = vmatpush1.msra.mxu0 %v2658
    %2660 = vmatprep.subr.mxu0 0.0
    %v2661 = vand.u32 %v2649, 4294901760
    %2662 = vmatpush1.msra.mxu0 %v2661
    %2663 = vmatprep.subr.mxu0 0.0
    %v2664 = vand.u32 %v2650, 4294901760
    %2665 = vmatpush1.msra.mxu0 %v2664
    %2666 = vmatprep.subr.mxu0 0.0
    %2667 = vmatpush1.msra.mxu0 0.0
    %2668 = vmatprep.subr.mxu0 0.0
    %2669 = vmatpush1.msra.mxu0 0.0
    %2670 = vmatprep.subr.mxu0 0.0
    %2671 = vmatpush1.msra.mxu0 0.0
    %2672 = vmatprep.subr.mxu0 0.0
    %2673 = vmatpush1.msra.mxu0 0.0
    %2674 = vmatprep.subr.mxu0 0.0
    %2675 = vmatpush1.msra.mxu0 0.0
    %2676 = vmatprep.subr.mxu0 0.0
    %2677 = vmatpush1.msra.mxu0 0.0
    %2678 = vmatprep.subr.mxu0 0.0
    %2679 = vmatpush1.msra.mxu0 0.0
    %2680 = vmatprep.subr.mxu0 0.0
    %2681 = vmatpush1.msra.mxu0 0.0
    %2682 = vmatprep.subr.mxu0 0.0
    %2683 = vmatpush1.msra.mxu0 0.0
    %2684 = vmatprep.subr.mxu0 0.0
    %2685 = vmatpush1.msra.mxu0 0.0
    %2686 = vmatprep.subr.mxu0 0.0
    %2687 = vmatpush1.msra.mxu0 0.0
    %2688 = vmatprep.subr.mxu0 0.0
    %2689 = vmatpush1.msra.mxu0 0.0
    %2690 = vmatprep.subr.mxu0 0.0
    %2691 = vmatpush1.msra.mxu0 0.0
    %2692 = vmatprep.subr.mxu0 0.0
    %2693 = vmatpush1.msra.mxu0 0.0
    %2694 = vmatprep.subr.mxu0 0.0
    %2695 = vmatpush1.msra.mxu0 0.0
    %2696 = vmatprep.subr.mxu0 0.0
    %2697 = vmatpush1.msra.mxu0 0.0
    %2698 = vmatprep.subr.mxu0 0.0
    %2699 = vmatpush1.msra.mxu0 0.0
    %2700 = vmatprep.subr.mxu0 0.0
    %2701 = vmatpush1.msra.mxu0 0.0
    %2702 = vmatprep.subr.mxu0 0.0
    %2703 = vmatpush1.msra.mxu0 0.0
    %2704 = vmatprep.subr.mxu0 0.0
    %2705 = vmatpush1.msra.mxu0 0.0
    %2706 = vmatprep.subr.mxu0 0.0
    %2707 = vmatpush1.msra.mxu0 0.0
    %2708 = vmatprep.subr.mxu0 0.0
    %2709 = vmatpush1.msra.mxu0 0.0
    %2710 = vmatprep.subr.mxu0 0.0
    %2711 = vmatpush1.msra.mxu0 0.0
    %2712 = vmatprep.subr.mxu0 0.0
    %2713 = vmatpush1.msra.mxu0 0.0
    %2714 = vmatprep.subr.mxu0 0.0
    %2715 = vmatpush1.msra.mxu0 0.0
    %2716 = vmatprep.subr.mxu0 0.0
    %2717 = vmatpush1.msra.mxu0 0.0
    %2718 = vmatprep.subr.mxu0 0.0
    %2719 = vmatpush1.msra.mxu0 0.0
    %2720 = vmatprep.subr.mxu0 0.0
    %2721 = vmatpush1.msra.mxu0 0.0
    %2722 = vmatprep.mubr.f32.mxu0 0.0
    %v2723 = vand.u32 %v2652, 4294901760
    %v2724 = vsub.f32 %v2652, %v2723
    %v2725 = vand.u32 %v2724, 4294901760
    %v2726 = vsub.f32 %v2724, %v2725
    %v2727 = vand.u32 %v2726, 4294901760
    %2728 = vmatmul.mubr.f32.gmra.mrb[0].mxu0 %v2727
    %v2729 = vpop.f32.mrb[0].mxu0
    %v2730 = vadd.f32 0.0, %v2729
    %v2731 = vpop.f32.mrb[0].mxu0
    %2732 = vdwg.mxu0
    %2733 = vmatprep.subr.mxu0 0.0
    %v2734 = vand.u32 %v2647, 4294901760
    %v2735 = vsub.f32 %v2647, %v2734
    %v2736 = vand.u32 %v2735, 4294901760
    %v2737 = vsub.f32 %v2735, %v2736
    %v2738 = vand.u32 %v2737, 4294901760
    %2739 = vmatpush1.msra.mxu0 %v2738
    %2740 = vmatprep.subr.mxu0 0.0
    %v2741 = vand.u32 %v2648, 4294901760
    %v2742 = vsub.f32 %v2648, %v2741
    %v2743 = vand.u32 %v2742, 4294901760
    %v2744 = vsub.f32 %v2742, %v2743
    %v2745 = vand.u32 %v2744, 4294901760
    %2746 = vmatpush1.msra.mxu0 %v2745
    %2747 = vmatprep.subr.mxu0 0.0
    %v2748 = vand.u32 %v2649, 4294901760
    %v2749 = vsub.f32 %v2649, %v2748
    %v2750 = vand.u32 %v2749, 4294901760
    %v2751 = vsub.f32 %v2749, %v2750
    %v2752 = vand.u32 %v2751, 4294901760
    %2753 = vmatpush1.msra.mxu0 %v2752
    %2754 = vmatprep.subr.mxu0 0.0
    %v2755 = vand.u32 %v2650, 4294901760
    %v2756 = vsub.f32 %v2650, %v2755
    %v2757 = vand.u32 %v2756, 4294901760
    %v2758 = vsub.f32 %v2756, %v2757
    %v2759 = vand.u32 %v2758, 4294901760
    %2760 = vmatpush1.msra.mxu0 %v2759
    %2761 = vmatprep.subr.mxu0 0.0
    %2762 = vmatpush1.msra.mxu0 0.0
    %2763 = vmatprep.subr.mxu0 0.0
    %2764 = vmatpush1.msra.mxu0 0.0
    %2765 = vmatprep.subr.mxu0 0.0
    %2766 = vmatpush1.msra.mxu0 0.0
    %2767 = vmatprep.subr.mxu0 0.0
    %2768 = vmatpush1.msra.mxu0 0.0
    %2769 = vmatprep.subr.mxu0 0.0
    %2770 = vmatpush1.msra.mxu0 0.0
    %2771 = vmatprep.subr.mxu0 0.0
    %2772 = vmatpush1.msra.mxu0 0.0
    %2773 = vmatprep.subr.mxu0 0.0
    %2774 = vmatpush1.msra.mxu0 0.0
    %2775 = vmatprep.subr.mxu0 0.0
    %2776 = vmatpush1.msra.mxu0 0.0
    %2777 = vmatprep.subr.mxu0 0.0
    %2778 = vmatpush1.msra.mxu0 0.0
    %2779 = vmatprep.subr.mxu0 0.0
    %2780 = vmatpush1.msra.mxu0 0.0
    %2781 = vmatprep.subr.mxu0 0.0
    %2782 = vmatpush1.msra.mxu0 0.0
    %2783 = vmatprep.subr.mxu0 0.0
    %2784 = vmatpush1.msra.mxu0 0.0
    %2785 = vmatprep.subr.mxu0 0.0
    %2786 = vmatpush1.msra.mxu0 0.0
    %2787 = vmatprep.subr.mxu0 0.0
    %2788 = vmatpush1.msra.mxu0 0.0
    %2789 = vmatprep.subr.mxu0 0.0
    %2790 = vmatpush1.msra.mxu0 0.0
    %2791 = vmatprep.subr.mxu0 0.0
    %2792 = vmatpush1.msra.mxu0 0.0
    %2793 = vmatprep.subr.mxu0 0.0
    %2794 = vmatpush1.msra.mxu0 0.0
    %2795 = vmatprep.subr.mxu0 0.0
    %2796 = vmatpush1.msra.mxu0 0.0
    %2797 = vmatprep.subr.mxu0 0.0
    %2798 = vmatpush1.msra.mxu0 0.0
    %2799 = vmatprep.subr.mxu0 0.0
    %2800 = vmatpush1.msra.mxu0 0.0
    %2801 = vmatprep.subr.mxu0 0.0
    %2802 = vmatpush1.msra.mxu0 0.0
    %2803 = vmatprep.subr.mxu0 0.0
    %2804 = vmatpush1.msra.mxu0 0.0
    %2805 = vmatprep.subr.mxu0 0.0
    %2806 = vmatpush1.msra.mxu0 0.0
    %2807 = vmatprep.subr.mxu0 0.0
    %2808 = vmatpush1.msra.mxu0 0.0
    %2809 = vmatprep.subr.mxu0 0.0
    %2810 = vmatpush1.msra.mxu0 0.0
    %2811 = vmatprep.subr.mxu0 0.0
    %2812 = vmatpush1.msra.mxu0 0.0
    %2813 = vmatprep.subr.mxu0 0.0
    %2814 = vmatpush1.msra.mxu0 0.0
    %2815 = vmatprep.subr.mxu0 0.0
    %2816 = vmatpush1.msra.mxu0 0.0
    %2817 = vmatprep.mubr.f32.mxu0 0.0
    %v2818 = vand.u32 %v2652, 4294901760
    %2819 = vmatmul.mubr.f32.gmra.mrb[0].mxu0 %v2818
    %v2820 = vpop.f32.mrb[0].mxu0
    %v2821 = vadd.f32 %v2730, %v2820
    %v2822 = vpop.f32.mrb[0].mxu0
    %2823 = vdwg.mxu0
    %2824 = vmatprep.subr.mxu0 0.0
    %v2825 = vand.u32 %v2647, 4294901760
    %v2826 = vsub.f32 %v2647, %v2825
    %2827 = vmatpush1.msra.mxu0 %v2826
    %2828 = vmatprep.subr.mxu0 0.0
    %v2829 = vand.u32 %v2648, 4294901760
    %v2830 = vsub.f32 %v2648, %v2829
    %2831 = vmatpush1.msra.mxu0 %v2830
    %2832 = vmatprep.subr.mxu0 0.0
    %v2833 = vand.u32 %v2649, 4294901760
    %v2834 = vsub.f32 %v2649, %v2833
    %2835 = vmatpush1.msra.mxu0 %v2834
    %2836 = vmatprep.subr.mxu0 0.0
    %v2837 = vand.u32 %v2650, 4294901760
    %v2838 = vsub.f32 %v2650, %v2837
    %2839 = vmatpush1.msra.mxu0 %v2838
    %2840 = vmatprep.subr.mxu0 0.0
    %2841 = vmatpush1.msra.mxu0 0.0
    %2842 = vmatprep.subr.mxu0 0.0
    %2843 = vmatpush1.msra.mxu0 0.0
    %2844 = vmatprep.subr.mxu0 0.0
    %2845 = vmatpush1.msra.mxu0 0.0
    %2846 = vmatprep.subr.mxu0 0.0
    %2847 = vmatpush1.msra.mxu0 0.0
    %2848 = vmatprep.subr.mxu0 0.0
    %2849 = vmatpush1.msra.mxu0 0.0
    %2850 = vmatprep.subr.mxu0 0.0
    %2851 = vmatpush1.msra.mxu0 0.0
    %2852 = vmatprep.subr.mxu0 0.0
    %2853 = vmatpush1.msra.mxu0 0.0
    %2854 = vmatprep.subr.mxu0 0.0
    %2855 = vmatpush1.msra.mxu0 0.0
    %2856 = vmatprep.subr.mxu0 0.0
    %2857 = vmatpush1.msra.mxu0 0.0
    %2858 = vmatprep.subr.mxu0 0.0
    %2859 = vmatpush1.msra.mxu0 0.0
    %2860 = vmatprep.subr.mxu0 0.0
    %2861 = vmatpush1.msra.mxu0 0.0
    %2862 = vmatprep.subr.mxu0 0.0
    %2863 = vmatpush1.msra.mxu0 0.0
    %2864 = vmatprep.subr.mxu0 0.0
    %2865 = vmatpush1.msra.mxu0 0.0
    %2866 = vmatprep.subr.mxu0 0.0
    %2867 = vmatpush1.msra.mxu0 0.0
    %2868 = vmatprep.subr.mxu0 0.0
    %2869 = vmatpush1.msra.mxu0 0.0
    %2870 = vmatprep.subr.mxu0 0.0
    %2871 = vmatpush1.msra.mxu0 0.0
    %2872 = vmatprep.subr.mxu0 0.0
    %2873 = vmatpush1.msra.mxu0 0.0
    %2874 = vmatprep.subr.mxu0 0.0
    %2875 = vmatpush1.msra.mxu0 0.0
    %2876 = vmatprep.subr.mxu0 0.0
    %2877 = vmatpush1.msra.mxu0 0.0
    %2878 = vmatprep.subr.mxu0 0.0
    %2879 = vmatpush1.msra.mxu0 0.0
    %2880 = vmatprep.subr.mxu0 0.0
    %2881 = vmatpush1.msra.mxu0 0.0
    %2882 = vmatprep.subr.mxu0 0.0
    %2883 = vmatpush1.msra.mxu0 0.0
    %2884 = vmatprep.subr.mxu0 0.0
    %2885 = vmatpush1.msra.mxu0 0.0
    %2886 = vmatprep.subr.mxu0 0.0
    %2887 = vmatpush1.msra.mxu0 0.0
    %2888 = vmatprep.subr.mxu0 0.0
    %2889 = vmatpush1.msra.mxu0 0.0
    %2890 = vmatprep.subr.mxu0 0.0
    %2891 = vmatpush1.msra.mxu0 0.0
    %2892 = vmatprep.subr.mxu0 0.0
    %2893 = vmatpush1.msra.mxu0 0.0
    %2894 = vmatprep.subr.mxu0 0.0
    %2895 = vmatpush1.msra.mxu0 0.0
    %2896 = vmatprep.mubr.f32.mxu0 0.0
    %v2897 = vand.u32 %v2652, 4294901760
    %v2898 = vsub.f32 %v2652, %v2897
    %2899 = vmatmul.mubr.f32.gmra.mrb[0].mxu0 %v2898
    %v2900 = vpop.f32.mrb[0].mxu0
    %v2901 = vadd.f32 %v2821, %v2900
    %v2902 = vpop.f32.mrb[0].mxu0
    %2903 = vdwg.mxu0
    %2904 = vmatprep.subr.mxu0 0.0
    %v2905 = vand.u32 %v2647, 4294901760
    %2906 = vmatpush1.msra.mxu0 %v2905
    %2907 = vmatprep.subr.mxu0 0.0
    %v2908 = vand.u32 %v2648, 4294901760
    %2909 = vmatpush1.msra.mxu0 %v2908
    %2910 = vmatprep.subr.mxu0 0.0
    %v2911 = vand.u32 %v2649, 4294901760
    %2912 = vmatpush1.msra.mxu0 %v2911
    %2913 = vmatprep.subr.mxu0 0.0
    %v2914 = vand.u32 %v2650, 4294901760
    %2915 = vmatpush1.msra.mxu0 %v2914
    %2916 = vmatprep.subr.mxu0 0.0
    %2917 = vmatpush1.msra.mxu0 0.0
    %2918 = vmatprep.subr.mxu0 0.0
    %2919 = vmatpush1.msra.mxu0 0.0
    %2920 = vmatprep.subr.mxu0 0.0
    %2921 = vmatpush1.msra.mxu0 0.0
    %2922 = vmatprep.subr.mxu0 0.0
    %2923 = vmatpush1.msra.mxu0 0.0
    %2924 = vmatprep.subr.mxu0 0.0
    %2925 = vmatpush1.msra.mxu0 0.0
    %2926 = vmatprep.subr.mxu0 0.0
    %2927 = vmatpush1.msra.mxu0 0.0
    %2928 = vmatprep.subr.mxu0 0.0
    %2929 = vmatpush1.msra.mxu0 0.0
    %2930 = vmatprep.subr.mxu0 0.0
    %2931 = vmatpush1.msra.mxu0 0.0
    %2932 = vmatprep.subr.mxu0 0.0
    %2933 = vmatpush1.msra.mxu0 0.0
    %2934 = vmatprep.subr.mxu0 0.0
    %2935 = vmatpush1.msra.mxu0 0.0
    %2936 = vmatprep.subr.mxu0 0.0
    %2937 = vmatpush1.msra.mxu0 0.0
    %2938 = vmatprep.subr.mxu0 0.0
    %2939 = vmatpush1.msra.mxu0 0.0
    %2940 = vmatprep.subr.mxu0 0.0
    %2941 = vmatpush1.msra.mxu0 0.0
    %2942 = vmatprep.subr.mxu0 0.0
    %2943 = vmatpush1.msra.mxu0 0.0
    %2944 = vmatprep.subr.mxu0 0.0
    %2945 = vmatpush1.msra.mxu0 0.0
    %2946 = vmatprep.subr.mxu0 0.0
    %2947 = vmatpush1.msra.mxu0 0.0
    %2948 = vmatprep.subr.mxu0 0.0
    %2949 = vmatpush1.msra.mxu0 0.0
    %2950 = vmatprep.subr.mxu0 0.0
    %2951 = vmatpush1.msra.mxu0 0.0
    %2952 = vmatprep.subr.mxu0 0.0
    %2953 = vmatpush1.msra.mxu0 0.0
    %2954 = vmatprep.subr.mxu0 0.0
    %2955 = vmatpush1.msra.mxu0 0.0
    %2956 = vmatprep.subr.mxu0 0.0
    %2957 = vmatpush1.msra.mxu0 0.0
    %2958 = vmatprep.subr.mxu0 0.0
    %2959 = vmatpush1.msra.mxu0 0.0
    %2960 = vmatprep.subr.mxu0 0.0
    %2961 = vmatpush1.msra.mxu0 0.0
    %2962 = vmatprep.subr.mxu0 0.0
    %2963 = vmatpush1.msra.mxu0 0.0
    %2964 = vmatprep.subr.mxu0 0.0
    %2965 = vmatpush1.msra.mxu0 0.0
    %2966 = vmatprep.subr.mxu0 0.0
    %2967 = vmatpush1.msra.mxu0 0.0
    %2968 = vmatprep.subr.mxu0 0.0
    %2969 = vmatpush1.msra.mxu0 0.0
    %2970 = vmatprep.subr.mxu0 0.0
    %2971 = vmatpush1.msra.mxu0 0.0
    %2972 = vmatprep.mubr.f32.mxu0 0.0
    %v2973 = vand.u32 %v2652, 4294901760
    %v2974 = vsub.f32 %v2652, %v2973
    %v2975 = vand.u32 %v2974, 4294901760
    %2976 = vmatmul.mubr.f32.gmra.mrb[0].mxu0 %v2975
    %v2977 = vpop.f32.mrb[0].mxu0
    %v2978 = vadd.f32 %v2901, %v2977
    %v2979 = vpop.f32.mrb[0].mxu0
    %2980 = vdwg.mxu0
    %2981 = vmatprep.subr.mxu0 0.0
    %v2982 = vand.u32 %v2647, 4294901760
    %v2983 = vsub.f32 %v2647, %v2982
    %v2984 = vand.u32 %v2983, 4294901760
    %2985 = vmatpush1.msra.mxu0 %v2984
    %2986 = vmatprep.subr.mxu0 0.0
    %v2987 = vand.u32 %v2648, 4294901760
    %v2988 = vsub.f32 %v2648, %v2987
    %v2989 = vand.u32 %v2988, 4294901760
    %2990 = vmatpush1.msra.mxu0 %v2989
    %2991 = vmatprep.subr.mxu0 0.0
    %v2992 = vand.u32 %v2649, 4294901760
    %v2993 = vsub.f32 %v2649, %v2992
    %v2994 = vand.u32 %v2993, 4294901760
    %2995 = vmatpush1.msra.mxu0 %v2994
    %2996 = vmatprep.subr.mxu0 0.0
    %v2997 = vand.u32 %v2650, 4294901760
    %v2998 = vsub.f32 %v2650, %v2997
    %v2999 = vand.u32 %v2998, 4294901760
    %3000 = vmatpush1.msra.mxu0 %v2999
    %3001 = vmatprep.subr.mxu0 0.0
    %3002 = vmatpush1.msra.mxu0 0.0
    %3003 = vmatprep.subr.mxu0 0.0
    %3004 = vmatpush1.msra.mxu0 0.0
    %3005 = vmatprep.subr.mxu0 0.0
    %3006 = vmatpush1.msra.mxu0 0.0
    %3007 = vmatprep.subr.mxu0 0.0
    %3008 = vmatpush1.msra.mxu0 0.0
    %3009 = vmatprep.subr.mxu0 0.0
    %3010 = vmatpush1.msra.mxu0 0.0
    %3011 = vmatprep.subr.mxu0 0.0
    %3012 = vmatpush1.msra.mxu0 0.0
    %3013 = vmatprep.subr.mxu0 0.0
    %3014 = vmatpush1.msra.mxu0 0.0
    %3015 = vmatprep.subr.mxu0 0.0
    %3016 = vmatpush1.msra.mxu0 0.0
    %3017 = vmatprep.subr.mxu0 0.0
    %3018 = vmatpush1.msra.mxu0 0.0
    %3019 = vmatprep.subr.mxu0 0.0
    %3020 = vmatpush1.msra.mxu0 0.0
    %3021 = vmatprep.subr.mxu0 0.0
    %3022 = vmatpush1.msra.mxu0 0.0
    %3023 = vmatprep.subr.mxu0 0.0
    %3024 = vmatpush1.msra.mxu0 0.0
    %3025 = vmatprep.subr.mxu0 0.0
    %3026 = vmatpush1.msra.mxu0 0.0
    %3027 = vmatprep.subr.mxu0 0.0
    %3028 = vmatpush1.msra.mxu0 0.0
    %3029 = vmatprep.subr.mxu0 0.0
    %3030 = vmatpush1.msra.mxu0 0.0
    %3031 = vmatprep.subr.mxu0 0.0
    %3032 = vmatpush1.msra.mxu0 0.0
    %3033 = vmatprep.subr.mxu0 0.0
    %3034 = vmatpush1.msra.mxu0 0.0
    %3035 = vmatprep.subr.mxu0 0.0
    %3036 = vmatpush1.msra.mxu0 0.0
    %3037 = vmatprep.subr.mxu0 0.0
    %3038 = vmatpush1.msra.mxu0 0.0
    %3039 = vmatprep.subr.mxu0 0.0
    %3040 = vmatpush1.msra.mxu0 0.0
    %3041 = vmatprep.subr.mxu0 0.0
    %3042 = vmatpush1.msra.mxu0 0.0
    %3043 = vmatprep.subr.mxu0 0.0
    %3044 = vmatpush1.msra.mxu0 0.0
    %3045 = vmatprep.subr.mxu0 0.0
    %3046 = vmatpush1.msra.mxu0 0.0
    %3047 = vmatprep.subr.mxu0 0.0
    %3048 = vmatpush1.msra.mxu0 0.0
    %3049 = vmatprep.subr.mxu0 0.0
    %3050 = vmatpush1.msra.mxu0 0.0
    %3051 = vmatprep.subr.mxu0 0.0
    %3052 = vmatpush1.msra.mxu0 0.0
    %3053 = vmatprep.subr.mxu0 0.0
    %3054 = vmatpush1.msra.mxu0 0.0
    %3055 = vmatprep.subr.mxu0 0.0
    %3056 = vmatpush1.msra.mxu0 0.0
    %3057 = vmatprep.mubr.f32.mxu0 0.0
    %v3058 = vand.u32 %v2652, 4294901760
    %3059 = vmatmul.mubr.f32.gmra.mrb[0].mxu0 %v3058
    %v3060 = vpop.f32.mrb[0].mxu0
    %v3061 = vadd.f32 %v2978, %v3060
    %v3062 = vpop.f32.mrb[0].mxu0
    %3063 = vdwg.mxu0
    %3064 = vmatprep.subr.mxu0 0.0
    %v3065 = vand.u32 %v2647, 4294901760
    %3066 = vmatpush1.msra.mxu0 %v3065
    %3067 = vmatprep.subr.mxu0 0.0
    %v3068 = vand.u32 %v2648, 4294901760
    %3069 = vmatpush1.msra.mxu0 %v3068
    %3070 = vmatprep.subr.mxu0 0.0
    %v3071 = vand.u32 %v2649, 4294901760
    %3072 = vmatpush1.msra.mxu0 %v3071
    %3073 = vmatprep.subr.mxu0 0.0
    %v3074 = vand.u32 %v2650, 4294901760
    %3075 = vmatpush1.msra.mxu0 %v3074
    %3076 = vmatprep.subr.mxu0 0.0
    %3077 = vmatpush1.msra.mxu0 0.0
    %3078 = vmatprep.subr.mxu0 0.0
    %3079 = vmatpush1.msra.mxu0 0.0
    %3080 = vmatprep.subr.mxu0 0.0
    %3081 = vmatpush1.msra.mxu0 0.0
    %3082 = vmatprep.subr.mxu0 0.0
    %3083 = vmatpush1.msra.mxu0 0.0
    %3084 = vmatprep.subr.mxu0 0.0
    %3085 = vmatpush1.msra.mxu0 0.0
    %3086 = vmatprep.subr.mxu0 0.0
    %3087 = vmatpush1.msra.mxu0 0.0
    %3088 = vmatprep.subr.mxu0 0.0
    %3089 = vmatpush1.msra.mxu0 0.0
    %3090 = vmatprep.subr.mxu0 0.0
    %3091 = vmatpush1.msra.mxu0 0.0
    %3092 = vmatprep.subr.mxu0 0.0
    %3093 = vmatpush1.msra.mxu0 0.0
    %3094 = vmatprep.subr.mxu0 0.0
    %3095 = vmatpush1.msra.mxu0 0.0
    %3096 = vmatprep.subr.mxu0 0.0
    %3097 = vmatpush1.msra.mxu0 0.0
    %3098 = vmatprep.subr.mxu0 0.0
    %3099 = vmatpush1.msra.mxu0 0.0
    %3100 = vmatprep.subr.mxu0 0.0
    %3101 = vmatpush1.msra.mxu0 0.0
    %3102 = vmatprep.subr.mxu0 0.0
    %3103 = vmatpush1.msra.mxu0 0.0
    %3104 = vmatprep.subr.mxu0 0.0
    %3105 = vmatpush1.msra.mxu0 0.0
    %3106 = vmatprep.subr.mxu0 0.0
    %3107 = vmatpush1.msra.mxu0 0.0
    %3108 = vmatprep.subr.mxu0 0.0
    %3109 = vmatpush1.msra.mxu0 0.0
    %3110 = vmatprep.subr.mxu0 0.0
    %3111 = vmatpush1.msra.mxu0 0.0
    %3112 = vmatprep.subr.mxu0 0.0
    %3113 = vmatpush1.msra.mxu0 0.0
    %3114 = vmatprep.subr.mxu0 0.0
    %3115 = vmatpush1.msra.mxu0 0.0
    %3116 = vmatprep.subr.mxu0 0.0
    %3117 = vmatpush1.msra.mxu0 0.0
    %3118 = vmatprep.subr.mxu0 0.0
    %3119 = vmatpush1.msra.mxu0 0.0
    %3120 = vmatprep.subr.mxu0 0.0
    %3121 = vmatpush1.msra.mxu0 0.0
    %3122 = vmatprep.subr.mxu0 0.0
    %3123 = vmatpush1.msra.mxu0 0.0
    %3124 = vmatprep.subr.mxu0 0.0
    %3125 = vmatpush1.msra.mxu0 0.0
    %3126 = vmatprep.subr.mxu0 0.0
    %3127 = vmatpush1.msra.mxu0 0.0
    %3128 = vmatprep.subr.mxu0 0.0
    %3129 = vmatpush1.msra.mxu0 0.0
    %3130 = vmatprep.subr.mxu0 0.0
    %3131 = vmatpush1.msra.mxu0 0.0
    %3132 = vmatprep.mubr.f32.mxu0 0.0
    %v3133 = vand.u32 %v2652, 4294901760
    %3134 = vmatmul.mubr.f32.gmra.mrb[0].mxu0 %v3133
    %v3135 = vpop.f32.mrb[0].mxu0
    %v3136 = vadd.f32 %v3061, %v3135
    %v3137 = vpop.f32.mrb[0].mxu0
    %3138 = vdwg.mxu0
    %v3139 = vld [vmem:[#allocation16] sm:$0xff]
    %v3140 = vld [vmem:[#allocation16 + $0x8] sm:$0xff]
    %v3141 = vld [vmem:[#allocation16 + $0x10] sm:$0xff]
    %v3142 = vld [vmem:[#allocation16 + $0x18] sm:$0xff]
    %3143 = vmatprep.subr.mxu0 0.0
    %v3144 = vand.u32 %v3139, 4294901760
    %3145 = vmatpush1.msra.mxu0 %v3144
    %3146 = vmatprep.subr.mxu0 0.0
    %v3147 = vand.u32 %v3140, 4294901760
    %3148 = vmatpush1.msra.mxu0 %v3147
    %3149 = vmatprep.subr.mxu0 0.0
    %v3150 = vand.u32 %v3141, 4294901760
    %3151 = vmatpush1.msra.mxu0 %v3150
    %3152 = vmatprep.subr.mxu0 0.0
    %v3153 = vand.u32 %v3142, 4294901760
    %3154 = vmatpush1.msra.mxu0 %v3153
    %3155 = vmatprep.subr.mxu0 0.0
    %3156 = vmatpush1.msra.mxu0 0.0
    %3157 = vmatprep.subr.mxu0 0.0
    %3158 = vmatpush1.msra.mxu0 0.0
    %3159 = vmatprep.subr.mxu0 0.0
    %3160 = vmatpush1.msra.mxu0 0.0
    %3161 = vmatprep.subr.mxu0 0.0
    %3162 = vmatpush1.msra.mxu0 0.0
    %3163 = vmatprep.subr.mxu0 0.0
    %3164 = vmatpush1.msra.mxu0 0.0
    %3165 = vmatprep.subr.mxu0 0.0
    %3166 = vmatpush1.msra.mxu0 0.0
    %3167 = vmatprep.subr.mxu0 0.0
    %3168 = vmatpush1.msra.mxu0 0.0
    %3169 = vmatprep.subr.mxu0 0.0
    %3170 = vmatpush1.msra.mxu0 0.0
    %3171 = vmatprep.subr.mxu0 0.0
    %3172 = vmatpush1.msra.mxu0 0.0
    %3173 = vmatprep.subr.mxu0 0.0
    %3174 = vmatpush1.msra.mxu0 0.0
    %3175 = vmatprep.subr.mxu0 0.0
    %3176 = vmatpush1.msra.mxu0 0.0
    %3177 = vmatprep.subr.mxu0 0.0
    %3178 = vmatpush1.msra.mxu0 0.0
    %3179 = vmatprep.subr.mxu0 0.0
    %3180 = vmatpush1.msra.mxu0 0.0
    %3181 = vmatprep.subr.mxu0 0.0
    %3182 = vmatpush1.msra.mxu0 0.0
    %3183 = vmatprep.subr.mxu0 0.0
    %3184 = vmatpush1.msra.mxu0 0.0
    %3185 = vmatprep.subr.mxu0 0.0
    %3186 = vmatpush1.msra.mxu0 0.0
    %3187 = vmatprep.subr.mxu0 0.0
    %3188 = vmatpush1.msra.mxu0 0.0
    %3189 = vmatprep.subr.mxu0 0.0
    %3190 = vmatpush1.msra.mxu0 0.0
    %3191 = vmatprep.subr.mxu0 0.0
    %3192 = vmatpush1.msra.mxu0 0.0
    %3193 = vmatprep.subr.mxu0 0.0
    %3194 = vmatpush1.msra.mxu0 0.0
    %3195 = vmatprep.subr.mxu0 0.0
    %3196 = vmatpush1.msra.mxu0 0.0
    %3197 = vmatprep.subr.mxu0 0.0
    %3198 = vmatpush1.msra.mxu0 0.0
    %3199 = vmatprep.subr.mxu0 0.0
    %3200 = vmatpush1.msra.mxu0 0.0
    %3201 = vmatprep.subr.mxu0 0.0
    %3202 = vmatpush1.msra.mxu0 0.0
    %3203 = vmatprep.subr.mxu0 0.0
    %3204 = vmatpush1.msra.mxu0 0.0
    %3205 = vmatprep.subr.mxu0 0.0
    %3206 = vmatpush1.msra.mxu0 0.0
    %3207 = vmatprep.subr.mxu0 0.0
    %3208 = vmatpush1.msra.mxu0 0.0
    %3209 = vmatprep.subr.mxu0 0.0
    %3210 = vmatpush1.msra.mxu0 0.0
    %3211 = vmatprep.mubr.f32.mxu0 0.0
    %v3212 = vand.u32 %v2652, 4294901760
    %v3213 = vsub.f32 %v2652, %v3212
    %v3214 = vand.u32 %v3213, 4294901760
    %v3215 = vsub.f32 %v3213, %v3214
    %v3216 = vand.u32 %v3215, 4294901760
    %3217 = vmatmul.mubr.f32.gmra.mrb[0].mxu0 %v3216
    %v3218 = vpop.f32.mrb[0].mxu0
    %v3219 = vadd.f32 0.0, %v3218
    %v3220 = vpop.f32.mrb[0].mxu0
    %3221 = vdwg.mxu0
    %3222 = vmatprep.subr.mxu0 0.0
    %v3223 = vand.u32 %v3139, 4294901760
    %v3224 = vsub.f32 %v3139, %v3223
    %v3225 = vand.u32 %v3224, 4294901760
    %v3226 = vsub.f32 %v3224, %v3225
    %v3227 = vand.u32 %v3226, 4294901760
    %3228 = vmatpush1.msra.mxu0 %v3227
    %3229 = vmatprep.subr.mxu0 0.0
    %v3230 = vand.u32 %v3140, 4294901760
    %v3231 = vsub.f32 %v3140, %v3230
    %v3232 = vand.u32 %v3231, 4294901760
    %v3233 = vsub.f32 %v3231, %v3232
    %v3234 = vand.u32 %v3233, 4294901760
    %3235 = vmatpush1.msra.mxu0 %v3234
    %3236 = vmatprep.subr.mxu0 0.0
    %v3237 = vand.u32 %v3141, 4294901760
    %v3238 = vsub.f32 %v3141, %v3237
    %v3239 = vand.u32 %v3238, 4294901760
    %v3240 = vsub.f32 %v3238, %v3239
    %v3241 = vand.u32 %v3240, 4294901760
    %3242 = vmatpush1.msra.mxu0 %v3241
    %3243 = vmatprep.subr.mxu0 0.0
    %v3244 = vand.u32 %v3142, 4294901760
    %v3245 = vsub.f32 %v3142, %v3244
    %v3246 = vand.u32 %v3245, 4294901760
    %v3247 = vsub.f32 %v3245, %v3246
    %v3248 = vand.u32 %v3247, 4294901760
    %3249 = vmatpush1.msra.mxu0 %v3248
    %3250 = vmatprep.subr.mxu0 0.0
    %3251 = vmatpush1.msra.mxu0 0.0
    %3252 = vmatprep.subr.mxu0 0.0
    %3253 = vmatpush1.msra.mxu0 0.0
    %3254 = vmatprep.subr.mxu0 0.0
    %3255 = vmatpush1.msra.mxu0 0.0
    %3256 = vmatprep.subr.mxu0 0.0
    %3257 = vmatpush1.msra.mxu0 0.0
    %3258 = vmatprep.subr.mxu0 0.0
    %3259 = vmatpush1.msra.mxu0 0.0
    %3260 = vmatprep.subr.mxu0 0.0
    %3261 = vmatpush1.msra.mxu0 0.0
    %3262 = vmatprep.subr.mxu0 0.0
    %3263 = vmatpush1.msra.mxu0 0.0
    %3264 = vmatprep.subr.mxu0 0.0
    %3265 = vmatpush1.msra.mxu0 0.0
    %3266 = vmatprep.subr.mxu0 0.0
    %3267 = vmatpush1.msra.mxu0 0.0
    %3268 = vmatprep.subr.mxu0 0.0
    %3269 = vmatpush1.msra.mxu0 0.0
    %3270 = vmatprep.subr.mxu0 0.0
    %3271 = vmatpush1.msra.mxu0 0.0
    %3272 = vmatprep.subr.mxu0 0.0
    %3273 = vmatpush1.msra.mxu0 0.0
    %3274 = vmatprep.subr.mxu0 0.0
    %3275 = vmatpush1.msra.mxu0 0.0
    %3276 = vmatprep.subr.mxu0 0.0
    %3277 = vmatpush1.msra.mxu0 0.0
    %3278 = vmatprep.subr.mxu0 0.0
    %3279 = vmatpush1.msra.mxu0 0.0
    %3280 = vmatprep.subr.mxu0 0.0
    %3281 = vmatpush1.msra.mxu0 0.0
    %3282 = vmatprep.subr.mxu0 0.0
    %3283 = vmatpush1.msra.mxu0 0.0
    %3284 = vmatprep.subr.mxu0 0.0
    %3285 = vmatpush1.msra.mxu0 0.0
    %3286 = vmatprep.subr.mxu0 0.0
    %3287 = vmatpush1.msra.mxu0 0.0
    %3288 = vmatprep.subr.mxu0 0.0
    %3289 = vmatpush1.msra.mxu0 0.0
    %3290 = vmatprep.subr.mxu0 0.0
    %3291 = vmatpush1.msra.mxu0 0.0
    %3292 = vmatprep.subr.mxu0 0.0
    %3293 = vmatpush1.msra.mxu0 0.0
    %3294 = vmatprep.subr.mxu0 0.0
    %3295 = vmatpush1.msra.mxu0 0.0
    %3296 = vmatprep.subr.mxu0 0.0
    %3297 = vmatpush1.msra.mxu0 0.0
    %3298 = vmatprep.subr.mxu0 0.0
    %3299 = vmatpush1.msra.mxu0 0.0
    %3300 = vmatprep.subr.mxu0 0.0
    %3301 = vmatpush1.msra.mxu0 0.0
    %3302 = vmatprep.subr.mxu0 0.0
    %3303 = vmatpush1.msra.mxu0 0.0
    %3304 = vmatprep.subr.mxu0 0.0
    %3305 = vmatpush1.msra.mxu0 0.0
    %3306 = vmatprep.mubr.f32.mxu0 0.0
    %v3307 = vand.u32 %v2652, 4294901760
    %3308 = vmatmul.mubr.f32.gmra.mrb[0].mxu0 %v3307
    %v3309 = vpop.f32.mrb[0].mxu0
    %v3310 = vadd.f32 %v3219, %v3309
    %v3311 = vpop.f32.mrb[0].mxu0
    %3312 = vdwg.mxu0
    %3313 = vmatprep.subr.mxu0 0.0
    %v3314 = vand.u32 %v3139, 4294901760
    %v3315 = vsub.f32 %v3139, %v3314
    %3316 = vmatpush1.msra.mxu0 %v3315
    %3317 = vmatprep.subr.mxu0 0.0
    %v3318 = vand.u32 %v3140, 4294901760
    %v3319 = vsub.f32 %v3140, %v3318
    %3320 = vmatpush1.msra.mxu0 %v3319
    %3321 = vmatprep.subr.mxu0 0.0
    %v3322 = vand.u32 %v3141, 4294901760
    %v3323 = vsub.f32 %v3141, %v3322
    %3324 = vmatpush1.msra.mxu0 %v3323
    %3325 = vmatprep.subr.mxu0 0.0
    %v3326 = vand.u32 %v3142, 4294901760
    %v3327 = vsub.f32 %v3142, %v3326
    %3328 = vmatpush1.msra.mxu0 %v3327
    %3329 = vmatprep.subr.mxu0 0.0
    %3330 = vmatpush1.msra.mxu0 0.0
    %3331 = vmatprep.subr.mxu0 0.0
    %3332 = vmatpush1.msra.mxu0 0.0
    %3333 = vmatprep.subr.mxu0 0.0
    %3334 = vmatpush1.msra.mxu0 0.0
    %3335 = vmatprep.subr.mxu0 0.0
    %3336 = vmatpush1.msra.mxu0 0.0
    %3337 = vmatprep.subr.mxu0 0.0
    %3338 = vmatpush1.msra.mxu0 0.0
    %3339 = vmatprep.subr.mxu0 0.0
    %3340 = vmatpush1.msra.mxu0 0.0
    %3341 = vmatprep.subr.mxu0 0.0
    %3342 = vmatpush1.msra.mxu0 0.0
    %3343 = vmatprep.subr.mxu0 0.0
    %3344 = vmatpush1.msra.mxu0 0.0
    %3345 = vmatprep.subr.mxu0 0.0
    %3346 = vmatpush1.msra.mxu0 0.0
    %3347 = vmatprep.subr.mxu0 0.0
    %3348 = vmatpush1.msra.mxu0 0.0
    %3349 = vmatprep.subr.mxu0 0.0
    %3350 = vmatpush1.msra.mxu0 0.0
    %3351 = vmatprep.subr.mxu0 0.0
    %3352 = vmatpush1.msra.mxu0 0.0
    %3353 = vmatprep.subr.mxu0 0.0
    %3354 = vmatpush1.msra.mxu0 0.0
    %3355 = vmatprep.subr.mxu0 0.0
    %3356 = vmatpush1.msra.mxu0 0.0
    %3357 = vmatprep.subr.mxu0 0.0
    %3358 = vmatpush1.msra.mxu0 0.0
    %3359 = vmatprep.subr.mxu0 0.0
    %3360 = vmatpush1.msra.mxu0 0.0
    %3361 = vmatprep.subr.mxu0 0.0
    %3362 = vmatpush1.msra.mxu0 0.0
    %3363 = vmatprep.subr.mxu0 0.0
    %3364 = vmatpush1.msra.mxu0 0.0
    %3365 = vmatprep.subr.mxu0 0.0
    %3366 = vmatpush1.msra.mxu0 0.0
    %3367 = vmatprep.subr.mxu0 0.0
    %3368 = vmatpush1.msra.mxu0 0.0
    %3369 = vmatprep.subr.mxu0 0.0
    %3370 = vmatpush1.msra.mxu0 0.0
    %3371 = vmatprep.subr.mxu0 0.0
    %3372 = vmatpush1.msra.mxu0 0.0
    %3373 = vmatprep.subr.mxu0 0.0
    %3374 = vmatpush1.msra.mxu0 0.0
    %3375 = vmatprep.subr.mxu0 0.0
    %3376 = vmatpush1.msra.mxu0 0.0
    %3377 = vmatprep.subr.mxu0 0.0
    %3378 = vmatpush1.msra.mxu0 0.0
    %3379 = vmatprep.subr.mxu0 0.0
    %3380 = vmatpush1.msra.mxu0 0.0
    %3381 = vmatprep.subr.mxu0 0.0
    %3382 = vmatpush1.msra.mxu0 0.0
    %3383 = vmatprep.subr.mxu0 0.0
    %3384 = vmatpush1.msra.mxu0 0.0
    %3385 = vmatprep.mubr.f32.mxu0 0.0
    %v3386 = vand.u32 %v2652, 4294901760
    %v3387 = vsub.f32 %v2652, %v3386
    %3388 = vmatmul.mubr.f32.gmra.mrb[0].mxu0 %v3387
    %v3389 = vpop.f32.mrb[0].mxu0
    %v3390 = vadd.f32 %v3310, %v3389
    %v3391 = vpop.f32.mrb[0].mxu0
    %3392 = vdwg.mxu0
    %3393 = vmatprep.subr.mxu0 0.0
    %v3394 = vand.u32 %v3139, 4294901760
    %3395 = vmatpush1.msra.mxu0 %v3394
    %3396 = vmatprep.subr.mxu0 0.0
    %v3397 = vand.u32 %v3140, 4294901760
    %3398 = vmatpush1.msra.mxu0 %v3397
    %3399 = vmatprep.subr.mxu0 0.0
    %v3400 = vand.u32 %v3141, 4294901760
    %3401 = vmatpush1.msra.mxu0 %v3400
    %3402 = vmatprep.subr.mxu0 0.0
    %v3403 = vand.u32 %v3142, 4294901760
    %3404 = vmatpush1.msra.mxu0 %v3403
    %3405 = vmatprep.subr.mxu0 0.0
    %3406 = vmatpush1.msra.mxu0 0.0
    %3407 = vmatprep.subr.mxu0 0.0
    %3408 = vmatpush1.msra.mxu0 0.0
    %3409 = vmatprep.subr.mxu0 0.0
    %3410 = vmatpush1.msra.mxu0 0.0
    %3411 = vmatprep.subr.mxu0 0.0
    %3412 = vmatpush1.msra.mxu0 0.0
    %3413 = vmatprep.subr.mxu0 0.0
    %3414 = vmatpush1.msra.mxu0 0.0
    %3415 = vmatprep.subr.mxu0 0.0
    %3416 = vmatpush1.msra.mxu0 0.0
    %3417 = vmatprep.subr.mxu0 0.0
    %3418 = vmatpush1.msra.mxu0 0.0
    %3419 = vmatprep.subr.mxu0 0.0
    %3420 = vmatpush1.msra.mxu0 0.0
    %3421 = vmatprep.subr.mxu0 0.0
    %3422 = vmatpush1.msra.mxu0 0.0
    %3423 = vmatprep.subr.mxu0 0.0
    %3424 = vmatpush1.msra.mxu0 0.0
    %3425 = vmatprep.subr.mxu0 0.0
    %3426 = vmatpush1.msra.mxu0 0.0
    %3427 = vmatprep.subr.mxu0 0.0
    %3428 = vmatpush1.msra.mxu0 0.0
    %3429 = vmatprep.subr.mxu0 0.0
    %3430 = vmatpush1.msra.mxu0 0.0
    %3431 = vmatprep.subr.mxu0 0.0
    %3432 = vmatpush1.msra.mxu0 0.0
    %3433 = vmatprep.subr.mxu0 0.0
    %3434 = vmatpush1.msra.mxu0 0.0
    %3435 = vmatprep.subr.mxu0 0.0
    %3436 = vmatpush1.msra.mxu0 0.0
    %3437 = vmatprep.subr.mxu0 0.0
    %3438 = vmatpush1.msra.mxu0 0.0
    %3439 = vmatprep.subr.mxu0 0.0
    %3440 = vmatpush1.msra.mxu0 0.0
    %3441 = vmatprep.subr.mxu0 0.0
    %3442 = vmatpush1.msra.mxu0 0.0
    %3443 = vmatprep.subr.mxu0 0.0
    %3444 = vmatpush1.msra.mxu0 0.0
    %3445 = vmatprep.subr.mxu0 0.0
    %3446 = vmatpush1.msra.mxu0 0.0
    %3447 = vmatprep.subr.mxu0 0.0
    %3448 = vmatpush1.msra.mxu0 0.0
    %3449 = vmatprep.subr.mxu0 0.0
    %3450 = vmatpush1.msra.mxu0 0.0
    %3451 = vmatprep.subr.mxu0 0.0
    %3452 = vmatpush1.msra.mxu0 0.0
    %3453 = vmatprep.subr.mxu0 0.0
    %3454 = vmatpush1.msra.mxu0 0.0
    %3455 = vmatprep.subr.mxu0 0.0
    %3456 = vmatpush1.msra.mxu0 0.0
    %3457 = vmatprep.subr.mxu0 0.0
    %3458 = vmatpush1.msra.mxu0 0.0
    %3459 = vmatprep.subr.mxu0 0.0
    %3460 = vmatpush1.msra.mxu0 0.0
    %3461 = vmatprep.mubr.f32.mxu0 0.0
    %v3462 = vand.u32 %v2652, 4294901760
    %v3463 = vsub.f32 %v2652, %v3462
    %v3464 = vand.u32 %v3463, 4294901760
    %3465 = vmatmul.mubr.f32.gmra.mrb[0].mxu0 %v3464
    %v3466 = vpop.f32.mrb[0].mxu0
    %v3467 = vadd.f32 %v3390, %v3466
    %v3468 = vpop.f32.mrb[0].mxu0
    %3469 = vdwg.mxu0
    %3470 = vmatprep.subr.mxu0 0.0
    %v3471 = vand.u32 %v3139, 4294901760
    %v3472 = vsub.f32 %v3139, %v3471
    %v3473 = vand.u32 %v3472, 4294901760
    %3474 = vmatpush1.msra.mxu0 %v3473
    %3475 = vmatprep.subr.mxu0 0.0
    %v3476 = vand.u32 %v3140, 4294901760
    %v3477 = vsub.f32 %v3140, %v3476
    %v3478 = vand.u32 %v3477, 4294901760
    %3479 = vmatpush1.msra.mxu0 %v3478
    %3480 = vmatprep.subr.mxu0 0.0
    %v3481 = vand.u32 %v3141, 4294901760
    %v3482 = vsub.f32 %v3141, %v3481
    %v3483 = vand.u32 %v3482, 4294901760
    %3484 = vmatpush1.msra.mxu0 %v3483
    %3485 = vmatprep.subr.mxu0 0.0
    %v3486 = vand.u32 %v3142, 4294901760
    %v3487 = vsub.f32 %v3142, %v3486
    %v3488 = vand.u32 %v3487, 4294901760
    %3489 = vmatpush1.msra.mxu0 %v3488
    %3490 = vmatprep.subr.mxu0 0.0
    %3491 = vmatpush1.msra.mxu0 0.0
    %3492 = vmatprep.subr.mxu0 0.0
    %3493 = vmatpush1.msra.mxu0 0.0
    %3494 = vmatprep.subr.mxu0 0.0
    %3495 = vmatpush1.msra.mxu0 0.0
    %3496 = vmatprep.subr.mxu0 0.0
    %3497 = vmatpush1.msra.mxu0 0.0
    %3498 = vmatprep.subr.mxu0 0.0
    %3499 = vmatpush1.msra.mxu0 0.0
    %3500 = vmatprep.subr.mxu0 0.0
    %3501 = vmatpush1.msra.mxu0 0.0
    %3502 = vmatprep.subr.mxu0 0.0
    %3503 = vmatpush1.msra.mxu0 0.0
    %3504 = vmatprep.subr.mxu0 0.0
    %3505 = vmatpush1.msra.mxu0 0.0
    %3506 = vmatprep.subr.mxu0 0.0
    %3507 = vmatpush1.msra.mxu0 0.0
    %3508 = vmatprep.subr.mxu0 0.0
    %3509 = vmatpush1.msra.mxu0 0.0
    %3510 = vmatprep.subr.mxu0 0.0
    %3511 = vmatpush1.msra.mxu0 0.0
    %3512 = vmatprep.subr.mxu0 0.0
    %3513 = vmatpush1.msra.mxu0 0.0
    %3514 = vmatprep.subr.mxu0 0.0
    %3515 = vmatpush1.msra.mxu0 0.0
    %3516 = vmatprep.subr.mxu0 0.0
    %3517 = vmatpush1.msra.mxu0 0.0
    %3518 = vmatprep.subr.mxu0 0.0
    %3519 = vmatpush1.msra.mxu0 0.0
    %3520 = vmatprep.subr.mxu0 0.0
    %3521 = vmatpush1.msra.mxu0 0.0
    %3522 = vmatprep.subr.mxu0 0.0
    %3523 = vmatpush1.msra.mxu0 0.0
    %3524 = vmatprep.subr.mxu0 0.0
    %3525 = vmatpush1.msra.mxu0 0.0
    %3526 = vmatprep.subr.mxu0 0.0
    %3527 = vmatpush1.msra.mxu0 0.0
    %3528 = vmatprep.subr.mxu0 0.0
    %3529 = vmatpush1.msra.mxu0 0.0
    %3530 = vmatprep.subr.mxu0 0.0
    %3531 = vmatpush1.msra.mxu0 0.0
    %3532 = vmatprep.subr.mxu0 0.0
    %3533 = vmatpush1.msra.mxu0 0.0
    %3534 = vmatprep.subr.mxu0 0.0
    %3535 = vmatpush1.msra.mxu0 0.0
    %3536 = vmatprep.subr.mxu0 0.0
    %3537 = vmatpush1.msra.mxu0 0.0
    %3538 = vmatprep.subr.mxu0 0.0
    %3539 = vmatpush1.msra.mxu0 0.0
    %3540 = vmatprep.subr.mxu0 0.0
    %3541 = vmatpush1.msra.mxu0 0.0
    %3542 = vmatprep.subr.mxu0 0.0
    %3543 = vmatpush1.msra.mxu0 0.0
    %3544 = vmatprep.subr.mxu0 0.0
    %3545 = vmatpush1.msra.mxu0 0.0
    %3546 = vmatprep.mubr.f32.mxu0 0.0
    %v3547 = vand.u32 %v2652, 4294901760
    %3548 = vmatmul.mubr.f32.gmra.mrb[0].mxu0 %v3547
    %v3549 = vpop.f32.mrb[0].mxu0
    %v3550 = vadd.f32 %v3467, %v3549
    %v3551 = vpop.f32.mrb[0].mxu0
    %3552 = vdwg.mxu0
    %3553 = vmatprep.subr.mxu0 0.0
    %v3554 = vand.u32 %v3139, 4294901760
    %3555 = vmatpush1.msra.mxu0 %v3554
    %3556 = vmatprep.subr.mxu0 0.0
    %v3557 = vand.u32 %v3140, 4294901760
    %3558 = vmatpush1.msra.mxu0 %v3557
    %3559 = vmatprep.subr.mxu0 0.0
    %v3560 = vand.u32 %v3141, 4294901760
    %3561 = vmatpush1.msra.mxu0 %v3560
    %3562 = vmatprep.subr.mxu0 0.0
    %v3563 = vand.u32 %v3142, 4294901760
    %3564 = vmatpush1.msra.mxu0 %v3563
    %3565 = vmatprep.subr.mxu0 0.0
    %3566 = vmatpush1.msra.mxu0 0.0
    %3567 = vmatprep.subr.mxu0 0.0
    %3568 = vmatpush1.msra.mxu0 0.0
    %3569 = vmatprep.subr.mxu0 0.0
    %3570 = vmatpush1.msra.mxu0 0.0
    %3571 = vmatprep.subr.mxu0 0.0
    %3572 = vmatpush1.msra.mxu0 0.0
    %3573 = vmatprep.subr.mxu0 0.0
    %3574 = vmatpush1.msra.mxu0 0.0
    %3575 = vmatprep.subr.mxu0 0.0
    %3576 = vmatpush1.msra.mxu0 0.0
    %3577 = vmatprep.subr.mxu0 0.0
    %3578 = vmatpush1.msra.mxu0 0.0
    %3579 = vmatprep.subr.mxu0 0.0
    %3580 = vmatpush1.msra.mxu0 0.0
    %3581 = vmatprep.subr.mxu0 0.0
    %3582 = vmatpush1.msra.mxu0 0.0
    %3583 = vmatprep.subr.mxu0 0.0
    %3584 = vmatpush1.msra.mxu0 0.0
    %3585 = vmatprep.subr.mxu0 0.0
    %3586 = vmatpush1.msra.mxu0 0.0
    %3587 = vmatprep.subr.mxu0 0.0
    %3588 = vmatpush1.msra.mxu0 0.0
    %3589 = vmatprep.subr.mxu0 0.0
    %3590 = vmatpush1.msra.mxu0 0.0
    %3591 = vmatprep.subr.mxu0 0.0
    %3592 = vmatpush1.msra.mxu0 0.0
    %3593 = vmatprep.subr.mxu0 0.0
    %3594 = vmatpush1.msra.mxu0 0.0
    %3595 = vmatprep.subr.mxu0 0.0
    %3596 = vmatpush1.msra.mxu0 0.0
    %3597 = vmatprep.subr.mxu0 0.0
    %3598 = vmatpush1.msra.mxu0 0.0
    %3599 = vmatprep.subr.mxu0 0.0
    %3600 = vmatpush1.msra.mxu0 0.0
    %3601 = vmatprep.subr.mxu0 0.0
    %3602 = vmatpush1.msra.mxu0 0.0
    %3603 = vmatprep.subr.mxu0 0.0
    %3604 = vmatpush1.msra.mxu0 0.0
    %3605 = vmatprep.subr.mxu0 0.0
    %3606 = vmatpush1.msra.mxu0 0.0
    %3607 = vmatprep.subr.mxu0 0.0
    %3608 = vmatpush1.msra.mxu0 0.0
    %3609 = vmatprep.subr.mxu0 0.0
    %3610 = vmatpush1.msra.mxu0 0.0
    %3611 = vmatprep.subr.mxu0 0.0
    %3612 = vmatpush1.msra.mxu0 0.0
    %3613 = vmatprep.subr.mxu0 0.0
    %3614 = vmatpush1.msra.mxu0 0.0
    %3615 = vmatprep.subr.mxu0 0.0
    %3616 = vmatpush1.msra.mxu0 0.0
    %3617 = vmatprep.subr.mxu0 0.0
    %3618 = vmatpush1.msra.mxu0 0.0
    %3619 = vmatprep.subr.mxu0 0.0
    %3620 = vmatpush1.msra.mxu0 0.0
    %3621 = vmatprep.mubr.f32.mxu0 0.0
    %v3622 = vand.u32 %v2652, 4294901760
    %3623 = vmatmul.mubr.f32.gmra.mrb[0].mxu0 %v3622
    %v3624 = vpop.f32.mrb[0].mxu0
    %v3625 = vadd.f32 %v3550, %v3624
    %v3626 = vpop.f32.mrb[0].mxu0
    %3627 = vdwg.mxu0
    %v3628 = vld [vmem:[#allocation2 + $0x2] sm:$0x1]
    %v3629 = vmul.f32 %v2637, %v2637
    %v3630 = vsel %vm1604, %v3629, 0.0
    %3631 = vadd.xlane.f32.xlu0 %v3630
    %v3632 = vpop.xlane.xlu0 %3631
    %s3633 = smul.f32 %s2642, 0.5
    %v3634 = vstv %s2642
    %v3635 = vadd.f32 %v3634, %v2646
    %v3636 = vrcp.pop %v3635
    %v3637 = vstv %s3633
    %v3638 = vmul.f32 %v3637, %v3636
    %v3639 = vsub.f32 0.0, %v2613
    %v3640 = vmul.f32 %v3638, %v3638
    %v3641 = vadd.f32 %v3632, %v3640
    %v3642 = vmul.f32 %v2613, %v3641
    %v3643 = vadd.f32 %v3639, %v3642
    %v3644 = vmul.f32 %v3643, 0.1
    %v3645 = vadd.f32 %v2613, %v3644
    %v3646 = vmax.f32 %v3645, 0.0
    %v3647 = vsub.f32 %v3646, %v2646
    %v3648 = vsub.f32 0.0, %v2622
    %v3649 = vmul.f32 %v2645, %v2646
    %v3650 = vadd.f32 %v3648, %v3649
    %v3651 = vadd.f32 %v3650, 1.0
    %v3652 = vadd.f32 %v3651, %v3647
    %v3653 = vmul.f32 %v3652, 0.1
    %v3654 = vadd.f32 %v2622, %v3653
    %v3655 = vrcp.pop %v2645
    %v3656 = vsub.f32 0.0, %v2636
    %v3657 = vmul.f32 %v3656, 0.5
    %v3658 = vstv %s2643
    %v3659 = vmul.f32 %v3658, %v3628
    %v3660 = vadd.f32 %v3657, %v3659
    %v3661 = vstv %s2644
    %v3662 = vmul.f32 %v3661, %v3655
    %v3663 = vmul.f32 %v3662, %v3136
    %v3664 = vadd.f32 %v3660, %v3663
    %v3665 = vstv %s2641
    %v3666 = vmul.f32 %v3665, %v3625
    %v3667 = vadd.f32 %v3664, %v3666
    %v3668 = vadd.f32 %v2636, %v3667
    %v3669 = vmax.f32 %v3668, 0.0
    %3670 = vst.msk [vmem:[#allocation17 + $0x2] sm:$0x1] %vm1604, %v3669
    %3671 = vst.msk [vmem:[%s9 + $0x2] sm:$0x1] %vm1606, %v3654
    %3672 = vst.msk [vmem:[%s10 + $0x2] sm:$0x1] %vm1606, %v3645
    %s3673 = sld [smem:[#allocation3 + $0x3]]
    %s3674 = sld [smem:[#allocation8 + $0x3]]
    %s3675 = sld [smem:[#allocation9 + $0x3]]
    %s3676 = sld [smem:[#allocation11 + $0x3]]
    %v3677 = vmax.f32 %v3654, 0.0
    %v3678 = vmin.f32 %v3645, 1.0
    %v3679 = vld [vmem:[#allocation14] sm:$0xff]
    %v3680 = vld [vmem:[#allocation14 + $0x8] sm:$0xff]
    %v3681 = vld [vmem:[#allocation14 + $0x10] sm:$0xff]
    %v3682 = vld [vmem:[#allocation14 + $0x18] sm:$0xff]
    %v3684 = vsel %vm583, %v3669, 0
    %3686 = vmatprep.subr.mxu0 0.0
    %v3687 = vand.u32 %v3679, 4294901760
    %3688 = vmatpush1.msra.mxu0 %v3687
    %3689 = vmatprep.subr.mxu0 0.0
    %v3690 = vand.u32 %v3680, 4294901760
    %3691 = vmatpush1.msra.mxu0 %v3690
    %3692 = vmatprep.subr.mxu0 0.0
    %v3693 = vand.u32 %v3681, 4294901760
    %3694 = vmatpush1.msra.mxu0 %v3693
    %3695 = vmatprep.subr.mxu0 0.0
    %v3696 = vand.u32 %v3682, 4294901760
    %3697 = vmatpush1.msra.mxu0 %v3696
    %3698 = vmatprep.subr.mxu0 0.0
    %3699 = vmatpush1.msra.mxu0 0.0
    %3700 = vmatprep.subr.mxu0 0.0
    %3701 = vmatpush1.msra.mxu0 0.0
    %3702 = vmatprep.subr.mxu0 0.0
    %3703 = vmatpush1.msra.mxu0 0.0
    %3704 = vmatprep.subr.mxu0 0.0
    %3705 = vmatpush1.msra.mxu0 0.0
    %3706 = vmatprep.subr.mxu0 0.0
    %3707 = vmatpush1.msra.mxu0 0.0
    %3708 = vmatprep.subr.mxu0 0.0
    %3709 = vmatpush1.msra.mxu0 0.0
    %3710 = vmatprep.subr.mxu0 0.0
    %3711 = vmatpush1.msra.mxu0 0.0
    %3712 = vmatprep.subr.mxu0 0.0
    %3713 = vmatpush1.msra.mxu0 0.0
    %3714 = vmatprep.subr.mxu0 0.0
    %3715 = vmatpush1.msra.mxu0 0.0
    %3716 = vmatprep.subr.mxu0 0.0
    %3717 = vmatpush1.msra.mxu0 0.0
    %3718 = vmatprep.subr.mxu0 0.0
    %3719 = vmatpush1.msra.mxu0 0.0
    %3720 = vmatprep.subr.mxu0 0.0
    %3721 = vmatpush1.msra.mxu0 0.0
    %3722 = vmatprep.subr.mxu0 0.0
    %3723 = vmatpush1.msra.mxu0 0.0
    %3724 = vmatprep.subr.mxu0 0.0
    %3725 = vmatpush1.msra.mxu0 0.0
    %3726 = vmatprep.subr.mxu0 0.0
    %3727 = vmatpush1.msra.mxu0 0.0
    %3728 = vmatprep.subr.mxu0 0.0
    %3729 = vmatpush1.msra.mxu0 0.0
    %3730 = vmatprep.subr.mxu0 0.0
    %3731 = vmatpush1.msra.mxu0 0.0
    %3732 = vmatprep.subr.mxu0 0.0
    %3733 = vmatpush1.msra.mxu0 0.0
    %3734 = vmatprep.subr.mxu0 0.0
    %3735 = vmatpush1.msra.mxu0 0.0
    %3736 = vmatprep.subr.mxu0 0.0
    %3737 = vmatpush1.msra.mxu0 0.0
    %3738 = vmatprep.subr.mxu0 0.0
    %3739 = vmatpush1.msra.mxu0 0.0
    %3740 = vmatprep.subr.mxu0 0.0
    %3741 = vmatpush1.msra.mxu0 0.0
    %3742 = vmatprep.subr.mxu0 0.0
    %3743 = vmatpush1.msra.mxu0 0.0
    %3744 = vmatprep.subr.mxu0 0.0
    %3745 = vmatpush1.msra.mxu0 0.0
    %3746 = vmatprep.subr.mxu0 0.0
    %3747 = vmatpush1.msra.mxu0 0.0
    %3748 = vmatprep.subr.mxu0 0.0
    %3749 = vmatpush1.msra.mxu0 0.0
    %3750 = vmatprep.subr.mxu0 0.0
    %3751 = vmatpush1.msra.mxu0 0.0
    %3752 = vmatprep.subr.mxu0 0.0
    %3753 = vmatpush1.msra.mxu0 0.0
    %3754 = vmatprep.mubr.f32.mxu0 0.0
    %v3755 = vand.u32 %v3684, 4294901760
    %v3756 = vsub.f32 %v3684, %v3755
    %v3757 = vand.u32 %v3756, 4294901760
    %v3758 = vsub.f32 %v3756, %v3757
    %v3759 = vand.u32 %v3758, 4294901760
    %3760 = vmatmul.mubr.f32.gmra.mrb[0].mxu0 %v3759
    %v3761 = vpop.f32.mrb[0].mxu0
    %v3762 = vadd.f32 0.0, %v3761
    %v3763 = vpop.f32.mrb[0].mxu0
    %3764 = vdwg.mxu0
    %3765 = vmatprep.subr.mxu0 0.0
    %v3766 = vand.u32 %v3679, 4294901760
    %v3767 = vsub.f32 %v3679, %v3766
    %v3768 = vand.u32 %v3767, 4294901760
    %v3769 = vsub.f32 %v3767, %v3768
    %v3770 = vand.u32 %v3769, 4294901760
    %3771 = vmatpush1.msra.mxu0 %v3770
    %3772 = vmatprep.subr.mxu0 0.0
    %v3773 = vand.u32 %v3680, 4294901760
    %v3774 = vsub.f32 %v3680, %v3773
    %v3775 = vand.u32 %v3774, 4294901760
    %v3776 = vsub.f32 %v3774, %v3775
    %v3777 = vand.u32 %v3776, 4294901760
    %3778 = vmatpush1.msra.mxu0 %v3777
    %3779 = vmatprep.subr.mxu0 0.0
    %v3780 = vand.u32 %v3681, 4294901760
    %v3781 = vsub.f32 %v3681, %v3780
    %v3782 = vand.u32 %v3781, 4294901760
    %v3783 = vsub.f32 %v3781, %v3782
    %v3784 = vand.u32 %v3783, 4294901760
    %3785 = vmatpush1.msra.mxu0 %v3784
    %3786 = vmatprep.subr.mxu0 0.0
    %v3787 = vand.u32 %v3682, 4294901760
    %v3788 = vsub.f32 %v3682, %v3787
    %v3789 = vand.u32 %v3788, 4294901760
    %v3790 = vsub.f32 %v3788, %v3789
    %v3791 = vand.u32 %v3790, 4294901760
    %3792 = vmatpush1.msra.mxu0 %v3791
    %3793 = vmatprep.subr.mxu0 0.0
    %3794 = vmatpush1.msra.mxu0 0.0
    %3795 = vmatprep.subr.mxu0 0.0
    %3796 = vmatpush1.msra.mxu0 0.0
    %3797 = vmatprep.subr.mxu0 0.0
    %3798 = vmatpush1.msra.mxu0 0.0
    %3799 = vmatprep.subr.mxu0 0.0
    %3800 = vmatpush1.msra.mxu0 0.0
    %3801 = vmatprep.subr.mxu0 0.0
    %3802 = vmatpush1.msra.mxu0 0.0
    %3803 = vmatprep.subr.mxu0 0.0
    %3804 = vmatpush1.msra.mxu0 0.0
    %3805 = vmatprep.subr.mxu0 0.0
    %3806 = vmatpush1.msra.mxu0 0.0
    %3807 = vmatprep.subr.mxu0 0.0
    %3808 = vmatpush1.msra.mxu0 0.0
    %3809 = vmatprep.subr.mxu0 0.0
    %3810 = vmatpush1.msra.mxu0 0.0
    %3811 = vmatprep.subr.mxu0 0.0
    %3812 = vmatpush1.msra.mxu0 0.0
    %3813 = vmatprep.subr.mxu0 0.0
    %3814 = vmatpush1.msra.mxu0 0.0
    %3815 = vmatprep.subr.mxu0 0.0
    %3816 = vmatpush1.msra.mxu0 0.0
    %3817 = vmatprep.subr.mxu0 0.0
    %3818 = vmatpush1.msra.mxu0 0.0
    %3819 = vmatprep.subr.mxu0 0.0
    %3820 = vmatpush1.msra.mxu0 0.0
    %3821 = vmatprep.subr.mxu0 0.0
    %3822 = vmatpush1.msra.mxu0 0.0
    %3823 = vmatprep.subr.mxu0 0.0
    %3824 = vmatpush1.msra.mxu0 0.0
    %3825 = vmatprep.subr.mxu0 0.0
    %3826 = vmatpush1.msra.mxu0 0.0
    %3827 = vmatprep.subr.mxu0 0.0
    %3828 = vmatpush1.msra.mxu0 0.0
    %3829 = vmatprep.subr.mxu0 0.0
    %3830 = vmatpush1.msra.mxu0 0.0
    %3831 = vmatprep.subr.mxu0 0.0
    %3832 = vmatpush1.msra.mxu0 0.0
    %3833 = vmatprep.subr.mxu0 0.0
    %3834 = vmatpush1.msra.mxu0 0.0
    %3835 = vmatprep.subr.mxu0 0.0
    %3836 = vmatpush1.msra.mxu0 0.0
    %3837 = vmatprep.subr.mxu0 0.0
    %3838 = vmatpush1.msra.mxu0 0.0
    %3839 = vmatprep.subr.mxu0 0.0
    %3840 = vmatpush1.msra.mxu0 0.0
    %3841 = vmatprep.subr.mxu0 0.0
    %3842 = vmatpush1.msra.mxu0 0.0
    %3843 = vmatprep.subr.mxu0 0.0
    %3844 = vmatpush1.msra.mxu0 0.0
    %3845 = vmatprep.subr.mxu0 0.0
    %3846 = vmatpush1.msra.mxu0 0.0
    %3847 = vmatprep.subr.mxu0 0.0
    %3848 = vmatpush1.msra.mxu0 0.0
    %3849 = vmatprep.mubr.f32.mxu0 0.0
    %v3850 = vand.u32 %v3684, 4294901760
    %3851 = vmatmul.mubr.f32.gmra.mrb[0].mxu0 %v3850
    %v3852 = vpop.f32.mrb[0].mxu0
    %v3853 = vadd.f32 %v3762, %v3852
    %v3854 = vpop.f32.mrb[0].mxu0
    %3855 = vdwg.mxu0
    %3856 = vmatprep.subr.mxu0 0.0
    %v3857 = vand.u32 %v3679, 4294901760
    %v3858 = vsub.f32 %v3679, %v3857
    %3859 = vmatpush1.msra.mxu0 %v3858
    %3860 = vmatprep.subr.mxu0 0.0
    %v3861 = vand.u32 %v3680, 4294901760
    %v3862 = vsub.f32 %v3680, %v3861
    %3863 = vmatpush1.msra.mxu0 %v3862
    %3864 = vmatprep.subr.mxu0 0.0
    %v3865 = vand.u32 %v3681, 4294901760
    %v3866 = vsub.f32 %v3681, %v3865
    %3867 = vmatpush1.msra.mxu0 %v3866
    %3868 = vmatprep.subr.mxu0 0.0
    %v3869 = vand.u32 %v3682, 4294901760
    %v3870 = vsub.f32 %v3682, %v3869
    %3871 = vmatpush1.msra.mxu0 %v3870
    %3872 = vmatprep.subr.mxu0 0.0
    %3873 = vmatpush1.msra.mxu0 0.0
    %3874 = vmatprep.subr.mxu0 0.0
    %3875 = vmatpush1.msra.mxu0 0.0
    %3876 = vmatprep.subr.mxu0 0.0
    %3877 = vmatpush1.msra.mxu0 0.0
    %3878 = vmatprep.subr.mxu0 0.0
    %3879 = vmatpush1.msra.mxu0 0.0
    %3880 = vmatprep.subr.mxu0 0.0
    %3881 = vmatpush1.msra.mxu0 0.0
    %3882 = vmatprep.subr.mxu0 0.0
    %3883 = vmatpush1.msra.mxu0 0.0
    %3884 = vmatprep.subr.mxu0 0.0
    %3885 = vmatpush1.msra.mxu0 0.0
    %3886 = vmatprep.subr.mxu0 0.0
    %3887 = vmatpush1.msra.mxu0 0.0
    %3888 = vmatprep.subr.mxu0 0.0
    %3889 = vmatpush1.msra.mxu0 0.0
    %3890 = vmatprep.subr.mxu0 0.0
    %3891 = vmatpush1.msra.mxu0 0.0
    %3892 = vmatprep.subr.mxu0 0.0
    %3893 = vmatpush1.msra.mxu0 0.0
    %3894 = vmatprep.subr.mxu0 0.0
    %3895 = vmatpush1.msra.mxu0 0.0
    %3896 = vmatprep.subr.mxu0 0.0
    %3897 = vmatpush1.msra.mxu0 0.0
    %3898 = vmatprep.subr.mxu0 0.0
    %3899 = vmatpush1.msra.mxu0 0.0
    %3900 = vmatprep.subr.mxu0 0.0
    %3901 = vmatpush1.msra.mxu0 0.0
    %3902 = vmatprep.subr.mxu0 0.0
    %3903 = vmatpush1.msra.mxu0 0.0
    %3904 = vmatprep.subr.mxu0 0.0
    %3905 = vmatpush1.msra.mxu0 0.0
    %3906 = vmatprep.subr.mxu0 0.0
    %3907 = vmatpush1.msra.mxu0 0.0
    %3908 = vmatprep.subr.mxu0 0.0
    %3909 = vmatpush1.msra.mxu0 0.0
    %3910 = vmatprep.subr.mxu0 0.0
    %3911 = vmatpush1.msra.mxu0 0.0
    %3912 = vmatprep.subr.mxu0 0.0
    %3913 = vmatpush1.msra.mxu0 0.0
    %3914 = vmatprep.subr.mxu0 0.0
    %3915 = vmatpush1.msra.mxu0 0.0
    %3916 = vmatprep.subr.mxu0 0.0
    %3917 = vmatpush1.msra.mxu0 0.0
    %3918 = vmatprep.subr.mxu0 0.0
    %3919 = vmatpush1.msra.mxu0 0.0
    %3920 = vmatprep.subr.mxu0 0.0
    %3921 = vmatpush1.msra.mxu0 0.0
    %3922 = vmatprep.subr.mxu0 0.0
    %3923 = vmatpush1.msra.mxu0 0.0
    %3924 = vmatprep.subr.mxu0 0.0
    %3925 = vmatpush1.msra.mxu0 0.0
    %3926 = vmatprep.subr.mxu0 0.0
    %3927 = vmatpush1.msra.mxu0 0.0
    %3928 = vmatprep.mubr.f32.mxu0 0.0
    %v3929 = vand.u32 %v3684, 4294901760
    %v3930 = vsub.f32 %v3684, %v3929
    %3931 = vmatmul.mubr.f32.gmra.mrb[0].mxu0 %v3930
    %v3932 = vpop.f32.mrb[0].mxu0
    %v3933 = vadd.f32 %v3853, %v3932
    %v3934 = vpop.f32.mrb[0].mxu0
    %3935 = vdwg.mxu0
    %3936 = vmatprep.subr.mxu0 0.0
    %v3937 = vand.u32 %v3679, 4294901760
    %3938 = vmatpush1.msra.mxu0 %v3937
    %3939 = vmatprep.subr.mxu0 0.0
    %v3940 = vand.u32 %v3680, 4294901760
    %3941 = vmatpush1.msra.mxu0 %v3940
    %3942 = vmatprep.subr.mxu0 0.0
    %v3943 = vand.u32 %v3681, 4294901760
    %3944 = vmatpush1.msra.mxu0 %v3943
    %3945 = vmatprep.subr.mxu0 0.0
    %v3946 = vand.u32 %v3682, 4294901760
    %3947 = vmatpush1.msra.mxu0 %v3946
    %3948 = vmatprep.subr.mxu0 0.0
    %3949 = vmatpush1.msra.mxu0 0.0
    %3950 = vmatprep.subr.mxu0 0.0
    %3951 = vmatpush1.msra.mxu0 0.0
    %3952 = vmatprep.subr.mxu0 0.0
    %3953 = vmatpush1.msra.mxu0 0.0
    %3954 = vmatprep.subr.mxu0 0.0
    %3955 = vmatpush1.msra.mxu0 0.0
    %3956 = vmatprep.subr.mxu0 0.0
    %3957 = vmatpush1.msra.mxu0 0.0
    %3958 = vmatprep.subr.mxu0 0.0
    %3959 = vmatpush1.msra.mxu0 0.0
    %3960 = vmatprep.subr.mxu0 0.0
    %3961 = vmatpush1.msra.mxu0 0.0
    %3962 = vmatprep.subr.mxu0 0.0
    %3963 = vmatpush1.msra.mxu0 0.0
    %3964 = vmatprep.subr.mxu0 0.0
    %3965 = vmatpush1.msra.mxu0 0.0
    %3966 = vmatprep.subr.mxu0 0.0
    %3967 = vmatpush1.msra.mxu0 0.0
    %3968 = vmatprep.subr.mxu0 0.0
    %3969 = vmatpush1.msra.mxu0 0.0
    %3970 = vmatprep.subr.mxu0 0.0
    %3971 = vmatpush1.msra.mxu0 0.0
    %3972 = vmatprep.subr.mxu0 0.0
    %3973 = vmatpush1.msra.mxu0 0.0
    %3974 = vmatprep.subr.mxu0 0.0
    %3975 = vmatpush1.msra.mxu0 0.0
    %3976 = vmatprep.subr.mxu0 0.0
    %3977 = vmatpush1.msra.mxu0 0.0
    %3978 = vmatprep.subr.mxu0 0.0
    %3979 = vmatpush1.msra.mxu0 0.0
    %3980 = vmatprep.subr.mxu0 0.0
    %3981 = vmatpush1.msra.mxu0 0.0
    %3982 = vmatprep.subr.mxu0 0.0
    %3983 = vmatpush1.msra.mxu0 0.0
    %3984 = vmatprep.subr.mxu0 0.0
    %3985 = vmatpush1.msra.mxu0 0.0
    %3986 = vmatprep.subr.mxu0 0.0
    %3987 = vmatpush1.msra.mxu0 0.0
    %3988 = vmatprep.subr.mxu0 0.0
    %3989 = vmatpush1.msra.mxu0 0.0
    %3990 = vmatprep.subr.mxu0 0.0
    %3991 = vmatpush1.msra.mxu0 0.0
    %3992 = vmatprep.subr.mxu0 0.0
    %3993 = vmatpush1.msra.mxu0 0.0
    %3994 = vmatprep.subr.mxu0 0.0
    %3995 = vmatpush1.msra.mxu0 0.0
    %3996 = vmatprep.subr.mxu0 0.0
    %3997 = vmatpush1.msra.mxu0 0.0
    %3998 = vmatprep.subr.mxu0 0.0
    %3999 = vmatpush1.msra.mxu0 0.0
    %4000 = vmatprep.subr.mxu0 0.0
    %4001 = vmatpush1.msra.mxu0 0.0
    %4002 = vmatprep.subr.mxu0 0.0
    %4003 = vmatpush1.msra.mxu0 0.0
    %4004 = vmatprep.mubr.f32.mxu0 0.0
    %v4005 = vand.u32 %v3684, 4294901760
    %v4006 = vsub.f32 %v3684, %v4005
    %v4007 = vand.u32 %v4006, 4294901760
    %4008 = vmatmul.mubr.f32.gmra.mrb[0].mxu0 %v4007
    %v4009 = vpop.f32.mrb[0].mxu0
    %v4010 = vadd.f32 %v3933, %v4009
    %v4011 = vpop.f32.mrb[0].mxu0
    %4012 = vdwg.mxu0
    %4013 = vmatprep.subr.mxu0 0.0
    %v4014 = vand.u32 %v3679, 4294901760
    %v4015 = vsub.f32 %v3679, %v4014
    %v4016 = vand.u32 %v4015, 4294901760
    %4017 = vmatpush1.msra.mxu0 %v4016
    %4018 = vmatprep.subr.mxu0 0.0
    %v4019 = vand.u32 %v3680, 4294901760
    %v4020 = vsub.f32 %v3680, %v4019
    %v4021 = vand.u32 %v4020, 4294901760
    %4022 = vmatpush1.msra.mxu0 %v4021
    %4023 = vmatprep.subr.mxu0 0.0
    %v4024 = vand.u32 %v3681, 4294901760
    %v4025 = vsub.f32 %v3681, %v4024
    %v4026 = vand.u32 %v4025, 4294901760
    %4027 = vmatpush1.msra.mxu0 %v4026
    %4028 = vmatprep.subr.mxu0 0.0
    %v4029 = vand.u32 %v3682, 4294901760
    %v4030 = vsub.f32 %v3682, %v4029
    %v4031 = vand.u32 %v4030, 4294901760
    %4032 = vmatpush1.msra.mxu0 %v4031
    %4033 = vmatprep.subr.mxu0 0.0
    %4034 = vmatpush1.msra.mxu0 0.0
    %4035 = vmatprep.subr.mxu0 0.0
    %4036 = vmatpush1.msra.mxu0 0.0
    %4037 = vmatprep.subr.mxu0 0.0
    %4038 = vmatpush1.msra.mxu0 0.0
    %4039 = vmatprep.subr.mxu0 0.0
    %4040 = vmatpush1.msra.mxu0 0.0
    %4041 = vmatprep.subr.mxu0 0.0
    %4042 = vmatpush1.msra.mxu0 0.0
    %4043 = vmatprep.subr.mxu0 0.0
    %4044 = vmatpush1.msra.mxu0 0.0
    %4045 = vmatprep.subr.mxu0 0.0
    %4046 = vmatpush1.msra.mxu0 0.0
    %4047 = vmatprep.subr.mxu0 0.0
    %4048 = vmatpush1.msra.mxu0 0.0
    %4049 = vmatprep.subr.mxu0 0.0
    %4050 = vmatpush1.msra.mxu0 0.0
    %4051 = vmatprep.subr.mxu0 0.0
    %4052 = vmatpush1.msra.mxu0 0.0
    %4053 = vmatprep.subr.mxu0 0.0
    %4054 = vmatpush1.msra.mxu0 0.0
    %4055 = vmatprep.subr.mxu0 0.0
    %4056 = vmatpush1.msra.mxu0 0.0
    %4057 = vmatprep.subr.mxu0 0.0
    %4058 = vmatpush1.msra.mxu0 0.0
    %4059 = vmatprep.subr.mxu0 0.0
    %4060 = vmatpush1.msra.mxu0 0.0
    %4061 = vmatprep.subr.mxu0 0.0
    %4062 = vmatpush1.msra.mxu0 0.0
    %4063 = vmatprep.subr.mxu0 0.0
    %4064 = vmatpush1.msra.mxu0 0.0
    %4065 = vmatprep.subr.mxu0 0.0
    %4066 = vmatpush1.msra.mxu0 0.0
    %4067 = vmatprep.subr.mxu0 0.0
    %4068 = vmatpush1.msra.mxu0 0.0
    %4069 = vmatprep.subr.mxu0 0.0
    %4070 = vmatpush1.msra.mxu0 0.0
    %4071 = vmatprep.subr.mxu0 0.0
    %4072 = vmatpush1.msra.mxu0 0.0
    %4073 = vmatprep.subr.mxu0 0.0
    %4074 = vmatpush1.msra.mxu0 0.0
    %4075 = vmatprep.subr.mxu0 0.0
    %4076 = vmatpush1.msra.mxu0 0.0
    %4077 = vmatprep.subr.mxu0 0.0
    %4078 = vmatpush1.msra.mxu0 0.0
    %4079 = vmatprep.subr.mxu0 0.0
    %4080 = vmatpush1.msra.mxu0 0.0
    %4081 = vmatprep.subr.mxu0 0.0
    %4082 = vmatpush1.msra.mxu0 0.0
    %4083 = vmatprep.subr.mxu0 0.0
    %4084 = vmatpush1.msra.mxu0 0.0
    %4085 = vmatprep.subr.mxu0 0.0
    %4086 = vmatpush1.msra.mxu0 0.0
    %4087 = vmatprep.subr.mxu0 0.0
    %4088 = vmatpush1.msra.mxu0 0.0
    %4089 = vmatprep.mubr.f32.mxu0 0.0
    %v4090 = vand.u32 %v3684, 4294901760
    %4091 = vmatmul.mubr.f32.gmra.mrb[0].mxu0 %v4090
    %v4092 = vpop.f32.mrb[0].mxu0
    %v4093 = vadd.f32 %v4010, %v4092
    %v4094 = vpop.f32.mrb[0].mxu0
    %4095 = vdwg.mxu0
    %4096 = vmatprep.subr.mxu0 0.0
    %v4097 = vand.u32 %v3679, 4294901760
    %4098 = vmatpush1.msra.mxu0 %v4097
    %4099 = vmatprep.subr.mxu0 0.0
    %v4100 = vand.u32 %v3680, 4294901760
    %4101 = vmatpush1.msra.mxu0 %v4100
    %4102 = vmatprep.subr.mxu0 0.0
    %v4103 = vand.u32 %v3681, 4294901760
    %4104 = vmatpush1.msra.mxu0 %v4103
    %4105 = vmatprep.subr.mxu0 0.0
    %v4106 = vand.u32 %v3682, 4294901760
    %4107 = vmatpush1.msra.mxu0 %v4106
    %4108 = vmatprep.subr.mxu0 0.0
    %4109 = vmatpush1.msra.mxu0 0.0
    %4110 = vmatprep.subr.mxu0 0.0
    %4111 = vmatpush1.msra.mxu0 0.0
    %4112 = vmatprep.subr.mxu0 0.0
    %4113 = vmatpush1.msra.mxu0 0.0
    %4114 = vmatprep.subr.mxu0 0.0
    %4115 = vmatpush1.msra.mxu0 0.0
    %4116 = vmatprep.subr.mxu0 0.0
    %4117 = vmatpush1.msra.mxu0 0.0
    %4118 = vmatprep.subr.mxu0 0.0
    %4119 = vmatpush1.msra.mxu0 0.0
    %4120 = vmatprep.subr.mxu0 0.0
    %4121 = vmatpush1.msra.mxu0 0.0
    %4122 = vmatprep.subr.mxu0 0.0
    %4123 = vmatpush1.msra.mxu0 0.0
    %4124 = vmatprep.subr.mxu0 0.0
    %4125 = vmatpush1.msra.mxu0 0.0
    %4126 = vmatprep.subr.mxu0 0.0
    %4127 = vmatpush1.msra.mxu0 0.0
    %4128 = vmatprep.subr.mxu0 0.0
    %4129 = vmatpush1.msra.mxu0 0.0
    %4130 = vmatprep.subr.mxu0 0.0
    %4131 = vmatpush1.msra.mxu0 0.0
    %4132 = vmatprep.subr.mxu0 0.0
    %4133 = vmatpush1.msra.mxu0 0.0
    %4134 = vmatprep.subr.mxu0 0.0
    %4135 = vmatpush1.msra.mxu0 0.0
    %4136 = vmatprep.subr.mxu0 0.0
    %4137 = vmatpush1.msra.mxu0 0.0
    %4138 = vmatprep.subr.mxu0 0.0
    %4139 = vmatpush1.msra.mxu0 0.0
    %4140 = vmatprep.subr.mxu0 0.0
    %4141 = vmatpush1.msra.mxu0 0.0
    %4142 = vmatprep.subr.mxu0 0.0
    %4143 = vmatpush1.msra.mxu0 0.0
    %4144 = vmatprep.subr.mxu0 0.0
    %4145 = vmatpush1.msra.mxu0 0.0
    %4146 = vmatprep.subr.mxu0 0.0
    %4147 = vmatpush1.msra.mxu0 0.0
    %4148 = vmatprep.subr.mxu0 0.0
    %4149 = vmatpush1.msra.mxu0 0.0
    %4150 = vmatprep.subr.mxu0 0.0
    %4151 = vmatpush1.msra.mxu0 0.0
    %4152 = vmatprep.subr.mxu0 0.0
    %4153 = vmatpush1.msra.mxu0 0.0
    %4154 = vmatprep.subr.mxu0 0.0
    %4155 = vmatpush1.msra.mxu0 0.0
    %4156 = vmatprep.subr.mxu0 0.0
    %4157 = vmatpush1.msra.mxu0 0.0
    %4158 = vmatprep.subr.mxu0 0.0
    %4159 = vmatpush1.msra.mxu0 0.0
    %4160 = vmatprep.subr.mxu0 0.0
    %4161 = vmatpush1.msra.mxu0 0.0
    %4162 = vmatprep.subr.mxu0 0.0
    %4163 = vmatpush1.msra.mxu0 0.0
    %4164 = vmatprep.mubr.f32.mxu0 0.0
    %v4165 = vand.u32 %v3684, 4294901760
    %4166 = vmatmul.mubr.f32.gmra.mrb[0].mxu0 %v4165
    %v4167 = vpop.f32.mrb[0].mxu0
    %v4168 = vadd.f32 %v4093, %v4167
    %v4169 = vpop.f32.mrb[0].mxu0
    %4170 = vdwg.mxu0
    %v4171 = vld [vmem:[#allocation16] sm:$0xff]
    %v4172 = vld [vmem:[#allocation16 + $0x8] sm:$0xff]
    %v4173 = vld [vmem:[#allocation16 + $0x10] sm:$0xff]
    %v4174 = vld [vmem:[#allocation16 + $0x18] sm:$0xff]
    %4175 = vmatprep.subr.mxu0 0.0
    %v4176 = vand.u32 %v4171, 4294901760
    %4177 = vmatpush1.msra.mxu0 %v4176
    %4178 = vmatprep.subr.mxu0 0.0
    %v4179 = vand.u32 %v4172, 4294901760
    %4180 = vmatpush1.msra.mxu0 %v4179
    %4181 = vmatprep.subr.mxu0 0.0
    %v4182 = vand.u32 %v4173, 4294901760
    %4183 = vmatpush1.msra.mxu0 %v4182
    %4184 = vmatprep.subr.mxu0 0.0
    %v4185 = vand.u32 %v4174, 4294901760
    %4186 = vmatpush1.msra.mxu0 %v4185
    %4187 = vmatprep.subr.mxu0 0.0
    %4188 = vmatpush1.msra.mxu0 0.0
    %4189 = vmatprep.subr.mxu0 0.0
    %4190 = vmatpush1.msra.mxu0 0.0
    %4191 = vmatprep.subr.mxu0 0.0
    %4192 = vmatpush1.msra.mxu0 0.0
    %4193 = vmatprep.subr.mxu0 0.0
    %4194 = vmatpush1.msra.mxu0 0.0
    %4195 = vmatprep.subr.mxu0 0.0
    %4196 = vmatpush1.msra.mxu0 0.0
    %4197 = vmatprep.subr.mxu0 0.0
    %4198 = vmatpush1.msra.mxu0 0.0
    %4199 = vmatprep.subr.mxu0 0.0
    %4200 = vmatpush1.msra.mxu0 0.0
    %4201 = vmatprep.subr.mxu0 0.0
    %4202 = vmatpush1.msra.mxu0 0.0
    %4203 = vmatprep.subr.mxu0 0.0
    %4204 = vmatpush1.msra.mxu0 0.0
    %4205 = vmatprep.subr.mxu0 0.0
    %4206 = vmatpush1.msra.mxu0 0.0
    %4207 = vmatprep.subr.mxu0 0.0
    %4208 = vmatpush1.msra.mxu0 0.0
    %4209 = vmatprep.subr.mxu0 0.0
    %4210 = vmatpush1.msra.mxu0 0.0
    %4211 = vmatprep.subr.mxu0 0.0
    %4212 = vmatpush1.msra.mxu0 0.0
    %4213 = vmatprep.subr.mxu0 0.0
    %4214 = vmatpush1.msra.mxu0 0.0
    %4215 = vmatprep.subr.mxu0 0.0
    %4216 = vmatpush1.msra.mxu0 0.0
    %4217 = vmatprep.subr.mxu0 0.0
    %4218 = vmatpush1.msra.mxu0 0.0
    %4219 = vmatprep.subr.mxu0 0.0
    %4220 = vmatpush1.msra.mxu0 0.0
    %4221 = vmatprep.subr.mxu0 0.0
    %4222 = vmatpush1.msra.mxu0 0.0
    %4223 = vmatprep.subr.mxu0 0.0
    %4224 = vmatpush1.msra.mxu0 0.0
    %4225 = vmatprep.subr.mxu0 0.0
    %4226 = vmatpush1.msra.mxu0 0.0
    %4227 = vmatprep.subr.mxu0 0.0
    %4228 = vmatpush1.msra.mxu0 0.0
    %4229 = vmatprep.subr.mxu0 0.0
    %4230 = vmatpush1.msra.mxu0 0.0
    %4231 = vmatprep.subr.mxu0 0.0
    %4232 = vmatpush1.msra.mxu0 0.0
    %4233 = vmatprep.subr.mxu0 0.0
    %4234 = vmatpush1.msra.mxu0 0.0
    %4235 = vmatprep.subr.mxu0 0.0
    %4236 = vmatpush1.msra.mxu0 0.0
    %4237 = vmatprep.subr.mxu0 0.0
    %4238 = vmatpush1.msra.mxu0 0.0
    %4239 = vmatprep.subr.mxu0 0.0
    %4240 = vmatpush1.msra.mxu0 0.0
    %4241 = vmatprep.subr.mxu0 0.0
    %4242 = vmatpush1.msra.mxu0 0.0
    %4243 = vmatprep.mubr.f32.mxu0 0.0
    %v4244 = vand.u32 %v3684, 4294901760
    %v4245 = vsub.f32 %v3684, %v4244
    %v4246 = vand.u32 %v4245, 4294901760
    %v4247 = vsub.f32 %v4245, %v4246
    %v4248 = vand.u32 %v4247, 4294901760
    %4249 = vmatmul.mubr.f32.gmra.mrb[0].mxu0 %v4248
    %v4250 = vpop.f32.mrb[0].mxu0
    %v4251 = vadd.f32 0.0, %v4250
    %v4252 = vpop.f32.mrb[0].mxu0
    %4253 = vdwg.mxu0
    %4254 = vmatprep.subr.mxu0 0.0
    %v4255 = vand.u32 %v4171, 4294901760
    %v4256 = vsub.f32 %v4171, %v4255
    %v4257 = vand.u32 %v4256, 4294901760
    %v4258 = vsub.f32 %v4256, %v4257
    %v4259 = vand.u32 %v4258, 4294901760
    %4260 = vmatpush1.msra.mxu0 %v4259
    %4261 = vmatprep.subr.mxu0 0.0
    %v4262 = vand.u32 %v4172, 4294901760
    %v4263 = vsub.f32 %v4172, %v4262
    %v4264 = vand.u32 %v4263, 4294901760
    %v4265 = vsub.f32 %v4263, %v4264
    %v4266 = vand.u32 %v4265, 4294901760
    %4267 = vmatpush1.msra.mxu0 %v4266
    %4268 = vmatprep.subr.mxu0 0.0
    %v4269 = vand.u32 %v4173, 4294901760
    %v4270 = vsub.f32 %v4173, %v4269
    %v4271 = vand.u32 %v4270, 4294901760
    %v4272 = vsub.f32 %v4270, %v4271
    %v4273 = vand.u32 %v4272, 4294901760
    %4274 = vmatpush1.msra.mxu0 %v4273
    %4275 = vmatprep.subr.mxu0 0.0
    %v4276 = vand.u32 %v4174, 4294901760
    %v4277 = vsub.f32 %v4174, %v4276
    %v4278 = vand.u32 %v4277, 4294901760
    %v4279 = vsub.f32 %v4277, %v4278
    %v4280 = vand.u32 %v4279, 4294901760
    %4281 = vmatpush1.msra.mxu0 %v4280
    %4282 = vmatprep.subr.mxu0 0.0
    %4283 = vmatpush1.msra.mxu0 0.0
    %4284 = vmatprep.subr.mxu0 0.0
    %4285 = vmatpush1.msra.mxu0 0.0
    %4286 = vmatprep.subr.mxu0 0.0
    %4287 = vmatpush1.msra.mxu0 0.0
    %4288 = vmatprep.subr.mxu0 0.0
    %4289 = vmatpush1.msra.mxu0 0.0
    %4290 = vmatprep.subr.mxu0 0.0
    %4291 = vmatpush1.msra.mxu0 0.0
    %4292 = vmatprep.subr.mxu0 0.0
    %4293 = vmatpush1.msra.mxu0 0.0
    %4294 = vmatprep.subr.mxu0 0.0
    %4295 = vmatpush1.msra.mxu0 0.0
    %4296 = vmatprep.subr.mxu0 0.0
    %4297 = vmatpush1.msra.mxu0 0.0
    %4298 = vmatprep.subr.mxu0 0.0
    %4299 = vmatpush1.msra.mxu0 0.0
    %4300 = vmatprep.subr.mxu0 0.0
    %4301 = vmatpush1.msra.mxu0 0.0
    %4302 = vmatprep.subr.mxu0 0.0
    %4303 = vmatpush1.msra.mxu0 0.0
    %4304 = vmatprep.subr.mxu0 0.0
    %4305 = vmatpush1.msra.mxu0 0.0
    %4306 = vmatprep.subr.mxu0 0.0
    %4307 = vmatpush1.msra.mxu0 0.0
    %4308 = vmatprep.subr.mxu0 0.0
    %4309 = vmatpush1.msra.mxu0 0.0
    %4310 = vmatprep.subr.mxu0 0.0
    %4311 = vmatpush1.msra.mxu0 0.0
    %4312 = vmatprep.subr.mxu0 0.0
    %4313 = vmatpush1.msra.mxu0 0.0
    %4314 = vmatprep.subr.mxu0 0.0
    %4315 = vmatpush1.msra.mxu0 0.0
    %4316 = vmatprep.subr.mxu0 0.0
    %4317 = vmatpush1.msra.mxu0 0.0
    %4318 = vmatprep.subr.mxu0 0.0
    %4319 = vmatpush1.msra.mxu0 0.0
    %4320 = vmatprep.subr.mxu0 0.0
    %4321 = vmatpush1.msra.mxu0 0.0
    %4322 = vmatprep.subr.mxu0 0.0
    %4323 = vmatpush1.msra.mxu0 0.0
    %4324 = vmatprep.subr.mxu0 0.0
    %4325 = vmatpush1.msra.mxu0 0.0
    %4326 = vmatprep.subr.mxu0 0.0
    %4327 = vmatpush1.msra.mxu0 0.0
    %4328 = vmatprep.subr.mxu0 0.0
    %4329 = vmatpush1.msra.mxu0 0.0
    %4330 = vmatprep.subr.mxu0 0.0
    %4331 = vmatpush1.msra.mxu0 0.0
    %4332 = vmatprep.subr.mxu0 0.0
    %4333 = vmatpush1.msra.mxu0 0.0
    %4334 = vmatprep.subr.mxu0 0.0
    %4335 = vmatpush1.msra.mxu0 0.0
    %4336 = vmatprep.subr.mxu0 0.0
    %4337 = vmatpush1.msra.mxu0 0.0
    %4338 = vmatprep.mubr.f32.mxu0 0.0
    %v4339 = vand.u32 %v3684, 4294901760
    %4340 = vmatmul.mubr.f32.gmra.mrb[0].mxu0 %v4339
    %v4341 = vpop.f32.mrb[0].mxu0
    %v4342 = vadd.f32 %v4251, %v4341
    %v4343 = vpop.f32.mrb[0].mxu0
    %4344 = vdwg.mxu0
    %4345 = vmatprep.subr.mxu0 0.0
    %v4346 = vand.u32 %v4171, 4294901760
    %v4347 = vsub.f32 %v4171, %v4346
    %4348 = vmatpush1.msra.mxu0 %v4347
    %4349 = vmatprep.subr.mxu0 0.0
    %v4350 = vand.u32 %v4172, 4294901760
    %v4351 = vsub.f32 %v4172, %v4350
    %4352 = vmatpush1.msra.mxu0 %v4351
    %4353 = vmatprep.subr.mxu0 0.0
    %v4354 = vand.u32 %v4173, 4294901760
    %v4355 = vsub.f32 %v4173, %v4354
    %4356 = vmatpush1.msra.mxu0 %v4355
    %4357 = vmatprep.subr.mxu0 0.0
    %v4358 = vand.u32 %v4174, 4294901760
    %v4359 = vsub.f32 %v4174, %v4358
    %4360 = vmatpush1.msra.mxu0 %v4359
    %4361 = vmatprep.subr.mxu0 0.0
    %4362 = vmatpush1.msra.mxu0 0.0
    %4363 = vmatprep.subr.mxu0 0.0
    %4364 = vmatpush1.msra.mxu0 0.0
    %4365 = vmatprep.subr.mxu0 0.0
    %4366 = vmatpush1.msra.mxu0 0.0
    %4367 = vmatprep.subr.mxu0 0.0
    %4368 = vmatpush1.msra.mxu0 0.0
    %4369 = vmatprep.subr.mxu0 0.0
    %4370 = vmatpush1.msra.mxu0 0.0
    %4371 = vmatprep.subr.mxu0 0.0
    %4372 = vmatpush1.msra.mxu0 0.0
    %4373 = vmatprep.subr.mxu0 0.0
    %4374 = vmatpush1.msra.mxu0 0.0
    %4375 = vmatprep.subr.mxu0 0.0
    %4376 = vmatpush1.msra.mxu0 0.0
    %4377 = vmatprep.subr.mxu0 0.0
    %4378 = vmatpush1.msra.mxu0 0.0
    %4379 = vmatprep.subr.mxu0 0.0
    %4380 = vmatpush1.msra.mxu0 0.0
    %4381 = vmatprep.subr.mxu0 0.0
    %4382 = vmatpush1.msra.mxu0 0.0
    %4383 = vmatprep.subr.mxu0 0.0
    %4384 = vmatpush1.msra.mxu0 0.0
    %4385 = vmatprep.subr.mxu0 0.0
    %4386 = vmatpush1.msra.mxu0 0.0
    %4387 = vmatprep.subr.mxu0 0.0
    %4388 = vmatpush1.msra.mxu0 0.0
    %4389 = vmatprep.subr.mxu0 0.0
    %4390 = vmatpush1.msra.mxu0 0.0
    %4391 = vmatprep.subr.mxu0 0.0
    %4392 = vmatpush1.msra.mxu0 0.0
    %4393 = vmatprep.subr.mxu0 0.0
    %4394 = vmatpush1.msra.mxu0 0.0
    %4395 = vmatprep.subr.mxu0 0.0
    %4396 = vmatpush1.msra.mxu0 0.0
    %4397 = vmatprep.subr.mxu0 0.0
    %4398 = vmatpush1.msra.mxu0 0.0
    %4399 = vmatprep.subr.mxu0 0.0
    %4400 = vmatpush1.msra.mxu0 0.0
    %4401 = vmatprep.subr.mxu0 0.0
    %4402 = vmatpush1.msra.mxu0 0.0
    %4403 = vmatprep.subr.mxu0 0.0
    %4404 = vmatpush1.msra.mxu0 0.0
    %4405 = vmatprep.subr.mxu0 0.0
    %4406 = vmatpush1.msra.mxu0 0.0
    %4407 = vmatprep.subr.mxu0 0.0
    %4408 = vmatpush1.msra.mxu0 0.0
    %4409 = vmatprep.subr.mxu0 0.0
    %4410 = vmatpush1.msra.mxu0 0.0
    %4411 = vmatprep.subr.mxu0 0.0
    %4412 = vmatpush1.msra.mxu0 0.0
    %4413 = vmatprep.subr.mxu0 0.0
    %4414 = vmatpush1.msra.mxu0 0.0
    %4415 = vmatprep.subr.mxu0 0.0
    %4416 = vmatpush1.msra.mxu0 0.0
    %4417 = vmatprep.mubr.f32.mxu0 0.0
    %v4418 = vand.u32 %v3684, 4294901760
    %v4419 = vsub.f32 %v3684, %v4418
    %4420 = vmatmul.mubr.f32.gmra.mrb[0].mxu0 %v4419
    %v4421 = vpop.f32.mrb[0].mxu0
    %v4422 = vadd.f32 %v4342, %v4421
    %v4423 = vpop.f32.mrb[0].mxu0
    %4424 = vdwg.mxu0
    %4425 = vmatprep.subr.mxu0 0.0
    %v4426 = vand.u32 %v4171, 4294901760
    %4427 = vmatpush1.msra.mxu0 %v4426
    %4428 = vmatprep.subr.mxu0 0.0
    %v4429 = vand.u32 %v4172, 4294901760
    %4430 = vmatpush1.msra.mxu0 %v4429
    %4431 = vmatprep.subr.mxu0 0.0
    %v4432 = vand.u32 %v4173, 4294901760
    %4433 = vmatpush1.msra.mxu0 %v4432
    %4434 = vmatprep.subr.mxu0 0.0
    %v4435 = vand.u32 %v4174, 4294901760
    %4436 = vmatpush1.msra.mxu0 %v4435
    %4437 = vmatprep.subr.mxu0 0.0
    %4438 = vmatpush1.msra.mxu0 0.0
    %4439 = vmatprep.subr.mxu0 0.0
    %4440 = vmatpush1.msra.mxu0 0.0
    %4441 = vmatprep.subr.mxu0 0.0
    %4442 = vmatpush1.msra.mxu0 0.0
    %4443 = vmatprep.subr.mxu0 0.0
    %4444 = vmatpush1.msra.mxu0 0.0
    %4445 = vmatprep.subr.mxu0 0.0
    %4446 = vmatpush1.msra.mxu0 0.0
    %4447 = vmatprep.subr.mxu0 0.0
    %4448 = vmatpush1.msra.mxu0 0.0
    %4449 = vmatprep.subr.mxu0 0.0
    %4450 = vmatpush1.msra.mxu0 0.0
    %4451 = vmatprep.subr.mxu0 0.0
    %4452 = vmatpush1.msra.mxu0 0.0
    %4453 = vmatprep.subr.mxu0 0.0
    %4454 = vmatpush1.msra.mxu0 0.0
    %4455 = vmatprep.subr.mxu0 0.0
    %4456 = vmatpush1.msra.mxu0 0.0
    %4457 = vmatprep.subr.mxu0 0.0
    %4458 = vmatpush1.msra.mxu0 0.0
    %4459 = vmatprep.subr.mxu0 0.0
    %4460 = vmatpush1.msra.mxu0 0.0
    %4461 = vmatprep.subr.mxu0 0.0
    %4462 = vmatpush1.msra.mxu0 0.0
    %4463 = vmatprep.subr.mxu0 0.0
    %4464 = vmatpush1.msra.mxu0 0.0
    %4465 = vmatprep.subr.mxu0 0.0
    %4466 = vmatpush1.msra.mxu0 0.0
    %4467 = vmatprep.subr.mxu0 0.0
    %4468 = vmatpush1.msra.mxu0 0.0
    %4469 = vmatprep.subr.mxu0 0.0
    %4470 = vmatpush1.msra.mxu0 0.0
    %4471 = vmatprep.subr.mxu0 0.0
    %4472 = vmatpush1.msra.mxu0 0.0
    %4473 = vmatprep.subr.mxu0 0.0
    %4474 = vmatpush1.msra.mxu0 0.0
    %4475 = vmatprep.subr.mxu0 0.0
    %4476 = vmatpush1.msra.mxu0 0.0
    %4477 = vmatprep.subr.mxu0 0.0
    %4478 = vmatpush1.msra.mxu0 0.0
    %4479 = vmatprep.subr.mxu0 0.0
    %4480 = vmatpush1.msra.mxu0 0.0
    %4481 = vmatprep.subr.mxu0 0.0
    %4482 = vmatpush1.msra.mxu0 0.0
    %4483 = vmatprep.subr.mxu0 0.0
    %4484 = vmatpush1.msra.mxu0 0.0
    %4485 = vmatprep.subr.mxu0 0.0
    %4486 = vmatpush1.msra.mxu0 0.0
    %4487 = vmatprep.subr.mxu0 0.0
    %4488 = vmatpush1.msra.mxu0 0.0
    %4489 = vmatprep.subr.mxu0 0.0
    %4490 = vmatpush1.msra.mxu0 0.0
    %4491 = vmatprep.subr.mxu0 0.0
    %4492 = vmatpush1.msra.mxu0 0.0
    %4493 = vmatprep.mubr.f32.mxu0 0.0
    %v4494 = vand.u32 %v3684, 4294901760
    %v4495 = vsub.f32 %v3684, %v4494
    %v4496 = vand.u32 %v4495, 4294901760
    %4497 = vmatmul.mubr.f32.gmra.mrb[0].mxu0 %v4496
    %v4498 = vpop.f32.mrb[0].mxu0
    %v4499 = vadd.f32 %v4422, %v4498
    %v4500 = vpop.f32.mrb[0].mxu0
    %4501 = vdwg.mxu0
    %4502 = vmatprep.subr.mxu0 0.0
    %v4503 = vand.u32 %v4171, 4294901760
    %v4504 = vsub.f32 %v4171, %v4503
    %v4505 = vand.u32 %v4504, 4294901760
    %4506 = vmatpush1.msra.mxu0 %v4505
    %4507 = vmatprep.subr.mxu0 0.0
    %v4508 = vand.u32 %v4172, 4294901760
    %v4509 = vsub.f32 %v4172, %v4508
    %v4510 = vand.u32 %v4509, 4294901760
    %4511 = vmatpush1.msra.mxu0 %v4510
    %4512 = vmatprep.subr.mxu0 0.0
    %v4513 = vand.u32 %v4173, 4294901760
    %v4514 = vsub.f32 %v4173, %v4513
    %v4515 = vand.u32 %v4514, 4294901760
    %4516 = vmatpush1.msra.mxu0 %v4515
    %4517 = vmatprep.subr.mxu0 0.0
    %v4518 = vand.u32 %v4174, 4294901760
    %v4519 = vsub.f32 %v4174, %v4518
    %v4520 = vand.u32 %v4519, 4294901760
    %4521 = vmatpush1.msra.mxu0 %v4520
    %4522 = vmatprep.subr.mxu0 0.0
    %4523 = vmatpush1.msra.mxu0 0.0
    %4524 = vmatprep.subr.mxu0 0.0
    %4525 = vmatpush1.msra.mxu0 0.0
    %4526 = vmatprep.subr.mxu0 0.0
    %4527 = vmatpush1.msra.mxu0 0.0
    %4528 = vmatprep.subr.mxu0 0.0
    %4529 = vmatpush1.msra.mxu0 0.0
    %4530 = vmatprep.subr.mxu0 0.0
    %4531 = vmatpush1.msra.mxu0 0.0
    %4532 = vmatprep.subr.mxu0 0.0
    %4533 = vmatpush1.msra.mxu0 0.0
    %4534 = vmatprep.subr.mxu0 0.0
    %4535 = vmatpush1.msra.mxu0 0.0
    %4536 = vmatprep.subr.mxu0 0.0
    %4537 = vmatpush1.msra.mxu0 0.0
    %4538 = vmatprep.subr.mxu0 0.0
    %4539 = vmatpush1.msra.mxu0 0.0
    %4540 = vmatprep.subr.mxu0 0.0
    %4541 = vmatpush1.msra.mxu0 0.0
    %4542 = vmatprep.subr.mxu0 0.0
    %4543 = vmatpush1.msra.mxu0 0.0
    %4544 = vmatprep.subr.mxu0 0.0
    %4545 = vmatpush1.msra.mxu0 0.0
    %4546 = vmatprep.subr.mxu0 0.0
    %4547 = vmatpush1.msra.mxu0 0.0
    %4548 = vmatprep.subr.mxu0 0.0
    %4549 = vmatpush1.msra.mxu0 0.0
    %4550 = vmatprep.subr.mxu0 0.0
    %4551 = vmatpush1.msra.mxu0 0.0
    %4552 = vmatprep.subr.mxu0 0.0
    %4553 = vmatpush1.msra.mxu0 0.0
    %4554 = vmatprep.subr.mxu0 0.0
    %4555 = vmatpush1.msra.mxu0 0.0
    %4556 = vmatprep.subr.mxu0 0.0
    %4557 = vmatpush1.msra.mxu0 0.0
    %4558 = vmatprep.subr.mxu0 0.0
    %4559 = vmatpush1.msra.mxu0 0.0
    %4560 = vmatprep.subr.mxu0 0.0
    %4561 = vmatpush1.msra.mxu0 0.0
    %4562 = vmatprep.subr.mxu0 0.0
    %4563 = vmatpush1.msra.mxu0 0.0
    %4564 = vmatprep.subr.mxu0 0.0
    %4565 = vmatpush1.msra.mxu0 0.0
    %4566 = vmatprep.subr.mxu0 0.0
    %4567 = vmatpush1.msra.mxu0 0.0
    %4568 = vmatprep.subr.mxu0 0.0
    %4569 = vmatpush1.msra.mxu0 0.0
    %4570 = vmatprep.subr.mxu0 0.0
    %4571 = vmatpush1.msra.mxu0 0.0
    %4572 = vmatprep.subr.mxu0 0.0
    %4573 = vmatpush1.msra.mxu0 0.0
    %4574 = vmatprep.subr.mxu0 0.0
    %4575 = vmatpush1.msra.mxu0 0.0
    %4576 = vmatprep.subr.mxu0 0.0
    %4577 = vmatpush1.msra.mxu0 0.0
    %4578 = vmatprep.mubr.f32.mxu0 0.0
    %v4579 = vand.u32 %v3684, 4294901760
    %4580 = vmatmul.mubr.f32.gmra.mrb[0].mxu0 %v4579
    %v4581 = vpop.f32.mrb[0].mxu0
    %v4582 = vadd.f32 %v4499, %v4581
    %v4583 = vpop.f32.mrb[0].mxu0
    %4584 = vdwg.mxu0
    %4585 = vmatprep.subr.mxu0 0.0
    %v4586 = vand.u32 %v4171, 4294901760
    %4587 = vmatpush1.msra.mxu0 %v4586
    %4588 = vmatprep.subr.mxu0 0.0
    %v4589 = vand.u32 %v4172, 4294901760
    %4590 = vmatpush1.msra.mxu0 %v4589
    %4591 = vmatprep.subr.mxu0 0.0
    %v4592 = vand.u32 %v4173, 4294901760
    %4593 = vmatpush1.msra.mxu0 %v4592
    %4594 = vmatprep.subr.mxu0 0.0
    %v4595 = vand.u32 %v4174, 4294901760
    %4596 = vmatpush1.msra.mxu0 %v4595
    %4597 = vmatprep.subr.mxu0 0.0
    %4598 = vmatpush1.msra.mxu0 0.0
    %4599 = vmatprep.subr.mxu0 0.0
    %4600 = vmatpush1.msra.mxu0 0.0
    %4601 = vmatprep.subr.mxu0 0.0
    %4602 = vmatpush1.msra.mxu0 0.0
    %4603 = vmatprep.subr.mxu0 0.0
    %4604 = vmatpush1.msra.mxu0 0.0
    %4605 = vmatprep.subr.mxu0 0.0
    %4606 = vmatpush1.msra.mxu0 0.0
    %4607 = vmatprep.subr.mxu0 0.0
    %4608 = vmatpush1.msra.mxu0 0.0
    %4609 = vmatprep.subr.mxu0 0.0
    %4610 = vmatpush1.msra.mxu0 0.0
    %4611 = vmatprep.subr.mxu0 0.0
    %4612 = vmatpush1.msra.mxu0 0.0
    %4613 = vmatprep.subr.mxu0 0.0
    %4614 = vmatpush1.msra.mxu0 0.0
    %4615 = vmatprep.subr.mxu0 0.0
    %4616 = vmatpush1.msra.mxu0 0.0
    %4617 = vmatprep.subr.mxu0 0.0
    %4618 = vmatpush1.msra.mxu0 0.0
    %4619 = vmatprep.subr.mxu0 0.0
    %4620 = vmatpush1.msra.mxu0 0.0
    %4621 = vmatprep.subr.mxu0 0.0
    %4622 = vmatpush1.msra.mxu0 0.0
    %4623 = vmatprep.subr.mxu0 0.0
    %4624 = vmatpush1.msra.mxu0 0.0
    %4625 = vmatprep.subr.mxu0 0.0
    %4626 = vmatpush1.msra.mxu0 0.0
    %4627 = vmatprep.subr.mxu0 0.0
    %4628 = vmatpush1.msra.mxu0 0.0
    %4629 = vmatprep.subr.mxu0 0.0
    %4630 = vmatpush1.msra.mxu0 0.0
    %4631 = vmatprep.subr.mxu0 0.0
    %4632 = vmatpush1.msra.mxu0 0.0
    %4633 = vmatprep.subr.mxu0 0.0
    %4634 = vmatpush1.msra.mxu0 0.0
    %4635 = vmatprep.subr.mxu0 0.0
    %4636 = vmatpush1.msra.mxu0 0.0
    %4637 = vmatprep.subr.mxu0 0.0
    %4638 = vmatpush1.msra.mxu0 0.0
    %4639 = vmatprep.subr.mxu0 0.0
    %4640 = vmatpush1.msra.mxu0 0.0
    %4641 = vmatprep.subr.mxu0 0.0
    %4642 = vmatpush1.msra.mxu0 0.0
    %4643 = vmatprep.subr.mxu0 0.0
    %4644 = vmatpush1.msra.mxu0 0.0
    %4645 = vmatprep.subr.mxu0 0.0
    %4646 = vmatpush1.msra.mxu0 0.0
    %4647 = vmatprep.subr.mxu0 0.0
    %4648 = vmatpush1.msra.mxu0 0.0
    %4649 = vmatprep.subr.mxu0 0.0
    %4650 = vmatpush1.msra.mxu0 0.0
    %4651 = vmatprep.subr.mxu0 0.0
    %4652 = vmatpush1.msra.mxu0 0.0
    %4653 = vmatprep.mubr.f32.mxu0 0.0
    %v4654 = vand.u32 %v3684, 4294901760
    %4655 = vmatmul.mubr.f32.gmra.mrb[0].mxu0 %v4654
    %v4656 = vpop.f32.mrb[0].mxu0
    %v4657 = vadd.f32 %v4582, %v4656
    %v4658 = vpop.f32.mrb[0].mxu0
    %4659 = vdwg.mxu0
    %v4660 = vld [vmem:[#allocation2 + $0x3] sm:$0x1]
    %v4661 = vmul.f32 %v3669, %v3669
    %v4662 = vsel %vm1604, %v4661, 0.0
    %4663 = vadd.xlane.f32.xlu0 %v4662
    %v4664 = vpop.xlane.xlu0 %4663
    %s4665 = smul.f32 %s3674, 0.5
    %v4666 = vstv %s3674
    %v4667 = vadd.f32 %v4666, %v3678
    %v4668 = vrcp.pop %v4667
    %v4669 = vstv %s4665
    %v4670 = vmul.f32 %v4669, %v4668
    %v4671 = vsub.f32 0.0, %v3645
    %v4672 = vmul.f32 %v4670, %v4670
    %v4673 = vadd.f32 %v4664, %v4672
    %v4674 = vmul.f32 %v3645, %v4673
    %v4675 = vadd.f32 %v4671, %v4674
    %v4676 = vmul.f32 %v4675, 0.1
    %v4677 = vadd.f32 %v3645, %v4676
    %v4678 = vmax.f32 %v4677, 0.0
    %v4679 = vsub.f32 %v4678, %v3678
    %v4680 = vsub.f32 0.0, %v3654
    %v4681 = vmul.f32 %v3677, %v3678
    %v4682 = vadd.f32 %v4680, %v4681
    %v4683 = vadd.f32 %v4682, 1.0
    %v4684 = vadd.f32 %v4683, %v4679
    %v4685 = vmul.f32 %v4684, 0.1
    %v4686 = vadd.f32 %v3654, %v4685
    %v4687 = vrcp.pop %v3677
    %v4688 = vsub.f32 0.0, %v3668
    %v4689 = vmul.f32 %v4688, 0.5
    %v4690 = vstv %s3675
    %v4691 = vmul.f32 %v4690, %v4660
    %v4692 = vadd.f32 %v4689, %v4691
    %v4693 = vstv %s3676
    %v4694 = vmul.f32 %v4693, %v4687
    %v4695 = vmul.f32 %v4694, %v4168
    %v4696 = vadd.f32 %v4692, %v4695
    %v4697 = vstv %s3673
    %v4698 = vmul.f32 %v4697, %v4657
    %v4699 = vadd.f32 %v4696, %v4698
    %v4700 = vadd.f32 %v3668, %v4699
    %v4701 = vmax.f32 %v4700, 0.0
    %4702 = vst.msk [vmem:[#allocation17 + $0x3] sm:$0x1] %vm1604, %v4701
    %4703 = vst.msk [vmem:[%s9 + $0x3] sm:$0x1] %vm1606, %v4686
    %4704 = vst.msk [vmem:[%s10 + $0x3] sm:$0x1] %vm1606, %v4677
    %s4705 = sld [smem:[#allocation3 + $0x4]]
    %s4706 = sld [smem:[#allocation8 + $0x4]]
    %s4707 = sld [smem:[#allocation9 + $0x4]]
    %s4708 = sld [smem:[#allocation11 + $0x4]]
    %v4709 = vmax.f32 %v4686, 0.0
    %v4710 = vmin.f32 %v4677, 1.0
    %v4711 = vld [vmem:[#allocation14] sm:$0xff]
    %v4712 = vld [vmem:[#allocation14 + $0x8] sm:$0xff]
    %v4713 = vld [vmem:[#allocation14 + $0x10] sm:$0xff]
    %v4714 = vld [vmem:[#allocation14 + $0x18] sm:$0xff]
    %v4716 = vsel %vm583, %v4701, 0
    %4718 = vmatprep.subr.mxu0 0.0
    %v4719 = vand.u32 %v4711, 4294901760
    %4720 = vmatpush1.msra.mxu0 %v4719
    %4721 = vmatprep.subr.mxu0 0.0
    %v4722 = vand.u32 %v4712, 4294901760
    %4723 = vmatpush1.msra.mxu0 %v4722
    %4724 = vmatprep.subr.mxu0 0.0
    %v4725 = vand.u32 %v4713, 4294901760
    %4726 = vmatpush1.msra.mxu0 %v4725
    %4727 = vmatprep.subr.mxu0 0.0
    %v4728 = vand.u32 %v4714, 4294901760
    %4729 = vmatpush1.msra.mxu0 %v4728
    %4730 = vmatprep.subr.mxu0 0.0
    %4731 = vmatpush1.msra.mxu0 0.0
    %4732 = vmatprep.subr.mxu0 0.0
    %4733 = vmatpush1.msra.mxu0 0.0
    %4734 = vmatprep.subr.mxu0 0.0
    %4735 = vmatpush1.msra.mxu0 0.0
    %4736 = vmatprep.subr.mxu0 0.0
    %4737 = vmatpush1.msra.mxu0 0.0
    %4738 = vmatprep.subr.mxu0 0.0
    %4739 = vmatpush1.msra.mxu0 0.0
    %4740 = vmatprep.subr.mxu0 0.0
    %4741 = vmatpush1.msra.mxu0 0.0
    %4742 = vmatprep.subr.mxu0 0.0
    %4743 = vmatpush1.msra.mxu0 0.0
    %4744 = vmatprep.subr.mxu0 0.0
    %4745 = vmatpush1.msra.mxu0 0.0
    %4746 = vmatprep.subr.mxu0 0.0
    %4747 = vmatpush1.msra.mxu0 0.0
    %4748 = vmatprep.subr.mxu0 0.0
    %4749 = vmatpush1.msra.mxu0 0.0
    %4750 = vmatprep.subr.mxu0 0.0
    %4751 = vmatpush1.msra.mxu0 0.0
    %4752 = vmatprep.subr.mxu0 0.0
    %4753 = vmatpush1.msra.mxu0 0.0
    %4754 = vmatprep.subr.mxu0 0.0
    %4755 = vmatpush1.msra.mxu0 0.0
    %4756 = vmatprep.subr.mxu0 0.0
    %4757 = vmatpush1.msra.mxu0 0.0
    %4758 = vmatprep.subr.mxu0 0.0
    %4759 = vmatpush1.msra.mxu0 0.0
    %4760 = vmatprep.subr.mxu0 0.0
    %4761 = vmatpush1.msra.mxu0 0.0
    %4762 = vmatprep.subr.mxu0 0.0
    %4763 = vmatpush1.msra.mxu0 0.0
    %4764 = vmatprep.subr.mxu0 0.0
    %4765 = vmatpush1.msra.mxu0 0.0
    %4766 = vmatprep.subr.mxu0 0.0
    %4767 = vmatpush1.msra.mxu0 0.0
    %4768 = vmatprep.subr.mxu0 0.0
    %4769 = vmatpush1.msra.mxu0 0.0
    %4770 = vmatprep.subr.mxu0 0.0
    %4771 = vmatpush1.msra.mxu0 0.0
    %4772 = vmatprep.subr.mxu0 0.0
    %4773 = vmatpush1.msra.mxu0 0.0
    %4774 = vmatprep.subr.mxu0 0.0
    %4775 = vmatpush1.msra.mxu0 0.0
    %4776 = vmatprep.subr.mxu0 0.0
    %4777 = vmatpush1.msra.mxu0 0.0
    %4778 = vmatprep.subr.mxu0 0.0
    %4779 = vmatpush1.msra.mxu0 0.0
    %4780 = vmatprep.subr.mxu0 0.0
    %4781 = vmatpush1.msra.mxu0 0.0
    %4782 = vmatprep.subr.mxu0 0.0
    %4783 = vmatpush1.msra.mxu0 0.0
    %4784 = vmatprep.subr.mxu0 0.0
    %4785 = vmatpush1.msra.mxu0 0.0
    %4786 = vmatprep.mubr.f32.mxu0 0.0
    %v4787 = vand.u32 %v4716, 4294901760
    %v4788 = vsub.f32 %v4716, %v4787
    %v4789 = vand.u32 %v4788, 4294901760
    %v4790 = vsub.f32 %v4788, %v4789
    %v4791 = vand.u32 %v4790, 4294901760
    %4792 = vmatmul.mubr.f32.gmra.mrb[0].mxu0 %v4791
    %v4793 = vpop.f32.mrb[0].mxu0
    %v4794 = vadd.f32 0.0, %v4793
    %v4795 = vpop.f32.mrb[0].mxu0
    %4796 = vdwg.mxu0
    %4797 = vmatprep.subr.mxu0 0.0
    %v4798 = vand.u32 %v4711, 4294901760
    %v4799 = vsub.f32 %v4711, %v4798
    %v4800 = vand.u32 %v4799, 4294901760
    %v4801 = vsub.f32 %v4799, %v4800
    %v4802 = vand.u32 %v4801, 4294901760
    %4803 = vmatpush1.msra.mxu0 %v4802
    %4804 = vmatprep.subr.mxu0 0.0
    %v4805 = vand.u32 %v4712, 4294901760
    %v4806 = vsub.f32 %v4712, %v4805
    %v4807 = vand.u32 %v4806, 4294901760
    %v4808 = vsub.f32 %v4806, %v4807
    %v4809 = vand.u32 %v4808, 4294901760
    %4810 = vmatpush1.msra.mxu0 %v4809
    %4811 = vmatprep.subr.mxu0 0.0
    %v4812 = vand.u32 %v4713, 4294901760
    %v4813 = vsub.f32 %v4713, %v4812
    %v4814 = vand.u32 %v4813, 4294901760
    %v4815 = vsub.f32 %v4813, %v4814
    %v4816 = vand.u32 %v4815, 4294901760
    %4817 = vmatpush1.msra.mxu0 %v4816
    %4818 = vmatprep.subr.mxu0 0.0
    %v4819 = vand.u32 %v4714, 4294901760
    %v4820 = vsub.f32 %v4714, %v4819
    %v4821 = vand.u32 %v4820, 4294901760
    %v4822 = vsub.f32 %v4820, %v4821
    %v4823 = vand.u32 %v4822, 4294901760
    %4824 = vmatpush1.msra.mxu0 %v4823
    %4825 = vmatprep.subr.mxu0 0.0
    %4826 = vmatpush1.msra.mxu0 0.0
    %4827 = vmatprep.subr.mxu0 0.0
    %4828 = vmatpush1.msra.mxu0 0.0
    %4829 = vmatprep.subr.mxu0 0.0
    %4830 = vmatpush1.msra.mxu0 0.0
    %4831 = vmatprep.subr.mxu0 0.0
    %4832 = vmatpush1.msra.mxu0 0.0
    %4833 = vmatprep.subr.mxu0 0.0
    %4834 = vmatpush1.msra.mxu0 0.0
    %4835 = vmatprep.subr.mxu0 0.0
    %4836 = vmatpush1.msra.mxu0 0.0
    %4837 = vmatprep.subr.mxu0 0.0
    %4838 = vmatpush1.msra.mxu0 0.0
    %4839 = vmatprep.subr.mxu0 0.0
    %4840 = vmatpush1.msra.mxu0 0.0
    %4841 = vmatprep.subr.mxu0 0.0
    %4842 = vmatpush1.msra.mxu0 0.0
    %4843 = vmatprep.subr.mxu0 0.0
    %4844 = vmatpush1.msra.mxu0 0.0
    %4845 = vmatprep.subr.mxu0 0.0
    %4846 = vmatpush1.msra.mxu0 0.0
    %4847 = vmatprep.subr.mxu0 0.0
    %4848 = vmatpush1.msra.mxu0 0.0
    %4849 = vmatprep.subr.mxu0 0.0
    %4850 = vmatpush1.msra.mxu0 0.0
    %4851 = vmatprep.subr.mxu0 0.0
    %4852 = vmatpush1.msra.mxu0 0.0
    %4853 = vmatprep.subr.mxu0 0.0
    %4854 = vmatpush1.msra.mxu0 0.0
    %4855 = vmatprep.subr.mxu0 0.0
    %4856 = vmatpush1.msra.mxu0 0.0
    %4857 = vmatprep.subr.mxu0 0.0
    %4858 = vmatpush1.msra.mxu0 0.0
    %4859 = vmatprep.subr.mxu0 0.0
    %4860 = vmatpush1.msra.mxu0 0.0
    %4861 = vmatprep.subr.mxu0 0.0
    %4862 = vmatpush1.msra.mxu0 0.0
    %4863 = vmatprep.subr.mxu0 0.0
    %4864 = vmatpush1.msra.mxu0 0.0
    %4865 = vmatprep.subr.mxu0 0.0
    %4866 = vmatpush1.msra.mxu0 0.0
    %4867 = vmatprep.subr.mxu0 0.0
    %4868 = vmatpush1.msra.mxu0 0.0
    %4869 = vmatprep.subr.mxu0 0.0
    %4870 = vmatpush1.msra.mxu0 0.0
    %4871 = vmatprep.subr.mxu0 0.0
    %4872 = vmatpush1.msra.mxu0 0.0
    %4873 = vmatprep.subr.mxu0 0.0
    %4874 = vmatpush1.msra.mxu0 0.0
    %4875 = vmatprep.subr.mxu0 0.0
    %4876 = vmatpush1.msra.mxu0 0.0
    %4877 = vmatprep.subr.mxu0 0.0
    %4878 = vmatpush1.msra.mxu0 0.0
    %4879 = vmatprep.subr.mxu0 0.0
    %4880 = vmatpush1.msra.mxu0 0.0
    %4881 = vmatprep.mubr.f32.mxu0 0.0
    %v4882 = vand.u32 %v4716, 4294901760
    %4883 = vmatmul.mubr.f32.gmra.mrb[0].mxu0 %v4882
    %v4884 = vpop.f32.mrb[0].mxu0
    %v4885 = vadd.f32 %v4794, %v4884
    %v4886 = vpop.f32.mrb[0].mxu0
    %4887 = vdwg.mxu0
    %4888 = vmatprep.subr.mxu0 0.0
    %v4889 = vand.u32 %v4711, 4294901760
    %v4890 = vsub.f32 %v4711, %v4889
    %4891 = vmatpush1.msra.mxu0 %v4890
    %4892 = vmatprep.subr.mxu0 0.0
    %v4893 = vand.u32 %v4712, 4294901760
    %v4894 = vsub.f32 %v4712, %v4893
    %4895 = vmatpush1.msra.mxu0 %v4894
    %4896 = vmatprep.subr.mxu0 0.0
    %v4897 = vand.u32 %v4713, 4294901760
    %v4898 = vsub.f32 %v4713, %v4897
    %4899 = vmatpush1.msra.mxu0 %v4898
    %4900 = vmatprep.subr.mxu0 0.0
    %v4901 = vand.u32 %v4714, 4294901760
    %v4902 = vsub.f32 %v4714, %v4901
    %4903 = vmatpush1.msra.mxu0 %v4902
    %4904 = vmatprep.subr.mxu0 0.0
    %4905 = vmatpush1.msra.mxu0 0.0
    %4906 = vmatprep.subr.mxu0 0.0
    %4907 = vmatpush1.msra.mxu0 0.0
    %4908 = vmatprep.subr.mxu0 0.0
    %4909 = vmatpush1.msra.mxu0 0.0
    %4910 = vmatprep.subr.mxu0 0.0
    %4911 = vmatpush1.msra.mxu0 0.0
    %4912 = vmatprep.subr.mxu0 0.0
    %4913 = vmatpush1.msra.mxu0 0.0
    %4914 = vmatprep.subr.mxu0 0.0
    %4915 = vmatpush1.msra.mxu0 0.0
    %4916 = vmatprep.subr.mxu0 0.0
    %4917 = vmatpush1.msra.mxu0 0.0
    %4918 = vmatprep.subr.mxu0 0.0
    %4919 = vmatpush1.msra.mxu0 0.0
    %4920 = vmatprep.subr.mxu0 0.0
    %4921 = vmatpush1.msra.mxu0 0.0
    %4922 = vmatprep.subr.mxu0 0.0
    %4923 = vmatpush1.msra.mxu0 0.0
    %4924 = vmatprep.subr.mxu0 0.0
    %4925 = vmatpush1.msra.mxu0 0.0
    %4926 = vmatprep.subr.mxu0 0.0
    %4927 = vmatpush1.msra.mxu0 0.0
    %4928 = vmatprep.subr.mxu0 0.0
    %4929 = vmatpush1.msra.mxu0 0.0
    %4930 = vmatprep.subr.mxu0 0.0
    %4931 = vmatpush1.msra.mxu0 0.0
    %4932 = vmatprep.subr.mxu0 0.0
    %4933 = vmatpush1.msra.mxu0 0.0
    %4934 = vmatprep.subr.mxu0 0.0
    %4935 = vmatpush1.msra.mxu0 0.0
    %4936 = vmatprep.subr.mxu0 0.0
    %4937 = vmatpush1.msra.mxu0 0.0
    %4938 = vmatprep.subr.mxu0 0.0
    %4939 = vmatpush1.msra.mxu0 0.0
    %4940 = vmatprep.subr.mxu0 0.0
    %4941 = vmatpush1.msra.mxu0 0.0
    %4942 = vmatprep.subr.mxu0 0.0
    %4943 = vmatpush1.msra.mxu0 0.0
    %4944 = vmatprep.subr.mxu0 0.0
    %4945 = vmatpush1.msra.mxu0 0.0
    %4946 = vmatprep.subr.mxu0 0.0
    %4947 = vmatpush1.msra.mxu0 0.0
    %4948 = vmatprep.subr.mxu0 0.0
    %4949 = vmatpush1.msra.mxu0 0.0
    %4950 = vmatprep.subr.mxu0 0.0
    %4951 = vmatpush1.msra.mxu0 0.0
    %4952 = vmatprep.subr.mxu0 0.0
    %4953 = vmatpush1.msra.mxu0 0.0
    %4954 = vmatprep.subr.mxu0 0.0
    %4955 = vmatpush1.msra.mxu0 0.0
    %4956 = vmatprep.subr.mxu0 0.0
    %4957 = vmatpush1.msra.mxu0 0.0
    %4958 = vmatprep.subr.mxu0 0.0
    %4959 = vmatpush1.msra.mxu0 0.0
    %4960 = vmatprep.mubr.f32.mxu0 0.0
    %v4961 = vand.u32 %v4716, 4294901760
    %v4962 = vsub.f32 %v4716, %v4961
    %4963 = vmatmul.mubr.f32.gmra.mrb[0].mxu0 %v4962
    %v4964 = vpop.f32.mrb[0].mxu0
    %v4965 = vadd.f32 %v4885, %v4964
    %v4966 = vpop.f32.mrb[0].mxu0
    %4967 = vdwg.mxu0
    %4968 = vmatprep.subr.mxu0 0.0
    %v4969 = vand.u32 %v4711, 4294901760
    %4970 = vmatpush1.msra.mxu0 %v4969
    %4971 = vmatprep.subr.mxu0 0.0
    %v4972 = vand.u32 %v4712, 4294901760
    %4973 = vmatpush1.msra.mxu0 %v4972
    %4974 = vmatprep.subr.mxu0 0.0
    %v4975 = vand.u32 %v4713, 4294901760
    %4976 = vmatpush1.msra.mxu0 %v4975
    %4977 = vmatprep.subr.mxu0 0.0
    %v4978 = vand.u32 %v4714, 4294901760
    %4979 = vmatpush1.msra.mxu0 %v4978
    %4980 = vmatprep.subr.mxu0 0.0
    %4981 = vmatpush1.msra.mxu0 0.0
    %4982 = vmatprep.subr.mxu0 0.0
    %4983 = vmatpush1.msra.mxu0 0.0
    %4984 = vmatprep.subr.mxu0 0.0
    %4985 = vmatpush1.msra.mxu0 0.0
    %4986 = vmatprep.subr.mxu0 0.0
    %4987 = vmatpush1.msra.mxu0 0.0
    %4988 = vmatprep.subr.mxu0 0.0
    %4989 = vmatpush1.msra.mxu0 0.0
    %4990 = vmatprep.subr.mxu0 0.0
    %4991 = vmatpush1.msra.mxu0 0.0
    %4992 = vmatprep.subr.mxu0 0.0
    %4993 = vmatpush1.msra.mxu0 0.0
    %4994 = vmatprep.subr.mxu0 0.0
    %4995 = vmatpush1.msra.mxu0 0.0
    %4996 = vmatprep.subr.mxu0 0.0
    %4997 = vmatpush1.msra.mxu0 0.0
    %4998 = vmatprep.subr.mxu0 0.0
    %4999 = vmatpush1.msra.mxu0 0.0
    %5000 = vmatprep.subr.mxu0 0.0
    %5001 = vmatpush1.msra.mxu0 0.0
    %5002 = vmatprep.subr.mxu0 0.0
    %5003 = vmatpush1.msra.mxu0 0.0
    %5004 = vmatprep.subr.mxu0 0.0
    %5005 = vmatpush1.msra.mxu0 0.0
    %5006 = vmatprep.subr.mxu0 0.0
    %5007 = vmatpush1.msra.mxu0 0.0
    %5008 = vmatprep.subr.mxu0 0.0
    %5009 = vmatpush1.msra.mxu0 0.0
    %5010 = vmatprep.subr.mxu0 0.0
    %5011 = vmatpush1.msra.mxu0 0.0
    %5012 = vmatprep.subr.mxu0 0.0
    %5013 = vmatpush1.msra.mxu0 0.0
    %5014 = vmatprep.subr.mxu0 0.0
    %5015 = vmatpush1.msra.mxu0 0.0
    %5016 = vmatprep.subr.mxu0 0.0
    %5017 = vmatpush1.msra.mxu0 0.0
    %5018 = vmatprep.subr.mxu0 0.0
    %5019 = vmatpush1.msra.mxu0 0.0
    %5020 = vmatprep.subr.mxu0 0.0
    %5021 = vmatpush1.msra.mxu0 0.0
    %5022 = vmatprep.subr.mxu0 0.0
    %5023 = vmatpush1.msra.mxu0 0.0
    %5024 = vmatprep.subr.mxu0 0.0
    %5025 = vmatpush1.msra.mxu0 0.0
    %5026 = vmatprep.subr.mxu0 0.0
    %5027 = vmatpush1.msra.mxu0 0.0
    %5028 = vmatprep.subr.mxu0 0.0
    %5029 = vmatpush1.msra.mxu0 0.0
    %5030 = vmatprep.subr.mxu0 0.0
    %5031 = vmatpush1.msra.mxu0 0.0
    %5032 = vmatprep.subr.mxu0 0.0
    %5033 = vmatpush1.msra.mxu0 0.0
    %5034 = vmatprep.subr.mxu0 0.0
    %5035 = vmatpush1.msra.mxu0 0.0
    %5036 = vmatprep.mubr.f32.mxu0 0.0
    %v5037 = vand.u32 %v4716, 4294901760
    %v5038 = vsub.f32 %v4716, %v5037
    %v5039 = vand.u32 %v5038, 4294901760
    %5040 = vmatmul.mubr.f32.gmra.mrb[0].mxu0 %v5039
    %v5041 = vpop.f32.mrb[0].mxu0
    %v5042 = vadd.f32 %v4965, %v5041
    %v5043 = vpop.f32.mrb[0].mxu0
    %5044 = vdwg.mxu0
    %5045 = vmatprep.subr.mxu0 0.0
    %v5046 = vand.u32 %v4711, 4294901760
    %v5047 = vsub.f32 %v4711, %v5046
    %v5048 = vand.u32 %v5047, 4294901760
    %5049 = vmatpush1.msra.mxu0 %v5048
    %5050 = vmatprep.subr.mxu0 0.0
    %v5051 = vand.u32 %v4712, 4294901760
    %v5052 = vsub.f32 %v4712, %v5051
    %v5053 = vand.u32 %v5052, 4294901760
    %5054 = vmatpush1.msra.mxu0 %v5053
    %5055 = vmatprep.subr.mxu0 0.0
    %v5056 = vand.u32 %v4713, 4294901760
    %v5057 = vsub.f32 %v4713, %v5056
    %v5058 = vand.u32 %v5057, 4294901760
    %5059 = vmatpush1.msra.mxu0 %v5058
    %5060 = vmatprep.subr.mxu0 0.0
    %v5061 = vand.u32 %v4714, 4294901760
    %v5062 = vsub.f32 %v4714, %v5061
    %v5063 = vand.u32 %v5062, 4294901760
    %5064 = vmatpush1.msra.mxu0 %v5063
    %5065 = vmatprep.subr.mxu0 0.0
    %5066 = vmatpush1.msra.mxu0 0.0
    %5067 = vmatprep.subr.mxu0 0.0
    %5068 = vmatpush1.msra.mxu0 0.0
    %5069 = vmatprep.subr.mxu0 0.0
    %5070 = vmatpush1.msra.mxu0 0.0
    %5071 = vmatprep.subr.mxu0 0.0
    %5072 = vmatpush1.msra.mxu0 0.0
    %5073 = vmatprep.subr.mxu0 0.0
    %5074 = vmatpush1.msra.mxu0 0.0
    %5075 = vmatprep.subr.mxu0 0.0
    %5076 = vmatpush1.msra.mxu0 0.0
    %5077 = vmatprep.subr.mxu0 0.0
    %5078 = vmatpush1.msra.mxu0 0.0
    %5079 = vmatprep.subr.mxu0 0.0
    %5080 = vmatpush1.msra.mxu0 0.0
    %5081 = vmatprep.subr.mxu0 0.0
    %5082 = vmatpush1.msra.mxu0 0.0
    %5083 = vmatprep.subr.mxu0 0.0
    %5084 = vmatpush1.msra.mxu0 0.0
    %5085 = vmatprep.subr.mxu0 0.0
    %5086 = vmatpush1.msra.mxu0 0.0
    %5087 = vmatprep.subr.mxu0 0.0
    %5088 = vmatpush1.msra.mxu0 0.0
    %5089 = vmatprep.subr.mxu0 0.0
    %5090 = vmatpush1.msra.mxu0 0.0
    %5091 = vmatprep.subr.mxu0 0.0
    %5092 = vmatpush1.msra.mxu0 0.0
    %5093 = vmatprep.subr.mxu0 0.0
    %5094 = vmatpush1.msra.mxu0 0.0
    %5095 = vmatprep.subr.mxu0 0.0
    %5096 = vmatpush1.msra.mxu0 0.0
    %5097 = vmatprep.subr.mxu0 0.0
    %5098 = vmatpush1.msra.mxu0 0.0
    %5099 = vmatprep.subr.mxu0 0.0
    %5100 = vmatpush1.msra.mxu0 0.0
    %5101 = vmatprep.subr.mxu0 0.0
    %5102 = vmatpush1.msra.mxu0 0.0
    %5103 = vmatprep.subr.mxu0 0.0
    %5104 = vmatpush1.msra.mxu0 0.0
    %5105 = vmatprep.subr.mxu0 0.0
    %5106 = vmatpush1.msra.mxu0 0.0
    %5107 = vmatprep.subr.mxu0 0.0
    %5108 = vmatpush1.msra.mxu0 0.0
    %5109 = vmatprep.subr.mxu0 0.0
    %5110 = vmatpush1.msra.mxu0 0.0
    %5111 = vmatprep.subr.mxu0 0.0
    %5112 = vmatpush1.msra.mxu0 0.0
    %5113 = vmatprep.subr.mxu0 0.0
    %5114 = vmatpush1.msra.mxu0 0.0
    %5115 = vmatprep.subr.mxu0 0.0
    %5116 = vmatpush1.msra.mxu0 0.0
    %5117 = vmatprep.subr.mxu0 0.0
    %5118 = vmatpush1.msra.mxu0 0.0
    %5119 = vmatprep.subr.mxu0 0.0
    %5120 = vmatpush1.msra.mxu0 0.0
    %5121 = vmatprep.mubr.f32.mxu0 0.0
    %v5122 = vand.u32 %v4716, 4294901760
    %5123 = vmatmul.mubr.f32.gmra.mrb[0].mxu0 %v5122
    %v5124 = vpop.f32.mrb[0].mxu0
    %v5125 = vadd.f32 %v5042, %v5124
    %v5126 = vpop.f32.mrb[0].mxu0
    %5127 = vdwg.mxu0
    %5128 = vmatprep.subr.mxu0 0.0
    %v5129 = vand.u32 %v4711, 4294901760
    %5130 = vmatpush1.msra.mxu0 %v5129
    %5131 = vmatprep.subr.mxu0 0.0
    %v5132 = vand.u32 %v4712, 4294901760
    %5133 = vmatpush1.msra.mxu0 %v5132
    %5134 = vmatprep.subr.mxu0 0.0
    %v5135 = vand.u32 %v4713, 4294901760
    %5136 = vmatpush1.msra.mxu0 %v5135
    %5137 = vmatprep.subr.mxu0 0.0
    %v5138 = vand.u32 %v4714, 4294901760
    %5139 = vmatpush1.msra.mxu0 %v5138
    %5140 = vmatprep.subr.mxu0 0.0
    %5141 = vmatpush1.msra.mxu0 0.0
    %5142 = vmatprep.subr.mxu0 0.0
    %5143 = vmatpush1.msra.mxu0 0.0
    %5144 = vmatprep.subr.mxu0 0.0
    %5145 = vmatpush1.msra.mxu0 0.0
    %5146 = vmatprep.subr.mxu0 0.0
    %5147 = vmatpush1.msra.mxu0 0.0
    %5148 = vmatprep.subr.mxu0 0.0
    %5149 = vmatpush1.msra.mxu0 0.0
    %5150 = vmatprep.subr.mxu0 0.0
    %5151 = vmatpush1.msra.mxu0 0.0
    %5152 = vmatprep.subr.mxu0 0.0
    %5153 = vmatpush1.msra.mxu0 0.0
    %5154 = vmatprep.subr.mxu0 0.0
    %5155 = vmatpush1.msra.mxu0 0.0
    %5156 = vmatprep.subr.mxu0 0.0
    %5157 = vmatpush1.msra.mxu0 0.0
    %5158 = vmatprep.subr.mxu0 0.0
    %5159 = vmatpush1.msra.mxu0 0.0
    %5160 = vmatprep.subr.mxu0 0.0
    %5161 = vmatpush1.msra.mxu0 0.0
    %5162 = vmatprep.subr.mxu0 0.0
    %5163 = vmatpush1.msra.mxu0 0.0
    %5164 = vmatprep.subr.mxu0 0.0
    %5165 = vmatpush1.msra.mxu0 0.0
    %5166 = vmatprep.subr.mxu0 0.0
    %5167 = vmatpush1.msra.mxu0 0.0
    %5168 = vmatprep.subr.mxu0 0.0
    %5169 = vmatpush1.msra.mxu0 0.0
    %5170 = vmatprep.subr.mxu0 0.0
    %5171 = vmatpush1.msra.mxu0 0.0
    %5172 = vmatprep.subr.mxu0 0.0
    %5173 = vmatpush1.msra.mxu0 0.0
    %5174 = vmatprep.subr.mxu0 0.0
    %5175 = vmatpush1.msra.mxu0 0.0
    %5176 = vmatprep.subr.mxu0 0.0
    %5177 = vmatpush1.msra.mxu0 0.0
    %5178 = vmatprep.subr.mxu0 0.0
    %5179 = vmatpush1.msra.mxu0 0.0
    %5180 = vmatprep.subr.mxu0 0.0
    %5181 = vmatpush1.msra.mxu0 0.0
    %5182 = vmatprep.subr.mxu0 0.0
    %5183 = vmatpush1.msra.mxu0 0.0
    %5184 = vmatprep.subr.mxu0 0.0
    %5185 = vmatpush1.msra.mxu0 0.0
    %5186 = vmatprep.subr.mxu0 0.0
    %5187 = vmatpush1.msra.mxu0 0.0
    %5188 = vmatprep.subr.mxu0 0.0
    %5189 = vmatpush1.msra.mxu0 0.0
    %5190 = vmatprep.subr.mxu0 0.0
    %5191 = vmatpush1.msra.mxu0 0.0
    %5192 = vmatprep.subr.mxu0 0.0
    %5193 = vmatpush1.msra.mxu0 0.0
    %5194 = vmatprep.subr.mxu0 0.0
    %5195 = vmatpush1.msra.mxu0 0.0
    %5196 = vmatprep.mubr.f32.mxu0 0.0
    %v5197 = vand.u32 %v4716, 4294901760
    %5198 = vmatmul.mubr.f32.gmra.mrb[0].mxu0 %v5197
    %v5199 = vpop.f32.mrb[0].mxu0
    %v5200 = vadd.f32 %v5125, %v5199
    %v5201 = vpop.f32.mrb[0].mxu0
    %5202 = vdwg.mxu0
    %v5203 = vld [vmem:[#allocation16] sm:$0xff]
    %v5204 = vld [vmem:[#allocation16 + $0x8] sm:$0xff]
    %v5205 = vld [vmem:[#allocation16 + $0x10] sm:$0xff]
    %v5206 = vld [vmem:[#allocation16 + $0x18] sm:$0xff]
    %5207 = vmatprep.subr.mxu0 0.0
    %v5208 = vand.u32 %v5203, 4294901760
    %5209 = vmatpush1.msra.mxu0 %v5208
    %5210 = vmatprep.subr.mxu0 0.0
    %v5211 = vand.u32 %v5204, 4294901760
    %5212 = vmatpush1.msra.mxu0 %v5211
    %5213 = vmatprep.subr.mxu0 0.0
    %v5214 = vand.u32 %v5205, 4294901760
    %5215 = vmatpush1.msra.mxu0 %v5214
    %5216 = vmatprep.subr.mxu0 0.0
    %v5217 = vand.u32 %v5206, 4294901760
    %5218 = vmatpush1.msra.mxu0 %v5217
    %5219 = vmatprep.subr.mxu0 0.0
    %5220 = vmatpush1.msra.mxu0 0.0
    %5221 = vmatprep.subr.mxu0 0.0
    %5222 = vmatpush1.msra.mxu0 0.0
    %5223 = vmatprep.subr.mxu0 0.0
    %5224 = vmatpush1.msra.mxu0 0.0
    %5225 = vmatprep.subr.mxu0 0.0
    %5226 = vmatpush1.msra.mxu0 0.0
    %5227 = vmatprep.subr.mxu0 0.0
    %5228 = vmatpush1.msra.mxu0 0.0
    %5229 = vmatprep.subr.mxu0 0.0
    %5230 = vmatpush1.msra.mxu0 0.0
    %5231 = vmatprep.subr.mxu0 0.0
    %5232 = vmatpush1.msra.mxu0 0.0
    %5233 = vmatprep.subr.mxu0 0.0
    %5234 = vmatpush1.msra.mxu0 0.0
    %5235 = vmatprep.subr.mxu0 0.0
    %5236 = vmatpush1.msra.mxu0 0.0
    %5237 = vmatprep.subr.mxu0 0.0
    %5238 = vmatpush1.msra.mxu0 0.0
    %5239 = vmatprep.subr.mxu0 0.0
    %5240 = vmatpush1.msra.mxu0 0.0
    %5241 = vmatprep.subr.mxu0 0.0
    %5242 = vmatpush1.msra.mxu0 0.0
    %5243 = vmatprep.subr.mxu0 0.0
    %5244 = vmatpush1.msra.mxu0 0.0
    %5245 = vmatprep.subr.mxu0 0.0
    %5246 = vmatpush1.msra.mxu0 0.0
    %5247 = vmatprep.subr.mxu0 0.0
    %5248 = vmatpush1.msra.mxu0 0.0
    %5249 = vmatprep.subr.mxu0 0.0
    %5250 = vmatpush1.msra.mxu0 0.0
    %5251 = vmatprep.subr.mxu0 0.0
    %5252 = vmatpush1.msra.mxu0 0.0
    %5253 = vmatprep.subr.mxu0 0.0
    %5254 = vmatpush1.msra.mxu0 0.0
    %5255 = vmatprep.subr.mxu0 0.0
    %5256 = vmatpush1.msra.mxu0 0.0
    %5257 = vmatprep.subr.mxu0 0.0
    %5258 = vmatpush1.msra.mxu0 0.0
    %5259 = vmatprep.subr.mxu0 0.0
    %5260 = vmatpush1.msra.mxu0 0.0
    %5261 = vmatprep.subr.mxu0 0.0
    %5262 = vmatpush1.msra.mxu0 0.0
    %5263 = vmatprep.subr.mxu0 0.0
    %5264 = vmatpush1.msra.mxu0 0.0
    %5265 = vmatprep.subr.mxu0 0.0
    %5266 = vmatpush1.msra.mxu0 0.0
    %5267 = vmatprep.subr.mxu0 0.0
    %5268 = vmatpush1.msra.mxu0 0.0
    %5269 = vmatprep.subr.mxu0 0.0
    %5270 = vmatpush1.msra.mxu0 0.0
    %5271 = vmatprep.subr.mxu0 0.0
    %5272 = vmatpush1.msra.mxu0 0.0
    %5273 = vmatprep.subr.mxu0 0.0
    %5274 = vmatpush1.msra.mxu0 0.0
    %5275 = vmatprep.mubr.f32.mxu0 0.0
    %v5276 = vand.u32 %v4716, 4294901760
    %v5277 = vsub.f32 %v4716, %v5276
    %v5278 = vand.u32 %v5277, 4294901760
    %v5279 = vsub.f32 %v5277, %v5278
    %v5280 = vand.u32 %v5279, 4294901760
    %5281 = vmatmul.mubr.f32.gmra.mrb[0].mxu0 %v5280
    %v5282 = vpop.f32.mrb[0].mxu0
    %v5283 = vadd.f32 0.0, %v5282
    %v5284 = vpop.f32.mrb[0].mxu0
    %5285 = vdwg.mxu0
    %5286 = vmatprep.subr.mxu0 0.0
    %v5287 = vand.u32 %v5203, 4294901760
    %v5288 = vsub.f32 %v5203, %v5287
    %v5289 = vand.u32 %v5288, 4294901760
    %v5290 = vsub.f32 %v5288, %v5289
    %v5291 = vand.u32 %v5290, 4294901760
    %5292 = vmatpush1.msra.mxu0 %v5291
    %5293 = vmatprep.subr.mxu0 0.0
    %v5294 = vand.u32 %v5204, 4294901760
    %v5295 = vsub.f32 %v5204, %v5294
    %v5296 = vand.u32 %v5295, 4294901760
    %v5297 = vsub.f32 %v5295, %v5296
    %v5298 = vand.u32 %v5297, 4294901760
    %5299 = vmatpush1.msra.mxu0 %v5298
    %5300 = vmatprep.subr.mxu0 0.0
    %v5301 = vand.u32 %v5205, 4294901760
    %v5302 = vsub.f32 %v5205, %v5301
    %v5303 = vand.u32 %v5302, 4294901760
    %v5304 = vsub.f32 %v5302, %v5303
    %v5305 = vand.u32 %v5304, 4294901760
    %5306 = vmatpush1.msra.mxu0 %v5305
    %5307 = vmatprep.subr.mxu0 0.0
    %v5308 = vand.u32 %v5206, 4294901760
    %v5309 = vsub.f32 %v5206, %v5308
    %v5310 = vand.u32 %v5309, 4294901760
    %v5311 = vsub.f32 %v5309, %v5310
    %v5312 = vand.u32 %v5311, 4294901760
    %5313 = vmatpush1.msra.mxu0 %v5312
    %5314 = vmatprep.subr.mxu0 0.0
    %5315 = vmatpush1.msra.mxu0 0.0
    %5316 = vmatprep.subr.mxu0 0.0
    %5317 = vmatpush1.msra.mxu0 0.0
    %5318 = vmatprep.subr.mxu0 0.0
    %5319 = vmatpush1.msra.mxu0 0.0
    %5320 = vmatprep.subr.mxu0 0.0
    %5321 = vmatpush1.msra.mxu0 0.0
    %5322 = vmatprep.subr.mxu0 0.0
    %5323 = vmatpush1.msra.mxu0 0.0
    %5324 = vmatprep.subr.mxu0 0.0
    %5325 = vmatpush1.msra.mxu0 0.0
    %5326 = vmatprep.subr.mxu0 0.0
    %5327 = vmatpush1.msra.mxu0 0.0
    %5328 = vmatprep.subr.mxu0 0.0
    %5329 = vmatpush1.msra.mxu0 0.0
    %5330 = vmatprep.subr.mxu0 0.0
    %5331 = vmatpush1.msra.mxu0 0.0
    %5332 = vmatprep.subr.mxu0 0.0
    %5333 = vmatpush1.msra.mxu0 0.0
    %5334 = vmatprep.subr.mxu0 0.0
    %5335 = vmatpush1.msra.mxu0 0.0
    %5336 = vmatprep.subr.mxu0 0.0
    %5337 = vmatpush1.msra.mxu0 0.0
    %5338 = vmatprep.subr.mxu0 0.0
    %5339 = vmatpush1.msra.mxu0 0.0
    %5340 = vmatprep.subr.mxu0 0.0
    %5341 = vmatpush1.msra.mxu0 0.0
    %5342 = vmatprep.subr.mxu0 0.0
    %5343 = vmatpush1.msra.mxu0 0.0
    %5344 = vmatprep.subr.mxu0 0.0
    %5345 = vmatpush1.msra.mxu0 0.0
    %5346 = vmatprep.subr.mxu0 0.0
    %5347 = vmatpush1.msra.mxu0 0.0
    %5348 = vmatprep.subr.mxu0 0.0
    %5349 = vmatpush1.msra.mxu0 0.0
    %5350 = vmatprep.subr.mxu0 0.0
    %5351 = vmatpush1.msra.mxu0 0.0
    %5352 = vmatprep.subr.mxu0 0.0
    %5353 = vmatpush1.msra.mxu0 0.0
    %5354 = vmatprep.subr.mxu0 0.0
    %5355 = vmatpush1.msra.mxu0 0.0
    %5356 = vmatprep.subr.mxu0 0.0
    %5357 = vmatpush1.msra.mxu0 0.0
    %5358 = vmatprep.subr.mxu0 0.0
    %5359 = vmatpush1.msra.mxu0 0.0
    %5360 = vmatprep.subr.mxu0 0.0
    %5361 = vmatpush1.msra.mxu0 0.0
    %5362 = vmatprep.subr.mxu0 0.0
    %5363 = vmatpush1.msra.mxu0 0.0
    %5364 = vmatprep.subr.mxu0 0.0
    %5365 = vmatpush1.msra.mxu0 0.0
    %5366 = vmatprep.subr.mxu0 0.0
    %5367 = vmatpush1.msra.mxu0 0.0
    %5368 = vmatprep.subr.mxu0 0.0
    %5369 = vmatpush1.msra.mxu0 0.0
    %5370 = vmatprep.mubr.f32.mxu0 0.0
    %v5371 = vand.u32 %v4716, 4294901760
    %5372 = vmatmul.mubr.f32.gmra.mrb[0].mxu0 %v5371
    %v5373 = vpop.f32.mrb[0].mxu0
    %v5374 = vadd.f32 %v5283, %v5373
    %v5375 = vpop.f32.mrb[0].mxu0
    %5376 = vdwg.mxu0
    %5377 = vmatprep.subr.mxu0 0.0
    %v5378 = vand.u32 %v5203, 4294901760
    %v5379 = vsub.f32 %v5203, %v5378
    %5380 = vmatpush1.msra.mxu0 %v5379
    %5381 = vmatprep.subr.mxu0 0.0
    %v5382 = vand.u32 %v5204, 4294901760
    %v5383 = vsub.f32 %v5204, %v5382
    %5384 = vmatpush1.msra.mxu0 %v5383
    %5385 = vmatprep.subr.mxu0 0.0
    %v5386 = vand.u32 %v5205, 4294901760
    %v5387 = vsub.f32 %v5205, %v5386
    %5388 = vmatpush1.msra.mxu0 %v5387
    %5389 = vmatprep.subr.mxu0 0.0
    %v5390 = vand.u32 %v5206, 4294901760
    %v5391 = vsub.f32 %v5206, %v5390
    %5392 = vmatpush1.msra.mxu0 %v5391
    %5393 = vmatprep.subr.mxu0 0.0
    %5394 = vmatpush1.msra.mxu0 0.0
    %5395 = vmatprep.subr.mxu0 0.0
    %5396 = vmatpush1.msra.mxu0 0.0
    %5397 = vmatprep.subr.mxu0 0.0
    %5398 = vmatpush1.msra.mxu0 0.0
    %5399 = vmatprep.subr.mxu0 0.0
    %5400 = vmatpush1.msra.mxu0 0.0
    %5401 = vmatprep.subr.mxu0 0.0
    %5402 = vmatpush1.msra.mxu0 0.0
    %5403 = vmatprep.subr.mxu0 0.0
    %5404 = vmatpush1.msra.mxu0 0.0
    %5405 = vmatprep.subr.mxu0 0.0
    %5406 = vmatpush1.msra.mxu0 0.0
    %5407 = vmatprep.subr.mxu0 0.0
    %5408 = vmatpush1.msra.mxu0 0.0
    %5409 = vmatprep.subr.mxu0 0.0
    %5410 = vmatpush1.msra.mxu0 0.0
    %5411 = vmatprep.subr.mxu0 0.0
    %5412 = vmatpush1.msra.mxu0 0.0
    %5413 = vmatprep.subr.mxu0 0.0
    %5414 = vmatpush1.msra.mxu0 0.0
    %5415 = vmatprep.subr.mxu0 0.0
    %5416 = vmatpush1.msra.mxu0 0.0
    %5417 = vmatprep.subr.mxu0 0.0
    %5418 = vmatpush1.msra.mxu0 0.0
    %5419 = vmatprep.subr.mxu0 0.0
    %5420 = vmatpush1.msra.mxu0 0.0
    %5421 = vmatprep.subr.mxu0 0.0
    %5422 = vmatpush1.msra.mxu0 0.0
    %5423 = vmatprep.subr.mxu0 0.0
    %5424 = vmatpush1.msra.mxu0 0.0
    %5425 = vmatprep.subr.mxu0 0.0
    %5426 = vmatpush1.msra.mxu0 0.0
    %5427 = vmatprep.subr.mxu0 0.0
    %5428 = vmatpush1.msra.mxu0 0.0
    %5429 = vmatprep.subr.mxu0 0.0
    %5430 = vmatpush1.msra.mxu0 0.0
    %5431 = vmatprep.subr.mxu0 0.0
    %5432 = vmatpush1.msra.mxu0 0.0
    %5433 = vmatprep.subr.mxu0 0.0
    %5434 = vmatpush1.msra.mxu0 0.0
    %5435 = vmatprep.subr.mxu0 0.0
    %5436 = vmatpush1.msra.mxu0 0.0
    %5437 = vmatprep.subr.mxu0 0.0
    %5438 = vmatpush1.msra.mxu0 0.0
    %5439 = vmatprep.subr.mxu0 0.0
    %5440 = vmatpush1.msra.mxu0 0.0
    %5441 = vmatprep.subr.mxu0 0.0
    %5442 = vmatpush1.msra.mxu0 0.0
    %5443 = vmatprep.subr.mxu0 0.0
    %5444 = vmatpush1.msra.mxu0 0.0
    %5445 = vmatprep.subr.mxu0 0.0
    %5446 = vmatpush1.msra.mxu0 0.0
    %5447 = vmatprep.subr.mxu0 0.0
    %5448 = vmatpush1.msra.mxu0 0.0
    %5449 = vmatprep.mubr.f32.mxu0 0.0
    %v5450 = vand.u32 %v4716, 4294901760
    %v5451 = vsub.f32 %v4716, %v5450
    %5452 = vmatmul.mubr.f32.gmra.mrb[0].mxu0 %v5451
    %v5453 = vpop.f32.mrb[0].mxu0
    %v5454 = vadd.f32 %v5374, %v5453
    %v5455 = vpop.f32.mrb[0].mxu0
    %5456 = vdwg.mxu0
    %5457 = vmatprep.subr.mxu0 0.0
    %v5458 = vand.u32 %v5203, 4294901760
    %5459 = vmatpush1.msra.mxu0 %v5458
    %5460 = vmatprep.subr.mxu0 0.0
    %v5461 = vand.u32 %v5204, 4294901760
    %5462 = vmatpush1.msra.mxu0 %v5461
    %5463 = vmatprep.subr.mxu0 0.0
    %v5464 = vand.u32 %v5205, 4294901760
    %5465 = vmatpush1.msra.mxu0 %v5464
    %5466 = vmatprep.subr.mxu0 0.0
    %v5467 = vand.u32 %v5206, 4294901760
    %5468 = vmatpush1.msra.mxu0 %v5467
    %5469 = vmatprep.subr.mxu0 0.0
    %5470 = vmatpush1.msra.mxu0 0.0
    %5471 = vmatprep.subr.mxu0 0.0
    %5472 = vmatpush1.msra.mxu0 0.0
    %5473 = vmatprep.subr.mxu0 0.0
    %5474 = vmatpush1.msra.mxu0 0.0
    %5475 = vmatprep.subr.mxu0 0.0
    %5476 = vmatpush1.msra.mxu0 0.0
    %5477 = vmatprep.subr.mxu0 0.0
    %5478 = vmatpush1.msra.mxu0 0.0
    %5479 = vmatprep.subr.mxu0 0.0
    %5480 = vmatpush1.msra.mxu0 0.0
    %5481 = vmatprep.subr.mxu0 0.0
    %5482 = vmatpush1.msra.mxu0 0.0
    %5483 = vmatprep.subr.mxu0 0.0
    %5484 = vmatpush1.msra.mxu0 0.0
    %5485 = vmatprep.subr.mxu0 0.0
    %5486 = vmatpush1.msra.mxu0 0.0
    %5487 = vmatprep.subr.mxu0 0.0
    %5488 = vmatpush1.msra.mxu0 0.0
    %5489 = vmatprep.subr.mxu0 0.0
    %5490 = vmatpush1.msra.mxu0 0.0
    %5491 = vmatprep.subr.mxu0 0.0
    %5492 = vmatpush1.msra.mxu0 0.0
    %5493 = vmatprep.subr.mxu0 0.0
    %5494 = vmatpush1.msra.mxu0 0.0
    %5495 = vmatprep.subr.mxu0 0.0
    %5496 = vmatpush1.msra.mxu0 0.0
    %5497 = vmatprep.subr.mxu0 0.0
    %5498 = vmatpush1.msra.mxu0 0.0
    %5499 = vmatprep.subr.mxu0 0.0
    %5500 = vmatpush1.msra.mxu0 0.0
    %5501 = vmatprep.subr.mxu0 0.0
    %5502 = vmatpush1.msra.mxu0 0.0
    %5503 = vmatprep.subr.mxu0 0.0
    %5504 = vmatpush1.msra.mxu0 0.0
    %5505 = vmatprep.subr.mxu0 0.0
    %5506 = vmatpush1.msra.mxu0 0.0
    %5507 = vmatprep.subr.mxu0 0.0
    %5508 = vmatpush1.msra.mxu0 0.0
    %5509 = vmatprep.subr.mxu0 0.0
    %5510 = vmatpush1.msra.mxu0 0.0
    %5511 = vmatprep.subr.mxu0 0.0
    %5512 = vmatpush1.msra.mxu0 0.0
    %5513 = vmatprep.subr.mxu0 0.0
    %5514 = vmatpush1.msra.mxu0 0.0
    %5515 = vmatprep.subr.mxu0 0.0
    %5516 = vmatpush1.msra.mxu0 0.0
    %5517 = vmatprep.subr.mxu0 0.0
    %5518 = vmatpush1.msra.mxu0 0.0
    %5519 = vmatprep.subr.mxu0 0.0
    %5520 = vmatpush1.msra.mxu0 0.0
    %5521 = vmatprep.subr.mxu0 0.0
    %5522 = vmatpush1.msra.mxu0 0.0
    %5523 = vmatprep.subr.mxu0 0.0
    %5524 = vmatpush1.msra.mxu0 0.0
    %5525 = vmatprep.mubr.f32.mxu0 0.0
    %v5526 = vand.u32 %v4716, 4294901760
    %v5527 = vsub.f32 %v4716, %v5526
    %v5528 = vand.u32 %v5527, 4294901760
    %5529 = vmatmul.mubr.f32.gmra.mrb[0].mxu0 %v5528
    %v5530 = vpop.f32.mrb[0].mxu0
    %v5531 = vadd.f32 %v5454, %v5530
    %v5532 = vpop.f32.mrb[0].mxu0
    %5533 = vdwg.mxu0
    %5534 = vmatprep.subr.mxu0 0.0
    %v5535 = vand.u32 %v5203, 4294901760
    %v5536 = vsub.f32 %v5203, %v5535
    %v5537 = vand.u32 %v5536, 4294901760
    %5538 = vmatpush1.msra.mxu0 %v5537
    %5539 = vmatprep.subr.mxu0 0.0
    %v5540 = vand.u32 %v5204, 4294901760
    %v5541 = vsub.f32 %v5204, %v5540
    %v5542 = vand.u32 %v5541, 4294901760
    %5543 = vmatpush1.msra.mxu0 %v5542
    %5544 = vmatprep.subr.mxu0 0.0
    %v5545 = vand.u32 %v5205, 4294901760
    %v5546 = vsub.f32 %v5205, %v5545
    %v5547 = vand.u32 %v5546, 4294901760
    %5548 = vmatpush1.msra.mxu0 %v5547
    %5549 = vmatprep.subr.mxu0 0.0
    %v5550 = vand.u32 %v5206, 4294901760
    %v5551 = vsub.f32 %v5206, %v5550
    %v5552 = vand.u32 %v5551, 4294901760
    %5553 = vmatpush1.msra.mxu0 %v5552
    %5554 = vmatprep.subr.mxu0 0.0
    %5555 = vmatpush1.msra.mxu0 0.0
    %5556 = vmatprep.subr.mxu0 0.0
    %5557 = vmatpush1.msra.mxu0 0.0
    %5558 = vmatprep.subr.mxu0 0.0
    %5559 = vmatpush1.msra.mxu0 0.0
    %5560 = vmatprep.subr.mxu0 0.0
    %5561 = vmatpush1.msra.mxu0 0.0
    %5562 = vmatprep.subr.mxu0 0.0
    %5563 = vmatpush1.msra.mxu0 0.0
    %5564 = vmatprep.subr.mxu0 0.0
    %5565 = vmatpush1.msra.mxu0 0.0
    %5566 = vmatprep.subr.mxu0 0.0
    %5567 = vmatpush1.msra.mxu0 0.0
    %5568 = vmatprep.subr.mxu0 0.0
    %5569 = vmatpush1.msra.mxu0 0.0
    %5570 = vmatprep.subr.mxu0 0.0
    %5571 = vmatpush1.msra.mxu0 0.0
    %5572 = vmatprep.subr.mxu0 0.0
    %5573 = vmatpush1.msra.mxu0 0.0
    %5574 = vmatprep.subr.mxu0 0.0
    %5575 = vmatpush1.msra.mxu0 0.0
    %5576 = vmatprep.subr.mxu0 0.0
    %5577 = vmatpush1.msra.mxu0 0.0
    %5578 = vmatprep.subr.mxu0 0.0
    %5579 = vmatpush1.msra.mxu0 0.0
    %5580 = vmatprep.subr.mxu0 0.0
    %5581 = vmatpush1.msra.mxu0 0.0
    %5582 = vmatprep.subr.mxu0 0.0
    %5583 = vmatpush1.msra.mxu0 0.0
    %5584 = vmatprep.subr.mxu0 0.0
    %5585 = vmatpush1.msra.mxu0 0.0
    %5586 = vmatprep.subr.mxu0 0.0
    %5587 = vmatpush1.msra.mxu0 0.0
    %5588 = vmatprep.subr.mxu0 0.0
    %5589 = vmatpush1.msra.mxu0 0.0
    %5590 = vmatprep.subr.mxu0 0.0
    %5591 = vmatpush1.msra.mxu0 0.0
    %5592 = vmatprep.subr.mxu0 0.0
    %5593 = vmatpush1.msra.mxu0 0.0
    %5594 = vmatprep.subr.mxu0 0.0
    %5595 = vmatpush1.msra.mxu0 0.0
    %5596 = vmatprep.subr.mxu0 0.0
    %5597 = vmatpush1.msra.mxu0 0.0
    %5598 = vmatprep.subr.mxu0 0.0
    %5599 = vmatpush1.msra.mxu0 0.0
    %5600 = vmatprep.subr.mxu0 0.0
    %5601 = vmatpush1.msra.mxu0 0.0
    %5602 = vmatprep.subr.mxu0 0.0
    %5603 = vmatpush1.msra.mxu0 0.0
    %5604 = vmatprep.subr.mxu0 0.0
    %5605 = vmatpush1.msra.mxu0 0.0
    %5606 = vmatprep.subr.mxu0 0.0
    %5607 = vmatpush1.msra.mxu0 0.0
    %5608 = vmatprep.subr.mxu0 0.0
    %5609 = vmatpush1.msra.mxu0 0.0
    %5610 = vmatprep.mubr.f32.mxu0 0.0
    %v5611 = vand.u32 %v4716, 4294901760
    %5612 = vmatmul.mubr.f32.gmra.mrb[0].mxu0 %v5611
    %v5613 = vpop.f32.mrb[0].mxu0
    %v5614 = vadd.f32 %v5531, %v5613
    %v5615 = vpop.f32.mrb[0].mxu0
    %5616 = vdwg.mxu0
    %5617 = vmatprep.subr.mxu0 0.0
    %v5618 = vand.u32 %v5203, 4294901760
    %5619 = vmatpush1.msra.mxu0 %v5618
    %5620 = vmatprep.subr.mxu0 0.0
    %v5621 = vand.u32 %v5204, 4294901760
    %5622 = vmatpush1.msra.mxu0 %v5621
    %5623 = vmatprep.subr.mxu0 0.0
    %v5624 = vand.u32 %v5205, 4294901760
    %5625 = vmatpush1.msra.mxu0 %v5624
    %5626 = vmatprep.subr.mxu0 0.0
    %v5627 = vand.u32 %v5206, 4294901760
    %5628 = vmatpush1.msra.mxu0 %v5627
    %5629 = vmatprep.subr.mxu0 0.0
    %5630 = vmatpush1.msra.mxu0 0.0
    %5631 = vmatprep.subr.mxu0 0.0
    %5632 = vmatpush1.msra.mxu0 0.0
    %5633 = vmatprep.subr.mxu0 0.0
    %5634 = vmatpush1.msra.mxu0 0.0
    %5635 = vmatprep.subr.mxu0 0.0
    %5636 = vmatpush1.msra.mxu0 0.0
    %5637 = vmatprep.subr.mxu0 0.0
    %5638 = vmatpush1.msra.mxu0 0.0
    %5639 = vmatprep.subr.mxu0 0.0
    %5640 = vmatpush1.msra.mxu0 0.0
    %5641 = vmatprep.subr.mxu0 0.0
    %5642 = vmatpush1.msra.mxu0 0.0
    %5643 = vmatprep.subr.mxu0 0.0
    %5644 = vmatpush1.msra.mxu0 0.0
    %5645 = vmatprep.subr.mxu0 0.0
    %5646 = vmatpush1.msra.mxu0 0.0
    %5647 = vmatprep.subr.mxu0 0.0
    %5648 = vmatpush1.msra.mxu0 0.0
    %5649 = vmatprep.subr.mxu0 0.0
    %5650 = vmatpush1.msra.mxu0 0.0
    %5651 = vmatprep.subr.mxu0 0.0
    %5652 = vmatpush1.msra.mxu0 0.0
    %5653 = vmatprep.subr.mxu0 0.0
    %5654 = vmatpush1.msra.mxu0 0.0
    %5655 = vmatprep.subr.mxu0 0.0
    %5656 = vmatpush1.msra.mxu0 0.0
    %5657 = vmatprep.subr.mxu0 0.0
    %5658 = vmatpush1.msra.mxu0 0.0
    %5659 = vmatprep.subr.mxu0 0.0
    %5660 = vmatpush1.msra.mxu0 0.0
    %5661 = vmatprep.subr.mxu0 0.0
    %5662 = vmatpush1.msra.mxu0 0.0
    %5663 = vmatprep.subr.mxu0 0.0
    %5664 = vmatpush1.msra.mxu0 0.0
    %5665 = vmatprep.subr.mxu0 0.0
    %5666 = vmatpush1.msra.mxu0 0.0
    %5667 = vmatprep.subr.mxu0 0.0
    %5668 = vmatpush1.msra.mxu0 0.0
    %5669 = vmatprep.subr.mxu0 0.0
    %5670 = vmatpush1.msra.mxu0 0.0
    %5671 = vmatprep.subr.mxu0 0.0
    %5672 = vmatpush1.msra.mxu0 0.0
    %5673 = vmatprep.subr.mxu0 0.0
    %5674 = vmatpush1.msra.mxu0 0.0
    %5675 = vmatprep.subr.mxu0 0.0
    %5676 = vmatpush1.msra.mxu0 0.0
    %5677 = vmatprep.subr.mxu0 0.0
    %5678 = vmatpush1.msra.mxu0 0.0
    %5679 = vmatprep.subr.mxu0 0.0
    %5680 = vmatpush1.msra.mxu0 0.0
    %5681 = vmatprep.subr.mxu0 0.0
    %5682 = vmatpush1.msra.mxu0 0.0
    %5683 = vmatprep.subr.mxu0 0.0
    %5684 = vmatpush1.msra.mxu0 0.0
    %5685 = vmatprep.mubr.f32.mxu0 0.0
    %v5686 = vand.u32 %v4716, 4294901760
    %5687 = vmatmul.mubr.f32.gmra.mrb[0].mxu0 %v5686
    %v5688 = vpop.f32.mrb[0].mxu0
    %v5689 = vadd.f32 %v5614, %v5688
    %v5690 = vpop.f32.mrb[0].mxu0
    %5691 = vdwg.mxu0
    %v5692 = vld [vmem:[#allocation2 + $0x4] sm:$0x1]
    %v5693 = vmul.f32 %v4701, %v4701
    %v5694 = vsel %vm1604, %v5693, 0.0
    %5695 = vadd.xlane.f32.xlu0 %v5694
    %v5696 = vpop.xlane.xlu0 %5695
    %s5697 = smul.f32 %s4706, 0.5
    %v5698 = vstv %s4706
    %v5699 = vadd.f32 %v5698, %v4710
    %v5700 = vrcp.pop %v5699
    %v5701 = vstv %s5697
    %v5702 = vmul.f32 %v5701, %v5700
    %v5703 = vsub.f32 0.0, %v4677
    %v5704 = vmul.f32 %v5702, %v5702
    %v5705 = vadd.f32 %v5696, %v5704
    %v5706 = vmul.f32 %v4677, %v5705
    %v5707 = vadd.f32 %v5703, %v5706
    %v5708 = vmul.f32 %v5707, 0.1
    %v5709 = vadd.f32 %v4677, %v5708
    %v5710 = vmax.f32 %v5709, 0.0
    %v5711 = vsub.f32 %v5710, %v4710
    %v5712 = vsub.f32 0.0, %v4686
    %v5713 = vmul.f32 %v4709, %v4710
    %v5714 = vadd.f32 %v5712, %v5713
    %v5715 = vadd.f32 %v5714, 1.0
    %v5716 = vadd.f32 %v5715, %v5711
    %v5717 = vmul.f32 %v5716, 0.1
    %v5718 = vadd.f32 %v4686, %v5717
    %v5719 = vrcp.pop %v4709
    %v5720 = vsub.f32 0.0, %v4700
    %v5721 = vmul.f32 %v5720, 0.5
    %v5722 = vstv %s4707
    %v5723 = vmul.f32 %v5722, %v5692
    %v5724 = vadd.f32 %v5721, %v5723
    %v5725 = vstv %s4708
    %v5726 = vmul.f32 %v5725, %v5719
    %v5727 = vmul.f32 %v5726, %v5200
    %v5728 = vadd.f32 %v5724, %v5727
    %v5729 = vstv %s4705
    %v5730 = vmul.f32 %v5729, %v5689
    %v5731 = vadd.f32 %v5728, %v5730
    %v5732 = vadd.f32 %v4700, %v5731
    %v5733 = vmax.f32 %v5732, 0.0
    %5734 = vst.msk [vmem:[#allocation17 + $0x4] sm:$0x1] %vm1604, %v5733
    %5735 = vst.msk [vmem:[%s9 + $0x4] sm:$0x1] %vm1606, %v5718
    %5736 = vst.msk [vmem:[%s10 + $0x4] sm:$0x1] %vm1606, %v5709
    %s5737 = sld [smem:[#allocation3 + $0x5]]
    %s5738 = sld [smem:[#allocation8 + $0x5]]
    %s5739 = sld [smem:[#allocation9 + $0x5]]
    %s5740 = sld [smem:[#allocation11 + $0x5]]
    %v5741 = vmax.f32 %v5718, 0.0
    %v5742 = vmin.f32 %v5709, 1.0
    %v5743 = vld [vmem:[#allocation14] sm:$0xff]
    %v5744 = vld [vmem:[#allocation14 + $0x8] sm:$0xff]
    %v5745 = vld [vmem:[#allocation14 + $0x10] sm:$0xff]
    %v5746 = vld [vmem:[#allocation14 + $0x18] sm:$0xff]
    %v5748 = vsel %vm583, %v5733, 0
    %5750 = vmatprep.subr.mxu0 0.0
    %v5751 = vand.u32 %v5743, 4294901760
    %5752 = vmatpush1.msra.mxu0 %v5751
    %5753 = vmatprep.subr.mxu0 0.0
    %v5754 = vand.u32 %v5744, 4294901760
    %5755 = vmatpush1.msra.mxu0 %v5754
    %5756 = vmatprep.subr.mxu0 0.0
    %v5757 = vand.u32 %v5745, 4294901760
    %5758 = vmatpush1.msra.mxu0 %v5757
    %5759 = vmatprep.subr.mxu0 0.0
    %v5760 = vand.u32 %v5746, 4294901760
    %5761 = vmatpush1.msra.mxu0 %v5760
    %5762 = vmatprep.subr.mxu0 0.0
    %5763 = vmatpush1.msra.mxu0 0.0
    %5764 = vmatprep.subr.mxu0 0.0
    %5765 = vmatpush1.msra.mxu0 0.0
    %5766 = vmatprep.subr.mxu0 0.0
    %5767 = vmatpush1.msra.mxu0 0.0
    %5768 = vmatprep.subr.mxu0 0.0
    %5769 = vmatpush1.msra.mxu0 0.0
    %5770 = vmatprep.subr.mxu0 0.0
    %5771 = vmatpush1.msra.mxu0 0.0
    %5772 = vmatprep.subr.mxu0 0.0
    %5773 = vmatpush1.msra.mxu0 0.0
    %5774 = vmatprep.subr.mxu0 0.0
    %5775 = vmatpush1.msra.mxu0 0.0
    %5776 = vmatprep.subr.mxu0 0.0
    %5777 = vmatpush1.msra.mxu0 0.0
    %5778 = vmatprep.subr.mxu0 0.0
    %5779 = vmatpush1.msra.mxu0 0.0
    %5780 = vmatprep.subr.mxu0 0.0
    %5781 = vmatpush1.msra.mxu0 0.0
    %5782 = vmatprep.subr.mxu0 0.0
    %5783 = vmatpush1.msra.mxu0 0.0
    %5784 = vmatprep.subr.mxu0 0.0
    %5785 = vmatpush1.msra.mxu0 0.0
    %5786 = vmatprep.subr.mxu0 0.0
    %5787 = vmatpush1.msra.mxu0 0.0
    %5788 = vmatprep.subr.mxu0 0.0
    %5789 = vmatpush1.msra.mxu0 0.0
    %5790 = vmatprep.subr.mxu0 0.0
    %5791 = vmatpush1.msra.mxu0 0.0
    %5792 = vmatprep.subr.mxu0 0.0
    %5793 = vmatpush1.msra.mxu0 0.0
    %5794 = vmatprep.subr.mxu0 0.0
    %5795 = vmatpush1.msra.mxu0 0.0
    %5796 = vmatprep.subr.mxu0 0.0
    %5797 = vmatpush1.msra.mxu0 0.0
    %5798 = vmatprep.subr.mxu0 0.0
    %5799 = vmatpush1.msra.mxu0 0.0
    %5800 = vmatprep.subr.mxu0 0.0
    %5801 = vmatpush1.msra.mxu0 0.0
    %5802 = vmatprep.subr.mxu0 0.0
    %5803 = vmatpush1.msra.mxu0 0.0
    %5804 = vmatprep.subr.mxu0 0.0
    %5805 = vmatpush1.msra.mxu0 0.0
    %5806 = vmatprep.subr.mxu0 0.0
    %5807 = vmatpush1.msra.mxu0 0.0
    %5808 = vmatprep.subr.mxu0 0.0
    %5809 = vmatpush1.msra.mxu0 0.0
    %5810 = vmatprep.subr.mxu0 0.0
    %5811 = vmatpush1.msra.mxu0 0.0
    %5812 = vmatprep.subr.mxu0 0.0
    %5813 = vmatpush1.msra.mxu0 0.0
    %5814 = vmatprep.subr.mxu0 0.0
    %5815 = vmatpush1.msra.mxu0 0.0
    %5816 = vmatprep.subr.mxu0 0.0
    %5817 = vmatpush1.msra.mxu0 0.0
    %5818 = vmatprep.mubr.f32.mxu0 0.0
    %v5819 = vand.u32 %v5748, 4294901760
    %v5820 = vsub.f32 %v5748, %v5819
    %v5821 = vand.u32 %v5820, 4294901760
    %v5822 = vsub.f32 %v5820, %v5821
    %v5823 = vand.u32 %v5822, 4294901760
    %5824 = vmatmul.mubr.f32.gmra.mrb[0].mxu0 %v5823
    %v5825 = vpop.f32.mrb[0].mxu0
    %v5826 = vadd.f32 0.0, %v5825
    %v5827 = vpop.f32.mrb[0].mxu0
    %5828 = vdwg.mxu0
    %5829 = vmatprep.subr.mxu0 0.0
    %v5830 = vand.u32 %v5743, 4294901760
    %v5831 = vsub.f32 %v5743, %v5830
    %v5832 = vand.u32 %v5831, 4294901760
    %v5833 = vsub.f32 %v5831, %v5832
    %v5834 = vand.u32 %v5833, 4294901760
    %5835 = vmatpush1.msra.mxu0 %v5834
    %5836 = vmatprep.subr.mxu0 0.0
    %v5837 = vand.u32 %v5744, 4294901760
    %v5838 = vsub.f32 %v5744, %v5837
    %v5839 = vand.u32 %v5838, 4294901760
    %v5840 = vsub.f32 %v5838, %v5839
    %v5841 = vand.u32 %v5840, 4294901760
    %5842 = vmatpush1.msra.mxu0 %v5841
    %5843 = vmatprep.subr.mxu0 0.0
    %v5844 = vand.u32 %v5745, 4294901760
    %v5845 = vsub.f32 %v5745, %v5844
    %v5846 = vand.u32 %v5845, 4294901760
    %v5847 = vsub.f32 %v5845, %v5846
    %v5848 = vand.u32 %v5847, 4294901760
    %5849 = vmatpush1.msra.mxu0 %v5848
    %5850 = vmatprep.subr.mxu0 0.0
    %v5851 = vand.u32 %v5746, 4294901760
    %v5852 = vsub.f32 %v5746, %v5851
    %v5853 = vand.u32 %v5852, 4294901760
    %v5854 = vsub.f32 %v5852, %v5853
    %v5855 = vand.u32 %v5854, 4294901760
    %5856 = vmatpush1.msra.mxu0 %v5855
    %5857 = vmatprep.subr.mxu0 0.0
    %5858 = vmatpush1.msra.mxu0 0.0
    %5859 = vmatprep.subr.mxu0 0.0
    %5860 = vmatpush1.msra.mxu0 0.0
    %5861 = vmatprep.subr.mxu0 0.0
    %5862 = vmatpush1.msra.mxu0 0.0
    %5863 = vmatprep.subr.mxu0 0.0
    %5864 = vmatpush1.msra.mxu0 0.0
    %5865 = vmatprep.subr.mxu0 0.0
    %5866 = vmatpush1.msra.mxu0 0.0
    %5867 = vmatprep.subr.mxu0 0.0
    %5868 = vmatpush1.msra.mxu0 0.0
    %5869 = vmatprep.subr.mxu0 0.0
    %5870 = vmatpush1.msra.mxu0 0.0
    %5871 = vmatprep.subr.mxu0 0.0
    %5872 = vmatpush1.msra.mxu0 0.0
    %5873 = vmatprep.subr.mxu0 0.0
    %5874 = vmatpush1.msra.mxu0 0.0
    %5875 = vmatprep.subr.mxu0 0.0
    %5876 = vmatpush1.msra.mxu0 0.0
    %5877 = vmatprep.subr.mxu0 0.0
    %5878 = vmatpush1.msra.mxu0 0.0
    %5879 = vmatprep.subr.mxu0 0.0
    %5880 = vmatpush1.msra.mxu0 0.0
    %5881 = vmatprep.subr.mxu0 0.0
    %5882 = vmatpush1.msra.mxu0 0.0
    %5883 = vmatprep.subr.mxu0 0.0
    %5884 = vmatpush1.msra.mxu0 0.0
    %5885 = vmatprep.subr.mxu0 0.0
    %5886 = vmatpush1.msra.mxu0 0.0
    %5887 = vmatprep.subr.mxu0 0.0
    %5888 = vmatpush1.msra.mxu0 0.0
    %5889 = vmatprep.subr.mxu0 0.0
    %5890 = vmatpush1.msra.mxu0 0.0
    %5891 = vmatprep.subr.mxu0 0.0
    %5892 = vmatpush1.msra.mxu0 0.0
    %5893 = vmatprep.subr.mxu0 0.0
    %5894 = vmatpush1.msra.mxu0 0.0
    %5895 = vmatprep.subr.mxu0 0.0
    %5896 = vmatpush1.msra.mxu0 0.0
    %5897 = vmatprep.subr.mxu0 0.0
    %5898 = vmatpush1.msra.mxu0 0.0
    %5899 = vmatprep.subr.mxu0 0.0
    %5900 = vmatpush1.msra.mxu0 0.0
    %5901 = vmatprep.subr.mxu0 0.0
    %5902 = vmatpush1.msra.mxu0 0.0
    %5903 = vmatprep.subr.mxu0 0.0
    %5904 = vmatpush1.msra.mxu0 0.0
    %5905 = vmatprep.subr.mxu0 0.0
    %5906 = vmatpush1.msra.mxu0 0.0
    %5907 = vmatprep.subr.mxu0 0.0
    %5908 = vmatpush1.msra.mxu0 0.0
    %5909 = vmatprep.subr.mxu0 0.0
    %5910 = vmatpush1.msra.mxu0 0.0
    %5911 = vmatprep.subr.mxu0 0.0
    %5912 = vmatpush1.msra.mxu0 0.0
    %5913 = vmatprep.mubr.f32.mxu0 0.0
    %v5914 = vand.u32 %v5748, 4294901760
    %5915 = vmatmul.mubr.f32.gmra.mrb[0].mxu0 %v5914
    %v5916 = vpop.f32.mrb[0].mxu0
    %v5917 = vadd.f32 %v5826, %v5916
    %v5918 = vpop.f32.mrb[0].mxu0
    %5919 = vdwg.mxu0
    %5920 = vmatprep.subr.mxu0 0.0
    %v5921 = vand.u32 %v5743, 4294901760
    %v5922 = vsub.f32 %v5743, %v5921
    %5923 = vmatpush1.msra.mxu0 %v5922
    %5924 = vmatprep.subr.mxu0 0.0
    %v5925 = vand.u32 %v5744, 4294901760
    %v5926 = vsub.f32 %v5744, %v5925
    %5927 = vmatpush1.msra.mxu0 %v5926
    %5928 = vmatprep.subr.mxu0 0.0
    %v5929 = vand.u32 %v5745, 4294901760
    %v5930 = vsub.f32 %v5745, %v5929
    %5931 = vmatpush1.msra.mxu0 %v5930
    %5932 = vmatprep.subr.mxu0 0.0
    %v5933 = vand.u32 %v5746, 4294901760
    %v5934 = vsub.f32 %v5746, %v5933
    %5935 = vmatpush1.msra.mxu0 %v5934
    %5936 = vmatprep.subr.mxu0 0.0
    %5937 = vmatpush1.msra.mxu0 0.0
    %5938 = vmatprep.subr.mxu0 0.0
    %5939 = vmatpush1.msra.mxu0 0.0
    %5940 = vmatprep.subr.mxu0 0.0
    %5941 = vmatpush1.msra.mxu0 0.0
    %5942 = vmatprep.subr.mxu0 0.0
    %5943 = vmatpush1.msra.mxu0 0.0
    %5944 = vmatprep.subr.mxu0 0.0
    %5945 = vmatpush1.msra.mxu0 0.0
    %5946 = vmatprep.subr.mxu0 0.0
    %5947 = vmatpush1.msra.mxu0 0.0
    %5948 = vmatprep.subr.mxu0 0.0
    %5949 = vmatpush1.msra.mxu0 0.0
    %5950 = vmatprep.subr.mxu0 0.0
    %5951 = vmatpush1.msra.mxu0 0.0
    %5952 = vmatprep.subr.mxu0 0.0
    %5953 = vmatpush1.msra.mxu0 0.0
    %5954 = vmatprep.subr.mxu0 0.0
    %5955 = vmatpush1.msra.mxu0 0.0
    %5956 = vmatprep.subr.mxu0 0.0
    %5957 = vmatpush1.msra.mxu0 0.0
    %5958 = vmatprep.subr.mxu0 0.0
    %5959 = vmatpush1.msra.mxu0 0.0
    %5960 = vmatprep.subr.mxu0 0.0
    %5961 = vmatpush1.msra.mxu0 0.0
    %5962 = vmatprep.subr.mxu0 0.0
    %5963 = vmatpush1.msra.mxu0 0.0
    %5964 = vmatprep.subr.mxu0 0.0
    %5965 = vmatpush1.msra.mxu0 0.0
    %5966 = vmatprep.subr.mxu0 0.0
    %5967 = vmatpush1.msra.mxu0 0.0
    %5968 = vmatprep.subr.mxu0 0.0
    %5969 = vmatpush1.msra.mxu0 0.0
    %5970 = vmatprep.subr.mxu0 0.0
    %5971 = vmatpush1.msra.mxu0 0.0
    %5972 = vmatprep.subr.mxu0 0.0
    %5973 = vmatpush1.msra.mxu0 0.0
    %5974 = vmatprep.subr.mxu0 0.0
    %5975 = vmatpush1.msra.mxu0 0.0
    %5976 = vmatprep.subr.mxu0 0.0
    %5977 = vmatpush1.msra.mxu0 0.0
    %5978 = vmatprep.subr.mxu0 0.0
    %5979 = vmatpush1.msra.mxu0 0.0
    %5980 = vmatprep.subr.mxu0 0.0
    %5981 = vmatpush1.msra.mxu0 0.0
    %5982 = vmatprep.subr.mxu0 0.0
    %5983 = vmatpush1.msra.mxu0 0.0
    %5984 = vmatprep.subr.mxu0 0.0
    %5985 = vmatpush1.msra.mxu0 0.0
    %5986 = vmatprep.subr.mxu0 0.0
    %5987 = vmatpush1.msra.mxu0 0.0
    %5988 = vmatprep.subr.mxu0 0.0
    %5989 = vmatpush1.msra.mxu0 0.0
    %5990 = vmatprep.subr.mxu0 0.0
    %5991 = vmatpush1.msra.mxu0 0.0
    %5992 = vmatprep.mubr.f32.mxu0 0.0
    %v5993 = vand.u32 %v5748, 4294901760
    %v5994 = vsub.f32 %v5748, %v5993
    %5995 = vmatmul.mubr.f32.gmra.mrb[0].mxu0 %v5994
    %v5996 = vpop.f32.mrb[0].mxu0
    %v5997 = vadd.f32 %v5917, %v5996
    %v5998 = vpop.f32.mrb[0].mxu0
    %5999 = vdwg.mxu0
    %6000 = vmatprep.subr.mxu0 0.0
    %v6001 = vand.u32 %v5743, 4294901760
    %6002 = vmatpush1.msra.mxu0 %v6001
    %6003 = vmatprep.subr.mxu0 0.0
    %v6004 = vand.u32 %v5744, 4294901760
    %6005 = vmatpush1.msra.mxu0 %v6004
    %6006 = vmatprep.subr.mxu0 0.0
    %v6007 = vand.u32 %v5745, 4294901760
    %6008 = vmatpush1.msra.mxu0 %v6007
    %6009 = vmatprep.subr.mxu0 0.0
    %v6010 = vand.u32 %v5746, 4294901760
    %6011 = vmatpush1.msra.mxu0 %v6010
    %6012 = vmatprep.subr.mxu0 0.0
    %6013 = vmatpush1.msra.mxu0 0.0
    %6014 = vmatprep.subr.mxu0 0.0
    %6015 = vmatpush1.msra.mxu0 0.0
    %6016 = vmatprep.subr.mxu0 0.0
    %6017 = vmatpush1.msra.mxu0 0.0
    %6018 = vmatprep.subr.mxu0 0.0
    %6019 = vmatpush1.msra.mxu0 0.0
    %6020 = vmatprep.subr.mxu0 0.0
    %6021 = vmatpush1.msra.mxu0 0.0
    %6022 = vmatprep.subr.mxu0 0.0
    %6023 = vmatpush1.msra.mxu0 0.0
    %6024 = vmatprep.subr.mxu0 0.0
    %6025 = vmatpush1.msra.mxu0 0.0
    %6026 = vmatprep.subr.mxu0 0.0
    %6027 = vmatpush1.msra.mxu0 0.0
    %6028 = vmatprep.subr.mxu0 0.0
    %6029 = vmatpush1.msra.mxu0 0.0
    %6030 = vmatprep.subr.mxu0 0.0
    %6031 = vmatpush1.msra.mxu0 0.0
    %6032 = vmatprep.subr.mxu0 0.0
    %6033 = vmatpush1.msra.mxu0 0.0
    %6034 = vmatprep.subr.mxu0 0.0
    %6035 = vmatpush1.msra.mxu0 0.0
    %6036 = vmatprep.subr.mxu0 0.0
    %6037 = vmatpush1.msra.mxu0 0.0
    %6038 = vmatprep.subr.mxu0 0.0
    %6039 = vmatpush1.msra.mxu0 0.0
    %6040 = vmatprep.subr.mxu0 0.0
    %6041 = vmatpush1.msra.mxu0 0.0
    %6042 = vmatprep.subr.mxu0 0.0
    %6043 = vmatpush1.msra.mxu0 0.0
    %6044 = vmatprep.subr.mxu0 0.0
    %6045 = vmatpush1.msra.mxu0 0.0
    %6046 = vmatprep.subr.mxu0 0.0
    %6047 = vmatpush1.msra.mxu0 0.0
    %6048 = vmatprep.subr.mxu0 0.0
    %6049 = vmatpush1.msra.mxu0 0.0
    %6050 = vmatprep.subr.mxu0 0.0
    %6051 = vmatpush1.msra.mxu0 0.0
    %6052 = vmatprep.subr.mxu0 0.0
    %6053 = vmatpush1.msra.mxu0 0.0
    %6054 = vmatprep.subr.mxu0 0.0
    %6055 = vmatpush1.msra.mxu0 0.0
    %6056 = vmatprep.subr.mxu0 0.0
    %6057 = vmatpush1.msra.mxu0 0.0
    %6058 = vmatprep.subr.mxu0 0.0
    %6059 = vmatpush1.msra.mxu0 0.0
    %6060 = vmatprep.subr.mxu0 0.0
    %6061 = vmatpush1.msra.mxu0 0.0
    %6062 = vmatprep.subr.mxu0 0.0
    %6063 = vmatpush1.msra.mxu0 0.0
    %6064 = vmatprep.subr.mxu0 0.0
    %6065 = vmatpush1.msra.mxu0 0.0
    %6066 = vmatprep.subr.mxu0 0.0
    %6067 = vmatpush1.msra.mxu0 0.0
    %6068 = vmatprep.mubr.f32.mxu0 0.0
    %v6069 = vand.u32 %v5748, 4294901760
    %v6070 = vsub.f32 %v5748, %v6069
    %v6071 = vand.u32 %v6070, 4294901760
    %6072 = vmatmul.mubr.f32.gmra.mrb[0].mxu0 %v6071
    %v6073 = vpop.f32.mrb[0].mxu0
    %v6074 = vadd.f32 %v5997, %v6073
    %v6075 = vpop.f32.mrb[0].mxu0
    %6076 = vdwg.mxu0
    %6077 = vmatprep.subr.mxu0 0.0
    %v6078 = vand.u32 %v5743, 4294901760
    %v6079 = vsub.f32 %v5743, %v6078
    %v6080 = vand.u32 %v6079, 4294901760
    %6081 = vmatpush1.msra.mxu0 %v6080
    %6082 = vmatprep.subr.mxu0 0.0
    %v6083 = vand.u32 %v5744, 4294901760
    %v6084 = vsub.f32 %v5744, %v6083
    %v6085 = vand.u32 %v6084, 4294901760
    %6086 = vmatpush1.msra.mxu0 %v6085
    %6087 = vmatprep.subr.mxu0 0.0
    %v6088 = vand.u32 %v5745, 4294901760
    %v6089 = vsub.f32 %v5745, %v6088
    %v6090 = vand.u32 %v6089, 4294901760
    %6091 = vmatpush1.msra.mxu0 %v6090
    %6092 = vmatprep.subr.mxu0 0.0
    %v6093 = vand.u32 %v5746, 4294901760
    %v6094 = vsub.f32 %v5746, %v6093
    %v6095 = vand.u32 %v6094, 4294901760
    %6096 = vmatpush1.msra.mxu0 %v6095
    %6097 = vmatprep.subr.mxu0 0.0
    %6098 = vmatpush1.msra.mxu0 0.0
    %6099 = vmatprep.subr.mxu0 0.0
    %6100 = vmatpush1.msra.mxu0 0.0
    %6101 = vmatprep.subr.mxu0 0.0
    %6102 = vmatpush1.msra.mxu0 0.0
    %6103 = vmatprep.subr.mxu0 0.0
    %6104 = vmatpush1.msra.mxu0 0.0
    %6105 = vmatprep.subr.mxu0 0.0
    %6106 = vmatpush1.msra.mxu0 0.0
    %6107 = vmatprep.subr.mxu0 0.0
    %6108 = vmatpush1.msra.mxu0 0.0
    %6109 = vmatprep.subr.mxu0 0.0
    %6110 = vmatpush1.msra.mxu0 0.0
    %6111 = vmatprep.subr.mxu0 0.0
    %6112 = vmatpush1.msra.mxu0 0.0
    %6113 = vmatprep.subr.mxu0 0.0
    %6114 = vmatpush1.msra.mxu0 0.0
    %6115 = vmatprep.subr.mxu0 0.0
    %6116 = vmatpush1.msra.mxu0 0.0
    %6117 = vmatprep.subr.mxu0 0.0
    %6118 = vmatpush1.msra.mxu0 0.0
    %6119 = vmatprep.subr.mxu0 0.0
    %6120 = vmatpush1.msra.mxu0 0.0
    %6121 = vmatprep.subr.mxu0 0.0
    %6122 = vmatpush1.msra.mxu0 0.0
    %6123 = vmatprep.subr.mxu0 0.0
    %6124 = vmatpush1.msra.mxu0 0.0
    %6125 = vmatprep.subr.mxu0 0.0
    %6126 = vmatpush1.msra.mxu0 0.0
    %6127 = vmatprep.subr.mxu0 0.0
    %6128 = vmatpush1.msra.mxu0 0.0
    %6129 = vmatprep.subr.mxu0 0.0
    %6130 = vmatpush1.msra.mxu0 0.0
    %6131 = vmatprep.subr.mxu0 0.0
    %6132 = vmatpush1.msra.mxu0 0.0
    %6133 = vmatprep.subr.mxu0 0.0
    %6134 = vmatpush1.msra.mxu0 0.0
    %6135 = vmatprep.subr.mxu0 0.0
    %6136 = vmatpush1.msra.mxu0 0.0
    %6137 = vmatprep.subr.mxu0 0.0
    %6138 = vmatpush1.msra.mxu0 0.0
    %6139 = vmatprep.subr.mxu0 0.0
    %6140 = vmatpush1.msra.mxu0 0.0
    %6141 = vmatprep.subr.mxu0 0.0
    %6142 = vmatpush1.msra.mxu0 0.0
    %6143 = vmatprep.subr.mxu0 0.0
    %6144 = vmatpush1.msra.mxu0 0.0
    %6145 = vmatprep.subr.mxu0 0.0
    %6146 = vmatpush1.msra.mxu0 0.0
    %6147 = vmatprep.subr.mxu0 0.0
    %6148 = vmatpush1.msra.mxu0 0.0
    %6149 = vmatprep.subr.mxu0 0.0
    %6150 = vmatpush1.msra.mxu0 0.0
    %6151 = vmatprep.subr.mxu0 0.0
    %6152 = vmatpush1.msra.mxu0 0.0
    %6153 = vmatprep.mubr.f32.mxu0 0.0
    %v6154 = vand.u32 %v5748, 4294901760
    %6155 = vmatmul.mubr.f32.gmra.mrb[0].mxu0 %v6154
    %v6156 = vpop.f32.mrb[0].mxu0
    %v6157 = vadd.f32 %v6074, %v6156
    %v6158 = vpop.f32.mrb[0].mxu0
    %6159 = vdwg.mxu0
    %6160 = vmatprep.subr.mxu0 0.0
    %v6161 = vand.u32 %v5743, 4294901760
    %6162 = vmatpush1.msra.mxu0 %v6161
    %6163 = vmatprep.subr.mxu0 0.0
    %v6164 = vand.u32 %v5744, 4294901760
    %6165 = vmatpush1.msra.mxu0 %v6164
    %6166 = vmatprep.subr.mxu0 0.0
    %v6167 = vand.u32 %v5745, 4294901760
    %6168 = vmatpush1.msra.mxu0 %v6167
    %6169 = vmatprep.subr.mxu0 0.0
    %v6170 = vand.u32 %v5746, 4294901760
    %6171 = vmatpush1.msra.mxu0 %v6170
    %6172 = vmatprep.subr.mxu0 0.0
    %6173 = vmatpush1.msra.mxu0 0.0
    %6174 = vmatprep.subr.mxu0 0.0
    %6175 = vmatpush1.msra.mxu0 0.0
    %6176 = vmatprep.subr.mxu0 0.0
    %6177 = vmatpush1.msra.mxu0 0.0
    %6178 = vmatprep.subr.mxu0 0.0
    %6179 = vmatpush1.msra.mxu0 0.0
    %6180 = vmatprep.subr.mxu0 0.0
    %6181 = vmatpush1.msra.mxu0 0.0
    %6182 = vmatprep.subr.mxu0 0.0
    %6183 = vmatpush1.msra.mxu0 0.0
    %6184 = vmatprep.subr.mxu0 0.0
    %6185 = vmatpush1.msra.mxu0 0.0
    %6186 = vmatprep.subr.mxu0 0.0
    %6187 = vmatpush1.msra.mxu0 0.0
    %6188 = vmatprep.subr.mxu0 0.0
    %6189 = vmatpush1.msra.mxu0 0.0
    %6190 = vmatprep.subr.mxu0 0.0
    %6191 = vmatpush1.msra.mxu0 0.0
    %6192 = vmatprep.subr.mxu0 0.0
    %6193 = vmatpush1.msra.mxu0 0.0
    %6194 = vmatprep.subr.mxu0 0.0
    %6195 = vmatpush1.msra.mxu0 0.0
    %6196 = vmatprep.subr.mxu0 0.0
    %6197 = vmatpush1.msra.mxu0 0.0
    %6198 = vmatprep.subr.mxu0 0.0
    %6199 = vmatpush1.msra.mxu0 0.0
    %6200 = vmatprep.subr.mxu0 0.0
    %6201 = vmatpush1.msra.mxu0 0.0
    %6202 = vmatprep.subr.mxu0 0.0
    %6203 = vmatpush1.msra.mxu0 0.0
    %6204 = vmatprep.subr.mxu0 0.0
    %6205 = vmatpush1.msra.mxu0 0.0
    %6206 = vmatprep.subr.mxu0 0.0
    %6207 = vmatpush1.msra.mxu0 0.0
    %6208 = vmatprep.subr.mxu0 0.0
    %6209 = vmatpush1.msra.mxu0 0.0
    %6210 = vmatprep.subr.mxu0 0.0
    %6211 = vmatpush1.msra.mxu0 0.0
    %6212 = vmatprep.subr.mxu0 0.0
    %6213 = vmatpush1.msra.mxu0 0.0
    %6214 = vmatprep.subr.mxu0 0.0
    %6215 = vmatpush1.msra.mxu0 0.0
    %6216 = vmatprep.subr.mxu0 0.0
    %6217 = vmatpush1.msra.mxu0 0.0
    %6218 = vmatprep.subr.mxu0 0.0
    %6219 = vmatpush1.msra.mxu0 0.0
    %6220 = vmatprep.subr.mxu0 0.0
    %6221 = vmatpush1.msra.mxu0 0.0
    %6222 = vmatprep.subr.mxu0 0.0
    %6223 = vmatpush1.msra.mxu0 0.0
    %6224 = vmatprep.subr.mxu0 0.0
    %6225 = vmatpush1.msra.mxu0 0.0
    %6226 = vmatprep.subr.mxu0 0.0
    %6227 = vmatpush1.msra.mxu0 0.0
    %6228 = vmatprep.mubr.f32.mxu0 0.0
    %v6229 = vand.u32 %v5748, 4294901760
    %6230 = vmatmul.mubr.f32.gmra.mrb[0].mxu0 %v6229
    %v6231 = vpop.f32.mrb[0].mxu0
    %v6232 = vadd.f32 %v6157, %v6231
    %v6233 = vpop.f32.mrb[0].mxu0
    %6234 = vdwg.mxu0
    %v6235 = vld [vmem:[#allocation16] sm:$0xff]
    %v6236 = vld [vmem:[#allocation16 + $0x8] sm:$0xff]
    %v6237 = vld [vmem:[#allocation16 + $0x10] sm:$0xff]
    %v6238 = vld [vmem:[#allocation16 + $0x18] sm:$0xff]
    %6239 = vmatprep.subr.mxu0 0.0
    %v6240 = vand.u32 %v6235, 4294901760
    %6241 = vmatpush1.msra.mxu0 %v6240
    %6242 = vmatprep.subr.mxu0 0.0
    %v6243 = vand.u32 %v6236, 4294901760
    %6244 = vmatpush1.msra.mxu0 %v6243
    %6245 = vmatprep.subr.mxu0 0.0
    %v6246 = vand.u32 %v6237, 4294901760
    %6247 = vmatpush1.msra.mxu0 %v6246
    %6248 = vmatprep.subr.mxu0 0.0
    %v6249 = vand.u32 %v6238, 4294901760
    %6250 = vmatpush1.msra.mxu0 %v6249
    %6251 = vmatprep.subr.mxu0 0.0
    %6252 = vmatpush1.msra.mxu0 0.0
    %6253 = vmatprep.subr.mxu0 0.0
    %6254 = vmatpush1.msra.mxu0 0.0
    %6255 = vmatprep.subr.mxu0 0.0
    %6256 = vmatpush1.msra.mxu0 0.0
    %6257 = vmatprep.subr.mxu0 0.0
    %6258 = vmatpush1.msra.mxu0 0.0
    %6259 = vmatprep.subr.mxu0 0.0
    %6260 = vmatpush1.msra.mxu0 0.0
    %6261 = vmatprep.subr.mxu0 0.0
    %6262 = vmatpush1.msra.mxu0 0.0
    %6263 = vmatprep.subr.mxu0 0.0
    %6264 = vmatpush1.msra.mxu0 0.0
    %6265 = vmatprep.subr.mxu0 0.0
    %6266 = vmatpush1.msra.mxu0 0.0
    %6267 = vmatprep.subr.mxu0 0.0
    %6268 = vmatpush1.msra.mxu0 0.0
    %6269 = vmatprep.subr.mxu0 0.0
    %6270 = vmatpush1.msra.mxu0 0.0
    %6271 = vmatprep.subr.mxu0 0.0
    %6272 = vmatpush1.msra.mxu0 0.0
    %6273 = vmatprep.subr.mxu0 0.0
    %6274 = vmatpush1.msra.mxu0 0.0
    %6275 = vmatprep.subr.mxu0 0.0
    %6276 = vmatpush1.msra.mxu0 0.0
    %6277 = vmatprep.subr.mxu0 0.0
    %6278 = vmatpush1.msra.mxu0 0.0
    %6279 = vmatprep.subr.mxu0 0.0
    %6280 = vmatpush1.msra.mxu0 0.0
    %6281 = vmatprep.subr.mxu0 0.0
    %6282 = vmatpush1.msra.mxu0 0.0
    %6283 = vmatprep.subr.mxu0 0.0
    %6284 = vmatpush1.msra.mxu0 0.0
    %6285 = vmatprep.subr.mxu0 0.0
    %6286 = vmatpush1.msra.mxu0 0.0
    %6287 = vmatprep.subr.mxu0 0.0
    %6288 = vmatpush1.msra.mxu0 0.0
    %6289 = vmatprep.subr.mxu0 0.0
    %6290 = vmatpush1.msra.mxu0 0.0
    %6291 = vmatprep.subr.mxu0 0.0
    %6292 = vmatpush1.msra.mxu0 0.0
    %6293 = vmatprep.subr.mxu0 0.0
    %6294 = vmatpush1.msra.mxu0 0.0
    %6295 = vmatprep.subr.mxu0 0.0
    %6296 = vmatpush1.msra.mxu0 0.0
    %6297 = vmatprep.subr.mxu0 0.0
    %6298 = vmatpush1.msra.mxu0 0.0
    %6299 = vmatprep.subr.mxu0 0.0
    %6300 = vmatpush1.msra.mxu0 0.0
    %6301 = vmatprep.subr.mxu0 0.0
    %6302 = vmatpush1.msra.mxu0 0.0
    %6303 = vmatprep.subr.mxu0 0.0
    %6304 = vmatpush1.msra.mxu0 0.0
    %6305 = vmatprep.subr.mxu0 0.0
    %6306 = vmatpush1.msra.mxu0 0.0
    %6307 = vmatprep.mubr.f32.mxu0 0.0
    %v6308 = vand.u32 %v5748, 4294901760
    %v6309 = vsub.f32 %v5748, %v6308
    %v6310 = vand.u32 %v6309, 4294901760
    %v6311 = vsub.f32 %v6309, %v6310
    %v6312 = vand.u32 %v6311, 4294901760
    %6313 = vmatmul.mubr.f32.gmra.mrb[0].mxu0 %v6312
    %v6314 = vpop.f32.mrb[0].mxu0
    %v6315 = vadd.f32 0.0, %v6314
    %v6316 = vpop.f32.mrb[0].mxu0
    %6317 = vdwg.mxu0
    %6318 = vmatprep.subr.mxu0 0.0
    %v6319 = vand.u32 %v6235, 4294901760
    %v6320 = vsub.f32 %v6235, %v6319
    %v6321 = vand.u32 %v6320, 4294901760
    %v6322 = vsub.f32 %v6320, %v6321
    %v6323 = vand.u32 %v6322, 4294901760
    %6324 = vmatpush1.msra.mxu0 %v6323
    %6325 = vmatprep.subr.mxu0 0.0
    %v6326 = vand.u32 %v6236, 4294901760
    %v6327 = vsub.f32 %v6236, %v6326
    %v6328 = vand.u32 %v6327, 4294901760
    %v6329 = vsub.f32 %v6327, %v6328
    %v6330 = vand.u32 %v6329, 4294901760
    %6331 = vmatpush1.msra.mxu0 %v6330
    %6332 = vmatprep.subr.mxu0 0.0
    %v6333 = vand.u32 %v6237, 4294901760
    %v6334 = vsub.f32 %v6237, %v6333
    %v6335 = vand.u32 %v6334, 4294901760
    %v6336 = vsub.f32 %v6334, %v6335
    %v6337 = vand.u32 %v6336, 4294901760
    %6338 = vmatpush1.msra.mxu0 %v6337
    %6339 = vmatprep.subr.mxu0 0.0
    %v6340 = vand.u32 %v6238, 4294901760
    %v6341 = vsub.f32 %v6238, %v6340
    %v6342 = vand.u32 %v6341, 4294901760
    %v6343 = vsub.f32 %v6341, %v6342
    %v6344 = vand.u32 %v6343, 4294901760
    %6345 = vmatpush1.msra.mxu0 %v6344
    %6346 = vmatprep.subr.mxu0 0.0
    %6347 = vmatpush1.msra.mxu0 0.0
    %6348 = vmatprep.subr.mxu0 0.0
    %6349 = vmatpush1.msra.mxu0 0.0
    %6350 = vmatprep.subr.mxu0 0.0
    %6351 = vmatpush1.msra.mxu0 0.0
    %6352 = vmatprep.subr.mxu0 0.0
    %6353 = vmatpush1.msra.mxu0 0.0
    %6354 = vmatprep.subr.mxu0 0.0
    %6355 = vmatpush1.msra.mxu0 0.0
    %6356 = vmatprep.subr.mxu0 0.0
    %6357 = vmatpush1.msra.mxu0 0.0
    %6358 = vmatprep.subr.mxu0 0.0
    %6359 = vmatpush1.msra.mxu0 0.0
    %6360 = vmatprep.subr.mxu0 0.0
    %6361 = vmatpush1.msra.mxu0 0.0
    %6362 = vmatprep.subr.mxu0 0.0
    %6363 = vmatpush1.msra.mxu0 0.0
    %6364 = vmatprep.subr.mxu0 0.0
    %6365 = vmatpush1.msra.mxu0 0.0
    %6366 = vmatprep.subr.mxu0 0.0
    %6367 = vmatpush1.msra.mxu0 0.0
    %6368 = vmatprep.subr.mxu0 0.0
    %6369 = vmatpush1.msra.mxu0 0.0
    %6370 = vmatprep.subr.mxu0 0.0
    %6371 = vmatpush1.msra.mxu0 0.0
    %6372 = vmatprep.subr.mxu0 0.0
    %6373 = vmatpush1.msra.mxu0 0.0
    %6374 = vmatprep.subr.mxu0 0.0
    %6375 = vmatpush1.msra.mxu0 0.0
    %6376 = vmatprep.subr.mxu0 0.0
    %6377 = vmatpush1.msra.mxu0 0.0
    %6378 = vmatprep.subr.mxu0 0.0
    %6379 = vmatpush1.msra.mxu0 0.0
    %6380 = vmatprep.subr.mxu0 0.0
    %6381 = vmatpush1.msra.mxu0 0.0
    %6382 = vmatprep.subr.mxu0 0.0
    %6383 = vmatpush1.msra.mxu0 0.0
    %6384 = vmatprep.subr.mxu0 0.0
    %6385 = vmatpush1.msra.mxu0 0.0
    %6386 = vmatprep.subr.mxu0 0.0
    %6387 = vmatpush1.msra.mxu0 0.0
    %6388 = vmatprep.subr.mxu0 0.0
    %6389 = vmatpush1.msra.mxu0 0.0
    %6390 = vmatprep.subr.mxu0 0.0
    %6391 = vmatpush1.msra.mxu0 0.0
    %6392 = vmatprep.subr.mxu0 0.0
    %6393 = vmatpush1.msra.mxu0 0.0
    %6394 = vmatprep.subr.mxu0 0.0
    %6395 = vmatpush1.msra.mxu0 0.0
    %6396 = vmatprep.subr.mxu0 0.0
    %6397 = vmatpush1.msra.mxu0 0.0
    %6398 = vmatprep.subr.mxu0 0.0
    %6399 = vmatpush1.msra.mxu0 0.0
    %6400 = vmatprep.subr.mxu0 0.0
    %6401 = vmatpush1.msra.mxu0 0.0
    %6402 = vmatprep.mubr.f32.mxu0 0.0
    %v6403 = vand.u32 %v5748, 4294901760
    %6404 = vmatmul.mubr.f32.gmra.mrb[0].mxu0 %v6403
    %v6405 = vpop.f32.mrb[0].mxu0
    %v6406 = vadd.f32 %v6315, %v6405
    %v6407 = vpop.f32.mrb[0].mxu0
    %6408 = vdwg.mxu0
    %6409 = vmatprep.subr.mxu0 0.0
    %v6410 = vand.u32 %v6235, 4294901760
    %v6411 = vsub.f32 %v6235, %v6410
    %6412 = vmatpush1.msra.mxu0 %v6411
    %6413 = vmatprep.subr.mxu0 0.0
    %v6414 = vand.u32 %v6236, 4294901760
    %v6415 = vsub.f32 %v6236, %v6414
    %6416 = vmatpush1.msra.mxu0 %v6415
    %6417 = vmatprep.subr.mxu0 0.0
    %v6418 = vand.u32 %v6237, 4294901760
    %v6419 = vsub.f32 %v6237, %v6418
    %6420 = vmatpush1.msra.mxu0 %v6419
    %6421 = vmatprep.subr.mxu0 0.0
    %v6422 = vand.u32 %v6238, 4294901760
    %v6423 = vsub.f32 %v6238, %v6422
    %6424 = vmatpush1.msra.mxu0 %v6423
    %6425 = vmatprep.subr.mxu0 0.0
    %6426 = vmatpush1.msra.mxu0 0.0
    %6427 = vmatprep.subr.mxu0 0.0
    %6428 = vmatpush1.msra.mxu0 0.0
    %6429 = vmatprep.subr.mxu0 0.0
    %6430 = vmatpush1.msra.mxu0 0.0
    %6431 = vmatprep.subr.mxu0 0.0
    %6432 = vmatpush1.msra.mxu0 0.0
    %6433 = vmatprep.subr.mxu0 0.0
    %6434 = vmatpush1.msra.mxu0 0.0
    %6435 = vmatprep.subr.mxu0 0.0
    %6436 = vmatpush1.msra.mxu0 0.0
    %6437 = vmatprep.subr.mxu0 0.0
    %6438 = vmatpush1.msra.mxu0 0.0
    %6439 = vmatprep.subr.mxu0 0.0
    %6440 = vmatpush1.msra.mxu0 0.0
    %6441 = vmatprep.subr.mxu0 0.0
    %6442 = vmatpush1.msra.mxu0 0.0
    %6443 = vmatprep.subr.mxu0 0.0
    %6444 = vmatpush1.msra.mxu0 0.0
    %6445 = vmatprep.subr.mxu0 0.0
    %6446 = vmatpush1.msra.mxu0 0.0
    %6447 = vmatprep.subr.mxu0 0.0
    %6448 = vmatpush1.msra.mxu0 0.0
    %6449 = vmatprep.subr.mxu0 0.0
    %6450 = vmatpush1.msra.mxu0 0.0
    %6451 = vmatprep.subr.mxu0 0.0
    %6452 = vmatpush1.msra.mxu0 0.0
    %6453 = vmatprep.subr.mxu0 0.0
    %6454 = vmatpush1.msra.mxu0 0.0
    %6455 = vmatprep.subr.mxu0 0.0
    %6456 = vmatpush1.msra.mxu0 0.0
    %6457 = vmatprep.subr.mxu0 0.0
    %6458 = vmatpush1.msra.mxu0 0.0
    %6459 = vmatprep.subr.mxu0 0.0
    %6460 = vmatpush1.msra.mxu0 0.0
    %6461 = vmatprep.subr.mxu0 0.0
    %6462 = vmatpush1.msra.mxu0 0.0
    %6463 = vmatprep.subr.mxu0 0.0
    %6464 = vmatpush1.msra.mxu0 0.0
    %6465 = vmatprep.subr.mxu0 0.0
    %6466 = vmatpush1.msra.mxu0 0.0
    %6467 = vmatprep.subr.mxu0 0.0
    %6468 = vmatpush1.msra.mxu0 0.0
    %6469 = vmatprep.subr.mxu0 0.0
    %6470 = vmatpush1.msra.mxu0 0.0
    %6471 = vmatprep.subr.mxu0 0.0
    %6472 = vmatpush1.msra.mxu0 0.0
    %6473 = vmatprep.subr.mxu0 0.0
    %6474 = vmatpush1.msra.mxu0 0.0
    %6475 = vmatprep.subr.mxu0 0.0
    %6476 = vmatpush1.msra.mxu0 0.0
    %6477 = vmatprep.subr.mxu0 0.0
    %6478 = vmatpush1.msra.mxu0 0.0
    %6479 = vmatprep.subr.mxu0 0.0
    %6480 = vmatpush1.msra.mxu0 0.0
    %6481 = vmatprep.mubr.f32.mxu0 0.0
    %v6482 = vand.u32 %v5748, 4294901760
    %v6483 = vsub.f32 %v5748, %v6482
    %6484 = vmatmul.mubr.f32.gmra.mrb[0].mxu0 %v6483
    %v6485 = vpop.f32.mrb[0].mxu0
    %v6486 = vadd.f32 %v6406, %v6485
    %v6487 = vpop.f32.mrb[0].mxu0
    %6488 = vdwg.mxu0
    %6489 = vmatprep.subr.mxu0 0.0
    %v6490 = vand.u32 %v6235, 4294901760
    %6491 = vmatpush1.msra.mxu0 %v6490
    %6492 = vmatprep.subr.mxu0 0.0
    %v6493 = vand.u32 %v6236, 4294901760
    %6494 = vmatpush1.msra.mxu0 %v6493
    %6495 = vmatprep.subr.mxu0 0.0
    %v6496 = vand.u32 %v6237, 4294901760
    %6497 = vmatpush1.msra.mxu0 %v6496
    %6498 = vmatprep.subr.mxu0 0.0
    %v6499 = vand.u32 %v6238, 4294901760
    %6500 = vmatpush1.msra.mxu0 %v6499
    %6501 = vmatprep.subr.mxu0 0.0
    %6502 = vmatpush1.msra.mxu0 0.0
    %6503 = vmatprep.subr.mxu0 0.0
    %6504 = vmatpush1.msra.mxu0 0.0
    %6505 = vmatprep.subr.mxu0 0.0
    %6506 = vmatpush1.msra.mxu0 0.0
    %6507 = vmatprep.subr.mxu0 0.0
    %6508 = vmatpush1.msra.mxu0 0.0
    %6509 = vmatprep.subr.mxu0 0.0
    %6510 = vmatpush1.msra.mxu0 0.0
    %6511 = vmatprep.subr.mxu0 0.0
    %6512 = vmatpush1.msra.mxu0 0.0
    %6513 = vmatprep.subr.mxu0 0.0
    %6514 = vmatpush1.msra.mxu0 0.0
    %6515 = vmatprep.subr.mxu0 0.0
    %6516 = vmatpush1.msra.mxu0 0.0
    %6517 = vmatprep.subr.mxu0 0.0
    %6518 = vmatpush1.msra.mxu0 0.0
    %6519 = vmatprep.subr.mxu0 0.0
    %6520 = vmatpush1.msra.mxu0 0.0
    %6521 = vmatprep.subr.mxu0 0.0
    %6522 = vmatpush1.msra.mxu0 0.0
    %6523 = vmatprep.subr.mxu0 0.0
    %6524 = vmatpush1.msra.mxu0 0.0
    %6525 = vmatprep.subr.mxu0 0.0
    %6526 = vmatpush1.msra.mxu0 0.0
    %6527 = vmatprep.subr.mxu0 0.0
    %6528 = vmatpush1.msra.mxu0 0.0
    %6529 = vmatprep.subr.mxu0 0.0
    %6530 = vmatpush1.msra.mxu0 0.0
    %6531 = vmatprep.subr.mxu0 0.0
    %6532 = vmatpush1.msra.mxu0 0.0
    %6533 = vmatprep.subr.mxu0 0.0
    %6534 = vmatpush1.msra.mxu0 0.0
    %6535 = vmatprep.subr.mxu0 0.0
    %6536 = vmatpush1.msra.mxu0 0.0
    %6537 = vmatprep.subr.mxu0 0.0
    %6538 = vmatpush1.msra.mxu0 0.0
    %6539 = vmatprep.subr.mxu0 0.0
    %6540 = vmatpush1.msra.mxu0 0.0
    %6541 = vmatprep.subr.mxu0 0.0
    %6542 = vmatpush1.msra.mxu0 0.0
    %6543 = vmatprep.subr.mxu0 0.0
    %6544 = vmatpush1.msra.mxu0 0.0
    %6545 = vmatprep.subr.mxu0 0.0
    %6546 = vmatpush1.msra.mxu0 0.0
    %6547 = vmatprep.subr.mxu0 0.0
    %6548 = vmatpush1.msra.mxu0 0.0
    %6549 = vmatprep.subr.mxu0 0.0
    %6550 = vmatpush1.msra.mxu0 0.0
    %6551 = vmatprep.subr.mxu0 0.0
    %6552 = vmatpush1.msra.mxu0 0.0
    %6553 = vmatprep.subr.mxu0 0.0
    %6554 = vmatpush1.msra.mxu0 0.0
    %6555 = vmatprep.subr.mxu0 0.0
    %6556 = vmatpush1.msra.mxu0 0.0
    %6557 = vmatprep.mubr.f32.mxu0 0.0
    %v6558 = vand.u32 %v5748, 4294901760
    %v6559 = vsub.f32 %v5748, %v6558
    %v6560 = vand.u32 %v6559, 4294901760
    %6561 = vmatmul.mubr.f32.gmra.mrb[0].mxu0 %v6560
    %v6562 = vpop.f32.mrb[0].mxu0
    %v6563 = vadd.f32 %v6486, %v6562
    %v6564 = vpop.f32.mrb[0].mxu0
    %6565 = vdwg.mxu0
    %6566 = vmatprep.subr.mxu0 0.0
    %v6567 = vand.u32 %v6235, 4294901760
    %v6568 = vsub.f32 %v6235, %v6567
    %v6569 = vand.u32 %v6568, 4294901760
    %6570 = vmatpush1.msra.mxu0 %v6569
    %6571 = vmatprep.subr.mxu0 0.0
    %v6572 = vand.u32 %v6236, 4294901760
    %v6573 = vsub.f32 %v6236, %v6572
    %v6574 = vand.u32 %v6573, 4294901760
    %6575 = vmatpush1.msra.mxu0 %v6574
    %6576 = vmatprep.subr.mxu0 0.0
    %v6577 = vand.u32 %v6237, 4294901760
    %v6578 = vsub.f32 %v6237, %v6577
    %v6579 = vand.u32 %v6578, 4294901760
    %6580 = vmatpush1.msra.mxu0 %v6579
    %6581 = vmatprep.subr.mxu0 0.0
    %v6582 = vand.u32 %v6238, 4294901760
    %v6583 = vsub.f32 %v6238, %v6582
    %v6584 = vand.u32 %v6583, 4294901760
    %6585 = vmatpush1.msra.mxu0 %v6584
    %6586 = vmatprep.subr.mxu0 0.0
    %6587 = vmatpush1.msra.mxu0 0.0
    %6588 = vmatprep.subr.mxu0 0.0
    %6589 = vmatpush1.msra.mxu0 0.0
    %6590 = vmatprep.subr.mxu0 0.0
    %6591 = vmatpush1.msra.mxu0 0.0
    %6592 = vmatprep.subr.mxu0 0.0
    %6593 = vmatpush1.msra.mxu0 0.0
    %6594 = vmatprep.subr.mxu0 0.0
    %6595 = vmatpush1.msra.mxu0 0.0
    %6596 = vmatprep.subr.mxu0 0.0
    %6597 = vmatpush1.msra.mxu0 0.0
    %6598 = vmatprep.subr.mxu0 0.0
    %6599 = vmatpush1.msra.mxu0 0.0
    %6600 = vmatprep.subr.mxu0 0.0
    %6601 = vmatpush1.msra.mxu0 0.0
    %6602 = vmatprep.subr.mxu0 0.0
    %6603 = vmatpush1.msra.mxu0 0.0
    %6604 = vmatprep.subr.mxu0 0.0
    %6605 = vmatpush1.msra.mxu0 0.0
    %6606 = vmatprep.subr.mxu0 0.0
    %6607 = vmatpush1.msra.mxu0 0.0
    %6608 = vmatprep.subr.mxu0 0.0
    %6609 = vmatpush1.msra.mxu0 0.0
    %6610 = vmatprep.subr.mxu0 0.0
    %6611 = vmatpush1.msra.mxu0 0.0
    %6612 = vmatprep.subr.mxu0 0.0
    %6613 = vmatpush1.msra.mxu0 0.0
    %6614 = vmatprep.subr.mxu0 0.0
    %6615 = vmatpush1.msra.mxu0 0.0
    %6616 = vmatprep.subr.mxu0 0.0
    %6617 = vmatpush1.msra.mxu0 0.0
    %6618 = vmatprep.subr.mxu0 0.0
    %6619 = vmatpush1.msra.mxu0 0.0
    %6620 = vmatprep.subr.mxu0 0.0
    %6621 = vmatpush1.msra.mxu0 0.0
    %6622 = vmatprep.subr.mxu0 0.0
    %6623 = vmatpush1.msra.mxu0 0.0
    %6624 = vmatprep.subr.mxu0 0.0
    %6625 = vmatpush1.msra.mxu0 0.0
    %6626 = vmatprep.subr.mxu0 0.0
    %6627 = vmatpush1.msra.mxu0 0.0
    %6628 = vmatprep.subr.mxu0 0.0
    %6629 = vmatpush1.msra.mxu0 0.0
    %6630 = vmatprep.subr.mxu0 0.0
    %6631 = vmatpush1.msra.mxu0 0.0
    %6632 = vmatprep.subr.mxu0 0.0
    %6633 = vmatpush1.msra.mxu0 0.0
    %6634 = vmatprep.subr.mxu0 0.0
    %6635 = vmatpush1.msra.mxu0 0.0
    %6636 = vmatprep.subr.mxu0 0.0
    %6637 = vmatpush1.msra.mxu0 0.0
    %6638 = vmatprep.subr.mxu0 0.0
    %6639 = vmatpush1.msra.mxu0 0.0
    %6640 = vmatprep.subr.mxu0 0.0
    %6641 = vmatpush1.msra.mxu0 0.0
    %6642 = vmatprep.mubr.f32.mxu0 0.0
    %v6643 = vand.u32 %v5748, 4294901760
    %6644 = vmatmul.mubr.f32.gmra.mrb[0].mxu0 %v6643
    %v6645 = vpop.f32.mrb[0].mxu0
    %v6646 = vadd.f32 %v6563, %v6645
    %v6647 = vpop.f32.mrb[0].mxu0
    %6648 = vdwg.mxu0
    %6649 = vmatprep.subr.mxu0 0.0
    %v6650 = vand.u32 %v6235, 4294901760
    %6651 = vmatpush1.msra.mxu0 %v6650
    %6652 = vmatprep.subr.mxu0 0.0
    %v6653 = vand.u32 %v6236, 4294901760
    %6654 = vmatpush1.msra.mxu0 %v6653
    %6655 = vmatprep.subr.mxu0 0.0
    %v6656 = vand.u32 %v6237, 4294901760
    %6657 = vmatpush1.msra.mxu0 %v6656
    %6658 = vmatprep.subr.mxu0 0.0
    %v6659 = vand.u32 %v6238, 4294901760
    %6660 = vmatpush1.msra.mxu0 %v6659
    %6661 = vmatprep.subr.mxu0 0.0
    %6662 = vmatpush1.msra.mxu0 0.0
    %6663 = vmatprep.subr.mxu0 0.0
    %6664 = vmatpush1.msra.mxu0 0.0
    %6665 = vmatprep.subr.mxu0 0.0
    %6666 = vmatpush1.msra.mxu0 0.0
    %6667 = vmatprep.subr.mxu0 0.0
    %6668 = vmatpush1.msra.mxu0 0.0
    %6669 = vmatprep.subr.mxu0 0.0
    %6670 = vmatpush1.msra.mxu0 0.0
    %6671 = vmatprep.subr.mxu0 0.0
    %6672 = vmatpush1.msra.mxu0 0.0
    %6673 = vmatprep.subr.mxu0 0.0
    %6674 = vmatpush1.msra.mxu0 0.0
    %6675 = vmatprep.subr.mxu0 0.0
    %6676 = vmatpush1.msra.mxu0 0.0
    %6677 = vmatprep.subr.mxu0 0.0
    %6678 = vmatpush1.msra.mxu0 0.0
    %6679 = vmatprep.subr.mxu0 0.0
    %6680 = vmatpush1.msra.mxu0 0.0
    %6681 = vmatprep.subr.mxu0 0.0
    %6682 = vmatpush1.msra.mxu0 0.0
    %6683 = vmatprep.subr.mxu0 0.0
    %6684 = vmatpush1.msra.mxu0 0.0
    %6685 = vmatprep.subr.mxu0 0.0
    %6686 = vmatpush1.msra.mxu0 0.0
    %6687 = vmatprep.subr.mxu0 0.0
    %6688 = vmatpush1.msra.mxu0 0.0
    %6689 = vmatprep.subr.mxu0 0.0
    %6690 = vmatpush1.msra.mxu0 0.0
    %6691 = vmatprep.subr.mxu0 0.0
    %6692 = vmatpush1.msra.mxu0 0.0
    %6693 = vmatprep.subr.mxu0 0.0
    %6694 = vmatpush1.msra.mxu0 0.0
    %6695 = vmatprep.subr.mxu0 0.0
    %6696 = vmatpush1.msra.mxu0 0.0
    %6697 = vmatprep.subr.mxu0 0.0
    %6698 = vmatpush1.msra.mxu0 0.0
    %6699 = vmatprep.subr.mxu0 0.0
    %6700 = vmatpush1.msra.mxu0 0.0
    %6701 = vmatprep.subr.mxu0 0.0
    %6702 = vmatpush1.msra.mxu0 0.0
    %6703 = vmatprep.subr.mxu0 0.0
    %6704 = vmatpush1.msra.mxu0 0.0
    %6705 = vmatprep.subr.mxu0 0.0
    %6706 = vmatpush1.msra.mxu0 0.0
    %6707 = vmatprep.subr.mxu0 0.0
    %6708 = vmatpush1.msra.mxu0 0.0
    %6709 = vmatprep.subr.mxu0 0.0
    %6710 = vmatpush1.msra.mxu0 0.0
    %6711 = vmatprep.subr.mxu0 0.0
    %6712 = vmatpush1.msra.mxu0 0.0
    %6713 = vmatprep.subr.mxu0 0.0
    %6714 = vmatpush1.msra.mxu0 0.0
    %6715 = vmatprep.subr.mxu0 0.0
    %6716 = vmatpush1.msra.mxu0 0.0
    %6717 = vmatprep.mubr.f32.mxu0 0.0
    %v6718 = vand.u32 %v5748, 4294901760
    %6719 = vmatmul.mubr.f32.gmra.mrb[0].mxu0 %v6718
    %v6720 = vpop.f32.mrb[0].mxu0
    %v6721 = vadd.f32 %v6646, %v6720
    %v6722 = vpop.f32.mrb[0].mxu0
    %6723 = vdwg.mxu0
    %v6724 = vld [vmem:[#allocation2 + $0x5] sm:$0x1]
    %v6725 = vmul.f32 %v5733, %v5733
    %v6726 = vsel %vm1604, %v6725, 0.0
    %6727 = vadd.xlane.f32.xlu0 %v6726
    %v6728 = vpop.xlane.xlu0 %6727
    %s6729 = smul.f32 %s5738, 0.5
    %v6730 = vstv %s5738
    %v6731 = vadd.f32 %v6730, %v5742
    %v6732 = vrcp.pop %v6731
    %v6733 = vstv %s6729
    %v6734 = vmul.f32 %v6733, %v6732
    %v6735 = vsub.f32 0.0, %v5709
    %v6736 = vmul.f32 %v6734, %v6734
    %v6737 = vadd.f32 %v6728, %v6736
    %v6738 = vmul.f32 %v5709, %v6737
    %v6739 = vadd.f32 %v6735, %v6738
    %v6740 = vmul.f32 %v6739, 0.1
    %v6741 = vadd.f32 %v5709, %v6740
    %v6742 = vmax.f32 %v6741, 0.0
    %v6743 = vsub.f32 %v6742, %v5742
    %v6744 = vsub.f32 0.0, %v5718
    %v6745 = vmul.f32 %v5741, %v5742
    %v6746 = vadd.f32 %v6744, %v6745
    %v6747 = vadd.f32 %v6746, 1.0
    %v6748 = vadd.f32 %v6747, %v6743
    %v6749 = vmul.f32 %v6748, 0.1
    %v6750 = vadd.f32 %v5718, %v6749
    %v6751 = vrcp.pop %v5741
    %v6752 = vsub.f32 0.0, %v5732
    %v6753 = vmul.f32 %v6752, 0.5
    %v6754 = vstv %s5739
    %v6755 = vmul.f32 %v6754, %v6724
    %v6756 = vadd.f32 %v6753, %v6755
    %v6757 = vstv %s5740
    %v6758 = vmul.f32 %v6757, %v6751
    %v6759 = vmul.f32 %v6758, %v6232
    %v6760 = vadd.f32 %v6756, %v6759
    %v6761 = vstv %s5737
    %v6762 = vmul.f32 %v6761, %v6721
    %v6763 = vadd.f32 %v6760, %v6762
    %v6764 = vadd.f32 %v5732, %v6763
    %v6765 = vmax.f32 %v6764, 0.0
    %6766 = vst.msk [vmem:[#allocation17 + $0x5] sm:$0x1] %vm1604, %v6765
    %6767 = vst.msk [vmem:[%s9 + $0x5] sm:$0x1] %vm1606, %v6750
    %6768 = vst.msk [vmem:[%s10 + $0x5] sm:$0x1] %vm1606, %v6741
    %s6769 = sld [smem:[#allocation3 + $0x6]]
    %s6770 = sld [smem:[#allocation8 + $0x6]]
    %s6771 = sld [smem:[#allocation9 + $0x6]]
    %s6772 = sld [smem:[#allocation11 + $0x6]]
    %v6773 = vmax.f32 %v6750, 0.0
    %v6774 = vmin.f32 %v6741, 1.0
    %v6775 = vld [vmem:[#allocation14] sm:$0xff]
    %v6776 = vld [vmem:[#allocation14 + $0x8] sm:$0xff]
    %v6777 = vld [vmem:[#allocation14 + $0x10] sm:$0xff]
    %v6778 = vld [vmem:[#allocation14 + $0x18] sm:$0xff]
    %v6780 = vsel %vm583, %v6765, 0
    %6782 = vmatprep.subr.mxu0 0.0
    %v6783 = vand.u32 %v6775, 4294901760
    %6784 = vmatpush1.msra.mxu0 %v6783
    %6785 = vmatprep.subr.mxu0 0.0
    %v6786 = vand.u32 %v6776, 4294901760
    %6787 = vmatpush1.msra.mxu0 %v6786
    %6788 = vmatprep.subr.mxu0 0.0
    %v6789 = vand.u32 %v6777, 4294901760
    %6790 = vmatpush1.msra.mxu0 %v6789
    %6791 = vmatprep.subr.mxu0 0.0
    %v6792 = vand.u32 %v6778, 4294901760
    %6793 = vmatpush1.msra.mxu0 %v6792
    %6794 = vmatprep.subr.mxu0 0.0
    %6795 = vmatpush1.msra.mxu0 0.0
    %6796 = vmatprep.subr.mxu0 0.0
    %6797 = vmatpush1.msra.mxu0 0.0
    %6798 = vmatprep.subr.mxu0 0.0
    %6799 = vmatpush1.msra.mxu0 0.0
    %6800 = vmatprep.subr.mxu0 0.0
    %6801 = vmatpush1.msra.mxu0 0.0
    %6802 = vmatprep.subr.mxu0 0.0
    %6803 = vmatpush1.msra.mxu0 0.0
    %6804 = vmatprep.subr.mxu0 0.0
    %6805 = vmatpush1.msra.mxu0 0.0
    %6806 = vmatprep.subr.mxu0 0.0
    %6807 = vmatpush1.msra.mxu0 0.0
    %6808 = vmatprep.subr.mxu0 0.0
    %6809 = vmatpush1.msra.mxu0 0.0
    %6810 = vmatprep.subr.mxu0 0.0
    %6811 = vmatpush1.msra.mxu0 0.0
    %6812 = vmatprep.subr.mxu0 0.0
    %6813 = vmatpush1.msra.mxu0 0.0
    %6814 = vmatprep.subr.mxu0 0.0
    %6815 = vmatpush1.msra.mxu0 0.0
    %6816 = vmatprep.subr.mxu0 0.0
    %6817 = vmatpush1.msra.mxu0 0.0
    %6818 = vmatprep.subr.mxu0 0.0
    %6819 = vmatpush1.msra.mxu0 0.0
    %6820 = vmatprep.subr.mxu0 0.0
    %6821 = vmatpush1.msra.mxu0 0.0
    %6822 = vmatprep.subr.mxu0 0.0
    %6823 = vmatpush1.msra.mxu0 0.0
    %6824 = vmatprep.subr.mxu0 0.0
    %6825 = vmatpush1.msra.mxu0 0.0
    %6826 = vmatprep.subr.mxu0 0.0
    %6827 = vmatpush1.msra.mxu0 0.0
    %6828 = vmatprep.subr.mxu0 0.0
    %6829 = vmatpush1.msra.mxu0 0.0
    %6830 = vmatprep.subr.mxu0 0.0
    %6831 = vmatpush1.msra.mxu0 0.0
    %6832 = vmatprep.subr.mxu0 0.0
    %6833 = vmatpush1.msra.mxu0 0.0
    %6834 = vmatprep.subr.mxu0 0.0
    %6835 = vmatpush1.msra.mxu0 0.0
    %6836 = vmatprep.subr.mxu0 0.0
    %6837 = vmatpush1.msra.mxu0 0.0
    %6838 = vmatprep.subr.mxu0 0.0
    %6839 = vmatpush1.msra.mxu0 0.0
    %6840 = vmatprep.subr.mxu0 0.0
    %6841 = vmatpush1.msra.mxu0 0.0
    %6842 = vmatprep.subr.mxu0 0.0
    %6843 = vmatpush1.msra.mxu0 0.0
    %6844 = vmatprep.subr.mxu0 0.0
    %6845 = vmatpush1.msra.mxu0 0.0
    %6846 = vmatprep.subr.mxu0 0.0
    %6847 = vmatpush1.msra.mxu0 0.0
    %6848 = vmatprep.subr.mxu0 0.0
    %6849 = vmatpush1.msra.mxu0 0.0
    %6850 = vmatprep.mubr.f32.mxu0 0.0
    %v6851 = vand.u32 %v6780, 4294901760
    %v6852 = vsub.f32 %v6780, %v6851
    %v6853 = vand.u32 %v6852, 4294901760
    %v6854 = vsub.f32 %v6852, %v6853
    %v6855 = vand.u32 %v6854, 4294901760
    %6856 = vmatmul.mubr.f32.gmra.mrb[0].mxu0 %v6855
    %v6857 = vpop.f32.mrb[0].mxu0
    %v6858 = vadd.f32 0.0, %v6857
    %v6859 = vpop.f32.mrb[0].mxu0
    %6860 = vdwg.mxu0
    %6861 = vmatprep.subr.mxu0 0.0
    %v6862 = vand.u32 %v6775, 4294901760
    %v6863 = vsub.f32 %v6775, %v6862
    %v6864 = vand.u32 %v6863, 4294901760
    %v6865 = vsub.f32 %v6863, %v6864
    %v6866 = vand.u32 %v6865, 4294901760
    %6867 = vmatpush1.msra.mxu0 %v6866
    %6868 = vmatprep.subr.mxu0 0.0
    %v6869 = vand.u32 %v6776, 4294901760
    %v6870 = vsub.f32 %v6776, %v6869
    %v6871 = vand.u32 %v6870, 4294901760
    %v6872 = vsub.f32 %v6870, %v6871
    %v6873 = vand.u32 %v6872, 4294901760
    %6874 = vmatpush1.msra.mxu0 %v6873
    %6875 = vmatprep.subr.mxu0 0.0
    %v6876 = vand.u32 %v6777, 4294901760
    %v6877 = vsub.f32 %v6777, %v6876
    %v6878 = vand.u32 %v6877, 4294901760
    %v6879 = vsub.f32 %v6877, %v6878
    %v6880 = vand.u32 %v6879, 4294901760
    %6881 = vmatpush1.msra.mxu0 %v6880
    %6882 = vmatprep.subr.mxu0 0.0
    %v6883 = vand.u32 %v6778, 4294901760
    %v6884 = vsub.f32 %v6778, %v6883
    %v6885 = vand.u32 %v6884, 4294901760
    %v6886 = vsub.f32 %v6884, %v6885
    %v6887 = vand.u32 %v6886, 4294901760
    %6888 = vmatpush1.msra.mxu0 %v6887
    %6889 = vmatprep.subr.mxu0 0.0
    %6890 = vmatpush1.msra.mxu0 0.0
    %6891 = vmatprep.subr.mxu0 0.0
    %6892 = vmatpush1.msra.mxu0 0.0
    %6893 = vmatprep.subr.mxu0 0.0
    %6894 = vmatpush1.msra.mxu0 0.0
    %6895 = vmatprep.subr.mxu0 0.0
    %6896 = vmatpush1.msra.mxu0 0.0
    %6897 = vmatprep.subr.mxu0 0.0
    %6898 = vmatpush1.msra.mxu0 0.0
    %6899 = vmatprep.subr.mxu0 0.0
    %6900 = vmatpush1.msra.mxu0 0.0
    %6901 = vmatprep.subr.mxu0 0.0
    %6902 = vmatpush1.msra.mxu0 0.0
    %6903 = vmatprep.subr.mxu0 0.0
    %6904 = vmatpush1.msra.mxu0 0.0
    %6905 = vmatprep.subr.mxu0 0.0
    %6906 = vmatpush1.msra.mxu0 0.0
    %6907 = vmatprep.subr.mxu0 0.0
    %6908 = vmatpush1.msra.mxu0 0.0
    %6909 = vmatprep.subr.mxu0 0.0
    %6910 = vmatpush1.msra.mxu0 0.0
    %6911 = vmatprep.subr.mxu0 0.0
    %6912 = vmatpush1.msra.mxu0 0.0
    %6913 = vmatprep.subr.mxu0 0.0
    %6914 = vmatpush1.msra.mxu0 0.0
    %6915 = vmatprep.subr.mxu0 0.0
    %6916 = vmatpush1.msra.mxu0 0.0
    %6917 = vmatprep.subr.mxu0 0.0
    %6918 = vmatpush1.msra.mxu0 0.0
    %6919 = vmatprep.subr.mxu0 0.0
    %6920 = vmatpush1.msra.mxu0 0.0
    %6921 = vmatprep.subr.mxu0 0.0
    %6922 = vmatpush1.msra.mxu0 0.0
    %6923 = vmatprep.subr.mxu0 0.0
    %6924 = vmatpush1.msra.mxu0 0.0
    %6925 = vmatprep.subr.mxu0 0.0
    %6926 = vmatpush1.msra.mxu0 0.0
    %6927 = vmatprep.subr.mxu0 0.0
    %6928 = vmatpush1.msra.mxu0 0.0
    %6929 = vmatprep.subr.mxu0 0.0
    %6930 = vmatpush1.msra.mxu0 0.0
    %6931 = vmatprep.subr.mxu0 0.0
    %6932 = vmatpush1.msra.mxu0 0.0
    %6933 = vmatprep.subr.mxu0 0.0
    %6934 = vmatpush1.msra.mxu0 0.0
    %6935 = vmatprep.subr.mxu0 0.0
    %6936 = vmatpush1.msra.mxu0 0.0
    %6937 = vmatprep.subr.mxu0 0.0
    %6938 = vmatpush1.msra.mxu0 0.0
    %6939 = vmatprep.subr.mxu0 0.0
    %6940 = vmatpush1.msra.mxu0 0.0
    %6941 = vmatprep.subr.mxu0 0.0
    %6942 = vmatpush1.msra.mxu0 0.0
    %6943 = vmatprep.subr.mxu0 0.0
    %6944 = vmatpush1.msra.mxu0 0.0
    %6945 = vmatprep.mubr.f32.mxu0 0.0
    %v6946 = vand.u32 %v6780, 4294901760
    %6947 = vmatmul.mubr.f32.gmra.mrb[0].mxu0 %v6946
    %v6948 = vpop.f32.mrb[0].mxu0
    %v6949 = vadd.f32 %v6858, %v6948
    %v6950 = vpop.f32.mrb[0].mxu0
    %6951 = vdwg.mxu0
    %6952 = vmatprep.subr.mxu0 0.0
    %v6953 = vand.u32 %v6775, 4294901760
    %v6954 = vsub.f32 %v6775, %v6953
    %6955 = vmatpush1.msra.mxu0 %v6954
    %6956 = vmatprep.subr.mxu0 0.0
    %v6957 = vand.u32 %v6776, 4294901760
    %v6958 = vsub.f32 %v6776, %v6957
    %6959 = vmatpush1.msra.mxu0 %v6958
    %6960 = vmatprep.subr.mxu0 0.0
    %v6961 = vand.u32 %v6777, 4294901760
    %v6962 = vsub.f32 %v6777, %v6961
    %6963 = vmatpush1.msra.mxu0 %v6962
    %6964 = vmatprep.subr.mxu0 0.0
    %v6965 = vand.u32 %v6778, 4294901760
    %v6966 = vsub.f32 %v6778, %v6965
    %6967 = vmatpush1.msra.mxu0 %v6966
    %6968 = vmatprep.subr.mxu0 0.0
    %6969 = vmatpush1.msra.mxu0 0.0
    %6970 = vmatprep.subr.mxu0 0.0
    %6971 = vmatpush1.msra.mxu0 0.0
    %6972 = vmatprep.subr.mxu0 0.0
    %6973 = vmatpush1.msra.mxu0 0.0
    %6974 = vmatprep.subr.mxu0 0.0
    %6975 = vmatpush1.msra.mxu0 0.0
    %6976 = vmatprep.subr.mxu0 0.0
    %6977 = vmatpush1.msra.mxu0 0.0
    %6978 = vmatprep.subr.mxu0 0.0
    %6979 = vmatpush1.msra.mxu0 0.0
    %6980 = vmatprep.subr.mxu0 0.0
    %6981 = vmatpush1.msra.mxu0 0.0
    %6982 = vmatprep.subr.mxu0 0.0
    %6983 = vmatpush1.msra.mxu0 0.0
    %6984 = vmatprep.subr.mxu0 0.0
    %6985 = vmatpush1.msra.mxu0 0.0
    %6986 = vmatprep.subr.mxu0 0.0
    %6987 = vmatpush1.msra.mxu0 0.0
    %6988 = vmatprep.subr.mxu0 0.0
    %6989 = vmatpush1.msra.mxu0 0.0
    %6990 = vmatprep.subr.mxu0 0.0
    %6991 = vmatpush1.msra.mxu0 0.0
    %6992 = vmatprep.subr.mxu0 0.0
    %6993 = vmatpush1.msra.mxu0 0.0
    %6994 = vmatprep.subr.mxu0 0.0
    %6995 = vmatpush1.msra.mxu0 0.0
    %6996 = vmatprep.subr.mxu0 0.0
    %6997 = vmatpush1.msra.mxu0 0.0
    %6998 = vmatprep.subr.mxu0 0.0
    %6999 = vmatpush1.msra.mxu0 0.0
    %7000 = vmatprep.subr.mxu0 0.0
    %7001 = vmatpush1.msra.mxu0 0.0
    %7002 = vmatprep.subr.mxu0 0.0
    %7003 = vmatpush1.msra.mxu0 0.0
    %7004 = vmatprep.subr.mxu0 0.0
    %7005 = vmatpush1.msra.mxu0 0.0
    %7006 = vmatprep.subr.mxu0 0.0
    %7007 = vmatpush1.msra.mxu0 0.0
    %7008 = vmatprep.subr.mxu0 0.0
    %7009 = vmatpush1.msra.mxu0 0.0
    %7010 = vmatprep.subr.mxu0 0.0
    %7011 = vmatpush1.msra.mxu0 0.0
    %7012 = vmatprep.subr.mxu0 0.0
    %7013 = vmatpush1.msra.mxu0 0.0
    %7014 = vmatprep.subr.mxu0 0.0
    %7015 = vmatpush1.msra.mxu0 0.0
    %7016 = vmatprep.subr.mxu0 0.0
    %7017 = vmatpush1.msra.mxu0 0.0
    %7018 = vmatprep.subr.mxu0 0.0
    %7019 = vmatpush1.msra.mxu0 0.0
    %7020 = vmatprep.subr.mxu0 0.0
    %7021 = vmatpush1.msra.mxu0 0.0
    %7022 = vmatprep.subr.mxu0 0.0
    %7023 = vmatpush1.msra.mxu0 0.0
    %7024 = vmatprep.mubr.f32.mxu0 0.0
    %v7025 = vand.u32 %v6780, 4294901760
    %v7026 = vsub.f32 %v6780, %v7025
    %7027 = vmatmul.mubr.f32.gmra.mrb[0].mxu0 %v7026
    %v7028 = vpop.f32.mrb[0].mxu0
    %v7029 = vadd.f32 %v6949, %v7028
    %v7030 = vpop.f32.mrb[0].mxu0
    %7031 = vdwg.mxu0
    %7032 = vmatprep.subr.mxu0 0.0
    %v7033 = vand.u32 %v6775, 4294901760
    %7034 = vmatpush1.msra.mxu0 %v7033
    %7035 = vmatprep.subr.mxu0 0.0
    %v7036 = vand.u32 %v6776, 4294901760
    %7037 = vmatpush1.msra.mxu0 %v7036
    %7038 = vmatprep.subr.mxu0 0.0
    %v7039 = vand.u32 %v6777, 4294901760
    %7040 = vmatpush1.msra.mxu0 %v7039
    %7041 = vmatprep.subr.mxu0 0.0
    %v7042 = vand.u32 %v6778, 4294901760
    %7043 = vmatpush1.msra.mxu0 %v7042
    %7044 = vmatprep.subr.mxu0 0.0
    %7045 = vmatpush1.msra.mxu0 0.0
    %7046 = vmatprep.subr.mxu0 0.0
    %7047 = vmatpush1.msra.mxu0 0.0
    %7048 = vmatprep.subr.mxu0 0.0
    %7049 = vmatpush1.msra.mxu0 0.0
    %7050 = vmatprep.subr.mxu0 0.0
    %7051 = vmatpush1.msra.mxu0 0.0
    %7052 = vmatprep.subr.mxu0 0.0
    %7053 = vmatpush1.msra.mxu0 0.0
    %7054 = vmatprep.subr.mxu0 0.0
    %7055 = vmatpush1.msra.mxu0 0.0
    %7056 = vmatprep.subr.mxu0 0.0
    %7057 = vmatpush1.msra.mxu0 0.0
    %7058 = vmatprep.subr.mxu0 0.0
    %7059 = vmatpush1.msra.mxu0 0.0
    %7060 = vmatprep.subr.mxu0 0.0
    %7061 = vmatpush1.msra.mxu0 0.0
    %7062 = vmatprep.subr.mxu0 0.0
    %7063 = vmatpush1.msra.mxu0 0.0
    %7064 = vmatprep.subr.mxu0 0.0
    %7065 = vmatpush1.msra.mxu0 0.0
    %7066 = vmatprep.subr.mxu0 0.0
    %7067 = vmatpush1.msra.mxu0 0.0
    %7068 = vmatprep.subr.mxu0 0.0
    %7069 = vmatpush1.msra.mxu0 0.0
    %7070 = vmatprep.subr.mxu0 0.0
    %7071 = vmatpush1.msra.mxu0 0.0
    %7072 = vmatprep.subr.mxu0 0.0
    %7073 = vmatpush1.msra.mxu0 0.0
    %7074 = vmatprep.subr.mxu0 0.0
    %7075 = vmatpush1.msra.mxu0 0.0
    %7076 = vmatprep.subr.mxu0 0.0
    %7077 = vmatpush1.msra.mxu0 0.0
    %7078 = vmatprep.subr.mxu0 0.0
    %7079 = vmatpush1.msra.mxu0 0.0
    %7080 = vmatprep.subr.mxu0 0.0
    %7081 = vmatpush1.msra.mxu0 0.0
    %7082 = vmatprep.subr.mxu0 0.0
    %7083 = vmatpush1.msra.mxu0 0.0
    %7084 = vmatprep.subr.mxu0 0.0
    %7085 = vmatpush1.msra.mxu0 0.0
    %7086 = vmatprep.subr.mxu0 0.0
    %7087 = vmatpush1.msra.mxu0 0.0
    %7088 = vmatprep.subr.mxu0 0.0
    %7089 = vmatpush1.msra.mxu0 0.0
    %7090 = vmatprep.subr.mxu0 0.0
    %7091 = vmatpush1.msra.mxu0 0.0
    %7092 = vmatprep.subr.mxu0 0.0
    %7093 = vmatpush1.msra.mxu0 0.0
    %7094 = vmatprep.subr.mxu0 0.0
    %7095 = vmatpush1.msra.mxu0 0.0
    %7096 = vmatprep.subr.mxu0 0.0
    %7097 = vmatpush1.msra.mxu0 0.0
    %7098 = vmatprep.subr.mxu0 0.0
    %7099 = vmatpush1.msra.mxu0 0.0
    %7100 = vmatprep.mubr.f32.mxu0 0.0
    %v7101 = vand.u32 %v6780, 4294901760
    %v7102 = vsub.f32 %v6780, %v7101
    %v7103 = vand.u32 %v7102, 4294901760
    %7104 = vmatmul.mubr.f32.gmra.mrb[0].mxu0 %v7103
    %v7105 = vpop.f32.mrb[0].mxu0
    %v7106 = vadd.f32 %v7029, %v7105
    %v7107 = vpop.f32.mrb[0].mxu0
    %7108 = vdwg.mxu0
    %7109 = vmatprep.subr.mxu0 0.0
    %v7110 = vand.u32 %v6775, 4294901760
    %v7111 = vsub.f32 %v6775, %v7110
    %v7112 = vand.u32 %v7111, 4294901760
    %7113 = vmatpush1.msra.mxu0 %v7112
    %7114 = vmatprep.subr.mxu0 0.0
    %v7115 = vand.u32 %v6776, 4294901760
    %v7116 = vsub.f32 %v6776, %v7115
    %v7117 = vand.u32 %v7116, 4294901760
    %7118 = vmatpush1.msra.mxu0 %v7117
    %7119 = vmatprep.subr.mxu0 0.0
    %v7120 = vand.u32 %v6777, 4294901760
    %v7121 = vsub.f32 %v6777, %v7120
    %v7122 = vand.u32 %v7121, 4294901760
    %7123 = vmatpush1.msra.mxu0 %v7122
    %7124 = vmatprep.subr.mxu0 0.0
    %v7125 = vand.u32 %v6778, 4294901760
    %v7126 = vsub.f32 %v6778, %v7125
    %v7127 = vand.u32 %v7126, 4294901760
    %7128 = vmatpush1.msra.mxu0 %v7127
    %7129 = vmatprep.subr.mxu0 0.0
    %7130 = vmatpush1.msra.mxu0 0.0
    %7131 = vmatprep.subr.mxu0 0.0
    %7132 = vmatpush1.msra.mxu0 0.0
    %7133 = vmatprep.subr.mxu0 0.0
    %7134 = vmatpush1.msra.mxu0 0.0
    %7135 = vmatprep.subr.mxu0 0.0
    %7136 = vmatpush1.msra.mxu0 0.0
    %7137 = vmatprep.subr.mxu0 0.0
    %7138 = vmatpush1.msra.mxu0 0.0
    %7139 = vmatprep.subr.mxu0 0.0
    %7140 = vmatpush1.msra.mxu0 0.0
    %7141 = vmatprep.subr.mxu0 0.0
    %7142 = vmatpush1.msra.mxu0 0.0
    %7143 = vmatprep.subr.mxu0 0.0
    %7144 = vmatpush1.msra.mxu0 0.0
    %7145 = vmatprep.subr.mxu0 0.0
    %7146 = vmatpush1.msra.mxu0 0.0
    %7147 = vmatprep.subr.mxu0 0.0
    %7148 = vmatpush1.msra.mxu0 0.0
    %7149 = vmatprep.subr.mxu0 0.0
    %7150 = vmatpush1.msra.mxu0 0.0
    %7151 = vmatprep.subr.mxu0 0.0
    %7152 = vmatpush1.msra.mxu0 0.0
    %7153 = vmatprep.subr.mxu0 0.0
    %7154 = vmatpush1.msra.mxu0 0.0
    %7155 = vmatprep.subr.mxu0 0.0
    %7156 = vmatpush1.msra.mxu0 0.0
    %7157 = vmatprep.subr.mxu0 0.0
    %7158 = vmatpush1.msra.mxu0 0.0
    %7159 = vmatprep.subr.mxu0 0.0
    %7160 = vmatpush1.msra.mxu0 0.0
    %7161 = vmatprep.subr.mxu0 0.0
    %7162 = vmatpush1.msra.mxu0 0.0
    %7163 = vmatprep.subr.mxu0 0.0
    %7164 = vmatpush1.msra.mxu0 0.0
    %7165 = vmatprep.subr.mxu0 0.0
    %7166 = vmatpush1.msra.mxu0 0.0
    %7167 = vmatprep.subr.mxu0 0.0
    %7168 = vmatpush1.msra.mxu0 0.0
    %7169 = vmatprep.subr.mxu0 0.0
    %7170 = vmatpush1.msra.mxu0 0.0
    %7171 = vmatprep.subr.mxu0 0.0
    %7172 = vmatpush1.msra.mxu0 0.0
    %7173 = vmatprep.subr.mxu0 0.0
    %7174 = vmatpush1.msra.mxu0 0.0
    %7175 = vmatprep.subr.mxu0 0.0
    %7176 = vmatpush1.msra.mxu0 0.0
    %7177 = vmatprep.subr.mxu0 0.0
    %7178 = vmatpush1.msra.mxu0 0.0
    %7179 = vmatprep.subr.mxu0 0.0
    %7180 = vmatpush1.msra.mxu0 0.0
    %7181 = vmatprep.subr.mxu0 0.0
    %7182 = vmatpush1.msra.mxu0 0.0
    %7183 = vmatprep.subr.mxu0 0.0
    %7184 = vmatpush1.msra.mxu0 0.0
    %7185 = vmatprep.mubr.f32.mxu0 0.0
    %v7186 = vand.u32 %v6780, 4294901760
    %7187 = vmatmul.mubr.f32.gmra.mrb[0].mxu0 %v7186
    %v7188 = vpop.f32.mrb[0].mxu0
    %v7189 = vadd.f32 %v7106, %v7188
    %v7190 = vpop.f32.mrb[0].mxu0
    %7191 = vdwg.mxu0
    %7192 = vmatprep.subr.mxu0 0.0
    %v7193 = vand.u32 %v6775, 4294901760
    %7194 = vmatpush1.msra.mxu0 %v7193
    %7195 = vmatprep.subr.mxu0 0.0
    %v7196 = vand.u32 %v6776, 4294901760
    %7197 = vmatpush1.msra.mxu0 %v7196
    %7198 = vmatprep.subr.mxu0 0.0
    %v7199 = vand.u32 %v6777, 4294901760
    %7200 = vmatpush1.msra.mxu0 %v7199
    %7201 = vmatprep.subr.mxu0 0.0
    %v7202 = vand.u32 %v6778, 4294901760
    %7203 = vmatpush1.msra.mxu0 %v7202
    %7204 = vmatprep.subr.mxu0 0.0
    %7205 = vmatpush1.msra.mxu0 0.0
    %7206 = vmatprep.subr.mxu0 0.0
    %7207 = vmatpush1.msra.mxu0 0.0
    %7208 = vmatprep.subr.mxu0 0.0
    %7209 = vmatpush1.msra.mxu0 0.0
    %7210 = vmatprep.subr.mxu0 0.0
    %7211 = vmatpush1.msra.mxu0 0.0
    %7212 = vmatprep.subr.mxu0 0.0
    %7213 = vmatpush1.msra.mxu0 0.0
    %7214 = vmatprep.subr.mxu0 0.0
    %7215 = vmatpush1.msra.mxu0 0.0
    %7216 = vmatprep.subr.mxu0 0.0
    %7217 = vmatpush1.msra.mxu0 0.0
    %7218 = vmatprep.subr.mxu0 0.0
    %7219 = vmatpush1.msra.mxu0 0.0
    %7220 = vmatprep.subr.mxu0 0.0
    %7221 = vmatpush1.msra.mxu0 0.0
    %7222 = vmatprep.subr.mxu0 0.0
    %7223 = vmatpush1.msra.mxu0 0.0
    %7224 = vmatprep.subr.mxu0 0.0
    %7225 = vmatpush1.msra.mxu0 0.0
    %7226 = vmatprep.subr.mxu0 0.0
    %7227 = vmatpush1.msra.mxu0 0.0
    %7228 = vmatprep.subr.mxu0 0.0
    %7229 = vmatpush1.msra.mxu0 0.0
    %7230 = vmatprep.subr.mxu0 0.0
    %7231 = vmatpush1.msra.mxu0 0.0
    %7232 = vmatprep.subr.mxu0 0.0
    %7233 = vmatpush1.msra.mxu0 0.0
    %7234 = vmatprep.subr.mxu0 0.0
    %7235 = vmatpush1.msra.mxu0 0.0
    %7236 = vmatprep.subr.mxu0 0.0
    %7237 = vmatpush1.msra.mxu0 0.0
    %7238 = vmatprep.subr.mxu0 0.0
    %7239 = vmatpush1.msra.mxu0 0.0
    %7240 = vmatprep.subr.mxu0 0.0
    %7241 = vmatpush1.msra.mxu0 0.0
    %7242 = vmatprep.subr.mxu0 0.0
    %7243 = vmatpush1.msra.mxu0 0.0
    %7244 = vmatprep.subr.mxu0 0.0
    %7245 = vmatpush1.msra.mxu0 0.0
    %7246 = vmatprep.subr.mxu0 0.0
    %7247 = vmatpush1.msra.mxu0 0.0
    %7248 = vmatprep.subr.mxu0 0.0
    %7249 = vmatpush1.msra.mxu0 0.0
    %7250 = vmatprep.subr.mxu0 0.0
    %7251 = vmatpush1.msra.mxu0 0.0
    %7252 = vmatprep.subr.mxu0 0.0
    %7253 = vmatpush1.msra.mxu0 0.0
    %7254 = vmatprep.subr.mxu0 0.0
    %7255 = vmatpush1.msra.mxu0 0.0
    %7256 = vmatprep.subr.mxu0 0.0
    %7257 = vmatpush1.msra.mxu0 0.0
    %7258 = vmatprep.subr.mxu0 0.0
    %7259 = vmatpush1.msra.mxu0 0.0
    %7260 = vmatprep.mubr.f32.mxu0 0.0
    %v7261 = vand.u32 %v6780, 4294901760
    %7262 = vmatmul.mubr.f32.gmra.mrb[0].mxu0 %v7261
    %v7263 = vpop.f32.mrb[0].mxu0
    %v7264 = vadd.f32 %v7189, %v7263
    %v7265 = vpop.f32.mrb[0].mxu0
    %7266 = vdwg.mxu0
    %v7267 = vld [vmem:[#allocation16] sm:$0xff]
    %v7268 = vld [vmem:[#allocation16 + $0x8] sm:$0xff]
    %v7269 = vld [vmem:[#allocation16 + $0x10] sm:$0xff]
    %v7270 = vld [vmem:[#allocation16 + $0x18] sm:$0xff]
    %7271 = vmatprep.subr.mxu0 0.0
    %v7272 = vand.u32 %v7267, 4294901760
    %7273 = vmatpush1.msra.mxu0 %v7272
    %7274 = vmatprep.subr.mxu0 0.0
    %v7275 = vand.u32 %v7268, 4294901760
    %7276 = vmatpush1.msra.mxu0 %v7275
    %7277 = vmatprep.subr.mxu0 0.0
    %v7278 = vand.u32 %v7269, 4294901760
    %7279 = vmatpush1.msra.mxu0 %v7278
    %7280 = vmatprep.subr.mxu0 0.0
    %v7281 = vand.u32 %v7270, 4294901760
    %7282 = vmatpush1.msra.mxu0 %v7281
    %7283 = vmatprep.subr.mxu0 0.0
    %7284 = vmatpush1.msra.mxu0 0.0
    %7285 = vmatprep.subr.mxu0 0.0
    %7286 = vmatpush1.msra.mxu0 0.0
    %7287 = vmatprep.subr.mxu0 0.0
    %7288 = vmatpush1.msra.mxu0 0.0
    %7289 = vmatprep.subr.mxu0 0.0
    %7290 = vmatpush1.msra.mxu0 0.0
    %7291 = vmatprep.subr.mxu0 0.0
    %7292 = vmatpush1.msra.mxu0 0.0
    %7293 = vmatprep.subr.mxu0 0.0
    %7294 = vmatpush1.msra.mxu0 0.0
    %7295 = vmatprep.subr.mxu0 0.0
    %7296 = vmatpush1.msra.mxu0 0.0
    %7297 = vmatprep.subr.mxu0 0.0
    %7298 = vmatpush1.msra.mxu0 0.0
    %7299 = vmatprep.subr.mxu0 0.0
    %7300 = vmatpush1.msra.mxu0 0.0
    %7301 = vmatprep.subr.mxu0 0.0
    %7302 = vmatpush1.msra.mxu0 0.0
    %7303 = vmatprep.subr.mxu0 0.0
    %7304 = vmatpush1.msra.mxu0 0.0
    %7305 = vmatprep.subr.mxu0 0.0
    %7306 = vmatpush1.msra.mxu0 0.0
    %7307 = vmatprep.subr.mxu0 0.0
    %7308 = vmatpush1.msra.mxu0 0.0
    %7309 = vmatprep.subr.mxu0 0.0
    %7310 = vmatpush1.msra.mxu0 0.0
    %7311 = vmatprep.subr.mxu0 0.0
    %7312 = vmatpush1.msra.mxu0 0.0
    %7313 = vmatprep.subr.mxu0 0.0
    %7314 = vmatpush1.msra.mxu0 0.0
    %7315 = vmatprep.subr.mxu0 0.0
    %7316 = vmatpush1.msra.mxu0 0.0
    %7317 = vmatprep.subr.mxu0 0.0
    %7318 = vmatpush1.msra.mxu0 0.0
    %7319 = vmatprep.subr.mxu0 0.0
    %7320 = vmatpush1.msra.mxu0 0.0
    %7321 = vmatprep.subr.mxu0 0.0
    %7322 = vmatpush1.msra.mxu0 0.0
    %7323 = vmatprep.subr.mxu0 0.0
    %7324 = vmatpush1.msra.mxu0 0.0
    %7325 = vmatprep.subr.mxu0 0.0
    %7326 = vmatpush1.msra.mxu0 0.0
    %7327 = vmatprep.subr.mxu0 0.0
    %7328 = vmatpush1.msra.mxu0 0.0
    %7329 = vmatprep.subr.mxu0 0.0
    %7330 = vmatpush1.msra.mxu0 0.0
    %7331 = vmatprep.subr.mxu0 0.0
    %7332 = vmatpush1.msra.mxu0 0.0
    %7333 = vmatprep.subr.mxu0 0.0
    %7334 = vmatpush1.msra.mxu0 0.0
    %7335 = vmatprep.subr.mxu0 0.0
    %7336 = vmatpush1.msra.mxu0 0.0
    %7337 = vmatprep.subr.mxu0 0.0
    %7338 = vmatpush1.msra.mxu0 0.0
    %7339 = vmatprep.mubr.f32.mxu0 0.0
    %v7340 = vand.u32 %v6780, 4294901760
    %v7341 = vsub.f32 %v6780, %v7340
    %v7342 = vand.u32 %v7341, 4294901760
    %v7343 = vsub.f32 %v7341, %v7342
    %v7344 = vand.u32 %v7343, 4294901760
    %7345 = vmatmul.mubr.f32.gmra.mrb[0].mxu0 %v7344
    %v7346 = vpop.f32.mrb[0].mxu0
    %v7347 = vadd.f32 0.0, %v7346
    %v7348 = vpop.f32.mrb[0].mxu0
    %7349 = vdwg.mxu0
    %7350 = vmatprep.subr.mxu0 0.0
    %v7351 = vand.u32 %v7267, 4294901760
    %v7352 = vsub.f32 %v7267, %v7351
    %v7353 = vand.u32 %v7352, 4294901760
    %v7354 = vsub.f32 %v7352, %v7353
    %v7355 = vand.u32 %v7354, 4294901760
    %7356 = vmatpush1.msra.mxu0 %v7355
    %7357 = vmatprep.subr.mxu0 0.0
    %v7358 = vand.u32 %v7268, 4294901760
    %v7359 = vsub.f32 %v7268, %v7358
    %v7360 = vand.u32 %v7359, 4294901760
    %v7361 = vsub.f32 %v7359, %v7360
    %v7362 = vand.u32 %v7361, 4294901760
    %7363 = vmatpush1.msra.mxu0 %v7362
    %7364 = vmatprep.subr.mxu0 0.0
    %v7365 = vand.u32 %v7269, 4294901760
    %v7366 = vsub.f32 %v7269, %v7365
    %v7367 = vand.u32 %v7366, 4294901760
    %v7368 = vsub.f32 %v7366, %v7367
    %v7369 = vand.u32 %v7368, 4294901760
    %7370 = vmatpush1.msra.mxu0 %v7369
    %7371 = vmatprep.subr.mxu0 0.0
    %v7372 = vand.u32 %v7270, 4294901760
    %v7373 = vsub.f32 %v7270, %v7372
    %v7374 = vand.u32 %v7373, 4294901760
    %v7375 = vsub.f32 %v7373, %v7374
    %v7376 = vand.u32 %v7375, 4294901760
    %7377 = vmatpush1.msra.mxu0 %v7376
    %7378 = vmatprep.subr.mxu0 0.0
    %7379 = vmatpush1.msra.mxu0 0.0
    %7380 = vmatprep.subr.mxu0 0.0
    %7381 = vmatpush1.msra.mxu0 0.0
    %7382 = vmatprep.subr.mxu0 0.0
    %7383 = vmatpush1.msra.mxu0 0.0
    %7384 = vmatprep.subr.mxu0 0.0
    %7385 = vmatpush1.msra.mxu0 0.0
    %7386 = vmatprep.subr.mxu0 0.0
    %7387 = vmatpush1.msra.mxu0 0.0
    %7388 = vmatprep.subr.mxu0 0.0
    %7389 = vmatpush1.msra.mxu0 0.0
    %7390 = vmatprep.subr.mxu0 0.0
    %7391 = vmatpush1.msra.mxu0 0.0
    %7392 = vmatprep.subr.mxu0 0.0
    %7393 = vmatpush1.msra.mxu0 0.0
    %7394 = vmatprep.subr.mxu0 0.0
    %7395 = vmatpush1.msra.mxu0 0.0
    %7396 = vmatprep.subr.mxu0 0.0
    %7397 = vmatpush1.msra.mxu0 0.0
    %7398 = vmatprep.subr.mxu0 0.0
    %7399 = vmatpush1.msra.mxu0 0.0
    %7400 = vmatprep.subr.mxu0 0.0
    %7401 = vmatpush1.msra.mxu0 0.0
    %7402 = vmatprep.subr.mxu0 0.0
    %7403 = vmatpush1.msra.mxu0 0.0
    %7404 = vmatprep.subr.mxu0 0.0
    %7405 = vmatpush1.msra.mxu0 0.0
    %7406 = vmatprep.subr.mxu0 0.0
    %7407 = vmatpush1.msra.mxu0 0.0
    %7408 = vmatprep.subr.mxu0 0.0
    %7409 = vmatpush1.msra.mxu0 0.0
    %7410 = vmatprep.subr.mxu0 0.0
    %7411 = vmatpush1.msra.mxu0 0.0
    %7412 = vmatprep.subr.mxu0 0.0
    %7413 = vmatpush1.msra.mxu0 0.0
    %7414 = vmatprep.subr.mxu0 0.0
    %7415 = vmatpush1.msra.mxu0 0.0
    %7416 = vmatprep.subr.mxu0 0.0
    %7417 = vmatpush1.msra.mxu0 0.0
    %7418 = vmatprep.subr.mxu0 0.0
    %7419 = vmatpush1.msra.mxu0 0.0
    %7420 = vmatprep.subr.mxu0 0.0
    %7421 = vmatpush1.msra.mxu0 0.0
    %7422 = vmatprep.subr.mxu0 0.0
    %7423 = vmatpush1.msra.mxu0 0.0
    %7424 = vmatprep.subr.mxu0 0.0
    %7425 = vmatpush1.msra.mxu0 0.0
    %7426 = vmatprep.subr.mxu0 0.0
    %7427 = vmatpush1.msra.mxu0 0.0
    %7428 = vmatprep.subr.mxu0 0.0
    %7429 = vmatpush1.msra.mxu0 0.0
    %7430 = vmatprep.subr.mxu0 0.0
    %7431 = vmatpush1.msra.mxu0 0.0
    %7432 = vmatprep.subr.mxu0 0.0
    %7433 = vmatpush1.msra.mxu0 0.0
    %7434 = vmatprep.mubr.f32.mxu0 0.0
    %v7435 = vand.u32 %v6780, 4294901760
    %7436 = vmatmul.mubr.f32.gmra.mrb[0].mxu0 %v7435
    %v7437 = vpop.f32.mrb[0].mxu0
    %v7438 = vadd.f32 %v7347, %v7437
    %v7439 = vpop.f32.mrb[0].mxu0
    %7440 = vdwg.mxu0
    %7441 = vmatprep.subr.mxu0 0.0
    %v7442 = vand.u32 %v7267, 4294901760
    %v7443 = vsub.f32 %v7267, %v7442
    %7444 = vmatpush1.msra.mxu0 %v7443
    %7445 = vmatprep.subr.mxu0 0.0
    %v7446 = vand.u32 %v7268, 4294901760
    %v7447 = vsub.f32 %v7268, %v7446
    %7448 = vmatpush1.msra.mxu0 %v7447
    %7449 = vmatprep.subr.mxu0 0.0
    %v7450 = vand.u32 %v7269, 4294901760
    %v7451 = vsub.f32 %v7269, %v7450
    %7452 = vmatpush1.msra.mxu0 %v7451
    %7453 = vmatprep.subr.mxu0 0.0
    %v7454 = vand.u32 %v7270, 4294901760
    %v7455 = vsub.f32 %v7270, %v7454
    %7456 = vmatpush1.msra.mxu0 %v7455
    %7457 = vmatprep.subr.mxu0 0.0
    %7458 = vmatpush1.msra.mxu0 0.0
    %7459 = vmatprep.subr.mxu0 0.0
    %7460 = vmatpush1.msra.mxu0 0.0
    %7461 = vmatprep.subr.mxu0 0.0
    %7462 = vmatpush1.msra.mxu0 0.0
    %7463 = vmatprep.subr.mxu0 0.0
    %7464 = vmatpush1.msra.mxu0 0.0
    %7465 = vmatprep.subr.mxu0 0.0
    %7466 = vmatpush1.msra.mxu0 0.0
    %7467 = vmatprep.subr.mxu0 0.0
    %7468 = vmatpush1.msra.mxu0 0.0
    %7469 = vmatprep.subr.mxu0 0.0
    %7470 = vmatpush1.msra.mxu0 0.0
    %7471 = vmatprep.subr.mxu0 0.0
    %7472 = vmatpush1.msra.mxu0 0.0
    %7473 = vmatprep.subr.mxu0 0.0
    %7474 = vmatpush1.msra.mxu0 0.0
    %7475 = vmatprep.subr.mxu0 0.0
    %7476 = vmatpush1.msra.mxu0 0.0
    %7477 = vmatprep.subr.mxu0 0.0
    %7478 = vmatpush1.msra.mxu0 0.0
    %7479 = vmatprep.subr.mxu0 0.0
    %7480 = vmatpush1.msra.mxu0 0.0
    %7481 = vmatprep.subr.mxu0 0.0
    %7482 = vmatpush1.msra.mxu0 0.0
    %7483 = vmatprep.subr.mxu0 0.0
    %7484 = vmatpush1.msra.mxu0 0.0
    %7485 = vmatprep.subr.mxu0 0.0
    %7486 = vmatpush1.msra.mxu0 0.0
    %7487 = vmatprep.subr.mxu0 0.0
    %7488 = vmatpush1.msra.mxu0 0.0
    %7489 = vmatprep.subr.mxu0 0.0
    %7490 = vmatpush1.msra.mxu0 0.0
    %7491 = vmatprep.subr.mxu0 0.0
    %7492 = vmatpush1.msra.mxu0 0.0
    %7493 = vmatprep.subr.mxu0 0.0
    %7494 = vmatpush1.msra.mxu0 0.0
    %7495 = vmatprep.subr.mxu0 0.0
    %7496 = vmatpush1.msra.mxu0 0.0
    %7497 = vmatprep.subr.mxu0 0.0
    %7498 = vmatpush1.msra.mxu0 0.0
    %7499 = vmatprep.subr.mxu0 0.0
    %7500 = vmatpush1.msra.mxu0 0.0
    %7501 = vmatprep.subr.mxu0 0.0
    %7502 = vmatpush1.msra.mxu0 0.0
    %7503 = vmatprep.subr.mxu0 0.0
    %7504 = vmatpush1.msra.mxu0 0.0
    %7505 = vmatprep.subr.mxu0 0.0
    %7506 = vmatpush1.msra.mxu0 0.0
    %7507 = vmatprep.subr.mxu0 0.0
    %7508 = vmatpush1.msra.mxu0 0.0
    %7509 = vmatprep.subr.mxu0 0.0
    %7510 = vmatpush1.msra.mxu0 0.0
    %7511 = vmatprep.subr.mxu0 0.0
    %7512 = vmatpush1.msra.mxu0 0.0
    %7513 = vmatprep.mubr.f32.mxu0 0.0
    %v7514 = vand.u32 %v6780, 4294901760
    %v7515 = vsub.f32 %v6780, %v7514
    %7516 = vmatmul.mubr.f32.gmra.mrb[0].mxu0 %v7515
    %v7517 = vpop.f32.mrb[0].mxu0
    %v7518 = vadd.f32 %v7438, %v7517
    %v7519 = vpop.f32.mrb[0].mxu0
    %7520 = vdwg.mxu0
    %7521 = vmatprep.subr.mxu0 0.0
    %v7522 = vand.u32 %v7267, 4294901760
    %7523 = vmatpush1.msra.mxu0 %v7522
    %7524 = vmatprep.subr.mxu0 0.0
    %v7525 = vand.u32 %v7268, 4294901760
    %7526 = vmatpush1.msra.mxu0 %v7525
    %7527 = vmatprep.subr.mxu0 0.0
    %v7528 = vand.u32 %v7269, 4294901760
    %7529 = vmatpush1.msra.mxu0 %v7528
    %7530 = vmatprep.subr.mxu0 0.0
    %v7531 = vand.u32 %v7270, 4294901760
    %7532 = vmatpush1.msra.mxu0 %v7531
    %7533 = vmatprep.subr.mxu0 0.0
    %7534 = vmatpush1.msra.mxu0 0.0
    %7535 = vmatprep.subr.mxu0 0.0
    %7536 = vmatpush1.msra.mxu0 0.0
    %7537 = vmatprep.subr.mxu0 0.0
    %7538 = vmatpush1.msra.mxu0 0.0
    %7539 = vmatprep.subr.mxu0 0.0
    %7540 = vmatpush1.msra.mxu0 0.0
    %7541 = vmatprep.subr.mxu0 0.0
    %7542 = vmatpush1.msra.mxu0 0.0
    %7543 = vmatprep.subr.mxu0 0.0
    %7544 = vmatpush1.msra.mxu0 0.0
    %7545 = vmatprep.subr.mxu0 0.0
    %7546 = vmatpush1.msra.mxu0 0.0
    %7547 = vmatprep.subr.mxu0 0.0
    %7548 = vmatpush1.msra.mxu0 0.0
    %7549 = vmatprep.subr.mxu0 0.0
    %7550 = vmatpush1.msra.mxu0 0.0
    %7551 = vmatprep.subr.mxu0 0.0
    %7552 = vmatpush1.msra.mxu0 0.0
    %7553 = vmatprep.subr.mxu0 0.0
    %7554 = vmatpush1.msra.mxu0 0.0
    %7555 = vmatprep.subr.mxu0 0.0
    %7556 = vmatpush1.msra.mxu0 0.0
    %7557 = vmatprep.subr.mxu0 0.0
    %7558 = vmatpush1.msra.mxu0 0.0
    %7559 = vmatprep.subr.mxu0 0.0
    %7560 = vmatpush1.msra.mxu0 0.0
    %7561 = vmatprep.subr.mxu0 0.0
    %7562 = vmatpush1.msra.mxu0 0.0
    %7563 = vmatprep.subr.mxu0 0.0
    %7564 = vmatpush1.msra.mxu0 0.0
    %7565 = vmatprep.subr.mxu0 0.0
    %7566 = vmatpush1.msra.mxu0 0.0
    %7567 = vmatprep.subr.mxu0 0.0
    %7568 = vmatpush1.msra.mxu0 0.0
    %7569 = vmatprep.subr.mxu0 0.0
    %7570 = vmatpush1.msra.mxu0 0.0
    %7571 = vmatprep.subr.mxu0 0.0
    %7572 = vmatpush1.msra.mxu0 0.0
    %7573 = vmatprep.subr.mxu0 0.0
    %7574 = vmatpush1.msra.mxu0 0.0
    %7575 = vmatprep.subr.mxu0 0.0
    %7576 = vmatpush1.msra.mxu0 0.0
    %7577 = vmatprep.subr.mxu0 0.0
    %7578 = vmatpush1.msra.mxu0 0.0
    %7579 = vmatprep.subr.mxu0 0.0
    %7580 = vmatpush1.msra.mxu0 0.0
    %7581 = vmatprep.subr.mxu0 0.0
    %7582 = vmatpush1.msra.mxu0 0.0
    %7583 = vmatprep.subr.mxu0 0.0
    %7584 = vmatpush1.msra.mxu0 0.0
    %7585 = vmatprep.subr.mxu0 0.0
    %7586 = vmatpush1.msra.mxu0 0.0
    %7587 = vmatprep.subr.mxu0 0.0
    %7588 = vmatpush1.msra.mxu0 0.0
    %7589 = vmatprep.mubr.f32.mxu0 0.0
    %v7590 = vand.u32 %v6780, 4294901760
    %v7591 = vsub.f32 %v6780, %v7590
    %v7592 = vand.u32 %v7591, 4294901760
    %7593 = vmatmul.mubr.f32.gmra.mrb[0].mxu0 %v7592
    %v7594 = vpop.f32.mrb[0].mxu0
    %v7595 = vadd.f32 %v7518, %v7594
    %v7596 = vpop.f32.mrb[0].mxu0
    %7597 = vdwg.mxu0
    %7598 = vmatprep.subr.mxu0 0.0
    %v7599 = vand.u32 %v7267, 4294901760
    %v7600 = vsub.f32 %v7267, %v7599
    %v7601 = vand.u32 %v7600, 4294901760
    %7602 = vmatpush1.msra.mxu0 %v7601
    %7603 = vmatprep.subr.mxu0 0.0
    %v7604 = vand.u32 %v7268, 4294901760
    %v7605 = vsub.f32 %v7268, %v7604
    %v7606 = vand.u32 %v7605, 4294901760
    %7607 = vmatpush1.msra.mxu0 %v7606
    %7608 = vmatprep.subr.mxu0 0.0
    %v7609 = vand.u32 %v7269, 4294901760
    %v7610 = vsub.f32 %v7269, %v7609
    %v7611 = vand.u32 %v7610, 4294901760
    %7612 = vmatpush1.msra.mxu0 %v7611
    %7613 = vmatprep.subr.mxu0 0.0
    %v7614 = vand.u32 %v7270, 4294901760
    %v7615 = vsub.f32 %v7270, %v7614
    %v7616 = vand.u32 %v7615, 4294901760
    %7617 = vmatpush1.msra.mxu0 %v7616
    %7618 = vmatprep.subr.mxu0 0.0
    %7619 = vmatpush1.msra.mxu0 0.0
    %7620 = vmatprep.subr.mxu0 0.0
    %7621 = vmatpush1.msra.mxu0 0.0
    %7622 = vmatprep.subr.mxu0 0.0
    %7623 = vmatpush1.msra.mxu0 0.0
    %7624 = vmatprep.subr.mxu0 0.0
    %7625 = vmatpush1.msra.mxu0 0.0
    %7626 = vmatprep.subr.mxu0 0.0
    %7627 = vmatpush1.msra.mxu0 0.0
    %7628 = vmatprep.subr.mxu0 0.0
    %7629 = vmatpush1.msra.mxu0 0.0
    %7630 = vmatprep.subr.mxu0 0.0
    %7631 = vmatpush1.msra.mxu0 0.0
    %7632 = vmatprep.subr.mxu0 0.0
    %7633 = vmatpush1.msra.mxu0 0.0
    %7634 = vmatprep.subr.mxu0 0.0
    %7635 = vmatpush1.msra.mxu0 0.0
    %7636 = vmatprep.subr.mxu0 0.0
    %7637 = vmatpush1.msra.mxu0 0.0
    %7638 = vmatprep.subr.mxu0 0.0
    %7639 = vmatpush1.msra.mxu0 0.0
    %7640 = vmatprep.subr.mxu0 0.0
    %7641 = vmatpush1.msra.mxu0 0.0
    %7642 = vmatprep.subr.mxu0 0.0
    %7643 = vmatpush1.msra.mxu0 0.0
    %7644 = vmatprep.subr.mxu0 0.0
    %7645 = vmatpush1.msra.mxu0 0.0
    %7646 = vmatprep.subr.mxu0 0.0
    %7647 = vmatpush1.msra.mxu0 0.0
    %7648 = vmatprep.subr.mxu0 0.0
    %7649 = vmatpush1.msra.mxu0 0.0
    %7650 = vmatprep.subr.mxu0 0.0
    %7651 = vmatpush1.msra.mxu0 0.0
    %7652 = vmatprep.subr.mxu0 0.0
    %7653 = vmatpush1.msra.mxu0 0.0
    %7654 = vmatprep.subr.mxu0 0.0
    %7655 = vmatpush1.msra.mxu0 0.0
    %7656 = vmatprep.subr.mxu0 0.0
    %7657 = vmatpush1.msra.mxu0 0.0
    %7658 = vmatprep.subr.mxu0 0.0
    %7659 = vmatpush1.msra.mxu0 0.0
    %7660 = vmatprep.subr.mxu0 0.0
    %7661 = vmatpush1.msra.mxu0 0.0
    %7662 = vmatprep.subr.mxu0 0.0
    %7663 = vmatpush1.msra.mxu0 0.0
    %7664 = vmatprep.subr.mxu0 0.0
    %7665 = vmatpush1.msra.mxu0 0.0
    %7666 = vmatprep.subr.mxu0 0.0
    %7667 = vmatpush1.msra.mxu0 0.0
    %7668 = vmatprep.subr.mxu0 0.0
    %7669 = vmatpush1.msra.mxu0 0.0
    %7670 = vmatprep.subr.mxu0 0.0
    %7671 = vmatpush1.msra.mxu0 0.0
    %7672 = vmatprep.subr.mxu0 0.0
    %7673 = vmatpush1.msra.mxu0 0.0
    %7674 = vmatprep.mubr.f32.mxu0 0.0
    %v7675 = vand.u32 %v6780, 4294901760
    %7676 = vmatmul.mubr.f32.gmra.mrb[0].mxu0 %v7675
    %v7677 = vpop.f32.mrb[0].mxu0
    %v7678 = vadd.f32 %v7595, %v7677
    %v7679 = vpop.f32.mrb[0].mxu0
    %7680 = vdwg.mxu0
    %7681 = vmatprep.subr.mxu0 0.0
    %v7682 = vand.u32 %v7267, 4294901760
    %7683 = vmatpush1.msra.mxu0 %v7682
    %7684 = vmatprep.subr.mxu0 0.0
    %v7685 = vand.u32 %v7268, 4294901760
    %7686 = vmatpush1.msra.mxu0 %v7685
    %7687 = vmatprep.subr.mxu0 0.0
    %v7688 = vand.u32 %v7269, 4294901760
    %7689 = vmatpush1.msra.mxu0 %v7688
    %7690 = vmatprep.subr.mxu0 0.0
    %v7691 = vand.u32 %v7270, 4294901760
    %7692 = vmatpush1.msra.mxu0 %v7691
    %7693 = vmatprep.subr.mxu0 0.0
    %7694 = vmatpush1.msra.mxu0 0.0
    %7695 = vmatprep.subr.mxu0 0.0
    %7696 = vmatpush1.msra.mxu0 0.0
    %7697 = vmatprep.subr.mxu0 0.0
    %7698 = vmatpush1.msra.mxu0 0.0
    %7699 = vmatprep.subr.mxu0 0.0
    %7700 = vmatpush1.msra.mxu0 0.0
    %7701 = vmatprep.subr.mxu0 0.0
    %7702 = vmatpush1.msra.mxu0 0.0
    %7703 = vmatprep.subr.mxu0 0.0
    %7704 = vmatpush1.msra.mxu0 0.0
    %7705 = vmatprep.subr.mxu0 0.0
    %7706 = vmatpush1.msra.mxu0 0.0
    %7707 = vmatprep.subr.mxu0 0.0
    %7708 = vmatpush1.msra.mxu0 0.0
    %7709 = vmatprep.subr.mxu0 0.0
    %7710 = vmatpush1.msra.mxu0 0.0
    %7711 = vmatprep.subr.mxu0 0.0
    %7712 = vmatpush1.msra.mxu0 0.0
    %7713 = vmatprep.subr.mxu0 0.0
    %7714 = vmatpush1.msra.mxu0 0.0
    %7715 = vmatprep.subr.mxu0 0.0
    %7716 = vmatpush1.msra.mxu0 0.0
    %7717 = vmatprep.subr.mxu0 0.0
    %7718 = vmatpush1.msra.mxu0 0.0
    %7719 = vmatprep.subr.mxu0 0.0
    %7720 = vmatpush1.msra.mxu0 0.0
    %7721 = vmatprep.subr.mxu0 0.0
    %7722 = vmatpush1.msra.mxu0 0.0
    %7723 = vmatprep.subr.mxu0 0.0
    %7724 = vmatpush1.msra.mxu0 0.0
    %7725 = vmatprep.subr.mxu0 0.0
    %7726 = vmatpush1.msra.mxu0 0.0
    %7727 = vmatprep.subr.mxu0 0.0
    %7728 = vmatpush1.msra.mxu0 0.0
    %7729 = vmatprep.subr.mxu0 0.0
    %7730 = vmatpush1.msra.mxu0 0.0
    %7731 = vmatprep.subr.mxu0 0.0
    %7732 = vmatpush1.msra.mxu0 0.0
    %7733 = vmatprep.subr.mxu0 0.0
    %7734 = vmatpush1.msra.mxu0 0.0
    %7735 = vmatprep.subr.mxu0 0.0
    %7736 = vmatpush1.msra.mxu0 0.0
    %7737 = vmatprep.subr.mxu0 0.0
    %7738 = vmatpush1.msra.mxu0 0.0
    %7739 = vmatprep.subr.mxu0 0.0
    %7740 = vmatpush1.msra.mxu0 0.0
    %7741 = vmatprep.subr.mxu0 0.0
    %7742 = vmatpush1.msra.mxu0 0.0
    %7743 = vmatprep.subr.mxu0 0.0
    %7744 = vmatpush1.msra.mxu0 0.0
    %7745 = vmatprep.subr.mxu0 0.0
    %7746 = vmatpush1.msra.mxu0 0.0
    %7747 = vmatprep.subr.mxu0 0.0
    %7748 = vmatpush1.msra.mxu0 0.0
    %7749 = vmatprep.mubr.f32.mxu0 0.0
    %v7750 = vand.u32 %v6780, 4294901760
    %7751 = vmatmul.mubr.f32.gmra.mrb[0].mxu0 %v7750
    %v7752 = vpop.f32.mrb[0].mxu0
    %v7753 = vadd.f32 %v7678, %v7752
    %v7754 = vpop.f32.mrb[0].mxu0
    %7755 = vdwg.mxu0
    %v7756 = vld [vmem:[#allocation2 + $0x6] sm:$0x1]
    %v7757 = vmul.f32 %v6765, %v6765
    %v7758 = vsel %vm1604, %v7757, 0.0
    %7759 = vadd.xlane.f32.xlu0 %v7758
    %v7760 = vpop.xlane.xlu0 %7759
    %s7761 = smul.f32 %s6770, 0.5
    %v7762 = vstv %s6770
    %v7763 = vadd.f32 %v7762, %v6774
    %v7764 = vrcp.pop %v7763
    %v7765 = vstv %s7761
    %v7766 = vmul.f32 %v7765, %v7764
    %v7767 = vsub.f32 0.0, %v6741
    %v7768 = vmul.f32 %v7766, %v7766
    %v7769 = vadd.f32 %v7760, %v7768
    %v7770 = vmul.f32 %v6741, %v7769
    %v7771 = vadd.f32 %v7767, %v7770
    %v7772 = vmul.f32 %v7771, 0.1
    %v7773 = vadd.f32 %v6741, %v7772
    %v7774 = vmax.f32 %v7773, 0.0
    %v7775 = vsub.f32 %v7774, %v6774
    %v7776 = vsub.f32 0.0, %v6750
    %v7777 = vmul.f32 %v6773, %v6774
    %v7778 = vadd.f32 %v7776, %v7777
    %v7779 = vadd.f32 %v7778, 1.0
    %v7780 = vadd.f32 %v7779, %v7775
    %v7781 = vmul.f32 %v7780, 0.1
    %v7782 = vadd.f32 %v6750, %v7781
    %v7783 = vrcp.pop %v6773
    %v7784 = vsub.f32 0.0, %v6764
    %v7785 = vmul.f32 %v7784, 0.5
    %v7786 = vstv %s6771
    %v7787 = vmul.f32 %v7786, %v7756
    %v7788 = vadd.f32 %v7785, %v7787
    %v7789 = vstv %s6772
    %v7790 = vmul.f32 %v7789, %v7783
    %v7791 = vmul.f32 %v7790, %v7264
    %v7792 = vadd.f32 %v7788, %v7791
    %v7793 = vstv %s6769
    %v7794 = vmul.f32 %v7793, %v7753
    %v7795 = vadd.f32 %v7792, %v7794
    %v7796 = vadd.f32 %v6764, %v7795
    %v7797 = vmax.f32 %v7796, 0.0
    %7798 = vst.msk [vmem:[#allocation17 + $0x6] sm:$0x1] %vm1604, %v7797
    %7799 = vst.msk [vmem:[%s9 + $0x6] sm:$0x1] %vm1606, %v7782
    %7800 = vst.msk [vmem:[%s10 + $0x6] sm:$0x1] %vm1606, %v7773
    %s7801 = sld [smem:[#allocation3 + $0x7]]
    %s7802 = sld [smem:[#allocation8 + $0x7]]
    %s7803 = sld [smem:[#allocation9 + $0x7]]
    %s7804 = sld [smem:[#allocation11 + $0x7]]
    %v7805 = vmax.f32 %v7782, 0.0
    %v7806 = vmin.f32 %v7773, 1.0
    %v7807 = vld [vmem:[#allocation14] sm:$0xff]
    %v7808 = vld [vmem:[#allocation14 + $0x8] sm:$0xff]
    %v7809 = vld [vmem:[#allocation14 + $0x10] sm:$0xff]
    %v7810 = vld [vmem:[#allocation14 + $0x18] sm:$0xff]
    %v7812 = vsel %vm583, %v7797, 0
    %7814 = vmatprep.subr.mxu0 0.0
    %v7815 = vand.u32 %v7807, 4294901760
    %7816 = vmatpush1.msra.mxu0 %v7815
    %7817 = vmatprep.subr.mxu0 0.0
    %v7818 = vand.u32 %v7808, 4294901760
    %7819 = vmatpush1.msra.mxu0 %v7818
    %7820 = vmatprep.subr.mxu0 0.0
    %v7821 = vand.u32 %v7809, 4294901760
    %7822 = vmatpush1.msra.mxu0 %v7821
    %7823 = vmatprep.subr.mxu0 0.0
    %v7824 = vand.u32 %v7810, 4294901760
    %7825 = vmatpush1.msra.mxu0 %v7824
    %7826 = vmatprep.subr.mxu0 0.0
    %7827 = vmatpush1.msra.mxu0 0.0
    %7828 = vmatprep.subr.mxu0 0.0
    %7829 = vmatpush1.msra.mxu0 0.0
    %7830 = vmatprep.subr.mxu0 0.0
    %7831 = vmatpush1.msra.mxu0 0.0
    %7832 = vmatprep.subr.mxu0 0.0
    %7833 = vmatpush1.msra.mxu0 0.0
    %7834 = vmatprep.subr.mxu0 0.0
    %7835 = vmatpush1.msra.mxu0 0.0
    %7836 = vmatprep.subr.mxu0 0.0
    %7837 = vmatpush1.msra.mxu0 0.0
    %7838 = vmatprep.subr.mxu0 0.0
    %7839 = vmatpush1.msra.mxu0 0.0
    %7840 = vmatprep.subr.mxu0 0.0
    %7841 = vmatpush1.msra.mxu0 0.0
    %7842 = vmatprep.subr.mxu0 0.0
    %7843 = vmatpush1.msra.mxu0 0.0
    %7844 = vmatprep.subr.mxu0 0.0
    %7845 = vmatpush1.msra.mxu0 0.0
    %7846 = vmatprep.subr.mxu0 0.0
    %7847 = vmatpush1.msra.mxu0 0.0
    %7848 = vmatprep.subr.mxu0 0.0
    %7849 = vmatpush1.msra.mxu0 0.0
    %7850 = vmatprep.subr.mxu0 0.0
    %7851 = vmatpush1.msra.mxu0 0.0
    %7852 = vmatprep.subr.mxu0 0.0
    %7853 = vmatpush1.msra.mxu0 0.0
    %7854 = vmatprep.subr.mxu0 0.0
    %7855 = vmatpush1.msra.mxu0 0.0
    %7856 = vmatprep.subr.mxu0 0.0
    %7857 = vmatpush1.msra.mxu0 0.0
    %7858 = vmatprep.subr.mxu0 0.0
    %7859 = vmatpush1.msra.mxu0 0.0
    %7860 = vmatprep.subr.mxu0 0.0
    %7861 = vmatpush1.msra.mxu0 0.0
    %7862 = vmatprep.subr.mxu0 0.0
    %7863 = vmatpush1.msra.mxu0 0.0
    %7864 = vmatprep.subr.mxu0 0.0
    %7865 = vmatpush1.msra.mxu0 0.0
    %7866 = vmatprep.subr.mxu0 0.0
    %7867 = vmatpush1.msra.mxu0 0.0
    %7868 = vmatprep.subr.mxu0 0.0
    %7869 = vmatpush1.msra.mxu0 0.0
    %7870 = vmatprep.subr.mxu0 0.0
    %7871 = vmatpush1.msra.mxu0 0.0
    %7872 = vmatprep.subr.mxu0 0.0
    %7873 = vmatpush1.msra.mxu0 0.0
    %7874 = vmatprep.subr.mxu0 0.0
    %7875 = vmatpush1.msra.mxu0 0.0
    %7876 = vmatprep.subr.mxu0 0.0
    %7877 = vmatpush1.msra.mxu0 0.0
    %7878 = vmatprep.subr.mxu0 0.0
    %7879 = vmatpush1.msra.mxu0 0.0
    %7880 = vmatprep.subr.mxu0 0.0
    %7881 = vmatpush1.msra.mxu0 0.0
    %7882 = vmatprep.mubr.f32.mxu0 0.0
    %v7883 = vand.u32 %v7812, 4294901760
    %v7884 = vsub.f32 %v7812, %v7883
    %v7885 = vand.u32 %v7884, 4294901760
    %v7886 = vsub.f32 %v7884, %v7885
    %v7887 = vand.u32 %v7886, 4294901760
    %7888 = vmatmul.mubr.f32.gmra.mrb[0].mxu0 %v7887
    %v7889 = vpop.f32.mrb[0].mxu0
    %v7890 = vadd.f32 0.0, %v7889
    %v7891 = vpop.f32.mrb[0].mxu0
    %7892 = vdwg.mxu0
    %7893 = vmatprep.subr.mxu0 0.0
    %v7894 = vand.u32 %v7807, 4294901760
    %v7895 = vsub.f32 %v7807, %v7894
    %v7896 = vand.u32 %v7895, 4294901760
    %v7897 = vsub.f32 %v7895, %v7896
    %v7898 = vand.u32 %v7897, 4294901760
    %7899 = vmatpush1.msra.mxu0 %v7898
    %7900 = vmatprep.subr.mxu0 0.0
    %v7901 = vand.u32 %v7808, 4294901760
    %v7902 = vsub.f32 %v7808, %v7901
    %v7903 = vand.u32 %v7902, 4294901760
    %v7904 = vsub.f32 %v7902, %v7903
    %v7905 = vand.u32 %v7904, 4294901760
    %7906 = vmatpush1.msra.mxu0 %v7905
    %7907 = vmatprep.subr.mxu0 0.0
    %v7908 = vand.u32 %v7809, 4294901760
    %v7909 = vsub.f32 %v7809, %v7908
    %v7910 = vand.u32 %v7909, 4294901760
    %v7911 = vsub.f32 %v7909, %v7910
    %v7912 = vand.u32 %v7911, 4294901760
    %7913 = vmatpush1.msra.mxu0 %v7912
    %7914 = vmatprep.subr.mxu0 0.0
    %v7915 = vand.u32 %v7810, 4294901760
    %v7916 = vsub.f32 %v7810, %v7915
    %v7917 = vand.u32 %v7916, 4294901760
    %v7918 = vsub.f32 %v7916, %v7917
    %v7919 = vand.u32 %v7918, 4294901760
    %7920 = vmatpush1.msra.mxu0 %v7919
    %7921 = vmatprep.subr.mxu0 0.0
    %7922 = vmatpush1.msra.mxu0 0.0
    %7923 = vmatprep.subr.mxu0 0.0
    %7924 = vmatpush1.msra.mxu0 0.0
    %7925 = vmatprep.subr.mxu0 0.0
    %7926 = vmatpush1.msra.mxu0 0.0
    %7927 = vmatprep.subr.mxu0 0.0
    %7928 = vmatpush1.msra.mxu0 0.0
    %7929 = vmatprep.subr.mxu0 0.0
    %7930 = vmatpush1.msra.mxu0 0.0
    %7931 = vmatprep.subr.mxu0 0.0
    %7932 = vmatpush1.msra.mxu0 0.0
    %7933 = vmatprep.subr.mxu0 0.0
    %7934 = vmatpush1.msra.mxu0 0.0
    %7935 = vmatprep.subr.mxu0 0.0
    %7936 = vmatpush1.msra.mxu0 0.0
    %7937 = vmatprep.subr.mxu0 0.0
    %7938 = vmatpush1.msra.mxu0 0.0
    %7939 = vmatprep.subr.mxu0 0.0
    %7940 = vmatpush1.msra.mxu0 0.0
    %7941 = vmatprep.subr.mxu0 0.0
    %7942 = vmatpush1.msra.mxu0 0.0
    %7943 = vmatprep.subr.mxu0 0.0
    %7944 = vmatpush1.msra.mxu0 0.0
    %7945 = vmatprep.subr.mxu0 0.0
    %7946 = vmatpush1.msra.mxu0 0.0
    %7947 = vmatprep.subr.mxu0 0.0
    %7948 = vmatpush1.msra.mxu0 0.0
    %7949 = vmatprep.subr.mxu0 0.0
    %7950 = vmatpush1.msra.mxu0 0.0
    %7951 = vmatprep.subr.mxu0 0.0
    %7952 = vmatpush1.msra.mxu0 0.0
    %7953 = vmatprep.subr.mxu0 0.0
    %7954 = vmatpush1.msra.mxu0 0.0
    %7955 = vmatprep.subr.mxu0 0.0
    %7956 = vmatpush1.msra.mxu0 0.0
    %7957 = vmatprep.subr.mxu0 0.0
    %7958 = vmatpush1.msra.mxu0 0.0
    %7959 = vmatprep.subr.mxu0 0.0
    %7960 = vmatpush1.msra.mxu0 0.0
    %7961 = vmatprep.subr.mxu0 0.0
    %7962 = vmatpush1.msra.mxu0 0.0
    %7963 = vmatprep.subr.mxu0 0.0
    %7964 = vmatpush1.msra.mxu0 0.0
    %7965 = vmatprep.subr.mxu0 0.0
    %7966 = vmatpush1.msra.mxu0 0.0
    %7967 = vmatprep.subr.mxu0 0.0
    %7968 = vmatpush1.msra.mxu0 0.0
    %7969 = vmatprep.subr.mxu0 0.0
    %7970 = vmatpush1.msra.mxu0 0.0
    %7971 = vmatprep.subr.mxu0 0.0
    %7972 = vmatpush1.msra.mxu0 0.0
    %7973 = vmatprep.subr.mxu0 0.0
    %7974 = vmatpush1.msra.mxu0 0.0
    %7975 = vmatprep.subr.mxu0 0.0
    %7976 = vmatpush1.msra.mxu0 0.0
    %7977 = vmatprep.mubr.f32.mxu0 0.0
    %v7978 = vand.u32 %v7812, 4294901760
    %7979 = vmatmul.mubr.f32.gmra.mrb[0].mxu0 %v7978
    %v7980 = vpop.f32.mrb[0].mxu0
    %v7981 = vadd.f32 %v7890, %v7980
    %v7982 = vpop.f32.mrb[0].mxu0
    %7983 = vdwg.mxu0
    %7984 = vmatprep.subr.mxu0 0.0
    %v7985 = vand.u32 %v7807, 4294901760
    %v7986 = vsub.f32 %v7807, %v7985
    %7987 = vmatpush1.msra.mxu0 %v7986
    %7988 = vmatprep.subr.mxu0 0.0
    %v7989 = vand.u32 %v7808, 4294901760
    %v7990 = vsub.f32 %v7808, %v7989
    %7991 = vmatpush1.msra.mxu0 %v7990
    %7992 = vmatprep.subr.mxu0 0.0
    %v7993 = vand.u32 %v7809, 4294901760
    %v7994 = vsub.f32 %v7809, %v7993
    %7995 = vmatpush1.msra.mxu0 %v7994
    %7996 = vmatprep.subr.mxu0 0.0
    %v7997 = vand.u32 %v7810, 4294901760
    %v7998 = vsub.f32 %v7810, %v7997
    %7999 = vmatpush1.msra.mxu0 %v7998
    %8000 = vmatprep.subr.mxu0 0.0
    %8001 = vmatpush1.msra.mxu0 0.0
    %8002 = vmatprep.subr.mxu0 0.0
    %8003 = vmatpush1.msra.mxu0 0.0
    %8004 = vmatprep.subr.mxu0 0.0
    %8005 = vmatpush1.msra.mxu0 0.0
    %8006 = vmatprep.subr.mxu0 0.0
    %8007 = vmatpush1.msra.mxu0 0.0
    %8008 = vmatprep.subr.mxu0 0.0
    %8009 = vmatpush1.msra.mxu0 0.0
    %8010 = vmatprep.subr.mxu0 0.0
    %8011 = vmatpush1.msra.mxu0 0.0
    %8012 = vmatprep.subr.mxu0 0.0
    %8013 = vmatpush1.msra.mxu0 0.0
    %8014 = vmatprep.subr.mxu0 0.0
    %8015 = vmatpush1.msra.mxu0 0.0
    %8016 = vmatprep.subr.mxu0 0.0
    %8017 = vmatpush1.msra.mxu0 0.0
    %8018 = vmatprep.subr.mxu0 0.0
    %8019 = vmatpush1.msra.mxu0 0.0
    %8020 = vmatprep.subr.mxu0 0.0
    %8021 = vmatpush1.msra.mxu0 0.0
    %8022 = vmatprep.subr.mxu0 0.0
    %8023 = vmatpush1.msra.mxu0 0.0
    %8024 = vmatprep.subr.mxu0 0.0
    %8025 = vmatpush1.msra.mxu0 0.0
    %8026 = vmatprep.subr.mxu0 0.0
    %8027 = vmatpush1.msra.mxu0 0.0
    %8028 = vmatprep.subr.mxu0 0.0
    %8029 = vmatpush1.msra.mxu0 0.0
    %8030 = vmatprep.subr.mxu0 0.0
    %8031 = vmatpush1.msra.mxu0 0.0
    %8032 = vmatprep.subr.mxu0 0.0
    %8033 = vmatpush1.msra.mxu0 0.0
    %8034 = vmatprep.subr.mxu0 0.0
    %8035 = vmatpush1.msra.mxu0 0.0
    %8036 = vmatprep.subr.mxu0 0.0
    %8037 = vmatpush1.msra.mxu0 0.0
    %8038 = vmatprep.subr.mxu0 0.0
    %8039 = vmatpush1.msra.mxu0 0.0
    %8040 = vmatprep.subr.mxu0 0.0
    %8041 = vmatpush1.msra.mxu0 0.0
    %8042 = vmatprep.subr.mxu0 0.0
    %8043 = vmatpush1.msra.mxu0 0.0
    %8044 = vmatprep.subr.mxu0 0.0
    %8045 = vmatpush1.msra.mxu0 0.0
    %8046 = vmatprep.subr.mxu0 0.0
    %8047 = vmatpush1.msra.mxu0 0.0
    %8048 = vmatprep.subr.mxu0 0.0
    %8049 = vmatpush1.msra.mxu0 0.0
    %8050 = vmatprep.subr.mxu0 0.0
    %8051 = vmatpush1.msra.mxu0 0.0
    %8052 = vmatprep.subr.mxu0 0.0
    %8053 = vmatpush1.msra.mxu0 0.0
    %8054 = vmatprep.subr.mxu0 0.0
    %8055 = vmatpush1.msra.mxu0 0.0
    %8056 = vmatprep.mubr.f32.mxu0 0.0
    %v8057 = vand.u32 %v7812, 4294901760
    %v8058 = vsub.f32 %v7812, %v8057
    %8059 = vmatmul.mubr.f32.gmra.mrb[0].mxu0 %v8058
    %v8060 = vpop.f32.mrb[0].mxu0
    %v8061 = vadd.f32 %v7981, %v8060
    %v8062 = vpop.f32.mrb[0].mxu0
    %8063 = vdwg.mxu0
    %8064 = vmatprep.subr.mxu0 0.0
    %v8065 = vand.u32 %v7807, 4294901760
    %8066 = vmatpush1.msra.mxu0 %v8065
    %8067 = vmatprep.subr.mxu0 0.0
    %v8068 = vand.u32 %v7808, 4294901760
    %8069 = vmatpush1.msra.mxu0 %v8068
    %8070 = vmatprep.subr.mxu0 0.0
    %v8071 = vand.u32 %v7809, 4294901760
    %8072 = vmatpush1.msra.mxu0 %v8071
    %8073 = vmatprep.subr.mxu0 0.0
    %v8074 = vand.u32 %v7810, 4294901760
    %8075 = vmatpush1.msra.mxu0 %v8074
    %8076 = vmatprep.subr.mxu0 0.0
    %8077 = vmatpush1.msra.mxu0 0.0
    %8078 = vmatprep.subr.mxu0 0.0
    %8079 = vmatpush1.msra.mxu0 0.0
    %8080 = vmatprep.subr.mxu0 0.0
    %8081 = vmatpush1.msra.mxu0 0.0
    %8082 = vmatprep.subr.mxu0 0.0
    %8083 = vmatpush1.msra.mxu0 0.0
    %8084 = vmatprep.subr.mxu0 0.0
    %8085 = vmatpush1.msra.mxu0 0.0
    %8086 = vmatprep.subr.mxu0 0.0
    %8087 = vmatpush1.msra.mxu0 0.0
    %8088 = vmatprep.subr.mxu0 0.0
    %8089 = vmatpush1.msra.mxu0 0.0
    %8090 = vmatprep.subr.mxu0 0.0
    %8091 = vmatpush1.msra.mxu0 0.0
    %8092 = vmatprep.subr.mxu0 0.0
    %8093 = vmatpush1.msra.mxu0 0.0
    %8094 = vmatprep.subr.mxu0 0.0
    %8095 = vmatpush1.msra.mxu0 0.0
    %8096 = vmatprep.subr.mxu0 0.0
    %8097 = vmatpush1.msra.mxu0 0.0
    %8098 = vmatprep.subr.mxu0 0.0
    %8099 = vmatpush1.msra.mxu0 0.0
    %8100 = vmatprep.subr.mxu0 0.0
    %8101 = vmatpush1.msra.mxu0 0.0
    %8102 = vmatprep.subr.mxu0 0.0
    %8103 = vmatpush1.msra.mxu0 0.0
    %8104 = vmatprep.subr.mxu0 0.0
    %8105 = vmatpush1.msra.mxu0 0.0
    %8106 = vmatprep.subr.mxu0 0.0
    %8107 = vmatpush1.msra.mxu0 0.0
    %8108 = vmatprep.subr.mxu0 0.0
    %8109 = vmatpush1.msra.mxu0 0.0
    %8110 = vmatprep.subr.mxu0 0.0
    %8111 = vmatpush1.msra.mxu0 0.0
    %8112 = vmatprep.subr.mxu0 0.0
    %8113 = vmatpush1.msra.mxu0 0.0
    %8114 = vmatprep.subr.mxu0 0.0
    %8115 = vmatpush1.msra.mxu0 0.0
    %8116 = vmatprep.subr.mxu0 0.0
    %8117 = vmatpush1.msra.mxu0 0.0
    %8118 = vmatprep.subr.mxu0 0.0
    %8119 = vmatpush1.msra.mxu0 0.0
    %8120 = vmatprep.subr.mxu0 0.0
    %8121 = vmatpush1.msra.mxu0 0.0
    %8122 = vmatprep.subr.mxu0 0.0
    %8123 = vmatpush1.msra.mxu0 0.0
    %8124 = vmatprep.subr.mxu0 0.0
    %8125 = vmatpush1.msra.mxu0 0.0
    %8126 = vmatprep.subr.mxu0 0.0
    %8127 = vmatpush1.msra.mxu0 0.0
    %8128 = vmatprep.subr.mxu0 0.0
    %8129 = vmatpush1.msra.mxu0 0.0
    %8130 = vmatprep.subr.mxu0 0.0
    %8131 = vmatpush1.msra.mxu0 0.0
    %8132 = vmatprep.mubr.f32.mxu0 0.0
    %v8133 = vand.u32 %v7812, 4294901760
    %v8134 = vsub.f32 %v7812, %v8133
    %v8135 = vand.u32 %v8134, 4294901760
    %8136 = vmatmul.mubr.f32.gmra.mrb[0].mxu0 %v8135
    %v8137 = vpop.f32.mrb[0].mxu0
    %v8138 = vadd.f32 %v8061, %v8137
    %v8139 = vpop.f32.mrb[0].mxu0
    %8140 = vdwg.mxu0
    %8141 = vmatprep.subr.mxu0 0.0
    %v8142 = vand.u32 %v7807, 4294901760
    %v8143 = vsub.f32 %v7807, %v8142
    %v8144 = vand.u32 %v8143, 4294901760
    %8145 = vmatpush1.msra.mxu0 %v8144
    %8146 = vmatprep.subr.mxu0 0.0
    %v8147 = vand.u32 %v7808, 4294901760
    %v8148 = vsub.f32 %v7808, %v8147
    %v8149 = vand.u32 %v8148, 4294901760
    %8150 = vmatpush1.msra.mxu0 %v8149
    %8151 = vmatprep.subr.mxu0 0.0
    %v8152 = vand.u32 %v7809, 4294901760
    %v8153 = vsub.f32 %v7809, %v8152
    %v8154 = vand.u32 %v8153, 4294901760
    %8155 = vmatpush1.msra.mxu0 %v8154
    %8156 = vmatprep.subr.mxu0 0.0
    %v8157 = vand.u32 %v7810, 4294901760
    %v8158 = vsub.f32 %v7810, %v8157
    %v8159 = vand.u32 %v8158, 4294901760
    %8160 = vmatpush1.msra.mxu0 %v8159
    %8161 = vmatprep.subr.mxu0 0.0
    %8162 = vmatpush1.msra.mxu0 0.0
    %8163 = vmatprep.subr.mxu0 0.0
    %8164 = vmatpush1.msra.mxu0 0.0
    %8165 = vmatprep.subr.mxu0 0.0
    %8166 = vmatpush1.msra.mxu0 0.0
    %8167 = vmatprep.subr.mxu0 0.0
    %8168 = vmatpush1.msra.mxu0 0.0
    %8169 = vmatprep.subr.mxu0 0.0
    %8170 = vmatpush1.msra.mxu0 0.0
    %8171 = vmatprep.subr.mxu0 0.0
    %8172 = vmatpush1.msra.mxu0 0.0
    %8173 = vmatprep.subr.mxu0 0.0
    %8174 = vmatpush1.msra.mxu0 0.0
    %8175 = vmatprep.subr.mxu0 0.0
    %8176 = vmatpush1.msra.mxu0 0.0
    %8177 = vmatprep.subr.mxu0 0.0
    %8178 = vmatpush1.msra.mxu0 0.0
    %8179 = vmatprep.subr.mxu0 0.0
    %8180 = vmatpush1.msra.mxu0 0.0
    %8181 = vmatprep.subr.mxu0 0.0
    %8182 = vmatpush1.msra.mxu0 0.0
    %8183 = vmatprep.subr.mxu0 0.0
    %8184 = vmatpush1.msra.mxu0 0.0
    %8185 = vmatprep.subr.mxu0 0.0
    %8186 = vmatpush1.msra.mxu0 0.0
    %8187 = vmatprep.subr.mxu0 0.0
    %8188 = vmatpush1.msra.mxu0 0.0
    %8189 = vmatprep.subr.mxu0 0.0
    %8190 = vmatpush1.msra.mxu0 0.0
    %8191 = vmatprep.subr.mxu0 0.0
    %8192 = vmatpush1.msra.mxu0 0.0
    %8193 = vmatprep.subr.mxu0 0.0
    %8194 = vmatpush1.msra.mxu0 0.0
    %8195 = vmatprep.subr.mxu0 0.0
    %8196 = vmatpush1.msra.mxu0 0.0
    %8197 = vmatprep.subr.mxu0 0.0
    %8198 = vmatpush1.msra.mxu0 0.0
    %8199 = vmatprep.subr.mxu0 0.0
    %8200 = vmatpush1.msra.mxu0 0.0
    %8201 = vmatprep.subr.mxu0 0.0
    %8202 = vmatpush1.msra.mxu0 0.0
    %8203 = vmatprep.subr.mxu0 0.0
    %8204 = vmatpush1.msra.mxu0 0.0
    %8205 = vmatprep.subr.mxu0 0.0
    %8206 = vmatpush1.msra.mxu0 0.0
    %8207 = vmatprep.subr.mxu0 0.0
    %8208 = vmatpush1.msra.mxu0 0.0
    %8209 = vmatprep.subr.mxu0 0.0
    %8210 = vmatpush1.msra.mxu0 0.0
    %8211 = vmatprep.subr.mxu0 0.0
    %8212 = vmatpush1.msra.mxu0 0.0
    %8213 = vmatprep.subr.mxu0 0.0
    %8214 = vmatpush1.msra.mxu0 0.0
    %8215 = vmatprep.subr.mxu0 0.0
    %8216 = vmatpush1.msra.mxu0 0.0
    %8217 = vmatprep.mubr.f32.mxu0 0.0
    %v8218 = vand.u32 %v7812, 4294901760
    %8219 = vmatmul.mubr.f32.gmra.mrb[0].mxu0 %v8218
    %v8220 = vpop.f32.mrb[0].mxu0
    %v8221 = vadd.f32 %v8138, %v8220
    %v8222 = vpop.f32.mrb[0].mxu0
    %8223 = vdwg.mxu0
    %8224 = vmatprep.subr.mxu0 0.0
    %v8225 = vand.u32 %v7807, 4294901760
    %8226 = vmatpush1.msra.mxu0 %v8225
    %8227 = vmatprep.subr.mxu0 0.0
    %v8228 = vand.u32 %v7808, 4294901760
    %8229 = vmatpush1.msra.mxu0 %v8228
    %8230 = vmatprep.subr.mxu0 0.0
    %v8231 = vand.u32 %v7809, 4294901760
    %8232 = vmatpush1.msra.mxu0 %v8231
    %8233 = vmatprep.subr.mxu0 0.0
    %v8234 = vand.u32 %v7810, 4294901760
    %8235 = vmatpush1.msra.mxu0 %v8234
    %8236 = vmatprep.subr.mxu0 0.0
    %8237 = vmatpush1.msra.mxu0 0.0
    %8238 = vmatprep.subr.mxu0 0.0
    %8239 = vmatpush1.msra.mxu0 0.0
    %8240 = vmatprep.subr.mxu0 0.0
    %8241 = vmatpush1.msra.mxu0 0.0
    %8242 = vmatprep.subr.mxu0 0.0
    %8243 = vmatpush1.msra.mxu0 0.0
    %8244 = vmatprep.subr.mxu0 0.0
    %8245 = vmatpush1.msra.mxu0 0.0
    %8246 = vmatprep.subr.mxu0 0.0
    %8247 = vmatpush1.msra.mxu0 0.0
    %8248 = vmatprep.subr.mxu0 0.0
    %8249 = vmatpush1.msra.mxu0 0.0
    %8250 = vmatprep.subr.mxu0 0.0
    %8251 = vmatpush1.msra.mxu0 0.0
    %8252 = vmatprep.subr.mxu0 0.0
    %8253 = vmatpush1.msra.mxu0 0.0
    %8254 = vmatprep.subr.mxu0 0.0
    %8255 = vmatpush1.msra.mxu0 0.0
    %8256 = vmatprep.subr.mxu0 0.0
    %8257 = vmatpush1.msra.mxu0 0.0
    %8258 = vmatprep.subr.mxu0 0.0
    %8259 = vmatpush1.msra.mxu0 0.0
    %8260 = vmatprep.subr.mxu0 0.0
    %8261 = vmatpush1.msra.mxu0 0.0
    %8262 = vmatprep.subr.mxu0 0.0
    %8263 = vmatpush1.msra.mxu0 0.0
    %8264 = vmatprep.subr.mxu0 0.0
    %8265 = vmatpush1.msra.mxu0 0.0
    %8266 = vmatprep.subr.mxu0 0.0
    %8267 = vmatpush1.msra.mxu0 0.0
    %8268 = vmatprep.subr.mxu0 0.0
    %8269 = vmatpush1.msra.mxu0 0.0
    %8270 = vmatprep.subr.mxu0 0.0
    %8271 = vmatpush1.msra.mxu0 0.0
    %8272 = vmatprep.subr.mxu0 0.0
    %8273 = vmatpush1.msra.mxu0 0.0
    %8274 = vmatprep.subr.mxu0 0.0
    %8275 = vmatpush1.msra.mxu0 0.0
    %8276 = vmatprep.subr.mxu0 0.0
    %8277 = vmatpush1.msra.mxu0 0.0
    %8278 = vmatprep.subr.mxu0 0.0
    %8279 = vmatpush1.msra.mxu0 0.0
    %8280 = vmatprep.subr.mxu0 0.0
    %8281 = vmatpush1.msra.mxu0 0.0
    %8282 = vmatprep.subr.mxu0 0.0
    %8283 = vmatpush1.msra.mxu0 0.0
    %8284 = vmatprep.subr.mxu0 0.0
    %8285 = vmatpush1.msra.mxu0 0.0
    %8286 = vmatprep.subr.mxu0 0.0
    %8287 = vmatpush1.msra.mxu0 0.0
    %8288 = vmatprep.subr.mxu0 0.0
    %8289 = vmatpush1.msra.mxu0 0.0
    %8290 = vmatprep.subr.mxu0 0.0
    %8291 = vmatpush1.msra.mxu0 0.0
    %8292 = vmatprep.mubr.f32.mxu0 0.0
    %v8293 = vand.u32 %v7812, 4294901760
    %8294 = vmatmul.mubr.f32.gmra.mrb[0].mxu0 %v8293
    %v8295 = vpop.f32.mrb[0].mxu0
    %v8296 = vadd.f32 %v8221, %v8295
    %v8297 = vpop.f32.mrb[0].mxu0
    %8298 = vdwg.mxu0
    %v8299 = vld [vmem:[#allocation16] sm:$0xff]
    %v8300 = vld [vmem:[#allocation16 + $0x8] sm:$0xff]
    %v8301 = vld [vmem:[#allocation16 + $0x10] sm:$0xff]
    %v8302 = vld [vmem:[#allocation16 + $0x18] sm:$0xff]
    %8303 = vmatprep.subr.mxu0 0.0
    %v8304 = vand.u32 %v8299, 4294901760
    %8305 = vmatpush1.msra.mxu0 %v8304
    %8306 = vmatprep.subr.mxu0 0.0
    %v8307 = vand.u32 %v8300, 4294901760
    %8308 = vmatpush1.msra.mxu0 %v8307
    %8309 = vmatprep.subr.mxu0 0.0
    %v8310 = vand.u32 %v8301, 4294901760
    %8311 = vmatpush1.msra.mxu0 %v8310
    %8312 = vmatprep.subr.mxu0 0.0
    %v8313 = vand.u32 %v8302, 4294901760
    %8314 = vmatpush1.msra.mxu0 %v8313
    %8315 = vmatprep.subr.mxu0 0.0
    %8316 = vmatpush1.msra.mxu0 0.0
    %8317 = vmatprep.subr.mxu0 0.0
    %8318 = vmatpush1.msra.mxu0 0.0
    %8319 = vmatprep.subr.mxu0 0.0
    %8320 = vmatpush1.msra.mxu0 0.0
    %8321 = vmatprep.subr.mxu0 0.0
    %8322 = vmatpush1.msra.mxu0 0.0
    %8323 = vmatprep.subr.mxu0 0.0
    %8324 = vmatpush1.msra.mxu0 0.0
    %8325 = vmatprep.subr.mxu0 0.0
    %8326 = vmatpush1.msra.mxu0 0.0
    %8327 = vmatprep.subr.mxu0 0.0
    %8328 = vmatpush1.msra.mxu0 0.0
    %8329 = vmatprep.subr.mxu0 0.0
    %8330 = vmatpush1.msra.mxu0 0.0
    %8331 = vmatprep.subr.mxu0 0.0
    %8332 = vmatpush1.msra.mxu0 0.0
    %8333 = vmatprep.subr.mxu0 0.0
    %8334 = vmatpush1.msra.mxu0 0.0
    %8335 = vmatprep.subr.mxu0 0.0
    %8336 = vmatpush1.msra.mxu0 0.0
    %8337 = vmatprep.subr.mxu0 0.0
    %8338 = vmatpush1.msra.mxu0 0.0
    %8339 = vmatprep.subr.mxu0 0.0
    %8340 = vmatpush1.msra.mxu0 0.0
    %8341 = vmatprep.subr.mxu0 0.0
    %8342 = vmatpush1.msra.mxu0 0.0
    %8343 = vmatprep.subr.mxu0 0.0
    %8344 = vmatpush1.msra.mxu0 0.0
    %8345 = vmatprep.subr.mxu0 0.0
    %8346 = vmatpush1.msra.mxu0 0.0
    %8347 = vmatprep.subr.mxu0 0.0
    %8348 = vmatpush1.msra.mxu0 0.0
    %8349 = vmatprep.subr.mxu0 0.0
    %8350 = vmatpush1.msra.mxu0 0.0
    %8351 = vmatprep.subr.mxu0 0.0
    %8352 = vmatpush1.msra.mxu0 0.0
    %8353 = vmatprep.subr.mxu0 0.0
    %8354 = vmatpush1.msra.mxu0 0.0
    %8355 = vmatprep.subr.mxu0 0.0
    %8356 = vmatpush1.msra.mxu0 0.0
    %8357 = vmatprep.subr.mxu0 0.0
    %8358 = vmatpush1.msra.mxu0 0.0
    %8359 = vmatprep.subr.mxu0 0.0
    %8360 = vmatpush1.msra.mxu0 0.0
    %8361 = vmatprep.subr.mxu0 0.0
    %8362 = vmatpush1.msra.mxu0 0.0
    %8363 = vmatprep.subr.mxu0 0.0
    %8364 = vmatpush1.msra.mxu0 0.0
    %8365 = vmatprep.subr.mxu0 0.0
    %8366 = vmatpush1.msra.mxu0 0.0
    %8367 = vmatprep.subr.mxu0 0.0
    %8368 = vmatpush1.msra.mxu0 0.0
    %8369 = vmatprep.subr.mxu0 0.0
    %8370 = vmatpush1.msra.mxu0 0.0
    %8371 = vmatprep.mubr.f32.mxu0 0.0
    %v8372 = vand.u32 %v7812, 4294901760
    %v8373 = vsub.f32 %v7812, %v8372
    %v8374 = vand.u32 %v8373, 4294901760
    %v8375 = vsub.f32 %v8373, %v8374
    %v8376 = vand.u32 %v8375, 4294901760
    %8377 = vmatmul.mubr.f32.gmra.mrb[0].mxu0 %v8376
    %v8378 = vpop.f32.mrb[0].mxu0
    %v8379 = vadd.f32 0.0, %v8378
    %v8380 = vpop.f32.mrb[0].mxu0
    %8381 = vdwg.mxu0
    %8382 = vmatprep.subr.mxu0 0.0
    %v8383 = vand.u32 %v8299, 4294901760
    %v8384 = vsub.f32 %v8299, %v8383
    %v8385 = vand.u32 %v8384, 4294901760
    %v8386 = vsub.f32 %v8384, %v8385
    %v8387 = vand.u32 %v8386, 4294901760
    %8388 = vmatpush1.msra.mxu0 %v8387
    %8389 = vmatprep.subr.mxu0 0.0
    %v8390 = vand.u32 %v8300, 4294901760
    %v8391 = vsub.f32 %v8300, %v8390
    %v8392 = vand.u32 %v8391, 4294901760
    %v8393 = vsub.f32 %v8391, %v8392
    %v8394 = vand.u32 %v8393, 4294901760
    %8395 = vmatpush1.msra.mxu0 %v8394
    %8396 = vmatprep.subr.mxu0 0.0
    %v8397 = vand.u32 %v8301, 4294901760
    %v8398 = vsub.f32 %v8301, %v8397
    %v8399 = vand.u32 %v8398, 4294901760
    %v8400 = vsub.f32 %v8398, %v8399
    %v8401 = vand.u32 %v8400, 4294901760
    %8402 = vmatpush1.msra.mxu0 %v8401
    %8403 = vmatprep.subr.mxu0 0.0
    %v8404 = vand.u32 %v8302, 4294901760
    %v8405 = vsub.f32 %v8302, %v8404
    %v8406 = vand.u32 %v8405, 4294901760
    %v8407 = vsub.f32 %v8405, %v8406
    %v8408 = vand.u32 %v8407, 4294901760
    %8409 = vmatpush1.msra.mxu0 %v8408
    %8410 = vmatprep.subr.mxu0 0.0
    %8411 = vmatpush1.msra.mxu0 0.0
    %8412 = vmatprep.subr.mxu0 0.0
    %8413 = vmatpush1.msra.mxu0 0.0
    %8414 = vmatprep.subr.mxu0 0.0
    %8415 = vmatpush1.msra.mxu0 0.0
    %8416 = vmatprep.subr.mxu0 0.0
    %8417 = vmatpush1.msra.mxu0 0.0
    %8418 = vmatprep.subr.mxu0 0.0
    %8419 = vmatpush1.msra.mxu0 0.0
    %8420 = vmatprep.subr.mxu0 0.0
    %8421 = vmatpush1.msra.mxu0 0.0
    %8422 = vmatprep.subr.mxu0 0.0
    %8423 = vmatpush1.msra.mxu0 0.0
    %8424 = vmatprep.subr.mxu0 0.0
    %8425 = vmatpush1.msra.mxu0 0.0
    %8426 = vmatprep.subr.mxu0 0.0
    %8427 = vmatpush1.msra.mxu0 0.0
    %8428 = vmatprep.subr.mxu0 0.0
    %8429 = vmatpush1.msra.mxu0 0.0
    %8430 = vmatprep.subr.mxu0 0.0
    %8431 = vmatpush1.msra.mxu0 0.0
    %8432 = vmatprep.subr.mxu0 0.0
    %8433 = vmatpush1.msra.mxu0 0.0
    %8434 = vmatprep.subr.mxu0 0.0
    %8435 = vmatpush1.msra.mxu0 0.0
    %8436 = vmatprep.subr.mxu0 0.0
    %8437 = vmatpush1.msra.mxu0 0.0
    %8438 = vmatprep.subr.mxu0 0.0
    %8439 = vmatpush1.msra.mxu0 0.0
    %8440 = vmatprep.subr.mxu0 0.0
    %8441 = vmatpush1.msra.mxu0 0.0
    %8442 = vmatprep.subr.mxu0 0.0
    %8443 = vmatpush1.msra.mxu0 0.0
    %8444 = vmatprep.subr.mxu0 0.0
    %8445 = vmatpush1.msra.mxu0 0.0
    %8446 = vmatprep.subr.mxu0 0.0
    %8447 = vmatpush1.msra.mxu0 0.0
    %8448 = vmatprep.subr.mxu0 0.0
    %8449 = vmatpush1.msra.mxu0 0.0
    %8450 = vmatprep.subr.mxu0 0.0
    %8451 = vmatpush1.msra.mxu0 0.0
    %8452 = vmatprep.subr.mxu0 0.0
    %8453 = vmatpush1.msra.mxu0 0.0
    %8454 = vmatprep.subr.mxu0 0.0
    %8455 = vmatpush1.msra.mxu0 0.0
    %8456 = vmatprep.subr.mxu0 0.0
    %8457 = vmatpush1.msra.mxu0 0.0
    %8458 = vmatprep.subr.mxu0 0.0
    %8459 = vmatpush1.msra.mxu0 0.0
    %8460 = vmatprep.subr.mxu0 0.0
    %8461 = vmatpush1.msra.mxu0 0.0
    %8462 = vmatprep.subr.mxu0 0.0
    %8463 = vmatpush1.msra.mxu0 0.0
    %8464 = vmatprep.subr.mxu0 0.0
    %8465 = vmatpush1.msra.mxu0 0.0
    %8466 = vmatprep.mubr.f32.mxu0 0.0
    %v8467 = vand.u32 %v7812, 4294901760
    %8468 = vmatmul.mubr.f32.gmra.mrb[0].mxu0 %v8467
    %v8469 = vpop.f32.mrb[0].mxu0
    %v8470 = vadd.f32 %v8379, %v8469
    %v8471 = vpop.f32.mrb[0].mxu0
    %8472 = vdwg.mxu0
    %8473 = vmatprep.subr.mxu0 0.0
    %v8474 = vand.u32 %v8299, 4294901760
    %v8475 = vsub.f32 %v8299, %v8474
    %8476 = vmatpush1.msra.mxu0 %v8475
    %8477 = vmatprep.subr.mxu0 0.0
    %v8478 = vand.u32 %v8300, 4294901760
    %v8479 = vsub.f32 %v8300, %v8478
    %8480 = vmatpush1.msra.mxu0 %v8479
    %8481 = vmatprep.subr.mxu0 0.0
    %v8482 = vand.u32 %v8301, 4294901760
    %v8483 = vsub.f32 %v8301, %v8482
    %8484 = vmatpush1.msra.mxu0 %v8483
    %8485 = vmatprep.subr.mxu0 0.0
    %v8486 = vand.u32 %v8302, 4294901760
    %v8487 = vsub.f32 %v8302, %v8486
    %8488 = vmatpush1.msra.mxu0 %v8487
    %8489 = vmatprep.subr.mxu0 0.0
    %8490 = vmatpush1.msra.mxu0 0.0
    %8491 = vmatprep.subr.mxu0 0.0
    %8492 = vmatpush1.msra.mxu0 0.0
    %8493 = vmatprep.subr.mxu0 0.0
    %8494 = vmatpush1.msra.mxu0 0.0
    %8495 = vmatprep.subr.mxu0 0.0
    %8496 = vmatpush1.msra.mxu0 0.0
    %8497 = vmatprep.subr.mxu0 0.0
    %8498 = vmatpush1.msra.mxu0 0.0
    %8499 = vmatprep.subr.mxu0 0.0
    %8500 = vmatpush1.msra.mxu0 0.0
    %8501 = vmatprep.subr.mxu0 0.0
    %8502 = vmatpush1.msra.mxu0 0.0
    %8503 = vmatprep.subr.mxu0 0.0
    %8504 = vmatpush1.msra.mxu0 0.0
    %8505 = vmatprep.subr.mxu0 0.0
    %8506 = vmatpush1.msra.mxu0 0.0
    %8507 = vmatprep.subr.mxu0 0.0
    %8508 = vmatpush1.msra.mxu0 0.0
    %8509 = vmatprep.subr.mxu0 0.0
    %8510 = vmatpush1.msra.mxu0 0.0
    %8511 = vmatprep.subr.mxu0 0.0
    %8512 = vmatpush1.msra.mxu0 0.0
    %8513 = vmatprep.subr.mxu0 0.0
    %8514 = vmatpush1.msra.mxu0 0.0
    %8515 = vmatprep.subr.mxu0 0.0
    %8516 = vmatpush1.msra.mxu0 0.0
    %8517 = vmatprep.subr.mxu0 0.0
    %8518 = vmatpush1.msra.mxu0 0.0
    %8519 = vmatprep.subr.mxu0 0.0
    %8520 = vmatpush1.msra.mxu0 0.0
    %8521 = vmatprep.subr.mxu0 0.0
    %8522 = vmatpush1.msra.mxu0 0.0
    %8523 = vmatprep.subr.mxu0 0.0
    %8524 = vmatpush1.msra.mxu0 0.0
    %8525 = vmatprep.subr.mxu0 0.0
    %8526 = vmatpush1.msra.mxu0 0.0
    %8527 = vmatprep.subr.mxu0 0.0
    %8528 = vmatpush1.msra.mxu0 0.0
    %8529 = vmatprep.subr.mxu0 0.0
    %8530 = vmatpush1.msra.mxu0 0.0
    %8531 = vmatprep.subr.mxu0 0.0
    %8532 = vmatpush1.msra.mxu0 0.0
    %8533 = vmatprep.subr.mxu0 0.0
    %8534 = vmatpush1.msra.mxu0 0.0
    %8535 = vmatprep.subr.mxu0 0.0
    %8536 = vmatpush1.msra.mxu0 0.0
    %8537 = vmatprep.subr.mxu0 0.0
    %8538 = vmatpush1.msra.mxu0 0.0
    %8539 = vmatprep.subr.mxu0 0.0
    %8540 = vmatpush1.msra.mxu0 0.0
    %8541 = vmatprep.subr.mxu0 0.0
    %8542 = vmatpush1.msra.mxu0 0.0
    %8543 = vmatprep.subr.mxu0 0.0
    %8544 = vmatpush1.msra.mxu0 0.0
    %8545 = vmatprep.mubr.f32.mxu0 0.0
    %v8546 = vand.u32 %v7812, 4294901760
    %v8547 = vsub.f32 %v7812, %v8546
    %8548 = vmatmul.mubr.f32.gmra.mrb[0].mxu0 %v8547
    %v8549 = vpop.f32.mrb[0].mxu0
    %v8550 = vadd.f32 %v8470, %v8549
    %v8551 = vpop.f32.mrb[0].mxu0
    %8552 = vdwg.mxu0
    %8553 = vmatprep.subr.mxu0 0.0
    %v8554 = vand.u32 %v8299, 4294901760
    %8555 = vmatpush1.msra.mxu0 %v8554
    %8556 = vmatprep.subr.mxu0 0.0
    %v8557 = vand.u32 %v8300, 4294901760
    %8558 = vmatpush1.msra.mxu0 %v8557
    %8559 = vmatprep.subr.mxu0 0.0
    %v8560 = vand.u32 %v8301, 4294901760
    %8561 = vmatpush1.msra.mxu0 %v8560
    %8562 = vmatprep.subr.mxu0 0.0
    %v8563 = vand.u32 %v8302, 4294901760
    %8564 = vmatpush1.msra.mxu0 %v8563
    %8565 = vmatprep.subr.mxu0 0.0
    %8566 = vmatpush1.msra.mxu0 0.0
    %8567 = vmatprep.subr.mxu0 0.0
    %8568 = vmatpush1.msra.mxu0 0.0
    %8569 = vmatprep.subr.mxu0 0.0
    %8570 = vmatpush1.msra.mxu0 0.0
    %8571 = vmatprep.subr.mxu0 0.0
    %8572 = vmatpush1.msra.mxu0 0.0
    %8573 = vmatprep.subr.mxu0 0.0
    %8574 = vmatpush1.msra.mxu0 0.0
    %8575 = vmatprep.subr.mxu0 0.0
    %8576 = vmatpush1.msra.mxu0 0.0
    %8577 = vmatprep.subr.mxu0 0.0
    %8578 = vmatpush1.msra.mxu0 0.0
    %8579 = vmatprep.subr.mxu0 0.0
    %8580 = vmatpush1.msra.mxu0 0.0
    %8581 = vmatprep.subr.mxu0 0.0
    %8582 = vmatpush1.msra.mxu0 0.0
    %8583 = vmatprep.subr.mxu0 0.0
    %8584 = vmatpush1.msra.mxu0 0.0
    %8585 = vmatprep.subr.mxu0 0.0
    %8586 = vmatpush1.msra.mxu0 0.0
    %8587 = vmatprep.subr.mxu0 0.0
    %8588 = vmatpush1.msra.mxu0 0.0
    %8589 = vmatprep.subr.mxu0 0.0
    %8590 = vmatpush1.msra.mxu0 0.0
    %8591 = vmatprep.subr.mxu0 0.0
    %8592 = vmatpush1.msra.mxu0 0.0
    %8593 = vmatprep.subr.mxu0 0.0
    %8594 = vmatpush1.msra.mxu0 0.0
    %8595 = vmatprep.subr.mxu0 0.0
    %8596 = vmatpush1.msra.mxu0 0.0
    %8597 = vmatprep.subr.mxu0 0.0
    %8598 = vmatpush1.msra.mxu0 0.0
    %8599 = vmatprep.subr.mxu0 0.0
    %8600 = vmatpush1.msra.mxu0 0.0
    %8601 = vmatprep.subr.mxu0 0.0
    %8602 = vmatpush1.msra.mxu0 0.0
    %8603 = vmatprep.subr.mxu0 0.0
    %8604 = vmatpush1.msra.mxu0 0.0
    %8605 = vmatprep.subr.mxu0 0.0
    %8606 = vmatpush1.msra.mxu0 0.0
    %8607 = vmatprep.subr.mxu0 0.0
    %8608 = vmatpush1.msra.mxu0 0.0
    %8609 = vmatprep.subr.mxu0 0.0
    %8610 = vmatpush1.msra.mxu0 0.0
    %8611 = vmatprep.subr.mxu0 0.0
    %8612 = vmatpush1.msra.mxu0 0.0
    %8613 = vmatprep.subr.mxu0 0.0
    %8614 = vmatpush1.msra.mxu0 0.0
    %8615 = vmatprep.subr.mxu0 0.0
    %8616 = vmatpush1.msra.mxu0 0.0
    %8617 = vmatprep.subr.mxu0 0.0
    %8618 = vmatpush1.msra.mxu0 0.0
    %8619 = vmatprep.subr.mxu0 0.0
    %8620 = vmatpush1.msra.mxu0 0.0
    %8621 = vmatprep.mubr.f32.mxu0 0.0
    %v8622 = vand.u32 %v7812, 4294901760
    %v8623 = vsub.f32 %v7812, %v8622
    %v8624 = vand.u32 %v8623, 4294901760
    %8625 = vmatmul.mubr.f32.gmra.mrb[0].mxu0 %v8624
    %v8626 = vpop.f32.mrb[0].mxu0
    %v8627 = vadd.f32 %v8550, %v8626
    %v8628 = vpop.f32.mrb[0].mxu0
    %8629 = vdwg.mxu0
    %8630 = vmatprep.subr.mxu0 0.0
    %v8631 = vand.u32 %v8299, 4294901760
    %v8632 = vsub.f32 %v8299, %v8631
    %v8633 = vand.u32 %v8632, 4294901760
    %8634 = vmatpush1.msra.mxu0 %v8633
    %8635 = vmatprep.subr.mxu0 0.0
    %v8636 = vand.u32 %v8300, 4294901760
    %v8637 = vsub.f32 %v8300, %v8636
    %v8638 = vand.u32 %v8637, 4294901760
    %8639 = vmatpush1.msra.mxu0 %v8638
    %8640 = vmatprep.subr.mxu0 0.0
    %v8641 = vand.u32 %v8301, 4294901760
    %v8642 = vsub.f32 %v8301, %v8641
    %v8643 = vand.u32 %v8642, 4294901760
    %8644 = vmatpush1.msra.mxu0 %v8643
    %8645 = vmatprep.subr.mxu0 0.0
    %v8646 = vand.u32 %v8302, 4294901760
    %v8647 = vsub.f32 %v8302, %v8646
    %v8648 = vand.u32 %v8647, 4294901760
    %8649 = vmatpush1.msra.mxu0 %v8648
    %8650 = vmatprep.subr.mxu0 0.0
    %8651 = vmatpush1.msra.mxu0 0.0
    %8652 = vmatprep.subr.mxu0 0.0
    %8653 = vmatpush1.msra.mxu0 0.0
    %8654 = vmatprep.subr.mxu0 0.0
    %8655 = vmatpush1.msra.mxu0 0.0
    %8656 = vmatprep.subr.mxu0 0.0
    %8657 = vmatpush1.msra.mxu0 0.0
    %8658 = vmatprep.subr.mxu0 0.0
    %8659 = vmatpush1.msra.mxu0 0.0
    %8660 = vmatprep.subr.mxu0 0.0
    %8661 = vmatpush1.msra.mxu0 0.0
    %8662 = vmatprep.subr.mxu0 0.0
    %8663 = vmatpush1.msra.mxu0 0.0
    %8664 = vmatprep.subr.mxu0 0.0
    %8665 = vmatpush1.msra.mxu0 0.0
    %8666 = vmatprep.subr.mxu0 0.0
    %8667 = vmatpush1.msra.mxu0 0.0
    %8668 = vmatprep.subr.mxu0 0.0
    %8669 = vmatpush1.msra.mxu0 0.0
    %8670 = vmatprep.subr.mxu0 0.0
    %8671 = vmatpush1.msra.mxu0 0.0
    %8672 = vmatprep.subr.mxu0 0.0
    %8673 = vmatpush1.msra.mxu0 0.0
    %8674 = vmatprep.subr.mxu0 0.0
    %8675 = vmatpush1.msra.mxu0 0.0
    %8676 = vmatprep.subr.mxu0 0.0
    %8677 = vmatpush1.msra.mxu0 0.0
    %8678 = vmatprep.subr.mxu0 0.0
    %8679 = vmatpush1.msra.mxu0 0.0
    %8680 = vmatprep.subr.mxu0 0.0
    %8681 = vmatpush1.msra.mxu0 0.0
    %8682 = vmatprep.subr.mxu0 0.0
    %8683 = vmatpush1.msra.mxu0 0.0
    %8684 = vmatprep.subr.mxu0 0.0
    %8685 = vmatpush1.msra.mxu0 0.0
    %8686 = vmatprep.subr.mxu0 0.0
    %8687 = vmatpush1.msra.mxu0 0.0
    %8688 = vmatprep.subr.mxu0 0.0
    %8689 = vmatpush1.msra.mxu0 0.0
    %8690 = vmatprep.subr.mxu0 0.0
    %8691 = vmatpush1.msra.mxu0 0.0
    %8692 = vmatprep.subr.mxu0 0.0
    %8693 = vmatpush1.msra.mxu0 0.0
    %8694 = vmatprep.subr.mxu0 0.0
    %8695 = vmatpush1.msra.mxu0 0.0
    %8696 = vmatprep.subr.mxu0 0.0
    %8697 = vmatpush1.msra.mxu0 0.0
    %8698 = vmatprep.subr.mxu0 0.0
    %8699 = vmatpush1.msra.mxu0 0.0
    %8700 = vmatprep.subr.mxu0 0.0
    %8701 = vmatpush1.msra.mxu0 0.0
    %8702 = vmatprep.subr.mxu0 0.0
    %8703 = vmatpush1.msra.mxu0 0.0
    %8704 = vmatprep.subr.mxu0 0.0
    %8705 = vmatpush1.msra.mxu0 0.0
    %8706 = vmatprep.mubr.f32.mxu0 0.0
    %v8707 = vand.u32 %v7812, 4294901760
    %8708 = vmatmul.mubr.f32.gmra.mrb[0].mxu0 %v8707
    %v8709 = vpop.f32.mrb[0].mxu0
    %v8710 = vadd.f32 %v8627, %v8709
    %v8711 = vpop.f32.mrb[0].mxu0
    %8712 = vdwg.mxu0
    %8713 = vmatprep.subr.mxu0 0.0
    %v8714 = vand.u32 %v8299, 4294901760
    %8715 = vmatpush1.msra.mxu0 %v8714
    %8716 = vmatprep.subr.mxu0 0.0
    %v8717 = vand.u32 %v8300, 4294901760
    %8718 = vmatpush1.msra.mxu0 %v8717
    %8719 = vmatprep.subr.mxu0 0.0
    %v8720 = vand.u32 %v8301, 4294901760
    %8721 = vmatpush1.msra.mxu0 %v8720
    %8722 = vmatprep.subr.mxu0 0.0
    %v8723 = vand.u32 %v8302, 4294901760
    %8724 = vmatpush1.msra.mxu0 %v8723
    %8725 = vmatprep.subr.mxu0 0.0
    %8726 = vmatpush1.msra.mxu0 0.0
    %8727 = vmatprep.subr.mxu0 0.0
    %8728 = vmatpush1.msra.mxu0 0.0
    %8729 = vmatprep.subr.mxu0 0.0
    %8730 = vmatpush1.msra.mxu0 0.0
    %8731 = vmatprep.subr.mxu0 0.0
    %8732 = vmatpush1.msra.mxu0 0.0
    %8733 = vmatprep.subr.mxu0 0.0
    %8734 = vmatpush1.msra.mxu0 0.0
    %8735 = vmatprep.subr.mxu0 0.0
    %8736 = vmatpush1.msra.mxu0 0.0
    %8737 = vmatprep.subr.mxu0 0.0
    %8738 = vmatpush1.msra.mxu0 0.0
    %8739 = vmatprep.subr.mxu0 0.0
    %8740 = vmatpush1.msra.mxu0 0.0
    %8741 = vmatprep.subr.mxu0 0.0
    %8742 = vmatpush1.msra.mxu0 0.0
    %8743 = vmatprep.subr.mxu0 0.0
    %8744 = vmatpush1.msra.mxu0 0.0
    %8745 = vmatprep.subr.mxu0 0.0
    %8746 = vmatpush1.msra.mxu0 0.0
    %8747 = vmatprep.subr.mxu0 0.0
    %8748 = vmatpush1.msra.mxu0 0.0
    %8749 = vmatprep.subr.mxu0 0.0
    %8750 = vmatpush1.msra.mxu0 0.0
    %8751 = vmatprep.subr.mxu0 0.0
    %8752 = vmatpush1.msra.mxu0 0.0
    %8753 = vmatprep.subr.mxu0 0.0
    %8754 = vmatpush1.msra.mxu0 0.0
    %8755 = vmatprep.subr.mxu0 0.0
    %8756 = vmatpush1.msra.mxu0 0.0
    %8757 = vmatprep.subr.mxu0 0.0
    %8758 = vmatpush1.msra.mxu0 0.0
    %8759 = vmatprep.subr.mxu0 0.0
    %8760 = vmatpush1.msra.mxu0 0.0
    %8761 = vmatprep.subr.mxu0 0.0
    %8762 = vmatpush1.msra.mxu0 0.0
    %8763 = vmatprep.subr.mxu0 0.0
    %8764 = vmatpush1.msra.mxu0 0.0
    %8765 = vmatprep.subr.mxu0 0.0
    %8766 = vmatpush1.msra.mxu0 0.0
    %8767 = vmatprep.subr.mxu0 0.0
    %8768 = vmatpush1.msra.mxu0 0.0
    %8769 = vmatprep.subr.mxu0 0.0
    %8770 = vmatpush1.msra.mxu0 0.0
    %8771 = vmatprep.subr.mxu0 0.0
    %8772 = vmatpush1.msra.mxu0 0.0
    %8773 = vmatprep.subr.mxu0 0.0
    %8774 = vmatpush1.msra.mxu0 0.0
    %8775 = vmatprep.subr.mxu0 0.0
    %8776 = vmatpush1.msra.mxu0 0.0
    %8777 = vmatprep.subr.mxu0 0.0
    %8778 = vmatpush1.msra.mxu0 0.0
    %8779 = vmatprep.subr.mxu0 0.0
    %8780 = vmatpush1.msra.mxu0 0.0
    %8781 = vmatprep.mubr.f32.mxu0 0.0
    %v8782 = vand.u32 %v7812, 4294901760
    %8783 = vmatmul.mubr.f32.gmra.mrb[0].mxu0 %v8782
    %v8784 = vpop.f32.mrb[0].mxu0
    %v8785 = vadd.f32 %v8710, %v8784
    %v8786 = vpop.f32.mrb[0].mxu0
    %8787 = vdwg.mxu0
    %v8788 = vld [vmem:[#allocation2 + $0x7] sm:$0x1]
    %v8789 = vmul.f32 %v7797, %v7797
    %v8790 = vsel %vm1604, %v8789, 0.0
    %8791 = vadd.xlane.f32.xlu0 %v8790
    %v8792 = vpop.xlane.xlu0 %8791
    %s8793 = smul.f32 %s7802, 0.5
    %v8794 = vstv %s7802
    %v8795 = vadd.f32 %v8794, %v7806
    %v8796 = vrcp.pop %v8795
    %v8797 = vstv %s8793
    %v8798 = vmul.f32 %v8797, %v8796
    %v8799 = vsub.f32 0.0, %v7773
    %v8800 = vmul.f32 %v8798, %v8798
    %v8801 = vadd.f32 %v8792, %v8800
    %v8802 = vmul.f32 %v7773, %v8801
    %v8803 = vadd.f32 %v8799, %v8802
    %v8804 = vmul.f32 %v8803, 0.1
    %v8805 = vadd.f32 %v7773, %v8804
    %v8806 = vmax.f32 %v8805, 0.0
    %v8807 = vsub.f32 %v8806, %v7806
    %v8808 = vsub.f32 0.0, %v7782
    %v8809 = vmul.f32 %v7805, %v7806
    %v8810 = vadd.f32 %v8808, %v8809
    %v8811 = vadd.f32 %v8810, 1.0
    %v8812 = vadd.f32 %v8811, %v8807
    %v8813 = vmul.f32 %v8812, 0.1
    %v8814 = vadd.f32 %v7782, %v8813
    %v8815 = vrcp.pop %v7805
    %v8816 = vsub.f32 0.0, %v7796
    %v8817 = vmul.f32 %v8816, 0.5
    %v8818 = vstv %s7803
    %v8819 = vmul.f32 %v8818, %v8788
    %v8820 = vadd.f32 %v8817, %v8819
    %v8821 = vstv %s7804
    %v8822 = vmul.f32 %v8821, %v8815
    %v8823 = vmul.f32 %v8822, %v8296
    %v8824 = vadd.f32 %v8820, %v8823
    %v8825 = vstv %s7801
    %v8826 = vmul.f32 %v8825, %v8785
    %v8827 = vadd.f32 %v8824, %v8826
    %v8828 = vadd.f32 %v7796, %v8827
    %v8829 = vmax.f32 %v8828, 0.0
    %8830 = vst.msk [vmem:[#allocation17 + $0x7] sm:$0x1] %vm1604, %v8829
    %8831 = vst.msk [vmem:[%s9 + $0x7] sm:$0x1] %vm1606, %v8814
    %8832 = vst.msk [vmem:[%s10 + $0x7] sm:$0x1] %vm1606, %v8805
    // Predicated region
    $region62: #{tpu_custom_call.1} parent=1 // pred_check
      _
    $region63: #{tpu_custom_call.1} parent=1 // pred_check_branch
      %8834 = sbr.rel (0) target = $region65
    $region64: #{tpu_custom_call.1} parent=1 // pred_region
      %s8836 = ssub.s32 128, 128
      %8837 = vsyncadd [#allocation5], %s8836
      %s8839 = sshll.u32 [#allocation17], 4
      %s8840 = int_to_ptr.vmem [resolvable:$true] %s8839
      %8842 = dma.vmem_to_hbm [thread:$0]  %s8840, 128, %s8, [#allocation5]
    $region65: #{tpu_custom_call.1} parent=1 // pred_fallthru
      _
    // Predicated region
    $region66: #{tpu_custom_call.1} parent=1 // pred_check
      _
    $region67: #{tpu_custom_call.1} parent=1 // pred_check_branch
      %8844 = sbr.rel (0) target = $region69
    $region68: #{tpu_custom_call.1} parent=1 // pred_region
      _
    $region69: #{tpu_custom_call.1} parent=1 // pred_fallthru
      _
    // Predicated region
    $region70: #{tpu_custom_call.1} parent=1 // pred_check
      _
    $region71: #{tpu_custom_call.1} parent=1 // pred_check_branch
      %8846 = sbr.rel (0) target = $region73
    $region72: #{tpu_custom_call.1} parent=1 // pred_region
      _
    $region73: #{tpu_custom_call.1} parent=1 // pred_fallthru
      _
    // Predicated region
    $region74: #{tpu_custom_call.1} parent=1 // pred_check
      _
    $region75: #{tpu_custom_call.1} parent=1 // pred_check_branch
      %8848 = sbr.rel (0) target = $region77
    $region76: #{tpu_custom_call.1} parent=1 // pred_region
      %8849 = dma.done [#allocation5], 128
    $region77: #{tpu_custom_call.1} parent=1 // pred_fallthru
      _
    // Predicated region
    $region78: #{tpu_custom_call.1} parent=1 // pred_check
      _
    $region79: #{tpu_custom_call.1} parent=1 // pred_check_branch
      %8851 = sbr.rel (0) target = $region81
    $region80: #{tpu_custom_call.1} parent=1 // pred_region
      _
    $region81: #{tpu_custom_call.1} parent=1 // pred_fallthru
      _
    // Predicated region
    $region82: #{tpu_custom_call.1} parent=1 // pred_check
      _
    $region83: #{tpu_custom_call.1} parent=1 // pred_check_branch
      %8853 = sbr.rel (0) target = $region85
    $region84: #{tpu_custom_call.1} parent=1 // pred_region
      _
    $region85: #{tpu_custom_call.1} parent=1 // pred_fallthru
      _
    %8854 = vsyncpa [#allocation4], 1
    %8855 = vsyncpa [#allocation15], 1
    %8856 = vsyncpa [#allocation5], 1
    %8857 = vsyncpa [#allocation6], 1
    %8858 = vsyncpa [#allocation12], 1
    %8859 = vsyncpa [#allocation7], 1
    %8860 = vsyncpa [#allocation10], 1

</llo_original>
